<compile_context>
chip_gen: v7x
topology: tpu7x:2x2x1
jax: 0.10.0
libtpu: 0.0.40
codegen_flags: <defaults>
</compile_context>

<pallas_src>
import functools
import math

import jax
import jax.numpy as jnp
from jax import lax
from jax.experimental import pallas as pl
from jax.experimental.pallas import tpu as pltpu


# ----------------------------- fused residual-block kernel -----------------------------
def _resblock_kernel(x_ref, wd_ref, bd_ref, w1_ref, b1_ref, w2_ref, b2_ref,
                     out_ref, xpad_ref, *, dh_rows, h_dim, pad):
    lanes = x_ref.shape[-1]
    x = x_ref[0]                                                     # (D*H, W*Cp) f32

    # identity path: 1x1x1 conv (no bias) + BN, both folded into wd / bd
    ident = jnp.dot(x.astype(jnp.bfloat16), wd_ref[...],
                    preferred_element_type=jnp.float32) + bd_ref[...]

    # h coordinate of every row (row index = d*H + h); used to mask rows whose h+dh tap falls
    # outside [0, H).  The d taps are handled by the zero rows of the padded scratch, the w taps
    # by the banded weight matrices.
    row = lax.broadcasted_iota(jnp.int32, (dh_rows, 1), 0)
    if h_dim & (h_dim - 1) == 0:
        h_idx = row & (h_dim - 1)
    else:
        h_idx = row % h_dim

    def conv3x3_bn_relu(w_ref, b_ref):
        acc = jnp.zeros((dh_rows, lanes), jnp.float32)
        g = 0
        for dd in (-1, 0, 1):
            for dh in (-1, 0, 1):
                start = pad + dd * h_dim + dh
                xs = xpad_ref[start:start + dh_rows, :]
                if dh != 0:
                    ok = (h_idx + dh >= 0) & (h_idx + dh < h_dim)
                    xs = jnp.where(ok, xs, 0.0)
                acc = acc + jnp.dot(xs.astype(jnp.bfloat16), w_ref[g],
                                    preferred_element_type=jnp.float32)
                g += 1
        return jnp.maximum(acc + b_ref[...], 0.0)                    # (conv + BN) bias + ReLU

    # double conv: taps are read from the zero-padded VMEM scratch
    xpad_ref[...] = jnp.zeros(xpad_ref.shape, xpad_ref.dtype)
    xpad_ref[pad:pad + dh_rows, :] = x
    h1 = conv3x3_bn_relu(w1_ref, b1_ref)
    xpad_ref[pad:pad + dh_rows, :] = h1
    h2 = conv3x3_bn_relu(w2_ref, b2_ref)

    out_ref[0] = jnp.maximum(h2 + ident, 0.0)                        # residual add + ReLU


# ---------------------------------- MaxPool3d(2) kernel ---------------------------------
def _maxpool2_kernel(x_ref, o_ref, *, cp):
    # x_ref block: (1, Do, 2, Ho, 2, Wo, 2*Cp)  -- free bitcast view of the block output
    a = jnp.maximum(x_ref[0, :, 0], x_ref[0, :, 1])                  # d-pair  -> (Do,Ho,2,Wo,2Cp)
    a = jnp.maximum(a[:, :, 0], a[:, :, 1])                          # h-pair  -> (Do,Ho,Wo,2Cp)
    a = jnp.maximum(a[..., :cp], a[..., cp:])                        # w-pair  -> (Do,Ho,Wo,Cp)
    o_ref[0] = a


# -------------------------- weight folding / layout helpers (host side) ------------------
def _fold_bn(bn, eps=1e-5):
    gamma, beta, mean, var = bn
    scale = gamma / jnp.sqrt(var + eps)
    return scale, beta - scale * mean


def _banded_conv3_mats(w, scale, w_dim, cp):
    """Fold a (Cout,Cin,3,3,3) conv weight (per-out-channel BN scale applied) into 9
    block-banded (W*cp, W*cp) matrices, one per (dd, dh) tap; the three dw taps and the
    channel contraction are encoded inside each matrix (rows: w_in*cp+cin, cols: w_out*cp+cout)."""
    cout, cin = w.shape[0], w.shape[1]
    ws = (w * scale[:, None, None, None, None]).astype(jnp.float32)
    wp = jnp.zeros((cp, cp, 3, 3, 3), jnp.float32).at[:cout, :cin].set(ws)
    mats = []
    for dd in (-1, 0, 1):
        for dh in (-1, 0, 1):
            m = jnp.zeros((w_dim * cp, w_dim * cp), jnp.float32)
            for dw in (-1, 0, 1):
                tap = wp[:, :, dd + 1, dh + 1, dw + 1]               # (cp_out, cp_in)
                sel = jnp.eye(w_dim, k=-dw, dtype=jnp.float32)       # sel[w_in, w_out]=1 iff w_in=w_out+dw
                m = m + jnp.kron(sel, tap.T)
            mats.append(m)
    return jnp.stack(mats).astype(jnp.bfloat16)                      # (9, L, L)


def _banded_conv1_mat(w, scale, w_dim, cp):
    cout, cin = w.shape[0], w.shape[1]
    tap = (w[:, :, 0, 0, 0] * scale[:, None]).astype(jnp.float32)
    tp = jnp.zeros((cp, cp), jnp.float32).at[:cout, :cin].set(tap)
    return jnp.kron(jnp.eye(w_dim, dtype=jnp.float32), tp.T).astype(jnp.bfloat16)


def _lane_bias(bias, w_dim, cp):
    b = jnp.zeros((cp,), jnp.float32).at[:bias.shape[0]].set(bias)
    return jnp.tile(b, w_dim)[None, :]                               # (1, L)


# ------------------------------------- forward pass --------------------------------------
@jax.jit
def resblocki_forward(params, x):
    n, cin, d, h, w = x.shape
    cout = params["c1_w"].shape[0]
    assert d % 2 == 0 and h % 2 == 0 and w % 2 == 0
    cp = -(-max(cin, cout) // 8) * 8
    lanes = w * cp
    dh_rows = d * h
    pad = -(-(h + 1) // 8) * 8

    # fold BN (eval mode) and build the banded MXU weight matrices / lane biases
    s_ds, b_ds = _fold_bn(params["ds_bn"])
    s1, bb1 = _fold_bn(params["bn1"])
    s2, bb2 = _fold_bn(params["bn2"])
    wd = _banded_conv1_mat(params["ds_w"], s_ds, w, cp)
    bd = _lane_bias(b_ds, w, cp)
    w1 = _banded_conv3_mats(params["c1_w"], s1, w, cp)
    b1 = _lane_bias(s1 * params["c1_b"] + bb1, w, cp)
    w2 = _banded_conv3_mats(params["c2_w"], s2, w, cp)
    b2 = _lane_bias(s2 * params["c2_b"] + bb2, w, cp)

    # pack the NCDHW input into the lane-dense (D*H, W*Cp) layout
    xl = jnp.transpose(x, (0, 2, 3, 4, 1)).astype(jnp.float32)       # (N,D,H,W,Cin)
    xl = jnp.pad(xl, ((0, 0), (0, 0), (0, 0), (0, 0), (0, cp - cin)))
    xl = xl.reshape(n, dh_rows, lanes)

    # fused residual-block kernel (one grid step per batch element, fully VMEM-resident)
    out_l = pl.pallas_call(
        functools.partial(_resblock_kernel, dh_rows=dh_rows, h_dim=h, pad=pad),
        grid=(n,),
        in_specs=[
            pl.BlockSpec((1, dh_rows, lanes), lambda i: (i, 0, 0)),
            pl.BlockSpec((lanes, lanes), lambda i: (0, 0)),
            pl.BlockSpec((1, lanes), lambda i: (0, 0)),
            pl.BlockSpec((9, lanes, lanes), lambda i: (0, 0, 0)),
            pl.BlockSpec((1, lanes), lambda i: (0, 0)),
            pl.BlockSpec((9, lanes, lanes), lambda i: (0, 0, 0)),
            pl.BlockSpec((1, lanes), lambda i: (0, 0)),
        ],
        out_specs=pl.BlockSpec((1, dh_rows, lanes), lambda i: (i, 0, 0)),
        out_shape=jax.ShapeDtypeStruct((n, dh_rows, lanes), jnp.float32),
        scratch_shapes=[pltpu.VMEM((dh_rows + 2 * pad, lanes), jnp.float32)],
        compiler_params=pltpu.CompilerParams(dimension_semantics=("parallel",)),
    )(xl, wd, bd, w1, b1, w2, b2)

    # MaxPool3d(2) kernel, reading the block output through a free (bitcast) reshape
    do, ho, wo = d // 2, h // 2, w // 2
    pooled_l = pl.pallas_call(
        functools.partial(_maxpool2_kernel, cp=cp),
        grid=(n,),
        in_specs=[pl.BlockSpec((1, do, 2, ho, 2, wo, 2 * cp),
                               lambda i: (i, 0, 0, 0, 0, 0, 0))],
        out_specs=pl.BlockSpec((1, do, ho, wo, cp), lambda i: (i, 0, 0, 0, 0)),
        out_shape=jax.ShapeDtypeStruct((n, do, ho, wo, cp), jnp.float32),
        compiler_params=pltpu.CompilerParams(dimension_semantics=("parallel",)),
    )(out_l.reshape(n, do, 2, ho, 2, wo, 2 * cp))

    # unpack back to PyTorch NCDHW
    out = jnp.transpose(out_l.reshape(n, d, h, w, cp)[..., :cout], (0, 4, 1, 2, 3))
    pooled = jnp.transpose(pooled_l[..., :cout], (0, 4, 1, 2, 3))
    return pooled, out


# ----------------------------- pure-JAX reference (for validation) -----------------------
def _reference_forward(params, x, eps=1e-5):
    def bn(z, p):
        g, b, m, v = p
        inv = 1.0 / jnp.sqrt(v + eps)
        return (z - m[None, :, None, None, None]) * (g * inv)[None, :, None, None, None] \
            + b[None, :, None, None, None]

    dn = ("NCDHW", "OIDHW", "NCDHW")

    def conv(inp, wgt, p):
        return lax.conv_general_dilated(inp, wgt, (1, 1, 1), [(p, p)] * 3,
                                        dimension_numbers=dn)

    ident = bn(conv(x, params["ds_w"], 0), params["ds_bn"])
    h1 = jax.nn.relu(bn(conv(x, params["c1_w"], 1)
                        + params["c1_b"][None, :, None, None, None], params["bn1"]))
    h2 = jax.nn.relu(bn(conv(h1, params["c2_w"], 1)
                        + params["c2_b"][None, :, None, None, None], params["bn2"]))
    out = jax.nn.relu(h2 + ident)
    n, c, d, hh, w = out.shape
    pooled = out.reshape(n, c, d // 2, 2, hh // 2, 2, w // 2, 2).max(axis=(3, 5, 7))
    return pooled, out


if __name__ == "__main__":
    key = jax.random.PRNGKey(0)
    ks = jax.random.split(key, 10)
    batch, in_ch, out_ch, spatial = 2, 4, 8, 16

    def bn_params(k):
        k1, k2, k3, k4 = jax.random.split(k, 4)
        return (1.0 + 0.1 * jax.random.normal(k1, (out_ch,), jnp.float32),
                0.1 * jax.random.normal(k2, (out_ch,), jnp.float32),
                0.1 * jax.random.normal(k3, (out_ch,), jnp.float32),
                jax.random.uniform(k4, (out_ch,), jnp.float32, 0.5, 1.5))

    params = {
        "ds_w": jax.random.normal(ks[0], (out_ch, in_ch, 1, 1, 1), jnp.float32) / math.sqrt(in_ch),
        "ds_bn": bn_params(ks[1]),
        "c1_w": jax.random.normal(ks[2], (out_ch, in_ch, 3, 3, 3), jnp.float32) / math.sqrt(27 * in_ch),
        "c1_b": 0.05 * jax.random.normal(ks[3], (out_ch,), jnp.float32),
        "bn1": bn_params(ks[4]),
        "c2_w": jax.random.normal(ks[5], (out_ch, out_ch, 3, 3, 3), jnp.float32) / math.sqrt(27 * out_ch),
        "c2_b": 0.05 * jax.random.normal(ks[6], (out_ch,), jnp.float32),
        "bn2": bn_params(ks[7]),
    }
    x = jax.random.normal(ks[8], (batch, in_ch, spatial, spatial, spatial), jnp.float32)

    pooled, out = jax.block_until_ready(resblocki_forward(params, x))
    assert pooled.shape == (batch, out_ch, spatial // 2, spatial // 2, spatial // 2), pooled.shape
    assert out.shape == (batch, out_ch, spatial, spatial, spatial), out.shape
    assert bool(jnp.all(jnp.isfinite(pooled))) and bool(jnp.all(jnp.isfinite(out)))

    pooled_ref, out_ref = _reference_forward(params, x)
    assert bool(jnp.allclose(out, out_ref, atol=5e-2, rtol=5e-2)), \
        float(jnp.max(jnp.abs(out - out_ref)))
    assert bool(jnp.allclose(pooled, pooled_ref, atol=5e-2, rtol=5e-2)), \
        float(jnp.max(jnp.abs(pooled - pooled_ref)))
    print("KERNEL_OK")
</pallas_src>

<mosaic_0001>
module attributes {stable_mosaic.version = 11 : i64} {
  func.func @_resblock_kernel(%arg0: i32, %arg1: memref<1x256x128xf32, #tpu.memory_space<vmem>>, %arg2: memref<128x128xbf16, #tpu.memory_space<vmem>>, %arg3: memref<1x128xf32, #tpu.memory_space<vmem>>, %arg4: memref<9x128x128xbf16, #tpu.memory_space<vmem>>, %arg5: memref<1x128xf32, #tpu.memory_space<vmem>>, %arg6: memref<9x128x128xbf16, #tpu.memory_space<vmem>>, %arg7: memref<1x128xf32, #tpu.memory_space<vmem>>, %arg8: memref<1x256x128xf32, #tpu.memory_space<vmem>>, %arg9: memref<304x128xf32, #tpu.memory_space<vmem>>) attributes {dimension_semantics = [#tpu.dimension_semantics<parallel>], iteration_bounds = array<i64: 2>, scalar_prefetch = 0 : i64, scratch_operands = 1 : i64, tpu.core_type = #tpu.core_type<tc>, window_params = [{transform_indices = @transform_0, window_bounds = array<i64: 1, 256, 128>}, {pipeline_mode = #tpu.pipeline_mode<synchronous>, transform_indices = @transform_1, window_bounds = array<i64: 128, 128>}, {pipeline_mode = #tpu.pipeline_mode<synchronous>, transform_indices = @transform_2, window_bounds = array<i64: 1, 128>}, {pipeline_mode = #tpu.pipeline_mode<synchronous>, transform_indices = @transform_3, window_bounds = array<i64: 9, 128, 128>}, {pipeline_mode = #tpu.pipeline_mode<synchronous>, transform_indices = @transform_4, window_bounds = array<i64: 1, 128>}, {pipeline_mode = #tpu.pipeline_mode<synchronous>, transform_indices = @transform_5, window_bounds = array<i64: 9, 128, 128>}, {pipeline_mode = #tpu.pipeline_mode<synchronous>, transform_indices = @transform_6, window_bounds = array<i64: 1, 128>}, {transform_indices = @transform_7, window_bounds = array<i64: 1, 256, 128>}]} {
    %c0 = arith.constant 0 : index
    %c0_0 = arith.constant 0 : index
    %c0_1 = arith.constant 0 : index
    %0 = vector.load %arg1[%c0, %c0_0, %c0_1] : memref<1x256x128xf32, #tpu.memory_space<vmem>>, vector<1x256x128xf32>
    %1 = vector.shape_cast %0 : vector<1x256x128xf32> to vector<256x128xf32>
    %2 = arith.truncf %1 : vector<256x128xf32> to vector<256x128xbf16>
    %c0_2 = arith.constant 0 : index
    %c0_3 = arith.constant 0 : index
    %3 = vector.load %arg2[%c0_2, %c0_3] : memref<128x128xbf16, #tpu.memory_space<vmem>>, vector<128x128xbf16>
    %cst = arith.constant dense<0.000000e+00> : vector<256x128xf32>
    %4 = tpu.matmul %2, %3, %cst {dimension_numbers = #tpu.dot_dimension_numbers<[1], [0], [0], [1], [0, 0, 1, 1], [], []>} : vector<256x128xbf16>, vector<128x128xbf16>, vector<256x128xf32> -> vector<256x128xf32>
    %c0_4 = arith.constant 0 : index
    %c0_5 = arith.constant 0 : index
    %5 = vector.load %arg3[%c0_4, %c0_5] : memref<1x128xf32, #tpu.memory_space<vmem>>, vector<1x128xf32>
    %6 = vector.broadcast %5 : vector<1x128xf32> to vector<256x128xf32>
    %7 = arith.addf %4, %6 : vector<256x128xf32>
    %8 = tpu.iota {dimensions = array<i32: 0>} : vector<256x1xi32>
    %c15_i32 = arith.constant 15 : i32
    %9 = vector.broadcast %c15_i32 : i32 to vector<256x1xi32>
    %10 = arith.andi %8, %9 : vector<256x1xi32>
    %cst_6 = arith.constant 0.000000e+00 : f32
    %11 = vector.broadcast %cst_6 : f32 to vector<304x128xf32>
    %c0_7 = arith.constant 0 : index
    %c0_8 = arith.constant 0 : index
    %12 = vector.load %arg9[%c0_7, %c0_8] : memref<304x128xf32, #tpu.memory_space<vmem>>, vector<304x128xf32>
    tpu.vector_store %arg9[%c0_7, %c0_8], %11 {strides = array<i32>} : memref<304x128xf32, #tpu.memory_space<vmem>>, vector<304x128xf32>,
    %c24 = arith.constant 24 : index
    %c0_9 = arith.constant 0 : index
    %13 = vector.load %arg9[%c24, %c0_9] : memref<304x128xf32, #tpu.memory_space<vmem>>, vector<256x128xf32>
    tpu.vector_store %arg9[%c24, %c0_9], %1 {strides = array<i32>} : memref<304x128xf32, #tpu.memory_space<vmem>>, vector<256x128xf32>,
    %cst_10 = arith.constant 0.000000e+00 : f32
    %14 = vector.broadcast %cst_10 : f32 to vector<256x128xf32>
    %c7 = arith.constant 7 : index
    %c0_11 = arith.constant 0 : index
    %15 = vector.load %arg9[%c7, %c0_11] : memref<304x128xf32, #tpu.memory_space<vmem>>, vector<256x128xf32>
    %c-1_i32 = arith.constant -1 : i32
    %16 = vector.broadcast %c-1_i32 : i32 to vector<256x1xi32>
    %17 = arith.addi %10, %16 : vector<256x1xi32>
    %c0_i32 = arith.constant 0 : i32
    %18 = vector.broadcast %c0_i32 : i32 to vector<256x1xi32>
    %19 = arith.cmpi sge, %17, %18 : vector<256x1xi32>
    %c-1_i32_12 = arith.constant -1 : i32
    %20 = vector.broadcast %c-1_i32_12 : i32 to vector<256x1xi32>
    %21 = arith.addi %10, %20 : vector<256x1xi32>
    %c16_i32 = arith.constant 16 : i32
    %22 = vector.broadcast %c16_i32 : i32 to vector<256x1xi32>
    %23 = arith.cmpi slt, %21, %22 : vector<256x1xi32>
    %24 = arith.andi %19, %23 : vector<256x1xi1>
    %cst_13 = arith.constant 0.000000e+00 : f32
    %25 = vector.shape_cast %24 : vector<256x1xi1> to vector<256x1xi1>
    %26 = vector.broadcast %25 : vector<256x1xi1> to vector<256x128xi1>
    %27 = vector.broadcast %cst_13 : f32 to vector<256x128xf32>
    %28 = arith.select %26, %15, %27 : vector<256x128xi1>, vector<256x128xf32>
    %29 = arith.truncf %28 : vector<256x128xf32> to vector<256x128xbf16>
    %c0_14 = arith.constant 0 : index
    %c0_15 = arith.constant 0 : index
    %c0_16 = arith.constant 0 : index
    %30 = vector.load %arg4[%c0_14, %c0_15, %c0_16] : memref<9x128x128xbf16, #tpu.memory_space<vmem>>, vector<1x128x128xbf16>
    %31 = vector.shape_cast %30 : vector<1x128x128xbf16> to vector<128x128xbf16>
    %cst_17 = arith.constant dense<0.000000e+00> : vector<256x128xf32>
    %32 = tpu.matmul %29, %31, %cst_17 {dimension_numbers = #tpu.dot_dimension_numbers<[1], [0], [0], [1], [0, 0, 1, 1], [], []>} : vector<256x128xbf16>, vector<128x128xbf16>, vector<256x128xf32> -> vector<256x128xf32>
    %33 = arith.addf %14, %32 : vector<256x128xf32>
    %c8 = arith.constant 8 : index
    %c0_18 = arith.constant 0 : index
    %34 = vector.load %arg9[%c8, %c0_18] : memref<304x128xf32, #tpu.memory_space<vmem>>, vector<256x128xf32>
    %35 = arith.truncf %34 : vector<256x128xf32> to vector<256x128xbf16>
    %c1 = arith.constant 1 : index
    %c0_19 = arith.constant 0 : index
    %c0_20 = arith.constant 0 : index
    %36 = vector.load %arg4[%c1, %c0_19, %c0_20] : memref<9x128x128xbf16, #tpu.memory_space<vmem>>, vector<1x128x128xbf16>
    %37 = vector.shape_cast %36 : vector<1x128x128xbf16> to vector<128x128xbf16>
    %cst_21 = arith.constant dense<0.000000e+00> : vector<256x128xf32>
    %38 = tpu.matmul %35, %37, %cst_21 {dimension_numbers = #tpu.dot_dimension_numbers<[1], [0], [0], [1], [0, 0, 1, 1], [], []>} : vector<256x128xbf16>, vector<128x128xbf16>, vector<256x128xf32> -> vector<256x128xf32>
    %39 = arith.addf %33, %38 : vector<256x128xf32>
    %c9 = arith.constant 9 : index
    %c0_22 = arith.constant 0 : index
    %40 = vector.load %arg9[%c9, %c0_22] : memref<304x128xf32, #tpu.memory_space<vmem>>, vector<256x128xf32>
    %c1_i32 = arith.constant 1 : i32
    %41 = vector.broadcast %c1_i32 : i32 to vector<256x1xi32>
    %42 = arith.addi %10, %41 : vector<256x1xi32>
    %c0_i32_23 = arith.constant 0 : i32
    %43 = vector.broadcast %c0_i32_23 : i32 to vector<256x1xi32>
    %44 = arith.cmpi sge, %42, %43 : vector<256x1xi32>
    %c1_i32_24 = arith.constant 1 : i32
    %45 = vector.broadcast %c1_i32_24 : i32 to vector<256x1xi32>
    %46 = arith.addi %10, %45 : vector<256x1xi32>
    %c16_i32_25 = arith.constant 16 : i32
    %47 = vector.broadcast %c16_i32_25 : i32 to vector<256x1xi32>
    %48 = arith.cmpi slt, %46, %47 : vector<256x1xi32>
    %49 = arith.andi %44, %48 : vector<256x1xi1>
    %cst_26 = arith.constant 0.000000e+00 : f32
    %50 = vector.shape_cast %49 : vector<256x1xi1> to vector<256x1xi1>
    %51 = vector.broadcast %50 : vector<256x1xi1> to vector<256x128xi1>
    %52 = vector.broadcast %cst_26 : f32 to vector<256x128xf32>
    %53 = arith.select %51, %40, %52 : vector<256x128xi1>, vector<256x128xf32>
    %54 = arith.truncf %53 : vector<256x128xf32> to vector<256x128xbf16>
    %c2 = arith.constant 2 : index
    %c0_27 = arith.constant 0 : index
    %c0_28 = arith.constant 0 : index
    %55 = vector.load %arg4[%c2, %c0_27, %c0_28] : memref<9x128x128xbf16, #tpu.memory_space<vmem>>, vector<1x128x128xbf16>
    %56 = vector.shape_cast %55 : vector<1x128x128xbf16> to vector<128x128xbf16>
    %cst_29 = arith.constant dense<0.000000e+00> : vector<256x128xf32>
    %57 = tpu.matmul %54, %56, %cst_29 {dimension_numbers = #tpu.dot_dimension_numbers<[1], [0], [0], [1], [0, 0, 1, 1], [], []>} : vector<256x128xbf16>, vector<128x128xbf16>, vector<256x128xf32> -> vector<256x128xf32>
    %58 = arith.addf %39, %57 : vector<256x128xf32>
    %c23 = arith.constant 23 : index
    %c0_30 = arith.constant 0 : index
    %59 = vector.load %arg9[%c23, %c0_30] : memref<304x128xf32, #tpu.memory_space<vmem>>, vector<256x128xf32>
    %c-1_i32_31 = arith.constant -1 : i32
    %60 = vector.broadcast %c-1_i32_31 : i32 to vector<256x1xi32>
    %61 = arith.addi %10, %60 : vector<256x1xi32>
    %c0_i32_32 = arith.constant 0 : i32
    %62 = vector.broadcast %c0_i32_32 : i32 to vector<256x1xi32>
    %63 = arith.cmpi sge, %61, %62 : vector<256x1xi32>
    %c-1_i32_33 = arith.constant -1 : i32
    %64 = vector.broadcast %c-1_i32_33 : i32 to vector<256x1xi32>
    %65 = arith.addi %10, %64 : vector<256x1xi32>
    %c16_i32_34 = arith.constant 16 : i32
    %66 = vector.broadcast %c16_i32_34 : i32 to vector<256x1xi32>
    %67 = arith.cmpi slt, %65, %66 : vector<256x1xi32>
    %68 = arith.andi %63, %67 : vector<256x1xi1>
    %cst_35 = arith.constant 0.000000e+00 : f32
    %69 = vector.shape_cast %68 : vector<256x1xi1> to vector<256x1xi1>
    %70 = vector.broadcast %69 : vector<256x1xi1> to vector<256x128xi1>
    %71 = vector.broadcast %cst_35 : f32 to vector<256x128xf32>
    %72 = arith.select %70, %59, %71 : vector<256x128xi1>, vector<256x128xf32>
    %73 = arith.truncf %72 : vector<256x128xf32> to vector<256x128xbf16>
    %c3 = arith.constant 3 : index
    %c0_36 = arith.constant 0 : index
    %c0_37 = arith.constant 0 : index
    %74 = vector.load %arg4[%c3, %c0_36, %c0_37] : memref<9x128x128xbf16, #tpu.memory_space<vmem>>, vector<1x128x128xbf16>
    %75 = vector.shape_cast %74 : vector<1x128x128xbf16> to vector<128x128xbf16>
    %cst_38 = arith.constant dense<0.000000e+00> : vector<256x128xf32>
    %76 = tpu.matmul %73, %75, %cst_38 {dimension_numbers = #tpu.dot_dimension_numbers<[1], [0], [0], [1], [0, 0, 1, 1], [], []>} : vector<256x128xbf16>, vector<128x128xbf16>, vector<256x128xf32> -> vector<256x128xf32>
    %77 = arith.addf %58, %76 : vector<256x128xf32>
    %c24_39 = arith.constant 24 : index
    %c0_40 = arith.constant 0 : index
    %78 = vector.load %arg9[%c24_39, %c0_40] : memref<304x128xf32, #tpu.memory_space<vmem>>, vector<256x128xf32>
    %79 = arith.truncf %78 : vector<256x128xf32> to vector<256x128xbf16>
    %c4 = arith.constant 4 : index
    %c0_41 = arith.constant 0 : index
    %c0_42 = arith.constant 0 : index
    %80 = vector.load %arg4[%c4, %c0_41, %c0_42] : memref<9x128x128xbf16, #tpu.memory_space<vmem>>, vector<1x128x128xbf16>
    %81 = vector.shape_cast %80 : vector<1x128x128xbf16> to vector<128x128xbf16>
    %cst_43 = arith.constant dense<0.000000e+00> : vector<256x128xf32>
    %82 = tpu.matmul %79, %81, %cst_43 {dimension_numbers = #tpu.dot_dimension_numbers<[1], [0], [0], [1], [0, 0, 1, 1], [], []>} : vector<256x128xbf16>, vector<128x128xbf16>, vector<256x128xf32> -> vector<256x128xf32>
    %83 = arith.addf %77, %82 : vector<256x128xf32>
    %c25 = arith.constant 25 : index
    %c0_44 = arith.constant 0 : index
    %84 = vector.load %arg9[%c25, %c0_44] : memref<304x128xf32, #tpu.memory_space<vmem>>, vector<256x128xf32>
    %c1_i32_45 = arith.constant 1 : i32
    %85 = vector.broadcast %c1_i32_45 : i32 to vector<256x1xi32>
    %86 = arith.addi %10, %85 : vector<256x1xi32>
    %c0_i32_46 = arith.constant 0 : i32
    %87 = vector.broadcast %c0_i32_46 : i32 to vector<256x1xi32>
    %88 = arith.cmpi sge, %86, %87 : vector<256x1xi32>
    %c1_i32_47 = arith.constant 1 : i32
    %89 = vector.broadcast %c1_i32_47 : i32 to vector<256x1xi32>
    %90 = arith.addi %10, %89 : vector<256x1xi32>
    %c16_i32_48 = arith.constant 16 : i32
    %91 = vector.broadcast %c16_i32_48 : i32 to vector<256x1xi32>
    %92 = arith.cmpi slt, %90, %91 : vector<256x1xi32>
    %93 = arith.andi %88, %92 : vector<256x1xi1>
    %cst_49 = arith.constant 0.000000e+00 : f32
    %94 = vector.shape_cast %93 : vector<256x1xi1> to vector<256x1xi1>
    %95 = vector.broadcast %94 : vector<256x1xi1> to vector<256x128xi1>
    %96 = vector.broadcast %cst_49 : f32 to vector<256x128xf32>
    %97 = arith.select %95, %84, %96 : vector<256x128xi1>, vector<256x128xf32>
    %98 = arith.truncf %97 : vector<256x128xf32> to vector<256x128xbf16>
    %c5 = arith.constant 5 : index
    %c0_50 = arith.constant 0 : index
    %c0_51 = arith.constant 0 : index
    %99 = vector.load %arg4[%c5, %c0_50, %c0_51] : memref<9x128x128xbf16, #tpu.memory_space<vmem>>, vector<1x128x128xbf16>
    %100 = vector.shape_cast %99 : vector<1x128x128xbf16> to vector<128x128xbf16>
    %cst_52 = arith.constant dense<0.000000e+00> : vector<256x128xf32>
    %101 = tpu.matmul %98, %100, %cst_52 {dimension_numbers = #tpu.dot_dimension_numbers<[1], [0], [0], [1], [0, 0, 1, 1], [], []>} : vector<256x128xbf16>, vector<128x128xbf16>, vector<256x128xf32> -> vector<256x128xf32>
    %102 = arith.addf %83, %101 : vector<256x128xf32>
    %c39 = arith.constant 39 : index
    %c0_53 = arith.constant 0 : index
    %103 = vector.load %arg9[%c39, %c0_53] : memref<304x128xf32, #tpu.memory_space<vmem>>, vector<256x128xf32>
    %c-1_i32_54 = arith.constant -1 : i32
    %104 = vector.broadcast %c-1_i32_54 : i32 to vector<256x1xi32>
    %105 = arith.addi %10, %104 : vector<256x1xi32>
    %c0_i32_55 = arith.constant 0 : i32
    %106 = vector.broadcast %c0_i32_55 : i32 to vector<256x1xi32>
    %107 = arith.cmpi sge, %105, %106 : vector<256x1xi32>
    %c-1_i32_56 = arith.constant -1 : i32
    %108 = vector.broadcast %c-1_i32_56 : i32 to vector<256x1xi32>
    %109 = arith.addi %10, %108 : vector<256x1xi32>
    %c16_i32_57 = arith.constant 16 : i32
    %110 = vector.broadcast %c16_i32_57 : i32 to vector<256x1xi32>
    %111 = arith.cmpi slt, %109, %110 : vector<256x1xi32>
    %112 = arith.andi %107, %111 : vector<256x1xi1>
    %cst_58 = arith.constant 0.000000e+00 : f32
    %113 = vector.shape_cast %112 : vector<256x1xi1> to vector<256x1xi1>
    %114 = vector.broadcast %113 : vector<256x1xi1> to vector<256x128xi1>
    %115 = vector.broadcast %cst_58 : f32 to vector<256x128xf32>
    %116 = arith.select %114, %103, %115 : vector<256x128xi1>, vector<256x128xf32>
    %117 = arith.truncf %116 : vector<256x128xf32> to vector<256x128xbf16>
    %c6 = arith.constant 6 : index
    %c0_59 = arith.constant 0 : index
    %c0_60 = arith.constant 0 : index
    %118 = vector.load %arg4[%c6, %c0_59, %c0_60] : memref<9x128x128xbf16, #tpu.memory_space<vmem>>, vector<1x128x128xbf16>
    %119 = vector.shape_cast %118 : vector<1x128x128xbf16> to vector<128x128xbf16>
    %cst_61 = arith.constant dense<0.000000e+00> : vector<256x128xf32>
    %120 = tpu.matmul %117, %119, %cst_61 {dimension_numbers = #tpu.dot_dimension_numbers<[1], [0], [0], [1], [0, 0, 1, 1], [], []>} : vector<256x128xbf16>, vector<128x128xbf16>, vector<256x128xf32> -> vector<256x128xf32>
    %121 = arith.addf %102, %120 : vector<256x128xf32>
    %c40 = arith.constant 40 : index
    %c0_62 = arith.constant 0 : index
    %122 = vector.load %arg9[%c40, %c0_62] : memref<304x128xf32, #tpu.memory_space<vmem>>, vector<256x128xf32>
    %123 = arith.truncf %122 : vector<256x128xf32> to vector<256x128xbf16>
    %c7_63 = arith.constant 7 : index
    %c0_64 = arith.constant 0 : index
    %c0_65 = arith.constant 0 : index
    %124 = vector.load %arg4[%c7_63, %c0_64, %c0_65] : memref<9x128x128xbf16, #tpu.memory_space<vmem>>, vector<1x128x128xbf16>
    %125 = vector.shape_cast %124 : vector<1x128x128xbf16> to vector<128x128xbf16>
    %cst_66 = arith.constant dense<0.000000e+00> : vector<256x128xf32>
    %126 = tpu.matmul %123, %125, %cst_66 {dimension_numbers = #tpu.dot_dimension_numbers<[1], [0], [0], [1], [0, 0, 1, 1], [], []>} : vector<256x128xbf16>, vector<128x128xbf16>, vector<256x128xf32> -> vector<256x128xf32>
    %127 = arith.addf %121, %126 : vector<256x128xf32>
    %c41 = arith.constant 41 : index
    %c0_67 = arith.constant 0 : index
    %128 = vector.load %arg9[%c41, %c0_67] : memref<304x128xf32, #tpu.memory_space<vmem>>, vector<256x128xf32>
    %c1_i32_68 = arith.constant 1 : i32
    %129 = vector.broadcast %c1_i32_68 : i32 to vector<256x1xi32>
    %130 = arith.addi %10, %129 : vector<256x1xi32>
    %c0_i32_69 = arith.constant 0 : i32
    %131 = vector.broadcast %c0_i32_69 : i32 to vector<256x1xi32>
    %132 = arith.cmpi sge, %130, %131 : vector<256x1xi32>
    %c1_i32_70 = arith.constant 1 : i32
    %133 = vector.broadcast %c1_i32_70 : i32 to vector<256x1xi32>
    %134 = arith.addi %10, %133 : vector<256x1xi32>
    %c16_i32_71 = arith.constant 16 : i32
    %135 = vector.broadcast %c16_i32_71 : i32 to vector<256x1xi32>
    %136 = arith.cmpi slt, %134, %135 : vector<256x1xi32>
    %137 = arith.andi %132, %136 : vector<256x1xi1>
    %cst_72 = arith.constant 0.000000e+00 : f32
    %138 = vector.shape_cast %137 : vector<256x1xi1> to vector<256x1xi1>
    %139 = vector.broadcast %138 : vector<256x1xi1> to vector<256x128xi1>
    %140 = vector.broadcast %cst_72 : f32 to vector<256x128xf32>
    %141 = arith.select %139, %128, %140 : vector<256x128xi1>, vector<256x128xf32>
    %142 = arith.truncf %141 : vector<256x128xf32> to vector<256x128xbf16>
    %c8_73 = arith.constant 8 : index
    %c0_74 = arith.constant 0 : index
    %c0_75 = arith.constant 0 : index
    %143 = vector.load %arg4[%c8_73, %c0_74, %c0_75] : memref<9x128x128xbf16, #tpu.memory_space<vmem>>, vector<1x128x128xbf16>
    %144 = vector.shape_cast %143 : vector<1x128x128xbf16> to vector<128x128xbf16>
    %cst_76 = arith.constant dense<0.000000e+00> : vector<256x128xf32>
    %145 = tpu.matmul %142, %144, %cst_76 {dimension_numbers = #tpu.dot_dimension_numbers<[1], [0], [0], [1], [0, 0, 1, 1], [], []>} : vector<256x128xbf16>, vector<128x128xbf16>, vector<256x128xf32> -> vector<256x128xf32>
    %146 = arith.addf %127, %145 : vector<256x128xf32>
    %c0_77 = arith.constant 0 : index
    %c0_78 = arith.constant 0 : index
    %147 = vector.load %arg5[%c0_77, %c0_78] : memref<1x128xf32, #tpu.memory_space<vmem>>, vector<1x128xf32>
    %148 = vector.broadcast %147 : vector<1x128xf32> to vector<256x128xf32>
    %149 = arith.addf %146, %148 : vector<256x128xf32>
    %cst_79 = arith.constant 0.000000e+00 : f32
    %150 = vector.broadcast %cst_79 : f32 to vector<256x128xf32>
    %151 = arith.maximumf %149, %150 : vector<256x128xf32>
    %c24_80 = arith.constant 24 : index
    %c0_81 = arith.constant 0 : index
    %152 = vector.load %arg9[%c24_80, %c0_81] : memref<304x128xf32, #tpu.memory_space<vmem>>, vector<256x128xf32>
    tpu.vector_store %arg9[%c24_80, %c0_81], %151 {strides = array<i32>} : memref<304x128xf32, #tpu.memory_space<vmem>>, vector<256x128xf32>,
    %cst_82 = arith.constant 0.000000e+00 : f32
    %153 = vector.broadcast %cst_82 : f32 to vector<256x128xf32>
    %c7_83 = arith.constant 7 : index
    %c0_84 = arith.constant 0 : index
    %154 = vector.load %arg9[%c7_83, %c0_84] : memref<304x128xf32, #tpu.memory_space<vmem>>, vector<256x128xf32>
    %c-1_i32_85 = arith.constant -1 : i32
    %155 = vector.broadcast %c-1_i32_85 : i32 to vector<256x1xi32>
    %156 = arith.addi %10, %155 : vector<256x1xi32>
    %c0_i32_86 = arith.constant 0 : i32
    %157 = vector.broadcast %c0_i32_86 : i32 to vector<256x1xi32>
    %158 = arith.cmpi sge, %156, %157 : vector<256x1xi32>
    %c-1_i32_87 = arith.constant -1 : i32
    %159 = vector.broadcast %c-1_i32_87 : i32 to vector<256x1xi32>
    %160 = arith.addi %10, %159 : vector<256x1xi32>
    %c16_i32_88 = arith.constant 16 : i32
    %161 = vector.broadcast %c16_i32_88 : i32 to vector<256x1xi32>
    %162 = arith.cmpi slt, %160, %161 : vector<256x1xi32>
    %163 = arith.andi %158, %162 : vector<256x1xi1>
    %cst_89 = arith.constant 0.000000e+00 : f32
    %164 = vector.shape_cast %163 : vector<256x1xi1> to vector<256x1xi1>
    %165 = vector.broadcast %164 : vector<256x1xi1> to vector<256x128xi1>
    %166 = vector.broadcast %cst_89 : f32 to vector<256x128xf32>
    %167 = arith.select %165, %154, %166 : vector<256x128xi1>, vector<256x128xf32>
    %168 = arith.truncf %167 : vector<256x128xf32> to vector<256x128xbf16>
    %c0_90 = arith.constant 0 : index
    %c0_91 = arith.constant 0 : index
    %c0_92 = arith.constant 0 : index
    %169 = vector.load %arg6[%c0_90, %c0_91, %c0_92] : memref<9x128x128xbf16, #tpu.memory_space<vmem>>, vector<1x128x128xbf16>
    %170 = vector.shape_cast %169 : vector<1x128x128xbf16> to vector<128x128xbf16>
    %cst_93 = arith.constant dense<0.000000e+00> : vector<256x128xf32>
    %171 = tpu.matmul %168, %170, %cst_93 {dimension_numbers = #tpu.dot_dimension_numbers<[1], [0], [0], [1], [0, 0, 1, 1], [], []>} : vector<256x128xbf16>, vector<128x128xbf16>, vector<256x128xf32> -> vector<256x128xf32>
    %172 = arith.addf %153, %171 : vector<256x128xf32>
    %c8_94 = arith.constant 8 : index
    %c0_95 = arith.constant 0 : index
    %173 = vector.load %arg9[%c8_94, %c0_95] : memref<304x128xf32, #tpu.memory_space<vmem>>, vector<256x128xf32>
    %174 = arith.truncf %173 : vector<256x128xf32> to vector<256x128xbf16>
    %c1_96 = arith.constant 1 : index
    %c0_97 = arith.constant 0 : index
    %c0_98 = arith.constant 0 : index
    %175 = vector.load %arg6[%c1_96, %c0_97, %c0_98] : memref<9x128x128xbf16, #tpu.memory_space<vmem>>, vector<1x128x128xbf16>
    %176 = vector.shape_cast %175 : vector<1x128x128xbf16> to vector<128x128xbf16>
    %cst_99 = arith.constant dense<0.000000e+00> : vector<256x128xf32>
    %177 = tpu.matmul %174, %176, %cst_99 {dimension_numbers = #tpu.dot_dimension_numbers<[1], [0], [0], [1], [0, 0, 1, 1], [], []>} : vector<256x128xbf16>, vector<128x128xbf16>, vector<256x128xf32> -> vector<256x128xf32>
    %178 = arith.addf %172, %177 : vector<256x128xf32>
    %c9_100 = arith.constant 9 : index
    %c0_101 = arith.constant 0 : index
    %179 = vector.load %arg9[%c9_100, %c0_101] : memref<304x128xf32, #tpu.memory_space<vmem>>, vector<256x128xf32>
    %c1_i32_102 = arith.constant 1 : i32
    %180 = vector.broadcast %c1_i32_102 : i32 to vector<256x1xi32>
    %181 = arith.addi %10, %180 : vector<256x1xi32>
    %c0_i32_103 = arith.constant 0 : i32
    %182 = vector.broadcast %c0_i32_103 : i32 to vector<256x1xi32>
    %183 = arith.cmpi sge, %181, %182 : vector<256x1xi32>
    %c1_i32_104 = arith.constant 1 : i32
    %184 = vector.broadcast %c1_i32_104 : i32 to vector<256x1xi32>
    %185 = arith.addi %10, %184 : vector<256x1xi32>
    %c16_i32_105 = arith.constant 16 : i32
    %186 = vector.broadcast %c16_i32_105 : i32 to vector<256x1xi32>
    %187 = arith.cmpi slt, %185, %186 : vector<256x1xi32>
    %188 = arith.andi %183, %187 : vector<256x1xi1>
    %cst_106 = arith.constant 0.000000e+00 : f32
    %189 = vector.shape_cast %188 : vector<256x1xi1> to vector<256x1xi1>
    %190 = vector.broadcast %189 : vector<256x1xi1> to vector<256x128xi1>
    %191 = vector.broadcast %cst_106 : f32 to vector<256x128xf32>
    %192 = arith.select %190, %179, %191 : vector<256x128xi1>, vector<256x128xf32>
    %193 = arith.truncf %192 : vector<256x128xf32> to vector<256x128xbf16>
    %c2_107 = arith.constant 2 : index
    %c0_108 = arith.constant 0 : index
    %c0_109 = arith.constant 0 : index
    %194 = vector.load %arg6[%c2_107, %c0_108, %c0_109] : memref<9x128x128xbf16, #tpu.memory_space<vmem>>, vector<1x128x128xbf16>
    %195 = vector.shape_cast %194 : vector<1x128x128xbf16> to vector<128x128xbf16>
    %cst_110 = arith.constant dense<0.000000e+00> : vector<256x128xf32>
    %196 = tpu.matmul %193, %195, %cst_110 {dimension_numbers = #tpu.dot_dimension_numbers<[1], [0], [0], [1], [0, 0, 1, 1], [], []>} : vector<256x128xbf16>, vector<128x128xbf16>, vector<256x128xf32> -> vector<256x128xf32>
    %197 = arith.addf %178, %196 : vector<256x128xf32>
    %c23_111 = arith.constant 23 : index
    %c0_112 = arith.constant 0 : index
    %198 = vector.load %arg9[%c23_111, %c0_112] : memref<304x128xf32, #tpu.memory_space<vmem>>, vector<256x128xf32>
    %c-1_i32_113 = arith.constant -1 : i32
    %199 = vector.broadcast %c-1_i32_113 : i32 to vector<256x1xi32>
    %200 = arith.addi %10, %199 : vector<256x1xi32>
    %c0_i32_114 = arith.constant 0 : i32
    %201 = vector.broadcast %c0_i32_114 : i32 to vector<256x1xi32>
    %202 = arith.cmpi sge, %200, %201 : vector<256x1xi32>
    %c-1_i32_115 = arith.constant -1 : i32
    %203 = vector.broadcast %c-1_i32_115 : i32 to vector<256x1xi32>
    %204 = arith.addi %10, %203 : vector<256x1xi32>
    %c16_i32_116 = arith.constant 16 : i32
    %205 = vector.broadcast %c16_i32_116 : i32 to vector<256x1xi32>
    %206 = arith.cmpi slt, %204, %205 : vector<256x1xi32>
    %207 = arith.andi %202, %206 : vector<256x1xi1>
    %cst_117 = arith.constant 0.000000e+00 : f32
    %208 = vector.shape_cast %207 : vector<256x1xi1> to vector<256x1xi1>
    %209 = vector.broadcast %208 : vector<256x1xi1> to vector<256x128xi1>
    %210 = vector.broadcast %cst_117 : f32 to vector<256x128xf32>
    %211 = arith.select %209, %198, %210 : vector<256x128xi1>, vector<256x128xf32>
    %212 = arith.truncf %211 : vector<256x128xf32> to vector<256x128xbf16>
    %c3_118 = arith.constant 3 : index
    %c0_119 = arith.constant 0 : index
    %c0_120 = arith.constant 0 : index
    %213 = vector.load %arg6[%c3_118, %c0_119, %c0_120] : memref<9x128x128xbf16, #tpu.memory_space<vmem>>, vector<1x128x128xbf16>
    %214 = vector.shape_cast %213 : vector<1x128x128xbf16> to vector<128x128xbf16>
    %cst_121 = arith.constant dense<0.000000e+00> : vector<256x128xf32>
    %215 = tpu.matmul %212, %214, %cst_121 {dimension_numbers = #tpu.dot_dimension_numbers<[1], [0], [0], [1], [0, 0, 1, 1], [], []>} : vector<256x128xbf16>, vector<128x128xbf16>, vector<256x128xf32> -> vector<256x128xf32>
    %216 = arith.addf %197, %215 : vector<256x128xf32>
    %c24_122 = arith.constant 24 : index
    %c0_123 = arith.constant 0 : index
    %217 = vector.load %arg9[%c24_122, %c0_123] : memref<304x128xf32, #tpu.memory_space<vmem>>, vector<256x128xf32>
    %218 = arith.truncf %217 : vector<256x128xf32> to vector<256x128xbf16>
    %c4_124 = arith.constant 4 : index
    %c0_125 = arith.constant 0 : index
    %c0_126 = arith.constant 0 : index
    %219 = vector.load %arg6[%c4_124, %c0_125, %c0_126] : memref<9x128x128xbf16, #tpu.memory_space<vmem>>, vector<1x128x128xbf16>
    %220 = vector.shape_cast %219 : vector<1x128x128xbf16> to vector<128x128xbf16>
    %cst_127 = arith.constant dense<0.000000e+00> : vector<256x128xf32>
    %221 = tpu.matmul %218, %220, %cst_127 {dimension_numbers = #tpu.dot_dimension_numbers<[1], [0], [0], [1], [0, 0, 1, 1], [], []>} : vector<256x128xbf16>, vector<128x128xbf16>, vector<256x128xf32> -> vector<256x128xf32>
    %222 = arith.addf %216, %221 : vector<256x128xf32>
    %c25_128 = arith.constant 25 : index
    %c0_129 = arith.constant 0 : index
    %223 = vector.load %arg9[%c25_128, %c0_129] : memref<304x128xf32, #tpu.memory_space<vmem>>, vector<256x128xf32>
    %c1_i32_130 = arith.constant 1 : i32
    %224 = vector.broadcast %c1_i32_130 : i32 to vector<256x1xi32>
    %225 = arith.addi %10, %224 : vector<256x1xi32>
    %c0_i32_131 = arith.constant 0 : i32
    %226 = vector.broadcast %c0_i32_131 : i32 to vector<256x1xi32>
    %227 = arith.cmpi sge, %225, %226 : vector<256x1xi32>
    %c1_i32_132 = arith.constant 1 : i32
    %228 = vector.broadcast %c1_i32_132 : i32 to vector<256x1xi32>
    %229 = arith.addi %10, %228 : vector<256x1xi32>
    %c16_i32_133 = arith.constant 16 : i32
    %230 = vector.broadcast %c16_i32_133 : i32 to vector<256x1xi32>
    %231 = arith.cmpi slt, %229, %230 : vector<256x1xi32>
    %232 = arith.andi %227, %231 : vector<256x1xi1>
    %cst_134 = arith.constant 0.000000e+00 : f32
    %233 = vector.shape_cast %232 : vector<256x1xi1> to vector<256x1xi1>
    %234 = vector.broadcast %233 : vector<256x1xi1> to vector<256x128xi1>
    %235 = vector.broadcast %cst_134 : f32 to vector<256x128xf32>
    %236 = arith.select %234, %223, %235 : vector<256x128xi1>, vector<256x128xf32>
    %237 = arith.truncf %236 : vector<256x128xf32> to vector<256x128xbf16>
    %c5_135 = arith.constant 5 : index
    %c0_136 = arith.constant 0 : index
    %c0_137 = arith.constant 0 : index
    %238 = vector.load %arg6[%c5_135, %c0_136, %c0_137] : memref<9x128x128xbf16, #tpu.memory_space<vmem>>, vector<1x128x128xbf16>
    %239 = vector.shape_cast %238 : vector<1x128x128xbf16> to vector<128x128xbf16>
    %cst_138 = arith.constant dense<0.000000e+00> : vector<256x128xf32>
    %240 = tpu.matmul %237, %239, %cst_138 {dimension_numbers = #tpu.dot_dimension_numbers<[1], [0], [0], [1], [0, 0, 1, 1], [], []>} : vector<256x128xbf16>, vector<128x128xbf16>, vector<256x128xf32> -> vector<256x128xf32>
    %241 = arith.addf %222, %240 : vector<256x128xf32>
    %c39_139 = arith.constant 39 : index
    %c0_140 = arith.constant 0 : index
    %242 = vector.load %arg9[%c39_139, %c0_140] : memref<304x128xf32, #tpu.memory_space<vmem>>, vector<256x128xf32>
    %c-1_i32_141 = arith.constant -1 : i32
    %243 = vector.broadcast %c-1_i32_141 : i32 to vector<256x1xi32>
    %244 = arith.addi %10, %243 : vector<256x1xi32>
    %c0_i32_142 = arith.constant 0 : i32
    %245 = vector.broadcast %c0_i32_142 : i32 to vector<256x1xi32>
    %246 = arith.cmpi sge, %244, %245 : vector<256x1xi32>
    %c-1_i32_143 = arith.constant -1 : i32
    %247 = vector.broadcast %c-1_i32_143 : i32 to vector<256x1xi32>
    %248 = arith.addi %10, %247 : vector<256x1xi32>
    %c16_i32_144 = arith.constant 16 : i32
    %249 = vector.broadcast %c16_i32_144 : i32 to vector<256x1xi32>
    %250 = arith.cmpi slt, %248, %249 : vector<256x1xi32>
    %251 = arith.andi %246, %250 : vector<256x1xi1>
    %cst_145 = arith.constant 0.000000e+00 : f32
    %252 = vector.shape_cast %251 : vector<256x1xi1> to vector<256x1xi1>
    %253 = vector.broadcast %252 : vector<256x1xi1> to vector<256x128xi1>
    %254 = vector.broadcast %cst_145 : f32 to vector<256x128xf32>
    %255 = arith.select %253, %242, %254 : vector<256x128xi1>, vector<256x128xf32>
    %256 = arith.truncf %255 : vector<256x128xf32> to vector<256x128xbf16>
    %c6_146 = arith.constant 6 : index
    %c0_147 = arith.constant 0 : index
    %c0_148 = arith.constant 0 : index
    %257 = vector.load %arg6[%c6_146, %c0_147, %c0_148] : memref<9x128x128xbf16, #tpu.memory_space<vmem>>, vector<1x128x128xbf16>
    %258 = vector.shape_cast %257 : vector<1x128x128xbf16> to vector<128x128xbf16>
    %cst_149 = arith.constant dense<0.000000e+00> : vector<256x128xf32>
    %259 = tpu.matmul %256, %258, %cst_149 {dimension_numbers = #tpu.dot_dimension_numbers<[1], [0], [0], [1], [0, 0, 1, 1], [], []>} : vector<256x128xbf16>, vector<128x128xbf16>, vector<256x128xf32> -> vector<256x128xf32>
    %260 = arith.addf %241, %259 : vector<256x128xf32>
    %c40_150 = arith.constant 40 : index
    %c0_151 = arith.constant 0 : index
    %261 = vector.load %arg9[%c40_150, %c0_151] : memref<304x128xf32, #tpu.memory_space<vmem>>, vector<256x128xf32>
    %262 = arith.truncf %261 : vector<256x128xf32> to vector<256x128xbf16>
    %c7_152 = arith.constant 7 : index
    %c0_153 = arith.constant 0 : index
    %c0_154 = arith.constant 0 : index
    %263 = vector.load %arg6[%c7_152, %c0_153, %c0_154] : memref<9x128x128xbf16, #tpu.memory_space<vmem>>, vector<1x128x128xbf16>
    %264 = vector.shape_cast %263 : vector<1x128x128xbf16> to vector<128x128xbf16>
    %cst_155 = arith.constant dense<0.000000e+00> : vector<256x128xf32>
    %265 = tpu.matmul %262, %264, %cst_155 {dimension_numbers = #tpu.dot_dimension_numbers<[1], [0], [0], [1], [0, 0, 1, 1], [], []>} : vector<256x128xbf16>, vector<128x128xbf16>, vector<256x128xf32> -> vector<256x128xf32>
    %266 = arith.addf %260, %265 : vector<256x128xf32>
    %c41_156 = arith.constant 41 : index
    %c0_157 = arith.constant 0 : index
    %267 = vector.load %arg9[%c41_156, %c0_157] : memref<304x128xf32, #tpu.memory_space<vmem>>, vector<256x128xf32>
    %c1_i32_158 = arith.constant 1 : i32
    %268 = vector.broadcast %c1_i32_158 : i32 to vector<256x1xi32>
    %269 = arith.addi %10, %268 : vector<256x1xi32>
    %c0_i32_159 = arith.constant 0 : i32
    %270 = vector.broadcast %c0_i32_159 : i32 to vector<256x1xi32>
    %271 = arith.cmpi sge, %269, %270 : vector<256x1xi32>
    %c1_i32_160 = arith.constant 1 : i32
    %272 = vector.broadcast %c1_i32_160 : i32 to vector<256x1xi32>
    %273 = arith.addi %10, %272 : vector<256x1xi32>
    %c16_i32_161 = arith.constant 16 : i32
    %274 = vector.broadcast %c16_i32_161 : i32 to vector<256x1xi32>
    %275 = arith.cmpi slt, %273, %274 : vector<256x1xi32>
    %276 = arith.andi %271, %275 : vector<256x1xi1>
    %cst_162 = arith.constant 0.000000e+00 : f32
    %277 = vector.shape_cast %276 : vector<256x1xi1> to vector<256x1xi1>
    %278 = vector.broadcast %277 : vector<256x1xi1> to vector<256x128xi1>
    %279 = vector.broadcast %cst_162 : f32 to vector<256x128xf32>
    %280 = arith.select %278, %267, %279 : vector<256x128xi1>, vector<256x128xf32>
    %281 = arith.truncf %280 : vector<256x128xf32> to vector<256x128xbf16>
    %c8_163 = arith.constant 8 : index
    %c0_164 = arith.constant 0 : index
    %c0_165 = arith.constant 0 : index
    %282 = vector.load %arg6[%c8_163, %c0_164, %c0_165] : memref<9x128x128xbf16, #tpu.memory_space<vmem>>, vector<1x128x128xbf16>
    %283 = vector.shape_cast %282 : vector<1x128x128xbf16> to vector<128x128xbf16>
    %cst_166 = arith.constant dense<0.000000e+00> : vector<256x128xf32>
    %284 = tpu.matmul %281, %283, %cst_166 {dimension_numbers = #tpu.dot_dimension_numbers<[1], [0], [0], [1], [0, 0, 1, 1], [], []>} : vector<256x128xbf16>, vector<128x128xbf16>, vector<256x128xf32> -> vector<256x128xf32>
    %285 = arith.addf %266, %284 : vector<256x128xf32>
    %c0_167 = arith.constant 0 : index
    %c0_168 = arith.constant 0 : index
    %286 = vector.load %arg7[%c0_167, %c0_168] : memref<1x128xf32, #tpu.memory_space<vmem>>, vector<1x128xf32>
    %287 = vector.broadcast %286 : vector<1x128xf32> to vector<256x128xf32>
    %288 = arith.addf %285, %287 : vector<256x128xf32>
    %cst_169 = arith.constant 0.000000e+00 : f32
    %289 = vector.broadcast %cst_169 : f32 to vector<256x128xf32>
    %290 = arith.maximumf %288, %289 : vector<256x128xf32>
    %291 = arith.addf %290, %7 : vector<256x128xf32>
    %cst_170 = arith.constant 0.000000e+00 : f32
    %292 = vector.broadcast %cst_170 : f32 to vector<256x128xf32>
    %293 = arith.maximumf %291, %292 : vector<256x128xf32>
    %c0_171 = arith.constant 0 : index
    %c0_172 = arith.constant 0 : index
    %c0_173 = arith.constant 0 : index
    %294 = vector.load %arg8[%c0_171, %c0_172, %c0_173] : memref<1x256x128xf32, #tpu.memory_space<vmem>>, vector<1x256x128xf32>
    %295 = vector.shape_cast %294 : vector<1x256x128xf32> to vector<256x128xf32>
    %296 = vector.shape_cast %293 : vector<256x128xf32> to vector<1x256x128xf32>
    tpu.vector_store %arg8[%c0_171, %c0_172, %c0_173], %296 {strides = array<i32>} : memref<1x256x128xf32, #tpu.memory_space<vmem>>, vector<1x256x128xf32>,
    return
  }
  func.func @transform_0(%arg0: i32) -> (i32, i32, i32) {
    %c0_i32 = arith.constant 0 : i32
    %c0_i32_0 = arith.constant 0 : i32
    %c0_i32_1 = arith.constant 0 : i32
    return %arg0, %c0_i32, %c0_i32_0 : i32, i32, i32
  }
  func.func @transform_1(%arg0: i32) -> (i32, i32) {
    %c0_i32 = arith.constant 0 : i32
    %c0_i32_0 = arith.constant 0 : i32
    %c0_i32_1 = arith.constant 0 : i32
    return %c0_i32, %c0_i32_0 : i32, i32
  }
  func.func @transform_2(%arg0: i32) -> (i32, i32) {
    %c0_i32 = arith.constant 0 : i32
    %c0_i32_0 = arith.constant 0 : i32
    %c0_i32_1 = arith.constant 0 : i32
    return %c0_i32, %c0_i32_0 : i32, i32
  }
  func.func @transform_3(%arg0: i32) -> (i32, i32, i32) {
    %c0_i32 = arith.constant 0 : i32
    %c0_i32_0 = arith.constant 0 : i32
    %c0_i32_1 = arith.constant 0 : i32
    %c0_i32_2 = arith.constant 0 : i32
    return %c0_i32, %c0_i32_0, %c0_i32_1 : i32, i32, i32
  }
  func.func @transform_4(%arg0: i32) -> (i32, i32) {
    %c0_i32 = arith.constant 0 : i32
    %c0_i32_0 = arith.constant 0 : i32
    %c0_i32_1 = arith.constant 0 : i32
    return %c0_i32, %c0_i32_0 : i32, i32
  }
  func.func @transform_5(%arg0: i32) -> (i32, i32, i32) {
    %c0_i32 = arith.constant 0 : i32
    %c0_i32_0 = arith.constant 0 : i32
    %c0_i32_1 = arith.constant 0 : i32
    %c0_i32_2 = arith.constant 0 : i32
    return %c0_i32, %c0_i32_0, %c0_i32_1 : i32, i32, i32
  }
  func.func @transform_6(%arg0: i32) -> (i32, i32) {
    %c0_i32 = arith.constant 0 : i32
    %c0_i32_0 = arith.constant 0 : i32
    %c0_i32_1 = arith.constant 0 : i32
    return %c0_i32, %c0_i32_0 : i32, i32
  }
  func.func @transform_7(%arg0: i32) -> (i32, i32, i32) {
    %c0_i32 = arith.constant 0 : i32
    %c0_i32_0 = arith.constant 0 : i32
    %c0_i32_1 = arith.constant 0 : i32
    return %arg0, %c0_i32, %c0_i32_0 : i32, i32, i32
  }
}

module attributes {stable_mosaic.version = 11 : i64} {
  func.func @_maxpool2_kernel(%arg0: i32, %arg1: memref<1x8x2x8x2x8x16xf32, #tpu.memory_space<vmem>>, %arg2: memref<1x8x8x8x8xf32, #tpu.memory_space<vmem>>) attributes {dimension_semantics = [#tpu.dimension_semantics<parallel>], iteration_bounds = array<i64: 2>, scalar_prefetch = 0 : i64, scratch_operands = 0 : i64, tpu.core_type = #tpu.core_type<tc>, window_params = [{transform_indices = @transform_0, window_bounds = array<i64: 1, 8, 2, 8, 2, 8, 16>}, {transform_indices = @transform_1, window_bounds = array<i64: 1, 8, 8, 8, 8>}]} {
    %c0 = arith.constant 0 : index
    %c0_0 = arith.constant 0 : index
    %c0_1 = arith.constant 0 : index
    %c0_2 = arith.constant 0 : index
    %c0_3 = arith.constant 0 : index
    %c0_4 = arith.constant 0 : index
    %c0_5 = arith.constant 0 : index
    %0 = vector.load %arg1[%c0, %c0_0, %c0_1, %c0_2, %c0_3, %c0_4, %c0_5] : memref<1x8x2x8x2x8x16xf32, #tpu.memory_space<vmem>>, vector<1x8x1x8x2x8x16xf32>
    %1 = vector.shape_cast %0 : vector<1x8x1x8x2x8x16xf32> to vector<8x8x2x8x16xf32>
    %c0_6 = arith.constant 0 : index
    %c0_7 = arith.constant 0 : index
    %c1 = arith.constant 1 : index
    %c0_8 = arith.constant 0 : index
    %c0_9 = arith.constant 0 : index
    %c0_10 = arith.constant 0 : index
    %c0_11 = arith.constant 0 : index
    %2 = vector.load %arg1[%c0_6, %c0_7, %c1, %c0_8, %c0_9, %c0_10, %c0_11] : memref<1x8x2x8x2x8x16xf32, #tpu.memory_space<vmem>>, vector<1x8x1x8x2x8x16xf32>
    %3 = vector.shape_cast %2 : vector<1x8x1x8x2x8x16xf32> to vector<8x8x2x8x16xf32>
    %4 = arith.maximumf %1, %3 : vector<8x8x2x8x16xf32>
    %5 = vector.extract_strided_slice %4 {offsets = [0, 0, 0, 0, 0], sizes = [8, 8, 1, 8, 16], strides = [1, 1, 1, 1, 1]} : vector<8x8x2x8x16xf32> to vector<8x8x1x8x16xf32>
    %6 = vector.shape_cast %5 : vector<8x8x1x8x16xf32> to vector<8x8x8x16xf32>
    %7 = vector.extract_strided_slice %4 {offsets = [0, 0, 1, 0, 0], sizes = [8, 8, 1, 8, 16], strides = [1, 1, 1, 1, 1]} : vector<8x8x2x8x16xf32> to vector<8x8x1x8x16xf32>
    %8 = vector.shape_cast %7 : vector<8x8x1x8x16xf32> to vector<8x8x8x16xf32>
    %9 = arith.maximumf %6, %8 : vector<8x8x8x16xf32>
    %10 = vector.extract_strided_slice %9 {offsets = [0, 0, 0, 0], sizes = [8, 8, 8, 8], strides = [1, 1, 1, 1]} : vector<8x8x8x16xf32> to vector<8x8x8x8xf32>
    %11 = vector.extract_strided_slice %9 {offsets = [0, 0, 0, 8], sizes = [8, 8, 8, 8], strides = [1, 1, 1, 1]} : vector<8x8x8x16xf32> to vector<8x8x8x8xf32>
    %12 = arith.maximumf %10, %11 : vector<8x8x8x8xf32>
    %c0_12 = arith.constant 0 : index
    %c0_13 = arith.constant 0 : index
    %c0_14 = arith.constant 0 : index
    %c0_15 = arith.constant 0 : index
    %c0_16 = arith.constant 0 : index
    %13 = vector.load %arg2[%c0_12, %c0_13, %c0_14, %c0_15, %c0_16] : memref<1x8x8x8x8xf32, #tpu.memory_space<vmem>>, vector<1x8x8x8x8xf32>
    %14 = vector.shape_cast %13 : vector<1x8x8x8x8xf32> to vector<8x8x8x8xf32>
    %15 = vector.shape_cast %12 : vector<8x8x8x8xf32> to vector<1x8x8x8x8xf32>
    tpu.vector_store %arg2[%c0_12, %c0_13, %c0_14, %c0_15, %c0_16], %15 {strides = array<i32>} : memref<1x8x8x8x8xf32, #tpu.memory_space<vmem>>, vector<1x8x8x8x8xf32>,
    return
  }
  func.func @transform_0(%arg0: i32) -> (i32, i32, i32, i32, i32, i32, i32) {
    %c0_i32 = arith.constant 0 : i32
    %c0_i32_0 = arith.constant 0 : i32
    %c0_i32_1 = arith.constant 0 : i32
    %c0_i32_2 = arith.constant 0 : i32
    %c0_i32_3 = arith.constant 0 : i32
    %c0_i32_4 = arith.constant 0 : i32
    %c0_i32_5 = arith.constant 0 : i32
    return %arg0, %c0_i32, %c0_i32_0, %c0_i32_1, %c0_i32_2, %c0_i32_3, %c0_i32_4 : i32, i32, i32, i32, i32, i32, i32
  }
  func.func @transform_1(%arg0: i32) -> (i32, i32, i32, i32, i32) {
    %c0_i32 = arith.constant 0 : i32
    %c0_i32_0 = arith.constant 0 : i32
    %c0_i32_1 = arith.constant 0 : i32
    %c0_i32_2 = arith.constant 0 : i32
    %c0_i32_3 = arith.constant 0 : i32
    return %arg0, %c0_i32, %c0_i32_0, %c0_i32_1, %c0_i32_2 : i32, i32, i32, i32, i32
  }
}

</mosaic_0001>

<llo_original>
// kernel: tile.18
$region0: #{tile.18}
  #allocation0 [shape = 's32[1]{0}', space=sflag, size = 0x4, scoped, tag = 'scoped memory for tile.18']
  %s0 = inlined_call_operand.vmem [shape: f32[8], index: 0, kind: input, shape index: {}]
  %s1 = inlined_call_operand.vmem [shape: f32[16,8], index: 1, kind: output, shape index: {}]
  // Predicated region
  $region2: #{tile.18} parent=0 // pred_check
    _
  $region3: #{tile.18} parent=0 // pred_check_branch
    %3 = sbr.rel (0) target = $region5
  $region4: #{tile.18} parent=0 // pred_region
    _
  $region5: #{tile.18} parent=0 // pred_fallthru
    _
  %v4 = vld [vmem:[%s0] ss:$0 sm:$0xff]
  %5 = vst [vmem:[%s1] sm:$0xff] %v4
  %s6 = scalar_lea.vmem %s1, 8
  %7 = vst [vmem:[%s6] sm:$0xff] %v4

// kernel: tile.19
$region0: #{tile.19}
  %s0 = inlined_call_operand.vmem [shape: f32[16,8], index: 0, kind: input, shape index: {}]
  %s1 = inlined_call_operand.vmem [shape: f32[1,128], index: 1, kind: output, shape index: {}]
  $region1: #{tile.19} parent=0
    #allocation0 [shape = 'u8[4096]{0}', space=vmem, size = 0x1000, scoped, tag = 'scoped mem for output reshape']
    %v2 = vld [vmem:[%s0] sm:$0x1]
    %vm3 = vcmask 64512
    %4 = vst.msk [vmem:[#allocation0] sm:$0x1] %vm3, %v2
    %s5 = scalar_lea.vmem %s0, 15
    %v6 = vld [vmem:[%s5] sm:$0x1]
    %7 = vrot.lane.b32.xlu0 %v6, 120
    %v8 = vpop.permute.xlu0 %7
    %vm9 = vcmask 1048512
    %10 = vst.msk [vmem:[#allocation0] sm:$0x1] %vm9, %v8
    %s11 = scalar_lea.vmem %s0, 14
    %v12 = vld [vmem:[%s11] sm:$0x1]
    %13 = vrot.lane.b32.xlu0 %v12, 112
    %v14 = vpop.permute.xlu0 %13
    %vm15 = vcmask 982912
    %16 = vst.msk [vmem:[#allocation0] sm:$0x1] %vm15, %v14
    %s17 = scalar_lea.vmem %s0, 13
    %v18 = vld [vmem:[%s17] sm:$0x1]
    %19 = vrot.lane.b32.xlu0 %v18, 104
    %v20 = vpop.permute.xlu0 %19
    %vm21 = vcmask 917312
    %22 = vst.msk [vmem:[#allocation0] sm:$0x1] %vm21, %v20
    %s23 = scalar_lea.vmem %s0, 12
    %v24 = vld [vmem:[%s23] sm:$0x1]
    %25 = vrot.lane.b32.xlu0 %v24, 96
    %v26 = vpop.permute.xlu0 %25
    %vm27 = vcmask 851712
    %28 = vst.msk [vmem:[#allocation0] sm:$0x1] %vm27, %v26
    %s29 = scalar_lea.vmem %s0, 11
    %v30 = vld [vmem:[%s29] sm:$0x1]
    %31 = vrot.lane.b32.xlu0 %v30, 88
    %v32 = vpop.permute.xlu0 %31
    %vm33 = vcmask 786112
    %34 = vst.msk [vmem:[#allocation0] sm:$0x1] %vm33, %v32
    %s35 = scalar_lea.vmem %s0, 10
    %v36 = vld [vmem:[%s35] sm:$0x1]
    %37 = vrot.lane.b32.xlu0 %v36, 80
    %v38 = vpop.permute.xlu0 %37
    %vm39 = vcmask 720512
    %40 = vst.msk [vmem:[#allocation0] sm:$0x1] %vm39, %v38
    %s41 = scalar_lea.vmem %s0, 9
    %v42 = vld [vmem:[%s41] sm:$0x1]
    %43 = vrot.lane.b32.xlu0 %v42, 72
    %v44 = vpop.permute.xlu0 %43
    %vm45 = vcmask 654912
    %46 = vst.msk [vmem:[#allocation0] sm:$0x1] %vm45, %v44
    %s47 = scalar_lea.vmem %s0, 8
    %v48 = vld [vmem:[%s47] sm:$0x1]
    %49 = vrot.lane.b32.xlu0 %v48, 64
    %v50 = vpop.permute.xlu0 %49
    %vm51 = vcmask 589312
    %52 = vst.msk [vmem:[#allocation0] sm:$0x1] %vm51, %v50
    %s53 = scalar_lea.vmem %s0, 7
    %v54 = vld [vmem:[%s53] sm:$0x1]
    %55 = vrot.lane.b32.xlu0 %v54, 56
    %v56 = vpop.permute.xlu0 %55
    %vm57 = vcmask 523712
    %58 = vst.msk [vmem:[#allocation0] sm:$0x1] %vm57, %v56
    %s59 = scalar_lea.vmem %s0, 6
    %v60 = vld [vmem:[%s59] sm:$0x1]
    %61 = vrot.lane.b32.xlu0 %v60, 48
    %v62 = vpop.permute.xlu0 %61
    %vm63 = vcmask 458112
    %64 = vst.msk [vmem:[#allocation0] sm:$0x1] %vm63, %v62
    %s65 = scalar_lea.vmem %s0, 5
    %v66 = vld [vmem:[%s65] sm:$0x1]
    %67 = vrot.lane.b32.xlu0 %v66, 40
    %v68 = vpop.permute.xlu0 %67
    %vm69 = vcmask 392512
    %70 = vst.msk [vmem:[#allocation0] sm:$0x1] %vm69, %v68
    %s71 = scalar_lea.vmem %s0, 4
    %v72 = vld [vmem:[%s71] sm:$0x1]
    %73 = vrot.lane.b32.xlu0 %v72, 32
    %v74 = vpop.permute.xlu0 %73
    %vm75 = vcmask 326912
    %76 = vst.msk [vmem:[#allocation0] sm:$0x1] %vm75, %v74
    %s77 = scalar_lea.vmem %s0, 3
    %v78 = vld [vmem:[%s77] sm:$0x1]
    %79 = vrot.lane.b32.xlu0 %v78, 24
    %v80 = vpop.permute.xlu0 %79
    %vm81 = vcmask 261312
    %82 = vst.msk [vmem:[#allocation0] sm:$0x1] %vm81, %v80
    %s83 = scalar_lea.vmem %s0, 2
    %v84 = vld [vmem:[%s83] sm:$0x1]
    %85 = vrot.lane.b32.xlu0 %v84, 16
    %v86 = vpop.permute.xlu0 %85
    %vm87 = vcmask 195712
    %88 = vst.msk [vmem:[#allocation0] sm:$0x1] %vm87, %v86
    %s89 = scalar_lea.vmem %s0, 1
    %v90 = vld [vmem:[%s89] sm:$0x1]
    %91 = vrot.lane.b32.xlu0 %v90, 8
    %v92 = vpop.permute.xlu0 %91
    %vm93 = vcmask 130112
    %94 = vst.msk [vmem:[#allocation0] sm:$0x1] %vm93, %v92
    %s96 = sshllo.u32 0, 1
    %v98 = vld [vmem:[#allocation0] sm:%s96]
    %s99 = sshllo.u32 0, 1
    %100 = vst [vmem:[%s1] sm:%s99] %v98

// kernel: resblocki_forward.2
$region0: #{resblocki_forward.2}
  #allocation0 [shape = 'u32[]', space=smem, size = 0x4, offset = 0x4, fixed_abs, tag = 'smem constant byte address 0x4 - core index']
  #allocation1 [shape = 'u32[144,128]{1,0:T(1,128)}', space=vmem, size = 0x12000, scoped, tag = 'internal scratch']
  #allocation2 [shape = 'f32[304,128]{1,0:T(8,128)}', space=vmem, size = 0x26000, scoped, tag = 'scratch operand']
  %s0 = inlined_call_operand.vmem [shape: f32[2,256,128], index: 0, kind: input, shape index: {}]
  %s1 = inlined_call_operand.vmem [shape: bf16[128,128], index: 1, kind: input, shape index: {}]
  %s2 = inlined_call_operand.vmem [shape: f32[1,128], index: 2, kind: input, shape index: {}]
  %s3 = inlined_call_operand.vmem [shape: bf16[9,128,128], index: 3, kind: input, shape index: {}]
  %s4 = inlined_call_operand.vmem [shape: f32[1,128], index: 4, kind: input, shape index: {}]
  %s5 = inlined_call_operand.vmem [shape: bf16[9,128,128], index: 5, kind: input, shape index: {}]
  %s6 = inlined_call_operand.vmem [shape: f32[1,128], index: 6, kind: input, shape index: {}]
  %s7 = inlined_call_operand.vmem [shape: f32[2,256,128], index: 7, kind: output, shape index: {}]
  %s8 = sld [smem:[#allocation0]]
  $region61: #{resblocki_forward.2} parent=0
    _
  %s10 = ssub.s32 1, %s8
  %s11 = scalar_select 0, %s10, %s8
  loop: start=0, step=1, limit=4
  $region2: #{resblocki_forward.2} parent=0 // loop_pre_header
    _
  $region3: #{resblocki_forward.2} parent=0 // loop_header
    %s13 = sphi 0, %s17
    %p14 = scmp.ge.s32.totalorder %s13, 4
    %s23 = sphi 0, %s25
    %s26 = sphi 0, %s23
    %s27 = sphi 0, %s26
    %s43 = sphi 0, %s27
    %s47 = sphi 0, %s47
    %s49 = sphi 0, %s47
    %s50 = sphi 0, %s49
    %s64 = sphi 0, %s50
    %s68 = sphi 0, %s68
    %s70 = sphi 0, %s68
    %s71 = sphi 0, %s70
    %s85 = sphi 0, %s71
    %s89 = sphi 0, %s89
    %s91 = sphi 0, %s89
    %s92 = sphi 0, %s91
    %s106 = sphi 0, %s92
    %s110 = sphi 0, %s110
    %s112 = sphi 0, %s110
    %s113 = sphi 0, %s112
    %s127 = sphi 0, %s113
    %s131 = sphi 0, %s131
    %s133 = sphi 0, %s131
    %s134 = sphi 0, %s133
    %s148 = sphi 0, %s134
    %s152 = sphi 0, %s152
    %s154 = sphi 0, %s152
    %s155 = sphi 0, %s154
    %s169 = sphi 0, %s155
    %s175 = sphi 0, %s177
    %s178 = sphi 0, %s175
    %s179 = sphi 0, %s178
    %s195 = sphi 0, %s179
  $region4: #{resblocki_forward.2} parent=0 // loop_header_branch
    %16 = sbr.rel (%p14) target = $region8
  $region5: #{resblocki_forward.2} parent=0 // loop_body
    %s18 = ssub.s32 %s13, 1
    %s19 = ssub.s32 %s13, 2
    %s20 = sadd.s32 %s13, 1
    %s21 = ssub.s32 %s13, %s20
    %p22 = scmp.eq.s32.totalorder %s21, 0
    %s24 = sadd.s32 %s23, 1
    %s25 = scalar_select %p22, %s23, %s24
    %p28 = pneg %p22
    %p29 = scmp.eq.s32.totalorder %s13, 1
    %p30 = por %p28, %p29
    %p31 = scmp.ne.s32.totalorder %s23, %s26
    %p32 = scmp.eq.s32.totalorder %s13, 0
    %p33 = por %p31, %p32
    %p34 = scmp.ne.s32.totalorder %s23, %s26
    %p35 = scmp.eq.s32.totalorder %s18, 1
    %p36 = por %p34, %p35
    %p37 = scmp.ne.s32.totalorder %s26, %s27
    %p38 = scmp.eq.s32.totalorder %s18, 0
    %p39 = por %p37, %p38
    %p40 = scmp.ne.s32.totalorder %s26, %s27
    %p41 = scmp.eq.s32.totalorder %s19, 1
    %p42 = por %p40, %p41
    %p44 = scmp.ne.s32.totalorder %s27, %s43
    %p45 = scmp.eq.s32.totalorder %s19, 0
    %p46 = por %p44, %p45
    %s48 = sadd.s32 %s47, 1
    %p51 = scmp.eq.s32.totalorder %s13, 1
    %p52 = scmp.ne.s32.totalorder %s47, %s49
    %p53 = scmp.eq.s32.totalorder %s13, 0
    %p54 = por %p52, %p53
    %p55 = scmp.ne.s32.totalorder %s47, %s49
    %p56 = scmp.eq.s32.totalorder %s18, 1
    %p57 = por %p55, %p56
    %p58 = scmp.ne.s32.totalorder %s49, %s50
    %p59 = scmp.eq.s32.totalorder %s18, 0
    %p60 = por %p58, %p59
    %p61 = scmp.ne.s32.totalorder %s49, %s50
    %p62 = scmp.eq.s32.totalorder %s19, 1
    %p63 = por %p61, %p62
    %p65 = scmp.ne.s32.totalorder %s50, %s64
    %p66 = scmp.eq.s32.totalorder %s19, 0
    %p67 = por %p65, %p66
    %s69 = sadd.s32 %s68, 1
    %p72 = scmp.eq.s32.totalorder %s13, 1
    %p73 = scmp.ne.s32.totalorder %s68, %s70
    %p74 = scmp.eq.s32.totalorder %s13, 0
    %p75 = por %p73, %p74
    %p76 = scmp.ne.s32.totalorder %s68, %s70
    %p77 = scmp.eq.s32.totalorder %s18, 1
    %p78 = por %p76, %p77
    %p79 = scmp.ne.s32.totalorder %s70, %s71
    %p80 = scmp.eq.s32.totalorder %s18, 0
    %p81 = por %p79, %p80
    %p82 = scmp.ne.s32.totalorder %s70, %s71
    %p83 = scmp.eq.s32.totalorder %s19, 1
    %p84 = por %p82, %p83
    %p86 = scmp.ne.s32.totalorder %s71, %s85
    %p87 = scmp.eq.s32.totalorder %s19, 0
    %p88 = por %p86, %p87
    %s90 = sadd.s32 %s89, 1
    %p93 = scmp.eq.s32.totalorder %s13, 1
    %p94 = scmp.ne.s32.totalorder %s89, %s91
    %p95 = scmp.eq.s32.totalorder %s13, 0
    %p96 = por %p94, %p95
    %p97 = scmp.ne.s32.totalorder %s89, %s91
    %p98 = scmp.eq.s32.totalorder %s18, 1
    %p99 = por %p97, %p98
    %p100 = scmp.ne.s32.totalorder %s91, %s92
    %p101 = scmp.eq.s32.totalorder %s18, 0
    %p102 = por %p100, %p101
    %p103 = scmp.ne.s32.totalorder %s91, %s92
    %p104 = scmp.eq.s32.totalorder %s19, 1
    %p105 = por %p103, %p104
    %p107 = scmp.ne.s32.totalorder %s92, %s106
    %p108 = scmp.eq.s32.totalorder %s19, 0
    %p109 = por %p107, %p108
    %s111 = sadd.s32 %s110, 1
    %p114 = scmp.eq.s32.totalorder %s13, 1
    %p115 = scmp.ne.s32.totalorder %s110, %s112
    %p116 = scmp.eq.s32.totalorder %s13, 0
    %p117 = por %p115, %p116
    %p118 = scmp.ne.s32.totalorder %s110, %s112
    %p119 = scmp.eq.s32.totalorder %s18, 1
    %p120 = por %p118, %p119
    %p121 = scmp.ne.s32.totalorder %s112, %s113
    %p122 = scmp.eq.s32.totalorder %s18, 0
    %p123 = por %p121, %p122
    %p124 = scmp.ne.s32.totalorder %s112, %s113
    %p125 = scmp.eq.s32.totalorder %s19, 1
    %p126 = por %p124, %p125
    %p128 = scmp.ne.s32.totalorder %s113, %s127
    %p129 = scmp.eq.s32.totalorder %s19, 0
    %p130 = por %p128, %p129
    %s132 = sadd.s32 %s131, 1
    %p135 = scmp.eq.s32.totalorder %s13, 1
    %p136 = scmp.ne.s32.totalorder %s131, %s133
    %p137 = scmp.eq.s32.totalorder %s13, 0
    %p138 = por %p136, %p137
    %p139 = scmp.ne.s32.totalorder %s131, %s133
    %p140 = scmp.eq.s32.totalorder %s18, 1
    %p141 = por %p139, %p140
    %p142 = scmp.ne.s32.totalorder %s133, %s134
    %p143 = scmp.eq.s32.totalorder %s18, 0
    %p144 = por %p142, %p143
    %p145 = scmp.ne.s32.totalorder %s133, %s134
    %p146 = scmp.eq.s32.totalorder %s19, 1
    %p147 = por %p145, %p146
    %p149 = scmp.ne.s32.totalorder %s134, %s148
    %p150 = scmp.eq.s32.totalorder %s19, 0
    %p151 = por %p149, %p150
    %s153 = sadd.s32 %s152, 1
    %p156 = scmp.eq.s32.totalorder %s13, 1
    %p157 = scmp.ne.s32.totalorder %s152, %s154
    %p158 = scmp.eq.s32.totalorder %s13, 0
    %p159 = por %p157, %p158
    %p160 = scmp.ne.s32.totalorder %s152, %s154
    %p161 = scmp.eq.s32.totalorder %s18, 1
    %p162 = por %p160, %p161
    %p163 = scmp.ne.s32.totalorder %s154, %s155
    %p164 = scmp.eq.s32.totalorder %s18, 0
    %p165 = por %p163, %p164
    %p166 = scmp.ne.s32.totalorder %s154, %s155
    %p167 = scmp.eq.s32.totalorder %s19, 1
    %p168 = por %p166, %p167
    %p170 = scmp.ne.s32.totalorder %s155, %s169
    %p171 = scmp.eq.s32.totalorder %s19, 0
    %p172 = por %p170, %p171
    %s173 = ssub.s32 %s13, %s20
    %p174 = scmp.eq.s32.totalorder %s173, 0
    %s176 = sadd.s32 %s175, 1
    %s177 = scalar_select %p174, %s175, %s176
    %p180 = pneg %p174
    %p181 = scmp.eq.s32.totalorder %s13, 1
    %p182 = por %p180, %p181
    %p183 = scmp.ne.s32.totalorder %s175, %s178
    %p184 = scmp.eq.s32.totalorder %s13, 0
    %p185 = por %p183, %p184
    %p186 = scmp.ne.s32.totalorder %s175, %s178
    %p187 = scmp.eq.s32.totalorder %s18, 1
    %p188 = por %p186, %p187
    %p189 = scmp.ne.s32.totalorder %s178, %s179
    %p190 = scmp.eq.s32.totalorder %s18, 0
    %p191 = por %p189, %p190
    %p192 = scmp.ne.s32.totalorder %s178, %s179
    %p193 = scmp.eq.s32.totalorder %s19, 1
    %p194 = por %p192, %p193
    %p196 = scmp.ne.s32.totalorder %s179, %s195
    %p197 = scmp.eq.s32.totalorder %s19, 0
    %p198 = por %p196, %p197
    %p199 = scmp.le.s32.totalorder 1, %s13
    %p200 = scmp.lt.s32.totalorder %s13, 3
    %p201 = pnand %p199, %p200
    %p202 = pneg %p201
    // Predicated region
    $region9: #{resblocki_forward.2} parent=5 // pred_check
      _
    $region10: #{resblocki_forward.2} parent=5 // pred_check_branch
      %204 = sbr.rel (%p201) target = $region12
    $region11: #{resblocki_forward.2} parent=5 // pred_region
      %s205 = ssub.s32 %s13, 1
      // Predicated region
      $region13: #{resblocki_forward.2} parent=11 // pred_check
        %p206 = pneg %p60
      $region14: #{resblocki_forward.2} parent=11 // pred_check_branch
        %208 = sbr.rel (%p206) target = $region16
      $region15: #{resblocki_forward.2} parent=11 // pred_region
        _
      $region16: #{resblocki_forward.2} parent=11 // pred_fallthru
        _
      // Predicated region
      $region17: #{resblocki_forward.2} parent=11 // pred_check
        %p209 = pneg %p81
      $region18: #{resblocki_forward.2} parent=11 // pred_check_branch
        %211 = sbr.rel (%p209) target = $region20
      $region19: #{resblocki_forward.2} parent=11 // pred_region
        _
      $region20: #{resblocki_forward.2} parent=11 // pred_fallthru
        _
      // Predicated region
      $region21: #{resblocki_forward.2} parent=11 // pred_check
        %p212 = pneg %p102
      $region22: #{resblocki_forward.2} parent=11 // pred_check_branch
        %214 = sbr.rel (%p212) target = $region24
      $region23: #{resblocki_forward.2} parent=11 // pred_region
        _
      $region24: #{resblocki_forward.2} parent=11 // pred_fallthru
        _
      // Predicated region
      $region25: #{resblocki_forward.2} parent=11 // pred_check
        %p215 = pneg %p123
      $region26: #{resblocki_forward.2} parent=11 // pred_check_branch
        %217 = sbr.rel (%p215) target = $region28
      $region27: #{resblocki_forward.2} parent=11 // pred_region
        _
      $region28: #{resblocki_forward.2} parent=11 // pred_fallthru
        _
      // Predicated region
      $region29: #{resblocki_forward.2} parent=11 // pred_check
        %p218 = pneg %p144
      $region30: #{resblocki_forward.2} parent=11 // pred_check_branch
        %220 = sbr.rel (%p218) target = $region32
      $region31: #{resblocki_forward.2} parent=11 // pred_region
        _
      $region32: #{resblocki_forward.2} parent=11 // pred_fallthru
        _
      // Predicated region
      $region33: #{resblocki_forward.2} parent=11 // pred_check
        %p221 = pneg %p165
      $region34: #{resblocki_forward.2} parent=11 // pred_check_branch
        %223 = sbr.rel (%p221) target = $region36
      $region35: #{resblocki_forward.2} parent=11 // pred_region
        _
      $region36: #{resblocki_forward.2} parent=11 // pred_fallthru
        _
    $region12: #{resblocki_forward.2} parent=5 // pred_fallthru
      _
    %p224 = scmp.lt.s32.totalorder %s13, 2
    // Predicated region
    $region37: #{resblocki_forward.2} parent=5 // pred_check
      %p225 = pneg %p224
    $region38: #{resblocki_forward.2} parent=5 // pred_check_branch
      %227 = sbr.rel (%p225) target = $region40
    $region39: #{resblocki_forward.2} parent=5 // pred_region
      // Predicated region
      $region41: #{resblocki_forward.2} parent=39 // pred_check
        %p228 = pneg %p33
      $region42: #{resblocki_forward.2} parent=39 // pred_check_branch
        %230 = sbr.rel (%p228) target = $region44
      $region43: #{resblocki_forward.2} parent=39 // pred_region
        %p231 = scmp.lt.s32.totalorder %s13, 1
        %s232 = scalar_select %p231, %s13, 1
        %s233 = smul.addr %s232, 32
        %s234 = smul.addr %s233, 8
        %s235 = scalar_lea.vmem %s0, %s234
      $region44: #{resblocki_forward.2} parent=39 // pred_fallthru
        _
    $region40: #{resblocki_forward.2} parent=5 // pred_fallthru
      _
    %p236 = scmp.le.s32.totalorder 1, %s13
    %p237 = scmp.lt.s32.totalorder %s13, 3
    %p238 = pnand %p236, %p237
    %p239 = pneg %p238
    // Predicated region
    $region45: #{resblocki_forward.2} parent=5 // pred_check
      _
    $region46: #{resblocki_forward.2} parent=5 // pred_check_branch
      %241 = sbr.rel (%p238) target = $region48
    $region47: #{resblocki_forward.2} parent=5 // pred_region
      %s242 = ssub.s32 %s13, 1
      %p243 = scmp.lt.s32.totalorder %s18, 1
      %s244 = scalar_select %p243, %s18, 1
      %s245 = smul.addr %s244, 32
      %s246 = smul.addr %s245, 8
      %s247 = scalar_lea.vmem %s0, %s246
      %p248 = pneg %p39
      %p249 = pneg %p36
      %p250 = pneg %p60
      %p251 = pneg %p57
      %p252 = pneg %p81
      %p253 = pneg %p78
      %p254 = pneg %p102
      %p255 = pneg %p99
      %p256 = pneg %p123
      %p257 = pneg %p120
      %p258 = pneg %p144
      %p259 = pneg %p141
      %p260 = pneg %p165
      %p261 = pneg %p162
      %p262 = pneg %p191
      %p263 = pneg %p188
      %p264 = scmp.lt.s32.totalorder %s18, 1
      %s265 = scalar_select %p264, %s18, 1
      %s266 = smul.addr %s265, 32
      %s267 = smul.addr %s266, 8
      %s268 = scalar_lea.vmem %s7, %s267
      %p269 = scmp.lt.s32.totalorder %s18, 1
      %s270 = scalar_select %p269, %s18, 1
      %s271 = smul.addr %s270, 32
      %s272 = smul.addr %s271, 8
      %s273 = scalar_lea.vmem %s0, %s272
      %p274 = scmp.lt.s32.totalorder %s18, 1
      %s275 = scalar_select %p274, %s18, 1
      %s276 = smul.addr %s275, 32
      %s277 = smul.addr %s276, 8
      %s278 = scalar_lea.vmem %s7, %s277
      %v280 = vld [vmem:[%s273] sm:$0xff]
      %v281 = vld [vmem:[%s273 + $0x8] sm:$0xff]
      %v282 = vld [vmem:[%s273 + $0x10] sm:$0xff]
      %v283 = vld [vmem:[%s273 + $0x18] sm:$0xff]
      %v284 = vld [vmem:[%s273 + $0x20] sm:$0xff]
      %v285 = vld [vmem:[%s273 + $0x28] sm:$0xff]
      %v286 = vld [vmem:[%s273 + $0x30] sm:$0xff]
      %v287 = vld [vmem:[%s273 + $0x38] sm:$0xff]
      %v288 = vld [vmem:[%s273 + $0x40] sm:$0xff]
      %v289 = vld [vmem:[%s273 + $0x48] sm:$0xff]
      %v290 = vld [vmem:[%s273 + $0x50] sm:$0xff]
      %v291 = vld [vmem:[%s273 + $0x58] sm:$0xff]
      %v292 = vld [vmem:[%s273 + $0x60] sm:$0xff]
      %v293 = vld [vmem:[%s273 + $0x68] sm:$0xff]
      %v294 = vld [vmem:[%s273 + $0x70] sm:$0xff]
      %v295 = vld [vmem:[%s273 + $0x78] sm:$0xff]
      %v296 = vld [vmem:[%s273 + $0x80] sm:$0xff]
      %v297 = vld [vmem:[%s273 + $0x88] sm:$0xff]
      %v298 = vld [vmem:[%s273 + $0x90] sm:$0xff]
      %v299 = vld [vmem:[%s273 + $0x98] sm:$0xff]
      %v300 = vld [vmem:[%s273 + $0xa0] sm:$0xff]
      %v301 = vld [vmem:[%s273 + $0xa8] sm:$0xff]
      %v302 = vld [vmem:[%s273 + $0xb0] sm:$0xff]
      %v303 = vld [vmem:[%s273 + $0xb8] sm:$0xff]
      %v304 = vld [vmem:[%s273 + $0xc0] sm:$0xff]
      %v305 = vld [vmem:[%s273 + $0xc8] sm:$0xff]
      %v306 = vld [vmem:[%s273 + $0xd0] sm:$0xff]
      %v307 = vld [vmem:[%s273 + $0xd8] sm:$0xff]
      %v308 = vld [vmem:[%s273 + $0xe0] sm:$0xff]
      %v309 = vld [vmem:[%s273 + $0xe8] sm:$0xff]
      %v310 = vld [vmem:[%s273 + $0xf0] sm:$0xff]
      %v311 = vld [vmem:[%s273 + $0xf8] sm:$0xff]
      %v312 = vpack.c.bf16 %v281, %v280
      %v313 = vpack.c.bf16 %v283, %v282
      %v314 = vpack.c.bf16 %v285, %v284
      %v315 = vpack.c.bf16 %v287, %v286
      %v316 = vpack.c.bf16 %v289, %v288
      %v317 = vpack.c.bf16 %v291, %v290
      %v318 = vpack.c.bf16 %v293, %v292
      %v319 = vpack.c.bf16 %v295, %v294
      %v320 = vpack.c.bf16 %v297, %v296
      %v321 = vpack.c.bf16 %v299, %v298
      %v322 = vpack.c.bf16 %v301, %v300
      %v323 = vpack.c.bf16 %v303, %v302
      %v324 = vpack.c.bf16 %v305, %v304
      %v325 = vpack.c.bf16 %v307, %v306
      %v326 = vpack.c.bf16 %v309, %v308
      %v327 = vpack.c.bf16 %v311, %v310
      %v328 = vld [vmem:[%s1] sm:$0xf]
      %v329 = vld [vmem:[%s1 + $0x4] sm:$0xf]
      %v330 = vld [vmem:[%s1 + $0x8] sm:$0xf]
      %v331 = vld [vmem:[%s1 + $0xc] sm:$0xf]
      %v332 = vld [vmem:[%s1 + $0x10] sm:$0xf]
      %v333 = vld [vmem:[%s1 + $0x14] sm:$0xf]
      %v334 = vld [vmem:[%s1 + $0x18] sm:$0xf]
      %v335 = vld [vmem:[%s1 + $0x1c] sm:$0xf]
      %v336 = vld [vmem:[%s1 + $0x20] sm:$0xf]
      %v337 = vld [vmem:[%s1 + $0x24] sm:$0xf]
      %v338 = vld [vmem:[%s1 + $0x28] sm:$0xf]
      %v339 = vld [vmem:[%s1 + $0x2c] sm:$0xf]
      %v340 = vld [vmem:[%s1 + $0x30] sm:$0xf]
      %v341 = vld [vmem:[%s1 + $0x34] sm:$0xf]
      %v342 = vld [vmem:[%s1 + $0x38] sm:$0xf]
      %v343 = vld [vmem:[%s1 + $0x3c] sm:$0xf]
      %v344 = vld [vmem:[%s2] sm:$0x1]
      %v346 = vlaneseq
      %v347 = vshrl.u32 %v346, 7
      %v348 = vsub.s32 0, %v347
      %v349 = vrot.slane %v344, %v348
      %v367 = vunpack.c.l.b16 %v328
      %v368 = vunpack.c.l.b16 %v329
      %v369 = vunpack.c.l.b16 %v330
      %v370 = vunpack.c.l.b16 %v331
      %v371 = vunpack.c.l.b16 %v332
      %v372 = vunpack.c.l.b16 %v333
      %v373 = vunpack.c.l.b16 %v334
      %v374 = vunpack.c.l.b16 %v335
      %v375 = vunpack.c.l.b16 %v336
      %v376 = vunpack.c.l.b16 %v337
      %v377 = vunpack.c.l.b16 %v338
      %v378 = vunpack.c.l.b16 %v339
      %v379 = vunpack.c.l.b16 %v340
      %v380 = vunpack.c.l.b16 %v341
      %v381 = vunpack.c.l.b16 %v342
      %v382 = vunpack.c.l.b16 %v343
      %v383 = vpack.c.b16 %v368, %v367
      %v384 = vpack.c.b16 %v370, %v369
      %v385 = vpack.c.b16 %v372, %v371
      %v386 = vpack.c.b16 %v374, %v373
      %v387 = vpack.c.b16 %v376, %v375
      %v388 = vpack.c.b16 %v378, %v377
      %v389 = vpack.c.b16 %v380, %v379
      %v390 = vpack.c.b16 %v382, %v381
      %399 = vmatprep.subr.bf16.mxu0 0
      %400 = vmatpush1.bf16.msra.mxu0 %v383
      %401 = vmatprep.subr.bf16.mxu0 0
      %402 = vmatpush1.bf16.msra.mxu0 %v384
      %403 = vmatprep.subr.bf16.mxu0 0
      %404 = vmatpush1.bf16.msra.mxu0 %v385
      %405 = vmatprep.subr.bf16.mxu0 0
      %406 = vmatpush1.bf16.msra.mxu0 %v386
      %407 = vmatprep.subr.bf16.mxu0 0
      %408 = vmatpush1.bf16.msra.mxu0 %v387
      %409 = vmatprep.subr.bf16.mxu0 0
      %410 = vmatpush1.bf16.msra.mxu0 %v388
      %411 = vmatprep.subr.bf16.mxu0 0
      %412 = vmatpush1.bf16.msra.mxu0 %v389
      %413 = vmatprep.subr.bf16.mxu0 0
      %414 = vmatpush1.bf16.msra.mxu0 %v390
      %415 = vmatprep.subr.bf16.mxu0 0
      %416 = vmatpush1.bf16.msra.mxu0 0
      %417 = vmatprep.subr.bf16.mxu0 0
      %418 = vmatpush1.bf16.msra.mxu0 0
      %419 = vmatprep.subr.bf16.mxu0 0
      %420 = vmatpush1.bf16.msra.mxu0 0
      %421 = vmatprep.subr.bf16.mxu0 0
      %422 = vmatpush1.bf16.msra.mxu0 0
      %423 = vmatprep.subr.bf16.mxu0 0
      %424 = vmatpush1.bf16.msra.mxu0 0
      %425 = vmatprep.subr.bf16.mxu0 0
      %426 = vmatpush1.bf16.msra.mxu0 0
      %427 = vmatprep.subr.bf16.mxu0 0
      %428 = vmatpush1.bf16.msra.mxu0 0
      %429 = vmatprep.subr.bf16.mxu0 0
      %430 = vmatpush1.bf16.msra.mxu0 0
      %431 = vmatprep.mubr.bf16.mxu0 0
      %432 = vmatmul.mubr.bf16.gmra.mrb[0].mxu0 %v312
      %v433 = vpop.f32.mrb[0].mxu0
      %v434 = vadd.f32 %v349, %v433
      %v435 = vpop.f32.mrb[0].mxu0
      %v436 = vpop.f32.mrb[0].mxu0
      %v437 = vadd.f32 %v349, %v436
      %v438 = vpop.f32.mrb[0].mxu0
      %439 = vmatprep.mubr.bf16.mxu0 0
      %440 = vmatmul.mubr.bf16.gmra.mrb[0].mxu0 %v313
      %v441 = vpop.f32.mrb[0].mxu0
      %v442 = vadd.f32 %v349, %v441
      %v443 = vpop.f32.mrb[0].mxu0
      %v444 = vpop.f32.mrb[0].mxu0
      %v445 = vadd.f32 %v349, %v444
      %v446 = vpop.f32.mrb[0].mxu0
      %447 = vmatprep.mubr.bf16.mxu0 0
      %448 = vmatmul.mubr.bf16.gmra.mrb[0].mxu0 %v314
      %v449 = vpop.f32.mrb[0].mxu0
      %v450 = vadd.f32 %v349, %v449
      %v451 = vpop.f32.mrb[0].mxu0
      %v452 = vpop.f32.mrb[0].mxu0
      %v453 = vadd.f32 %v349, %v452
      %v454 = vpop.f32.mrb[0].mxu0
      %455 = vmatprep.mubr.bf16.mxu0 0
      %456 = vmatmul.mubr.bf16.gmra.mrb[0].mxu0 %v315
      %v457 = vpop.f32.mrb[0].mxu0
      %v458 = vadd.f32 %v349, %v457
      %v459 = vpop.f32.mrb[0].mxu0
      %v460 = vpop.f32.mrb[0].mxu0
      %v461 = vadd.f32 %v349, %v460
      %v462 = vpop.f32.mrb[0].mxu0
      %463 = vmatprep.mubr.bf16.mxu0 0
      %464 = vmatmul.mubr.bf16.gmra.mrb[0].mxu0 %v316
      %v465 = vpop.f32.mrb[0].mxu0
      %v466 = vadd.f32 %v349, %v465
      %v467 = vpop.f32.mrb[0].mxu0
      %v468 = vpop.f32.mrb[0].mxu0
      %v469 = vadd.f32 %v349, %v468
      %v470 = vpop.f32.mrb[0].mxu0
      %471 = vmatprep.mubr.bf16.mxu0 0
      %472 = vmatmul.mubr.bf16.gmra.mrb[0].mxu0 %v317
      %v473 = vpop.f32.mrb[0].mxu0
      %v474 = vadd.f32 %v349, %v473
      %v475 = vpop.f32.mrb[0].mxu0
      %v476 = vpop.f32.mrb[0].mxu0
      %v477 = vadd.f32 %v349, %v476
      %v478 = vpop.f32.mrb[0].mxu0
      %479 = vmatprep.mubr.bf16.mxu0 0
      %480 = vmatmul.mubr.bf16.gmra.mrb[0].mxu0 %v318
      %v481 = vpop.f32.mrb[0].mxu0
      %v482 = vadd.f32 %v349, %v481
      %v483 = vpop.f32.mrb[0].mxu0
      %v484 = vpop.f32.mrb[0].mxu0
      %v485 = vadd.f32 %v349, %v484
      %v486 = vpop.f32.mrb[0].mxu0
      %487 = vmatprep.mubr.bf16.mxu0 0
      %488 = vmatmul.mubr.bf16.gmra.mrb[0].mxu0 %v319
      %v489 = vpop.f32.mrb[0].mxu0
      %v490 = vadd.f32 %v349, %v489
      %v491 = vpop.f32.mrb[0].mxu0
      %v492 = vpop.f32.mrb[0].mxu0
      %v493 = vadd.f32 %v349, %v492
      %v494 = vpop.f32.mrb[0].mxu0
      %495 = vmatprep.mubr.bf16.mxu0 0
      %496 = vmatmul.mubr.bf16.gmra.mrb[0].mxu0 %v320
      %v497 = vpop.f32.mrb[0].mxu0
      %v498 = vadd.f32 %v349, %v497
      %v499 = vpop.f32.mrb[0].mxu0
      %v500 = vpop.f32.mrb[0].mxu0
      %v501 = vadd.f32 %v349, %v500
      %v502 = vpop.f32.mrb[0].mxu0
      %503 = vmatprep.mubr.bf16.mxu0 0
      %504 = vmatmul.mubr.bf16.gmra.mrb[0].mxu0 %v321
      %v505 = vpop.f32.mrb[0].mxu0
      %v506 = vadd.f32 %v349, %v505
      %v507 = vpop.f32.mrb[0].mxu0
      %v508 = vpop.f32.mrb[0].mxu0
      %v509 = vadd.f32 %v349, %v508
      %v510 = vpop.f32.mrb[0].mxu0
      %511 = vmatprep.mubr.bf16.mxu0 0
      %512 = vmatmul.mubr.bf16.gmra.mrb[0].mxu0 %v322
      %v513 = vpop.f32.mrb[0].mxu0
      %v514 = vadd.f32 %v349, %v513
      %v515 = vpop.f32.mrb[0].mxu0
      %v516 = vpop.f32.mrb[0].mxu0
      %v517 = vadd.f32 %v349, %v516
      %v518 = vpop.f32.mrb[0].mxu0
      %519 = vmatprep.mubr.bf16.mxu0 0
      %520 = vmatmul.mubr.bf16.gmra.mrb[0].mxu0 %v323
      %v521 = vpop.f32.mrb[0].mxu0
      %v522 = vadd.f32 %v349, %v521
      %v523 = vpop.f32.mrb[0].mxu0
      %v524 = vpop.f32.mrb[0].mxu0
      %v525 = vadd.f32 %v349, %v524
      %v526 = vpop.f32.mrb[0].mxu0
      %527 = vmatprep.mubr.bf16.mxu0 0
      %528 = vmatmul.mubr.bf16.gmra.mrb[0].mxu0 %v324
      %v529 = vpop.f32.mrb[0].mxu0
      %v530 = vadd.f32 %v349, %v529
      %v531 = vpop.f32.mrb[0].mxu0
      %v532 = vpop.f32.mrb[0].mxu0
      %v533 = vadd.f32 %v349, %v532
      %v534 = vpop.f32.mrb[0].mxu0
      %535 = vmatprep.mubr.bf16.mxu0 0
      %536 = vmatmul.mubr.bf16.gmra.mrb[0].mxu0 %v325
      %v537 = vpop.f32.mrb[0].mxu0
      %v538 = vadd.f32 %v349, %v537
      %v539 = vpop.f32.mrb[0].mxu0
      %v540 = vpop.f32.mrb[0].mxu0
      %v541 = vadd.f32 %v349, %v540
      %v542 = vpop.f32.mrb[0].mxu0
      %543 = vmatprep.mubr.bf16.mxu0 0
      %544 = vmatmul.mubr.bf16.gmra.mrb[0].mxu0 %v326
      %v545 = vpop.f32.mrb[0].mxu0
      %v546 = vadd.f32 %v349, %v545
      %v547 = vpop.f32.mrb[0].mxu0
      %v548 = vpop.f32.mrb[0].mxu0
      %v549 = vadd.f32 %v349, %v548
      %v550 = vpop.f32.mrb[0].mxu0
      %551 = vmatprep.mubr.bf16.mxu0 0
      %552 = vmatmul.mubr.bf16.gmra.mrb[0].mxu0 %v327
      %v553 = vpop.f32.mrb[0].mxu0
      %v554 = vadd.f32 %v349, %v553
      %v555 = vpop.f32.mrb[0].mxu0
      %v556 = vpop.f32.mrb[0].mxu0
      %v557 = vadd.f32 %v349, %v556
      %v558 = vpop.f32.mrb[0].mxu0
      %559 = vdwg.mxu0
      %v560 = vlaneseq
      %v561 = vshrl.u32 %v560, 7
      %v562 = vadd.s32 %v561, 8
      %v563 = vadd.s32 %v561, 16
      %v564 = vadd.s32 %v561, 24
      %v565 = vadd.s32 %v561, 32
      %v566 = vadd.s32 %v561, 40
      %v567 = vadd.s32 %v561, 48
      %v568 = vadd.s32 %v561, 56
      %v569 = vadd.s32 %v561, 64
      %v570 = vadd.s32 %v561, 72
      %v571 = vadd.s32 %v561, 80
      %v572 = vadd.s32 %v561, 88
      %v573 = vadd.s32 %v561, 96
      %v574 = vadd.s32 %v561, 104
      %v575 = vadd.s32 %v561, 112
      %v576 = vadd.s32 %v561, 120
      %v577 = vadd.s32 %v561, 128
      %v578 = vadd.s32 %v561, 136
      %v579 = vadd.s32 %v561, 144
      %v580 = vadd.s32 %v561, 152
      %v581 = vadd.s32 %v561, 160
      %v582 = vadd.s32 %v561, 168
      %v583 = vadd.s32 %v561, 176
      %v584 = vadd.s32 %v561, 184
      %v585 = vadd.s32 %v561, 192
      %v586 = vadd.s32 %v561, 200
      %v587 = vadd.s32 %v561, 208
      %v588 = vadd.s32 %v561, 216
      %v589 = vadd.s32 %v561, 224
      %v590 = vadd.s32 %v561, 232
      %v591 = vadd.s32 %v561, 240
      %v592 = vadd.s32 %v561, 248
      %v593 = vand.u32 %v561, 15
      %v594 = vand.u32 %v562, 15
      %v595 = vand.u32 %v563, 15
      %v596 = vand.u32 %v564, 15
      %v597 = vand.u32 %v565, 15
      %v598 = vand.u32 %v566, 15
      %v599 = vand.u32 %v567, 15
      %v600 = vand.u32 %v568, 15
      %v601 = vand.u32 %v569, 15
      %v602 = vand.u32 %v570, 15
      %v603 = vand.u32 %v571, 15
      %v604 = vand.u32 %v572, 15
      %v605 = vand.u32 %v573, 15
      %v606 = vand.u32 %v574, 15
      %v607 = vand.u32 %v575, 15
      %v608 = vand.u32 %v576, 15
      %v609 = vand.u32 %v577, 15
      %v610 = vand.u32 %v578, 15
      %v611 = vand.u32 %v579, 15
      %v612 = vand.u32 %v580, 15
      %v613 = vand.u32 %v581, 15
      %v614 = vand.u32 %v582, 15
      %v615 = vand.u32 %v583, 15
      %v616 = vand.u32 %v584, 15
      %v617 = vand.u32 %v585, 15
      %v618 = vand.u32 %v586, 15
      %v619 = vand.u32 %v587, 15
      %v620 = vand.u32 %v588, 15
      %v621 = vand.u32 %v589, 15
      %v622 = vand.u32 %v590, 15
      %v623 = vand.u32 %v591, 15
      %v624 = vand.u32 %v592, 15
      %625 = vst [vmem:[#allocation2] sm:$0xff] 0.0
      %626 = vst [vmem:[#allocation2 + $0x8] sm:$0xff] 0.0
      %627 = vst [vmem:[#allocation2 + $0x10] sm:$0xff] 0.0
      %628 = vst [vmem:[#allocation2 + $0x18] sm:$0xff] 0.0
      %629 = vst [vmem:[#allocation2 + $0x20] sm:$0xff] 0.0
      %630 = vst [vmem:[#allocation2 + $0x28] sm:$0xff] 0.0
      %631 = vst [vmem:[#allocation2 + $0x30] sm:$0xff] 0.0
      %632 = vst [vmem:[#allocation2 + $0x38] sm:$0xff] 0.0
      %633 = vst [vmem:[#allocation2 + $0x40] sm:$0xff] 0.0
      %634 = vst [vmem:[#allocation2 + $0x48] sm:$0xff] 0.0
      %635 = vst [vmem:[#allocation2 + $0x50] sm:$0xff] 0.0
      %636 = vst [vmem:[#allocation2 + $0x58] sm:$0xff] 0.0
      %637 = vst [vmem:[#allocation2 + $0x60] sm:$0xff] 0.0
      %638 = vst [vmem:[#allocation2 + $0x68] sm:$0xff] 0.0
      %639 = vst [vmem:[#allocation2 + $0x70] sm:$0xff] 0.0
      %640 = vst [vmem:[#allocation2 + $0x78] sm:$0xff] 0.0
      %641 = vst [vmem:[#allocation2 + $0x80] sm:$0xff] 0.0
      %642 = vst [vmem:[#allocation2 + $0x88] sm:$0xff] 0.0
      %643 = vst [vmem:[#allocation2 + $0x90] sm:$0xff] 0.0
      %644 = vst [vmem:[#allocation2 + $0x98] sm:$0xff] 0.0
      %645 = vst [vmem:[#allocation2 + $0xa0] sm:$0xff] 0.0
      %646 = vst [vmem:[#allocation2 + $0xa8] sm:$0xff] 0.0
      %647 = vst [vmem:[#allocation2 + $0xb0] sm:$0xff] 0.0
      %648 = vst [vmem:[#allocation2 + $0xb8] sm:$0xff] 0.0
      %649 = vst [vmem:[#allocation2 + $0xc0] sm:$0xff] 0.0
      %650 = vst [vmem:[#allocation2 + $0xc8] sm:$0xff] 0.0
      %651 = vst [vmem:[#allocation2 + $0xd0] sm:$0xff] 0.0
      %652 = vst [vmem:[#allocation2 + $0xd8] sm:$0xff] 0.0
      %653 = vst [vmem:[#allocation2 + $0xe0] sm:$0xff] 0.0
      %654 = vst [vmem:[#allocation2 + $0xe8] sm:$0xff] 0.0
      %655 = vst [vmem:[#allocation2 + $0xf0] sm:$0xff] 0.0
      %656 = vst [vmem:[#allocation2 + $0xf8] sm:$0xff] 0.0
      %657 = vst [vmem:[#allocation2 + $0x100] sm:$0xff] 0.0
      %658 = vst [vmem:[#allocation2 + $0x108] sm:$0xff] 0.0
      %659 = vst [vmem:[#allocation2 + $0x110] sm:$0xff] 0.0
      %660 = vst [vmem:[#allocation2 + $0x118] sm:$0xff] 0.0
      %661 = vst [vmem:[#allocation2 + $0x120] sm:$0xff] 0.0
      %662 = vst [vmem:[#allocation2 + $0x128] sm:$0xff] 0.0
      %663 = vst [vmem:[#allocation2 + $0x18] sm:$0xff] %v280
      %664 = vst [vmem:[#allocation2 + $0x20] sm:$0xff] %v281
      %665 = vst [vmem:[#allocation2 + $0x28] sm:$0xff] %v282
      %666 = vst [vmem:[#allocation2 + $0x30] sm:$0xff] %v283
      %667 = vst [vmem:[#allocation2 + $0x38] sm:$0xff] %v284
      %668 = vst [vmem:[#allocation2 + $0x40] sm:$0xff] %v285
      %669 = vst [vmem:[#allocation2 + $0x48] sm:$0xff] %v286
      %670 = vst [vmem:[#allocation2 + $0x50] sm:$0xff] %v287
      %671 = vst [vmem:[#allocation2 + $0x58] sm:$0xff] %v288
      %672 = vst [vmem:[#allocation2 + $0x60] sm:$0xff] %v289
      %673 = vst [vmem:[#allocation2 + $0x68] sm:$0xff] %v290
      %674 = vst [vmem:[#allocation2 + $0x70] sm:$0xff] %v291
      %675 = vst [vmem:[#allocation2 + $0x78] sm:$0xff] %v292
      %676 = vst [vmem:[#allocation2 + $0x80] sm:$0xff] %v293
      %677 = vst [vmem:[#allocation2 + $0x88] sm:$0xff] %v294
      %678 = vst [vmem:[#allocation2 + $0x90] sm:$0xff] %v295
      %679 = vst [vmem:[#allocation2 + $0x98] sm:$0xff] %v296
      %680 = vst [vmem:[#allocation2 + $0xa0] sm:$0xff] %v297
      %681 = vst [vmem:[#allocation2 + $0xa8] sm:$0xff] %v298
      %682 = vst [vmem:[#allocation2 + $0xb0] sm:$0xff] %v299
      %683 = vst [vmem:[#allocation2 + $0xb8] sm:$0xff] %v300
      %684 = vst [vmem:[#allocation2 + $0xc0] sm:$0xff] %v301
      %685 = vst [vmem:[#allocation2 + $0xc8] sm:$0xff] %v302
      %686 = vst [vmem:[#allocation2 + $0xd0] sm:$0xff] %v303
      %687 = vst [vmem:[#allocation2 + $0xd8] sm:$0xff] %v304
      %688 = vst [vmem:[#allocation2 + $0xe0] sm:$0xff] %v305
      %689 = vst [vmem:[#allocation2 + $0xe8] sm:$0xff] %v306
      %690 = vst [vmem:[#allocation2 + $0xf0] sm:$0xff] %v307
      %691 = vst [vmem:[#allocation2 + $0xf8] sm:$0xff] %v308
      %692 = vst [vmem:[#allocation2 + $0x100] sm:$0xff] %v309
      %693 = vst [vmem:[#allocation2 + $0x108] sm:$0xff] %v310
      %694 = vst [vmem:[#allocation2 + $0x110] sm:$0xff] %v311
      %v695 = vld [vmem:[#allocation2 + $0x7] sm:$0xff]
      %v696 = vld [vmem:[#allocation2 + $0xf] sm:$0xff]
      %v697 = vld [vmem:[#allocation2 + $0x17] sm:$0xff]
      %v698 = vld [vmem:[#allocation2 + $0x1f] sm:$0xff]
      %v699 = vld [vmem:[#allocation2 + $0x27] sm:$0xff]
      %v700 = vld [vmem:[#allocation2 + $0x2f] sm:$0xff]
      %v701 = vld [vmem:[#allocation2 + $0x37] sm:$0xff]
      %v702 = vld [vmem:[#allocation2 + $0x3f] sm:$0xff]
      %v703 = vld [vmem:[#allocation2 + $0x47] sm:$0xff]
      %v704 = vld [vmem:[#allocation2 + $0x4f] sm:$0xff]
      %v705 = vld [vmem:[#allocation2 + $0x57] sm:$0xff]
      %v706 = vld [vmem:[#allocation2 + $0x5f] sm:$0xff]
      %v707 = vld [vmem:[#allocation2 + $0x67] sm:$0xff]
      %v708 = vld [vmem:[#allocation2 + $0x6f] sm:$0xff]
      %v709 = vld [vmem:[#allocation2 + $0x77] sm:$0xff]
      %v710 = vld [vmem:[#allocation2 + $0x7f] sm:$0xff]
      %v711 = vld [vmem:[#allocation2 + $0x87] sm:$0xff]
      %v712 = vld [vmem:[#allocation2 + $0x8f] sm:$0xff]
      %v713 = vld [vmem:[#allocation2 + $0x97] sm:$0xff]
      %v714 = vld [vmem:[#allocation2 + $0x9f] sm:$0xff]
      %v715 = vld [vmem:[#allocation2 + $0xa7] sm:$0xff]
      %v716 = vld [vmem:[#allocation2 + $0xaf] sm:$0xff]
      %v717 = vld [vmem:[#allocation2 + $0xb7] sm:$0xff]
      %v718 = vld [vmem:[#allocation2 + $0xbf] sm:$0xff]
      %v719 = vld [vmem:[#allocation2 + $0xc7] sm:$0xff]
      %v720 = vld [vmem:[#allocation2 + $0xcf] sm:$0xff]
      %v721 = vld [vmem:[#allocation2 + $0xd7] sm:$0xff]
      %v722 = vld [vmem:[#allocation2 + $0xdf] sm:$0xff]
      %v723 = vld [vmem:[#allocation2 + $0xe7] sm:$0xff]
      %v724 = vld [vmem:[#allocation2 + $0xef] sm:$0xff]
      %v725 = vld [vmem:[#allocation2 + $0xf7] sm:$0xff]
      %v726 = vld [vmem:[#allocation2 + $0xff] sm:$0xff]
      %v727 = vadd.s32 %v593, 4294967295
      %v728 = vadd.s32 %v594, 4294967295
      %v729 = vadd.s32 %v595, 4294967295
      %v730 = vadd.s32 %v596, 4294967295
      %v731 = vadd.s32 %v597, 4294967295
      %v732 = vadd.s32 %v598, 4294967295
      %v733 = vadd.s32 %v599, 4294967295
      %v734 = vadd.s32 %v600, 4294967295
      %v735 = vadd.s32 %v601, 4294967295
      %v736 = vadd.s32 %v602, 4294967295
      %v737 = vadd.s32 %v603, 4294967295
      %v738 = vadd.s32 %v604, 4294967295
      %v739 = vadd.s32 %v605, 4294967295
      %v740 = vadd.s32 %v606, 4294967295
      %v741 = vadd.s32 %v607, 4294967295
      %v742 = vadd.s32 %v608, 4294967295
      %v743 = vadd.s32 %v609, 4294967295
      %v744 = vadd.s32 %v610, 4294967295
      %v745 = vadd.s32 %v611, 4294967295
      %v746 = vadd.s32 %v612, 4294967295
      %v747 = vadd.s32 %v613, 4294967295
      %v748 = vadd.s32 %v614, 4294967295
      %v749 = vadd.s32 %v615, 4294967295
      %v750 = vadd.s32 %v616, 4294967295
      %v751 = vadd.s32 %v617, 4294967295
      %v752 = vadd.s32 %v618, 4294967295
      %v753 = vadd.s32 %v619, 4294967295
      %v754 = vadd.s32 %v620, 4294967295
      %v755 = vadd.s32 %v621, 4294967295
      %v756 = vadd.s32 %v622, 4294967295
      %v757 = vadd.s32 %v623, 4294967295
      %v758 = vadd.s32 %v624, 4294967295
      %vm759 = vcmp.ge.s32.totalorder %v727, 0
      %vm760 = vcmp.ge.s32.totalorder %v728, 0
      %vm761 = vcmp.ge.s32.totalorder %v729, 0
      %vm762 = vcmp.ge.s32.totalorder %v730, 0
      %vm763 = vcmp.ge.s32.totalorder %v731, 0
      %vm764 = vcmp.ge.s32.totalorder %v732, 0
      %vm765 = vcmp.ge.s32.totalorder %v733, 0
      %vm766 = vcmp.ge.s32.totalorder %v734, 0
      %vm767 = vcmp.ge.s32.totalorder %v735, 0
      %vm768 = vcmp.ge.s32.totalorder %v736, 0
      %vm769 = vcmp.ge.s32.totalorder %v737, 0
      %vm770 = vcmp.ge.s32.totalorder %v738, 0
      %vm771 = vcmp.ge.s32.totalorder %v739, 0
      %vm772 = vcmp.ge.s32.totalorder %v740, 0
      %vm773 = vcmp.ge.s32.totalorder %v741, 0
      %vm774 = vcmp.ge.s32.totalorder %v742, 0
      %vm775 = vcmp.ge.s32.totalorder %v743, 0
      %vm776 = vcmp.ge.s32.totalorder %v744, 0
      %vm777 = vcmp.ge.s32.totalorder %v745, 0
      %vm778 = vcmp.ge.s32.totalorder %v746, 0
      %vm779 = vcmp.ge.s32.totalorder %v747, 0
      %vm780 = vcmp.ge.s32.totalorder %v748, 0
      %vm781 = vcmp.ge.s32.totalorder %v749, 0
      %vm782 = vcmp.ge.s32.totalorder %v750, 0
      %vm783 = vcmp.ge.s32.totalorder %v751, 0
      %vm784 = vcmp.ge.s32.totalorder %v752, 0
      %vm785 = vcmp.ge.s32.totalorder %v753, 0
      %vm786 = vcmp.ge.s32.totalorder %v754, 0
      %vm787 = vcmp.ge.s32.totalorder %v755, 0
      %vm788 = vcmp.ge.s32.totalorder %v756, 0
      %vm789 = vcmp.ge.s32.totalorder %v757, 0
      %vm790 = vcmp.ge.s32.totalorder %v758, 0
      %vm791 = vcmp.lt.s32.totalorder %v727, 16
      %vm792 = vcmp.lt.s32.totalorder %v728, 16
      %vm793 = vcmp.lt.s32.totalorder %v729, 16
      %vm794 = vcmp.lt.s32.totalorder %v730, 16
      %vm795 = vcmp.lt.s32.totalorder %v731, 16
      %vm796 = vcmp.lt.s32.totalorder %v732, 16
      %vm797 = vcmp.lt.s32.totalorder %v733, 16
      %vm798 = vcmp.lt.s32.totalorder %v734, 16
      %vm799 = vcmp.lt.s32.totalorder %v735, 16
      %vm800 = vcmp.lt.s32.totalorder %v736, 16
      %vm801 = vcmp.lt.s32.totalorder %v737, 16
      %vm802 = vcmp.lt.s32.totalorder %v738, 16
      %vm803 = vcmp.lt.s32.totalorder %v739, 16
      %vm804 = vcmp.lt.s32.totalorder %v740, 16
      %vm805 = vcmp.lt.s32.totalorder %v741, 16
      %vm806 = vcmp.lt.s32.totalorder %v742, 16
      %vm807 = vcmp.lt.s32.totalorder %v743, 16
      %vm808 = vcmp.lt.s32.totalorder %v744, 16
      %vm809 = vcmp.lt.s32.totalorder %v745, 16
      %vm810 = vcmp.lt.s32.totalorder %v746, 16
      %vm811 = vcmp.lt.s32.totalorder %v747, 16
      %vm812 = vcmp.lt.s32.totalorder %v748, 16
      %vm813 = vcmp.lt.s32.totalorder %v749, 16
      %vm814 = vcmp.lt.s32.totalorder %v750, 16
      %vm815 = vcmp.lt.s32.totalorder %v751, 16
      %vm816 = vcmp.lt.s32.totalorder %v752, 16
      %vm817 = vcmp.lt.s32.totalorder %v753, 16
      %vm818 = vcmp.lt.s32.totalorder %v754, 16
      %vm819 = vcmp.lt.s32.totalorder %v755, 16
      %vm820 = vcmp.lt.s32.totalorder %v756, 16
      %vm821 = vcmp.lt.s32.totalorder %v757, 16
      %vm822 = vcmp.lt.s32.totalorder %v758, 16
      %vm823 = vmand %vm759, %vm791
      %vm824 = vmand %vm760, %vm792
      %vm825 = vmand %vm761, %vm793
      %vm826 = vmand %vm762, %vm794
      %vm827 = vmand %vm763, %vm795
      %vm828 = vmand %vm764, %vm796
      %vm829 = vmand %vm765, %vm797
      %vm830 = vmand %vm766, %vm798
      %vm831 = vmand %vm767, %vm799
      %vm832 = vmand %vm768, %vm800
      %vm833 = vmand %vm769, %vm801
      %vm834 = vmand %vm770, %vm802
      %vm835 = vmand %vm771, %vm803
      %vm836 = vmand %vm772, %vm804
      %vm837 = vmand %vm773, %vm805
      %vm838 = vmand %vm774, %vm806
      %vm839 = vmand %vm775, %vm807
      %vm840 = vmand %vm776, %vm808
      %vm841 = vmand %vm777, %vm809
      %vm842 = vmand %vm778, %vm810
      %vm843 = vmand %vm779, %vm811
      %vm844 = vmand %vm780, %vm812
      %vm845 = vmand %vm781, %vm813
      %vm846 = vmand %vm782, %vm814
      %vm847 = vmand %vm783, %vm815
      %vm848 = vmand %vm784, %vm816
      %vm849 = vmand %vm785, %vm817
      %vm850 = vmand %vm786, %vm818
      %vm851 = vmand %vm787, %vm819
      %vm852 = vmand %vm788, %vm820
      %vm853 = vmand %vm789, %vm821
      %vm854 = vmand %vm790, %vm822
      %v855 = vsel %vm823, 1, 0
      %v856 = vsel %vm824, 1, 0
      %v857 = vsel %vm825, 1, 0
      %v858 = vsel %vm826, 1, 0
      %v859 = vsel %vm827, 1, 0
      %v860 = vsel %vm828, 1, 0
      %v861 = vsel %vm829, 1, 0
      %v862 = vsel %vm830, 1, 0
      %v863 = vsel %vm831, 1, 0
      %v864 = vsel %vm832, 1, 0
      %v865 = vsel %vm833, 1, 0
      %v866 = vsel %vm834, 1, 0
      %v867 = vsel %vm835, 1, 0
      %v868 = vsel %vm836, 1, 0
      %v869 = vsel %vm837, 1, 0
      %v870 = vsel %vm838, 1, 0
      %v871 = vsel %vm839, 1, 0
      %v872 = vsel %vm840, 1, 0
      %v873 = vsel %vm841, 1, 0
      %v874 = vsel %vm842, 1, 0
      %v875 = vsel %vm843, 1, 0
      %v876 = vsel %vm844, 1, 0
      %v877 = vsel %vm845, 1, 0
      %v878 = vsel %vm846, 1, 0
      %v879 = vsel %vm847, 1, 0
      %v880 = vsel %vm848, 1, 0
      %v881 = vsel %vm849, 1, 0
      %v882 = vsel %vm850, 1, 0
      %v883 = vsel %vm851, 1, 0
      %v884 = vsel %vm852, 1, 0
      %v885 = vsel %vm853, 1, 0
      %v886 = vsel %vm854, 1, 0
      %vm887 = vcmp.eq.s32.totalorder %v855, 1
      %vm888 = vcmp.eq.s32.totalorder %v856, 1
      %vm889 = vcmp.eq.s32.totalorder %v857, 1
      %vm890 = vcmp.eq.s32.totalorder %v858, 1
      %vm891 = vcmp.eq.s32.totalorder %v859, 1
      %vm892 = vcmp.eq.s32.totalorder %v860, 1
      %vm893 = vcmp.eq.s32.totalorder %v861, 1
      %vm894 = vcmp.eq.s32.totalorder %v862, 1
      %vm895 = vcmp.eq.s32.totalorder %v863, 1
      %vm896 = vcmp.eq.s32.totalorder %v864, 1
      %vm897 = vcmp.eq.s32.totalorder %v865, 1
      %vm898 = vcmp.eq.s32.totalorder %v866, 1
      %vm899 = vcmp.eq.s32.totalorder %v867, 1
      %vm900 = vcmp.eq.s32.totalorder %v868, 1
      %vm901 = vcmp.eq.s32.totalorder %v869, 1
      %vm902 = vcmp.eq.s32.totalorder %v870, 1
      %vm903 = vcmp.eq.s32.totalorder %v871, 1
      %vm904 = vcmp.eq.s32.totalorder %v872, 1
      %vm905 = vcmp.eq.s32.totalorder %v873, 1
      %vm906 = vcmp.eq.s32.totalorder %v874, 1
      %vm907 = vcmp.eq.s32.totalorder %v875, 1
      %vm908 = vcmp.eq.s32.totalorder %v876, 1
      %vm909 = vcmp.eq.s32.totalorder %v877, 1
      %vm910 = vcmp.eq.s32.totalorder %v878, 1
      %vm911 = vcmp.eq.s32.totalorder %v879, 1
      %vm912 = vcmp.eq.s32.totalorder %v880, 1
      %vm913 = vcmp.eq.s32.totalorder %v881, 1
      %vm914 = vcmp.eq.s32.totalorder %v882, 1
      %vm915 = vcmp.eq.s32.totalorder %v883, 1
      %vm916 = vcmp.eq.s32.totalorder %v884, 1
      %vm917 = vcmp.eq.s32.totalorder %v885, 1
      %vm918 = vcmp.eq.s32.totalorder %v886, 1
      %v919 = vsel %vm887, %v695, 0.0
      %v920 = vsel %vm888, %v696, 0.0
      %v921 = vsel %vm889, %v697, 0.0
      %v922 = vsel %vm890, %v698, 0.0
      %v923 = vsel %vm891, %v699, 0.0
      %v924 = vsel %vm892, %v700, 0.0
      %v925 = vsel %vm893, %v701, 0.0
      %v926 = vsel %vm894, %v702, 0.0
      %v927 = vsel %vm895, %v703, 0.0
      %v928 = vsel %vm896, %v704, 0.0
      %v929 = vsel %vm897, %v705, 0.0
      %v930 = vsel %vm898, %v706, 0.0
      %v931 = vsel %vm899, %v707, 0.0
      %v932 = vsel %vm900, %v708, 0.0
      %v933 = vsel %vm901, %v709, 0.0
      %v934 = vsel %vm902, %v710, 0.0
      %v935 = vsel %vm903, %v711, 0.0
      %v936 = vsel %vm904, %v712, 0.0
      %v937 = vsel %vm905, %v713, 0.0
      %v938 = vsel %vm906, %v714, 0.0
      %v939 = vsel %vm907, %v715, 0.0
      %v940 = vsel %vm908, %v716, 0.0
      %v941 = vsel %vm909, %v717, 0.0
      %v942 = vsel %vm910, %v718, 0.0
      %v943 = vsel %vm911, %v719, 0.0
      %v944 = vsel %vm912, %v720, 0.0
      %v945 = vsel %vm913, %v721, 0.0
      %v946 = vsel %vm914, %v722, 0.0
      %v947 = vsel %vm915, %v723, 0.0
      %v948 = vsel %vm916, %v724, 0.0
      %v949 = vsel %vm917, %v725, 0.0
      %v950 = vsel %vm918, %v726, 0.0
      %v951 = vpack.c.bf16 %v920, %v919
      %v952 = vpack.c.bf16 %v922, %v921
      %v953 = vpack.c.bf16 %v924, %v923
      %v954 = vpack.c.bf16 %v926, %v925
      %v955 = vpack.c.bf16 %v928, %v927
      %v956 = vpack.c.bf16 %v930, %v929
      %v957 = vpack.c.bf16 %v932, %v931
      %v958 = vpack.c.bf16 %v934, %v933
      %v959 = vpack.c.bf16 %v936, %v935
      %v960 = vpack.c.bf16 %v938, %v937
      %v961 = vpack.c.bf16 %v940, %v939
      %v962 = vpack.c.bf16 %v942, %v941
      %v963 = vpack.c.bf16 %v944, %v943
      %v964 = vpack.c.bf16 %v946, %v945
      %v965 = vpack.c.bf16 %v948, %v947
      %v966 = vpack.c.bf16 %v950, %v949
      %v967 = vld [vmem:[%s3] sm:$0xf]
      %v968 = vld [vmem:[%s3 + $0x4] sm:$0xf]
      %v969 = vld [vmem:[%s3 + $0x8] sm:$0xf]
      %v970 = vld [vmem:[%s3 + $0xc] sm:$0xf]
      %v971 = vld [vmem:[%s3 + $0x10] sm:$0xf]
      %v972 = vld [vmem:[%s3 + $0x14] sm:$0xf]
      %v973 = vld [vmem:[%s3 + $0x18] sm:$0xf]
      %v974 = vld [vmem:[%s3 + $0x1c] sm:$0xf]
      %v975 = vld [vmem:[%s3 + $0x20] sm:$0xf]
      %v976 = vld [vmem:[%s3 + $0x24] sm:$0xf]
      %v977 = vld [vmem:[%s3 + $0x28] sm:$0xf]
      %v978 = vld [vmem:[%s3 + $0x2c] sm:$0xf]
      %v979 = vld [vmem:[%s3 + $0x30] sm:$0xf]
      %v980 = vld [vmem:[%s3 + $0x34] sm:$0xf]
      %v981 = vld [vmem:[%s3 + $0x38] sm:$0xf]
      %v982 = vld [vmem:[%s3 + $0x3c] sm:$0xf]
      %v983 = vld [vmem:[#allocation2 + $0x8] sm:$0xff]
      %v984 = vld [vmem:[#allocation2 + $0x10] sm:$0xff]
      %v985 = vld [vmem:[#allocation2 + $0x18] sm:$0xff]
      %v986 = vld [vmem:[#allocation2 + $0x20] sm:$0xff]
      %v987 = vld [vmem:[#allocation2 + $0x28] sm:$0xff]
      %v988 = vld [vmem:[#allocation2 + $0x30] sm:$0xff]
      %v989 = vld [vmem:[#allocation2 + $0x38] sm:$0xff]
      %v990 = vld [vmem:[#allocation2 + $0x40] sm:$0xff]
      %v991 = vld [vmem:[#allocation2 + $0x48] sm:$0xff]
      %v992 = vld [vmem:[#allocation2 + $0x50] sm:$0xff]
      %v993 = vld [vmem:[#allocation2 + $0x58] sm:$0xff]
      %v994 = vld [vmem:[#allocation2 + $0x60] sm:$0xff]
      %v995 = vld [vmem:[#allocation2 + $0x68] sm:$0xff]
      %v996 = vld [vmem:[#allocation2 + $0x70] sm:$0xff]
      %v997 = vld [vmem:[#allocation2 + $0x78] sm:$0xff]
      %v998 = vld [vmem:[#allocation2 + $0x80] sm:$0xff]
      %v999 = vld [vmem:[#allocation2 + $0x88] sm:$0xff]
      %v1000 = vld [vmem:[#allocation2 + $0x90] sm:$0xff]
      %v1001 = vld [vmem:[#allocation2 + $0x98] sm:$0xff]
      %v1002 = vld [vmem:[#allocation2 + $0xa0] sm:$0xff]
      %v1003 = vld [vmem:[#allocation2 + $0xa8] sm:$0xff]
      %v1004 = vld [vmem:[#allocation2 + $0xb0] sm:$0xff]
      %v1005 = vld [vmem:[#allocation2 + $0xb8] sm:$0xff]
      %v1006 = vld [vmem:[#allocation2 + $0xc0] sm:$0xff]
      %v1007 = vld [vmem:[#allocation2 + $0xc8] sm:$0xff]
      %v1008 = vld [vmem:[#allocation2 + $0xd0] sm:$0xff]
      %v1009 = vld [vmem:[#allocation2 + $0xd8] sm:$0xff]
      %v1010 = vld [vmem:[#allocation2 + $0xe0] sm:$0xff]
      %v1011 = vld [vmem:[#allocation2 + $0xe8] sm:$0xff]
      %v1012 = vld [vmem:[#allocation2 + $0xf0] sm:$0xff]
      %v1013 = vld [vmem:[#allocation2 + $0xf8] sm:$0xff]
      %v1014 = vld [vmem:[#allocation2 + $0x100] sm:$0xff]
      %v1015 = vpack.c.bf16 %v984, %v983
      %v1016 = vpack.c.bf16 %v986, %v985
      %v1017 = vpack.c.bf16 %v988, %v987
      %v1018 = vpack.c.bf16 %v990, %v989
      %v1019 = vpack.c.bf16 %v992, %v991
      %v1020 = vpack.c.bf16 %v994, %v993
      %v1021 = vpack.c.bf16 %v996, %v995
      %v1022 = vpack.c.bf16 %v998, %v997
      %v1023 = vpack.c.bf16 %v1000, %v999
      %v1024 = vpack.c.bf16 %v1002, %v1001
      %v1025 = vpack.c.bf16 %v1004, %v1003
      %v1026 = vpack.c.bf16 %v1006, %v1005
      %v1027 = vpack.c.bf16 %v1008, %v1007
      %v1028 = vpack.c.bf16 %v1010, %v1009
      %v1029 = vpack.c.bf16 %v1012, %v1011
      %v1030 = vpack.c.bf16 %v1014, %v1013
      %s1031 = scalar_lea.vmem %s3, 64
      %v1032 = vld [vmem:[%s1031] sm:$0xf]
      %v1033 = vld [vmem:[%s1031 + $0x4] sm:$0xf]
      %v1034 = vld [vmem:[%s1031 + $0x8] sm:$0xf]
      %v1035 = vld [vmem:[%s1031 + $0xc] sm:$0xf]
      %v1036 = vld [vmem:[%s1031 + $0x10] sm:$0xf]
      %v1037 = vld [vmem:[%s1031 + $0x14] sm:$0xf]
      %v1038 = vld [vmem:[%s1031 + $0x18] sm:$0xf]
      %v1039 = vld [vmem:[%s1031 + $0x1c] sm:$0xf]
      %v1040 = vld [vmem:[%s1031 + $0x20] sm:$0xf]
      %v1041 = vld [vmem:[%s1031 + $0x24] sm:$0xf]
      %v1042 = vld [vmem:[%s1031 + $0x28] sm:$0xf]
      %v1043 = vld [vmem:[%s1031 + $0x2c] sm:$0xf]
      %v1044 = vld [vmem:[%s1031 + $0x30] sm:$0xf]
      %v1045 = vld [vmem:[%s1031 + $0x34] sm:$0xf]
      %v1046 = vld [vmem:[%s1031 + $0x38] sm:$0xf]
      %v1047 = vld [vmem:[%s1031 + $0x3c] sm:$0xf]
      %v1064 = vunpack.c.l.b16 %v1032
      %v1065 = vunpack.c.l.b16 %v1033
      %v1066 = vunpack.c.l.b16 %v1034
      %v1067 = vunpack.c.l.b16 %v1035
      %v1068 = vunpack.c.l.b16 %v1036
      %v1069 = vunpack.c.l.b16 %v1037
      %v1070 = vunpack.c.l.b16 %v1038
      %v1071 = vunpack.c.l.b16 %v1039
      %v1072 = vunpack.c.l.b16 %v1040
      %v1073 = vunpack.c.l.b16 %v1041
      %v1074 = vunpack.c.l.b16 %v1042
      %v1075 = vunpack.c.l.b16 %v1043
      %v1076 = vunpack.c.l.b16 %v1044
      %v1077 = vunpack.c.l.b16 %v1045
      %v1078 = vunpack.c.l.b16 %v1046
      %v1079 = vunpack.c.l.b16 %v1047
      %v1080 = vpack.c.b16 %v1065, %v1064
      %v1081 = vpack.c.b16 %v1067, %v1066
      %v1082 = vpack.c.b16 %v1069, %v1068
      %v1083 = vpack.c.b16 %v1071, %v1070
      %v1084 = vpack.c.b16 %v1073, %v1072
      %v1085 = vpack.c.b16 %v1075, %v1074
      %v1086 = vpack.c.b16 %v1077, %v1076
      %v1087 = vpack.c.b16 %v1079, %v1078
      %1096 = vmatprep.subr.bf16.mxu0 0
      %1097 = vmatpush1.bf16.msra.mxu0 %v1080
      %1098 = vmatprep.subr.bf16.mxu0 0
      %1099 = vmatpush1.bf16.msra.mxu0 %v1081
      %1100 = vmatprep.subr.bf16.mxu0 0
      %1101 = vmatpush1.bf16.msra.mxu0 %v1082
      %1102 = vmatprep.subr.bf16.mxu0 0
      %1103 = vmatpush1.bf16.msra.mxu0 %v1083
      %1104 = vmatprep.subr.bf16.mxu0 0
      %1105 = vmatpush1.bf16.msra.mxu0 %v1084
      %1106 = vmatprep.subr.bf16.mxu0 0
      %1107 = vmatpush1.bf16.msra.mxu0 %v1085
      %1108 = vmatprep.subr.bf16.mxu0 0
      %1109 = vmatpush1.bf16.msra.mxu0 %v1086
      %1110 = vmatprep.subr.bf16.mxu0 0
      %1111 = vmatpush1.bf16.msra.mxu0 %v1087
      %1112 = vmatprep.subr.bf16.mxu0 0
      %1113 = vmatpush1.bf16.msra.mxu0 0
      %1114 = vmatprep.subr.bf16.mxu0 0
      %1115 = vmatpush1.bf16.msra.mxu0 0
      %1116 = vmatprep.subr.bf16.mxu0 0
      %1117 = vmatpush1.bf16.msra.mxu0 0
      %1118 = vmatprep.subr.bf16.mxu0 0
      %1119 = vmatpush1.bf16.msra.mxu0 0
      %1120 = vmatprep.subr.bf16.mxu0 0
      %1121 = vmatpush1.bf16.msra.mxu0 0
      %1122 = vmatprep.subr.bf16.mxu0 0
      %1123 = vmatpush1.bf16.msra.mxu0 0
      %1124 = vmatprep.subr.bf16.mxu0 0
      %1125 = vmatpush1.bf16.msra.mxu0 0
      %1126 = vmatprep.subr.bf16.mxu0 0
      %1127 = vmatpush1.bf16.msra.mxu0 0
      %1128 = vmatprep.mubr.bf16.mxu0 0
      %1129 = vmatmul.mubr.bf16.gmra.mrb[0].mxu0 %v1015
      %v1130 = vpop.f32.mrb[0].mxu0
      %v1131 = vadd.f32 0.0, %v1130
      %v1132 = vpop.f32.mrb[0].mxu0
      %v1133 = vpop.f32.mrb[0].mxu0
      %v1134 = vadd.f32 0.0, %v1133
      %v1135 = vpop.f32.mrb[0].mxu0
      %1136 = vmatprep.mubr.bf16.mxu0 0
      %1137 = vmatmul.mubr.bf16.gmra.mrb[0].mxu0 %v1016
      %v1138 = vpop.f32.mrb[0].mxu0
      %v1139 = vadd.f32 0.0, %v1138
      %v1140 = vpop.f32.mrb[0].mxu0
      %v1141 = vpop.f32.mrb[0].mxu0
      %v1142 = vadd.f32 0.0, %v1141
      %v1143 = vpop.f32.mrb[0].mxu0
      %1144 = vmatprep.mubr.bf16.mxu0 0
      %1145 = vmatmul.mubr.bf16.gmra.mrb[0].mxu0 %v1017
      %v1146 = vpop.f32.mrb[0].mxu0
      %v1147 = vadd.f32 0.0, %v1146
      %v1148 = vpop.f32.mrb[0].mxu0
      %v1149 = vpop.f32.mrb[0].mxu0
      %v1150 = vadd.f32 0.0, %v1149
      %v1151 = vpop.f32.mrb[0].mxu0
      %1152 = vmatprep.mubr.bf16.mxu0 0
      %1153 = vmatmul.mubr.bf16.gmra.mrb[0].mxu0 %v1018
      %v1154 = vpop.f32.mrb[0].mxu0
      %v1155 = vadd.f32 0.0, %v1154
      %v1156 = vpop.f32.mrb[0].mxu0
      %v1157 = vpop.f32.mrb[0].mxu0
      %v1158 = vadd.f32 0.0, %v1157
      %v1159 = vpop.f32.mrb[0].mxu0
      %1160 = vmatprep.mubr.bf16.mxu0 0
      %1161 = vmatmul.mubr.bf16.gmra.mrb[0].mxu0 %v1019
      %v1162 = vpop.f32.mrb[0].mxu0
      %v1163 = vadd.f32 0.0, %v1162
      %v1164 = vpop.f32.mrb[0].mxu0
      %v1165 = vpop.f32.mrb[0].mxu0
      %v1166 = vadd.f32 0.0, %v1165
      %v1167 = vpop.f32.mrb[0].mxu0
      %1168 = vmatprep.mubr.bf16.mxu0 0
      %1169 = vmatmul.mubr.bf16.gmra.mrb[0].mxu0 %v1020
      %v1170 = vpop.f32.mrb[0].mxu0
      %v1171 = vadd.f32 0.0, %v1170
      %v1172 = vpop.f32.mrb[0].mxu0
      %v1173 = vpop.f32.mrb[0].mxu0
      %v1174 = vadd.f32 0.0, %v1173
      %v1175 = vpop.f32.mrb[0].mxu0
      %1176 = vmatprep.mubr.bf16.mxu0 0
      %1177 = vmatmul.mubr.bf16.gmra.mrb[0].mxu0 %v1021
      %v1178 = vpop.f32.mrb[0].mxu0
      %v1179 = vadd.f32 0.0, %v1178
      %v1180 = vpop.f32.mrb[0].mxu0
      %v1181 = vpop.f32.mrb[0].mxu0
      %v1182 = vadd.f32 0.0, %v1181
      %v1183 = vpop.f32.mrb[0].mxu0
      %1184 = vmatprep.mubr.bf16.mxu0 0
      %1185 = vmatmul.mubr.bf16.gmra.mrb[0].mxu0 %v1022
      %v1186 = vpop.f32.mrb[0].mxu0
      %v1187 = vadd.f32 0.0, %v1186
      %v1188 = vpop.f32.mrb[0].mxu0
      %v1189 = vpop.f32.mrb[0].mxu0
      %v1190 = vadd.f32 0.0, %v1189
      %v1191 = vpop.f32.mrb[0].mxu0
      %1192 = vmatprep.mubr.bf16.mxu0 0
      %1193 = vmatmul.mubr.bf16.gmra.mrb[0].mxu0 %v1023
      %v1194 = vpop.f32.mrb[0].mxu0
      %v1195 = vadd.f32 0.0, %v1194
      %v1196 = vpop.f32.mrb[0].mxu0
      %v1197 = vpop.f32.mrb[0].mxu0
      %v1198 = vadd.f32 0.0, %v1197
      %v1199 = vpop.f32.mrb[0].mxu0
      %1200 = vmatprep.mubr.bf16.mxu0 0
      %1201 = vmatmul.mubr.bf16.gmra.mrb[0].mxu0 %v1024
      %v1202 = vpop.f32.mrb[0].mxu0
      %v1203 = vadd.f32 0.0, %v1202
      %v1204 = vpop.f32.mrb[0].mxu0
      %v1205 = vpop.f32.mrb[0].mxu0
      %v1206 = vadd.f32 0.0, %v1205
      %v1207 = vpop.f32.mrb[0].mxu0
      %1208 = vmatprep.mubr.bf16.mxu0 0
      %1209 = vmatmul.mubr.bf16.gmra.mrb[0].mxu0 %v1025
      %v1210 = vpop.f32.mrb[0].mxu0
      %v1211 = vadd.f32 0.0, %v1210
      %v1212 = vpop.f32.mrb[0].mxu0
      %v1213 = vpop.f32.mrb[0].mxu0
      %v1214 = vadd.f32 0.0, %v1213
      %v1215 = vpop.f32.mrb[0].mxu0
      %1216 = vmatprep.mubr.bf16.mxu0 0
      %1217 = vmatmul.mubr.bf16.gmra.mrb[0].mxu0 %v1026
      %v1218 = vpop.f32.mrb[0].mxu0
      %v1219 = vadd.f32 0.0, %v1218
      %v1220 = vpop.f32.mrb[0].mxu0
      %v1221 = vpop.f32.mrb[0].mxu0
      %v1222 = vadd.f32 0.0, %v1221
      %v1223 = vpop.f32.mrb[0].mxu0
      %1224 = vmatprep.mubr.bf16.mxu0 0
      %1225 = vmatmul.mubr.bf16.gmra.mrb[0].mxu0 %v1027
      %v1226 = vpop.f32.mrb[0].mxu0
      %v1227 = vadd.f32 0.0, %v1226
      %v1228 = vpop.f32.mrb[0].mxu0
      %v1229 = vpop.f32.mrb[0].mxu0
      %v1230 = vadd.f32 0.0, %v1229
      %v1231 = vpop.f32.mrb[0].mxu0
      %1232 = vmatprep.mubr.bf16.mxu0 0
      %1233 = vmatmul.mubr.bf16.gmra.mrb[0].mxu0 %v1028
      %v1234 = vpop.f32.mrb[0].mxu0
      %v1235 = vadd.f32 0.0, %v1234
      %v1236 = vpop.f32.mrb[0].mxu0
      %v1237 = vpop.f32.mrb[0].mxu0
      %v1238 = vadd.f32 0.0, %v1237
      %v1239 = vpop.f32.mrb[0].mxu0
      %1240 = vmatprep.mubr.bf16.mxu0 0
      %1241 = vmatmul.mubr.bf16.gmra.mrb[0].mxu0 %v1029
      %v1242 = vpop.f32.mrb[0].mxu0
      %v1243 = vadd.f32 0.0, %v1242
      %v1244 = vpop.f32.mrb[0].mxu0
      %v1245 = vpop.f32.mrb[0].mxu0
      %v1246 = vadd.f32 0.0, %v1245
      %v1247 = vpop.f32.mrb[0].mxu0
      %1248 = vmatprep.mubr.bf16.mxu0 0
      %1249 = vmatmul.mubr.bf16.gmra.mrb[0].mxu0 %v1030
      %v1250 = vpop.f32.mrb[0].mxu0
      %v1251 = vadd.f32 0.0, %v1250
      %v1252 = vpop.f32.mrb[0].mxu0
      %v1253 = vpop.f32.mrb[0].mxu0
      %v1254 = vadd.f32 0.0, %v1253
      %v1255 = vpop.f32.mrb[0].mxu0
      %1256 = vdwg.mxu0
      %v1273 = vunpack.c.l.b16 %v967
      %v1274 = vunpack.c.l.b16 %v968
      %v1275 = vunpack.c.l.b16 %v969
      %v1276 = vunpack.c.l.b16 %v970
      %v1277 = vunpack.c.l.b16 %v971
      %v1278 = vunpack.c.l.b16 %v972
      %v1279 = vunpack.c.l.b16 %v973
      %v1280 = vunpack.c.l.b16 %v974
      %v1281 = vunpack.c.l.b16 %v975
      %v1282 = vunpack.c.l.b16 %v976
      %v1283 = vunpack.c.l.b16 %v977
      %v1284 = vunpack.c.l.b16 %v978
      %v1285 = vunpack.c.l.b16 %v979
      %v1286 = vunpack.c.l.b16 %v980
      %v1287 = vunpack.c.l.b16 %v981
      %v1288 = vunpack.c.l.b16 %v982
      %v1289 = vpack.c.b16 %v1274, %v1273
      %v1290 = vpack.c.b16 %v1276, %v1275
      %v1291 = vpack.c.b16 %v1278, %v1277
      %v1292 = vpack.c.b16 %v1280, %v1279
      %v1293 = vpack.c.b16 %v1282, %v1281
      %v1294 = vpack.c.b16 %v1284, %v1283
      %v1295 = vpack.c.b16 %v1286, %v1285
      %v1296 = vpack.c.b16 %v1288, %v1287
      %1305 = vmatprep.subr.bf16.mxu0 0
      %1306 = vmatpush1.bf16.msra.mxu0 %v1289
      %1307 = vmatprep.subr.bf16.mxu0 0
      %1308 = vmatpush1.bf16.msra.mxu0 %v1290
      %1309 = vmatprep.subr.bf16.mxu0 0
      %1310 = vmatpush1.bf16.msra.mxu0 %v1291
      %1311 = vmatprep.subr.bf16.mxu0 0
      %1312 = vmatpush1.bf16.msra.mxu0 %v1292
      %1313 = vmatprep.subr.bf16.mxu0 0
      %1314 = vmatpush1.bf16.msra.mxu0 %v1293
      %1315 = vmatprep.subr.bf16.mxu0 0
      %1316 = vmatpush1.bf16.msra.mxu0 %v1294
      %1317 = vmatprep.subr.bf16.mxu0 0
      %1318 = vmatpush1.bf16.msra.mxu0 %v1295
      %1319 = vmatprep.subr.bf16.mxu0 0
      %1320 = vmatpush1.bf16.msra.mxu0 %v1296
      %1321 = vmatprep.subr.bf16.mxu0 0
      %1322 = vmatpush1.bf16.msra.mxu0 0
      %1323 = vmatprep.subr.bf16.mxu0 0
      %1324 = vmatpush1.bf16.msra.mxu0 0
      %1325 = vmatprep.subr.bf16.mxu0 0
      %1326 = vmatpush1.bf16.msra.mxu0 0
      %1327 = vmatprep.subr.bf16.mxu0 0
      %1328 = vmatpush1.bf16.msra.mxu0 0
      %1329 = vmatprep.subr.bf16.mxu0 0
      %1330 = vmatpush1.bf16.msra.mxu0 0
      %1331 = vmatprep.subr.bf16.mxu0 0
      %1332 = vmatpush1.bf16.msra.mxu0 0
      %1333 = vmatprep.subr.bf16.mxu0 0
      %1334 = vmatpush1.bf16.msra.mxu0 0
      %1335 = vmatprep.subr.bf16.mxu0 0
      %1336 = vmatpush1.bf16.msra.mxu0 0
      %1337 = vmatprep.mubr.bf16.mxu0 0
      %1338 = vmatmul.mubr.bf16.gmra.mrb[0].mxu0 %v951
      %v1339 = vpop.f32.mrb[0].mxu0
      %v1340 = vadd.f32 %v1131, %v1339
      %v1341 = vpop.f32.mrb[0].mxu0
      %v1342 = vpop.f32.mrb[0].mxu0
      %v1343 = vadd.f32 %v1134, %v1342
      %v1344 = vpop.f32.mrb[0].mxu0
      %1345 = vmatprep.mubr.bf16.mxu0 0
      %1346 = vmatmul.mubr.bf16.gmra.mrb[0].mxu0 %v952
      %v1347 = vpop.f32.mrb[0].mxu0
      %v1348 = vadd.f32 %v1139, %v1347
      %v1349 = vpop.f32.mrb[0].mxu0
      %v1350 = vpop.f32.mrb[0].mxu0
      %v1351 = vadd.f32 %v1142, %v1350
      %v1352 = vpop.f32.mrb[0].mxu0
      %1353 = vmatprep.mubr.bf16.mxu0 0
      %1354 = vmatmul.mubr.bf16.gmra.mrb[0].mxu0 %v953
      %v1355 = vpop.f32.mrb[0].mxu0
      %v1356 = vadd.f32 %v1147, %v1355
      %v1357 = vpop.f32.mrb[0].mxu0
      %v1358 = vpop.f32.mrb[0].mxu0
      %v1359 = vadd.f32 %v1150, %v1358
      %v1360 = vpop.f32.mrb[0].mxu0
      %1361 = vmatprep.mubr.bf16.mxu0 0
      %1362 = vmatmul.mubr.bf16.gmra.mrb[0].mxu0 %v954
      %v1363 = vpop.f32.mrb[0].mxu0
      %v1364 = vadd.f32 %v1155, %v1363
      %v1365 = vpop.f32.mrb[0].mxu0
      %v1366 = vpop.f32.mrb[0].mxu0
      %v1367 = vadd.f32 %v1158, %v1366
      %v1368 = vpop.f32.mrb[0].mxu0
      %1369 = vmatprep.mubr.bf16.mxu0 0
      %1370 = vmatmul.mubr.bf16.gmra.mrb[0].mxu0 %v955
      %v1371 = vpop.f32.mrb[0].mxu0
      %v1372 = vadd.f32 %v1163, %v1371
      %v1373 = vpop.f32.mrb[0].mxu0
      %v1374 = vpop.f32.mrb[0].mxu0
      %v1375 = vadd.f32 %v1166, %v1374
      %v1376 = vpop.f32.mrb[0].mxu0
      %1377 = vmatprep.mubr.bf16.mxu0 0
      %1378 = vmatmul.mubr.bf16.gmra.mrb[0].mxu0 %v956
      %v1379 = vpop.f32.mrb[0].mxu0
      %v1380 = vadd.f32 %v1171, %v1379
      %v1381 = vpop.f32.mrb[0].mxu0
      %v1382 = vpop.f32.mrb[0].mxu0
      %v1383 = vadd.f32 %v1174, %v1382
      %v1384 = vpop.f32.mrb[0].mxu0
      %1385 = vmatprep.mubr.bf16.mxu0 0
      %1386 = vmatmul.mubr.bf16.gmra.mrb[0].mxu0 %v957
      %v1387 = vpop.f32.mrb[0].mxu0
      %v1388 = vadd.f32 %v1179, %v1387
      %v1389 = vpop.f32.mrb[0].mxu0
      %v1390 = vpop.f32.mrb[0].mxu0
      %v1391 = vadd.f32 %v1182, %v1390
      %v1392 = vpop.f32.mrb[0].mxu0
      %1393 = vmatprep.mubr.bf16.mxu0 0
      %1394 = vmatmul.mubr.bf16.gmra.mrb[0].mxu0 %v958
      %v1395 = vpop.f32.mrb[0].mxu0
      %v1396 = vadd.f32 %v1187, %v1395
      %v1397 = vpop.f32.mrb[0].mxu0
      %v1398 = vpop.f32.mrb[0].mxu0
      %v1399 = vadd.f32 %v1190, %v1398
      %v1400 = vpop.f32.mrb[0].mxu0
      %1401 = vmatprep.mubr.bf16.mxu0 0
      %1402 = vmatmul.mubr.bf16.gmra.mrb[0].mxu0 %v959
      %v1403 = vpop.f32.mrb[0].mxu0
      %v1404 = vadd.f32 %v1195, %v1403
      %v1405 = vpop.f32.mrb[0].mxu0
      %v1406 = vpop.f32.mrb[0].mxu0
      %v1407 = vadd.f32 %v1198, %v1406
      %v1408 = vpop.f32.mrb[0].mxu0
      %1409 = vmatprep.mubr.bf16.mxu0 0
      %1410 = vmatmul.mubr.bf16.gmra.mrb[0].mxu0 %v960
      %v1411 = vpop.f32.mrb[0].mxu0
      %v1412 = vadd.f32 %v1203, %v1411
      %v1413 = vpop.f32.mrb[0].mxu0
      %v1414 = vpop.f32.mrb[0].mxu0
      %v1415 = vadd.f32 %v1206, %v1414
      %v1416 = vpop.f32.mrb[0].mxu0
      %1417 = vmatprep.mubr.bf16.mxu0 0
      %1418 = vmatmul.mubr.bf16.gmra.mrb[0].mxu0 %v961
      %v1419 = vpop.f32.mrb[0].mxu0
      %v1420 = vadd.f32 %v1211, %v1419
      %v1421 = vpop.f32.mrb[0].mxu0
      %v1422 = vpop.f32.mrb[0].mxu0
      %v1423 = vadd.f32 %v1214, %v1422
      %v1424 = vpop.f32.mrb[0].mxu0
      %1425 = vmatprep.mubr.bf16.mxu0 0
      %1426 = vmatmul.mubr.bf16.gmra.mrb[0].mxu0 %v962
      %v1427 = vpop.f32.mrb[0].mxu0
      %v1428 = vadd.f32 %v1219, %v1427
      %v1429 = vpop.f32.mrb[0].mxu0
      %v1430 = vpop.f32.mrb[0].mxu0
      %v1431 = vadd.f32 %v1222, %v1430
      %v1432 = vpop.f32.mrb[0].mxu0
      %1433 = vmatprep.mubr.bf16.mxu0 0
      %1434 = vmatmul.mubr.bf16.gmra.mrb[0].mxu0 %v963
      %v1435 = vpop.f32.mrb[0].mxu0
      %v1436 = vadd.f32 %v1227, %v1435
      %v1437 = vpop.f32.mrb[0].mxu0
      %v1438 = vpop.f32.mrb[0].mxu0
      %v1439 = vadd.f32 %v1230, %v1438
      %v1440 = vpop.f32.mrb[0].mxu0
      %1441 = vmatprep.mubr.bf16.mxu0 0
      %1442 = vmatmul.mubr.bf16.gmra.mrb[0].mxu0 %v964
      %v1443 = vpop.f32.mrb[0].mxu0
      %v1444 = vadd.f32 %v1235, %v1443
      %v1445 = vpop.f32.mrb[0].mxu0
      %v1446 = vpop.f32.mrb[0].mxu0
      %v1447 = vadd.f32 %v1238, %v1446
      %v1448 = vpop.f32.mrb[0].mxu0
      %1449 = vmatprep.mubr.bf16.mxu0 0
      %1450 = vmatmul.mubr.bf16.gmra.mrb[0].mxu0 %v965
      %v1451 = vpop.f32.mrb[0].mxu0
      %v1452 = vadd.f32 %v1243, %v1451
      %v1453 = vpop.f32.mrb[0].mxu0
      %v1454 = vpop.f32.mrb[0].mxu0
      %v1455 = vadd.f32 %v1246, %v1454
      %v1456 = vpop.f32.mrb[0].mxu0
      %1457 = vmatprep.mubr.bf16.mxu0 0
      %1458 = vmatmul.mubr.bf16.gmra.mrb[0].mxu0 %v966
      %v1459 = vpop.f32.mrb[0].mxu0
      %v1460 = vadd.f32 %v1251, %v1459
      %v1461 = vpop.f32.mrb[0].mxu0
      %v1462 = vpop.f32.mrb[0].mxu0
      %v1463 = vadd.f32 %v1254, %v1462
      %v1464 = vpop.f32.mrb[0].mxu0
      %1465 = vdwg.mxu0
      %v1466 = vld [vmem:[#allocation2 + $0x9] sm:$0xff]
      %v1467 = vld [vmem:[#allocation2 + $0x11] sm:$0xff]
      %v1468 = vld [vmem:[#allocation2 + $0x19] sm:$0xff]
      %v1469 = vld [vmem:[#allocation2 + $0x21] sm:$0xff]
      %v1470 = vld [vmem:[#allocation2 + $0x29] sm:$0xff]
      %v1471 = vld [vmem:[#allocation2 + $0x31] sm:$0xff]
      %v1472 = vld [vmem:[#allocation2 + $0x39] sm:$0xff]
      %v1473 = vld [vmem:[#allocation2 + $0x41] sm:$0xff]
      %v1474 = vld [vmem:[#allocation2 + $0x49] sm:$0xff]
      %v1475 = vld [vmem:[#allocation2 + $0x51] sm:$0xff]
      %v1476 = vld [vmem:[#allocation2 + $0x59] sm:$0xff]
      %v1477 = vld [vmem:[#allocation2 + $0x61] sm:$0xff]
      %v1478 = vld [vmem:[#allocation2 + $0x69] sm:$0xff]
      %v1479 = vld [vmem:[#allocation2 + $0x71] sm:$0xff]
      %v1480 = vld [vmem:[#allocation2 + $0x79] sm:$0xff]
      %v1481 = vld [vmem:[#allocation2 + $0x81] sm:$0xff]
      %v1482 = vld [vmem:[#allocation2 + $0x89] sm:$0xff]
      %v1483 = vld [vmem:[#allocation2 + $0x91] sm:$0xff]
      %v1484 = vld [vmem:[#allocation2 + $0x99] sm:$0xff]
      %v1485 = vld [vmem:[#allocation2 + $0xa1] sm:$0xff]
      %v1486 = vld [vmem:[#allocation2 + $0xa9] sm:$0xff]
      %v1487 = vld [vmem:[#allocation2 + $0xb1] sm:$0xff]
      %v1488 = vld [vmem:[#allocation2 + $0xb9] sm:$0xff]
      %v1489 = vld [vmem:[#allocation2 + $0xc1] sm:$0xff]
      %v1490 = vld [vmem:[#allocation2 + $0xc9] sm:$0xff]
      %v1491 = vld [vmem:[#allocation2 + $0xd1] sm:$0xff]
      %v1492 = vld [vmem:[#allocation2 + $0xd9] sm:$0xff]
      %v1493 = vld [vmem:[#allocation2 + $0xe1] sm:$0xff]
      %v1494 = vld [vmem:[#allocation2 + $0xe9] sm:$0xff]
      %v1495 = vld [vmem:[#allocation2 + $0xf1] sm:$0xff]
      %v1496 = vld [vmem:[#allocation2 + $0xf9] sm:$0xff]
      %v1497 = vld [vmem:[#allocation2 + $0x101] sm:$0xff]
      %v1498 = vadd.s32 %v593, 1
      %v1499 = vadd.s32 %v594, 1
      %v1500 = vadd.s32 %v595, 1
      %v1501 = vadd.s32 %v596, 1
      %v1502 = vadd.s32 %v597, 1
      %v1503 = vadd.s32 %v598, 1
      %v1504 = vadd.s32 %v599, 1
      %v1505 = vadd.s32 %v600, 1
      %v1506 = vadd.s32 %v601, 1
      %v1507 = vadd.s32 %v602, 1
      %v1508 = vadd.s32 %v603, 1
      %v1509 = vadd.s32 %v604, 1
      %v1510 = vadd.s32 %v605, 1
      %v1511 = vadd.s32 %v606, 1
      %v1512 = vadd.s32 %v607, 1
      %v1513 = vadd.s32 %v608, 1
      %v1514 = vadd.s32 %v609, 1
      %v1515 = vadd.s32 %v610, 1
      %v1516 = vadd.s32 %v611, 1
      %v1517 = vadd.s32 %v612, 1
      %v1518 = vadd.s32 %v613, 1
      %v1519 = vadd.s32 %v614, 1
      %v1520 = vadd.s32 %v615, 1
      %v1521 = vadd.s32 %v616, 1
      %v1522 = vadd.s32 %v617, 1
      %v1523 = vadd.s32 %v618, 1
      %v1524 = vadd.s32 %v619, 1
      %v1525 = vadd.s32 %v620, 1
      %v1526 = vadd.s32 %v621, 1
      %v1527 = vadd.s32 %v622, 1
      %v1528 = vadd.s32 %v623, 1
      %v1529 = vadd.s32 %v624, 1
      %vm1530 = vcmp.ge.s32.totalorder %v1498, 0
      %vm1531 = vcmp.ge.s32.totalorder %v1499, 0
      %vm1532 = vcmp.ge.s32.totalorder %v1500, 0
      %vm1533 = vcmp.ge.s32.totalorder %v1501, 0
      %vm1534 = vcmp.ge.s32.totalorder %v1502, 0
      %vm1535 = vcmp.ge.s32.totalorder %v1503, 0
      %vm1536 = vcmp.ge.s32.totalorder %v1504, 0
      %vm1537 = vcmp.ge.s32.totalorder %v1505, 0
      %vm1538 = vcmp.ge.s32.totalorder %v1506, 0
      %vm1539 = vcmp.ge.s32.totalorder %v1507, 0
      %vm1540 = vcmp.ge.s32.totalorder %v1508, 0
      %vm1541 = vcmp.ge.s32.totalorder %v1509, 0
      %vm1542 = vcmp.ge.s32.totalorder %v1510, 0
      %vm1543 = vcmp.ge.s32.totalorder %v1511, 0
      %vm1544 = vcmp.ge.s32.totalorder %v1512, 0
      %vm1545 = vcmp.ge.s32.totalorder %v1513, 0
      %vm1546 = vcmp.ge.s32.totalorder %v1514, 0
      %vm1547 = vcmp.ge.s32.totalorder %v1515, 0
      %vm1548 = vcmp.ge.s32.totalorder %v1516, 0
      %vm1549 = vcmp.ge.s32.totalorder %v1517, 0
      %vm1550 = vcmp.ge.s32.totalorder %v1518, 0
      %vm1551 = vcmp.ge.s32.totalorder %v1519, 0
      %vm1552 = vcmp.ge.s32.totalorder %v1520, 0
      %vm1553 = vcmp.ge.s32.totalorder %v1521, 0
      %vm1554 = vcmp.ge.s32.totalorder %v1522, 0
      %vm1555 = vcmp.ge.s32.totalorder %v1523, 0
      %vm1556 = vcmp.ge.s32.totalorder %v1524, 0
      %vm1557 = vcmp.ge.s32.totalorder %v1525, 0
      %vm1558 = vcmp.ge.s32.totalorder %v1526, 0
      %vm1559 = vcmp.ge.s32.totalorder %v1527, 0
      %vm1560 = vcmp.ge.s32.totalorder %v1528, 0
      %vm1561 = vcmp.ge.s32.totalorder %v1529, 0
      %vm1562 = vcmp.lt.s32.totalorder %v1498, 16
      %vm1563 = vcmp.lt.s32.totalorder %v1499, 16
      %vm1564 = vcmp.lt.s32.totalorder %v1500, 16
      %vm1565 = vcmp.lt.s32.totalorder %v1501, 16
      %vm1566 = vcmp.lt.s32.totalorder %v1502, 16
      %vm1567 = vcmp.lt.s32.totalorder %v1503, 16
      %vm1568 = vcmp.lt.s32.totalorder %v1504, 16
      %vm1569 = vcmp.lt.s32.totalorder %v1505, 16
      %vm1570 = vcmp.lt.s32.totalorder %v1506, 16
      %vm1571 = vcmp.lt.s32.totalorder %v1507, 16
      %vm1572 = vcmp.lt.s32.totalorder %v1508, 16
      %vm1573 = vcmp.lt.s32.totalorder %v1509, 16
      %vm1574 = vcmp.lt.s32.totalorder %v1510, 16
      %vm1575 = vcmp.lt.s32.totalorder %v1511, 16
      %vm1576 = vcmp.lt.s32.totalorder %v1512, 16
      %vm1577 = vcmp.lt.s32.totalorder %v1513, 16
      %vm1578 = vcmp.lt.s32.totalorder %v1514, 16
      %vm1579 = vcmp.lt.s32.totalorder %v1515, 16
      %vm1580 = vcmp.lt.s32.totalorder %v1516, 16
      %vm1581 = vcmp.lt.s32.totalorder %v1517, 16
      %vm1582 = vcmp.lt.s32.totalorder %v1518, 16
      %vm1583 = vcmp.lt.s32.totalorder %v1519, 16
      %vm1584 = vcmp.lt.s32.totalorder %v1520, 16
      %vm1585 = vcmp.lt.s32.totalorder %v1521, 16
      %vm1586 = vcmp.lt.s32.totalorder %v1522, 16
      %vm1587 = vcmp.lt.s32.totalorder %v1523, 16
      %vm1588 = vcmp.lt.s32.totalorder %v1524, 16
      %vm1589 = vcmp.lt.s32.totalorder %v1525, 16
      %vm1590 = vcmp.lt.s32.totalorder %v1526, 16
      %vm1591 = vcmp.lt.s32.totalorder %v1527, 16
      %vm1592 = vcmp.lt.s32.totalorder %v1528, 16
      %vm1593 = vcmp.lt.s32.totalorder %v1529, 16
      %vm1594 = vmand %vm1530, %vm1562
      %vm1595 = vmand %vm1531, %vm1563
      %vm1596 = vmand %vm1532, %vm1564
      %vm1597 = vmand %vm1533, %vm1565
      %vm1598 = vmand %vm1534, %vm1566
      %vm1599 = vmand %vm1535, %vm1567
      %vm1600 = vmand %vm1536, %vm1568
      %vm1601 = vmand %vm1537, %vm1569
      %vm1602 = vmand %vm1538, %vm1570
      %vm1603 = vmand %vm1539, %vm1571
      %vm1604 = vmand %vm1540, %vm1572
      %vm1605 = vmand %vm1541, %vm1573
      %vm1606 = vmand %vm1542, %vm1574
      %vm1607 = vmand %vm1543, %vm1575
      %vm1608 = vmand %vm1544, %vm1576
      %vm1609 = vmand %vm1545, %vm1577
      %vm1610 = vmand %vm1546, %vm1578
      %vm1611 = vmand %vm1547, %vm1579
      %vm1612 = vmand %vm1548, %vm1580
      %vm1613 = vmand %vm1549, %vm1581
      %vm1614 = vmand %vm1550, %vm1582
      %vm1615 = vmand %vm1551, %vm1583
      %vm1616 = vmand %vm1552, %vm1584
      %vm1617 = vmand %vm1553, %vm1585
      %vm1618 = vmand %vm1554, %vm1586
      %vm1619 = vmand %vm1555, %vm1587
      %vm1620 = vmand %vm1556, %vm1588
      %vm1621 = vmand %vm1557, %vm1589
      %vm1622 = vmand %vm1558, %vm1590
      %vm1623 = vmand %vm1559, %vm1591
      %vm1624 = vmand %vm1560, %vm1592
      %vm1625 = vmand %vm1561, %vm1593
      %v1626 = vsel %vm1594, 1, 0
      %v1627 = vsel %vm1595, 1, 0
      %v1628 = vsel %vm1596, 1, 0
      %v1629 = vsel %vm1597, 1, 0
      %v1630 = vsel %vm1598, 1, 0
      %v1631 = vsel %vm1599, 1, 0
      %v1632 = vsel %vm1600, 1, 0
      %v1633 = vsel %vm1601, 1, 0
      %v1634 = vsel %vm1602, 1, 0
      %v1635 = vsel %vm1603, 1, 0
      %v1636 = vsel %vm1604, 1, 0
      %v1637 = vsel %vm1605, 1, 0
      %v1638 = vsel %vm1606, 1, 0
      %v1639 = vsel %vm1607, 1, 0
      %v1640 = vsel %vm1608, 1, 0
      %v1641 = vsel %vm1609, 1, 0
      %v1642 = vsel %vm1610, 1, 0
      %v1643 = vsel %vm1611, 1, 0
      %v1644 = vsel %vm1612, 1, 0
      %v1645 = vsel %vm1613, 1, 0
      %v1646 = vsel %vm1614, 1, 0
      %v1647 = vsel %vm1615, 1, 0
      %v1648 = vsel %vm1616, 1, 0
      %v1649 = vsel %vm1617, 1, 0
      %v1650 = vsel %vm1618, 1, 0
      %v1651 = vsel %vm1619, 1, 0
      %v1652 = vsel %vm1620, 1, 0
      %v1653 = vsel %vm1621, 1, 0
      %v1654 = vsel %vm1622, 1, 0
      %v1655 = vsel %vm1623, 1, 0
      %v1656 = vsel %vm1624, 1, 0
      %v1657 = vsel %vm1625, 1, 0
      %vm1658 = vcmp.eq.s32.totalorder %v1626, 1
      %vm1659 = vcmp.eq.s32.totalorder %v1627, 1
      %vm1660 = vcmp.eq.s32.totalorder %v1628, 1
      %vm1661 = vcmp.eq.s32.totalorder %v1629, 1
      %vm1662 = vcmp.eq.s32.totalorder %v1630, 1
      %vm1663 = vcmp.eq.s32.totalorder %v1631, 1
      %vm1664 = vcmp.eq.s32.totalorder %v1632, 1
      %vm1665 = vcmp.eq.s32.totalorder %v1633, 1
      %vm1666 = vcmp.eq.s32.totalorder %v1634, 1
      %vm1667 = vcmp.eq.s32.totalorder %v1635, 1
      %vm1668 = vcmp.eq.s32.totalorder %v1636, 1
      %vm1669 = vcmp.eq.s32.totalorder %v1637, 1
      %vm1670 = vcmp.eq.s32.totalorder %v1638, 1
      %vm1671 = vcmp.eq.s32.totalorder %v1639, 1
      %vm1672 = vcmp.eq.s32.totalorder %v1640, 1
      %vm1673 = vcmp.eq.s32.totalorder %v1641, 1
      %vm1674 = vcmp.eq.s32.totalorder %v1642, 1
      %vm1675 = vcmp.eq.s32.totalorder %v1643, 1
      %vm1676 = vcmp.eq.s32.totalorder %v1644, 1
      %vm1677 = vcmp.eq.s32.totalorder %v1645, 1
      %vm1678 = vcmp.eq.s32.totalorder %v1646, 1
      %vm1679 = vcmp.eq.s32.totalorder %v1647, 1
      %vm1680 = vcmp.eq.s32.totalorder %v1648, 1
      %vm1681 = vcmp.eq.s32.totalorder %v1649, 1
      %vm1682 = vcmp.eq.s32.totalorder %v1650, 1
      %vm1683 = vcmp.eq.s32.totalorder %v1651, 1
      %vm1684 = vcmp.eq.s32.totalorder %v1652, 1
      %vm1685 = vcmp.eq.s32.totalorder %v1653, 1
      %vm1686 = vcmp.eq.s32.totalorder %v1654, 1
      %vm1687 = vcmp.eq.s32.totalorder %v1655, 1
      %vm1688 = vcmp.eq.s32.totalorder %v1656, 1
      %vm1689 = vcmp.eq.s32.totalorder %v1657, 1
      %v1690 = vsel %vm1658, %v1466, 0.0
      %v1691 = vsel %vm1659, %v1467, 0.0
      %v1692 = vsel %vm1660, %v1468, 0.0
      %v1693 = vsel %vm1661, %v1469, 0.0
      %v1694 = vsel %vm1662, %v1470, 0.0
      %v1695 = vsel %vm1663, %v1471, 0.0
      %v1696 = vsel %vm1664, %v1472, 0.0
      %v1697 = vsel %vm1665, %v1473, 0.0
      %v1698 = vsel %vm1666, %v1474, 0.0
      %v1699 = vsel %vm1667, %v1475, 0.0
      %v1700 = vsel %vm1668, %v1476, 0.0
      %v1701 = vsel %vm1669, %v1477, 0.0
      %v1702 = vsel %vm1670, %v1478, 0.0
      %v1703 = vsel %vm1671, %v1479, 0.0
      %v1704 = vsel %vm1672, %v1480, 0.0
      %v1705 = vsel %vm1673, %v1481, 0.0
      %v1706 = vsel %vm1674, %v1482, 0.0
      %v1707 = vsel %vm1675, %v1483, 0.0
      %v1708 = vsel %vm1676, %v1484, 0.0
      %v1709 = vsel %vm1677, %v1485, 0.0
      %v1710 = vsel %vm1678, %v1486, 0.0
      %v1711 = vsel %vm1679, %v1487, 0.0
      %v1712 = vsel %vm1680, %v1488, 0.0
      %v1713 = vsel %vm1681, %v1489, 0.0
      %v1714 = vsel %vm1682, %v1490, 0.0
      %v1715 = vsel %vm1683, %v1491, 0.0
      %v1716 = vsel %vm1684, %v1492, 0.0
      %v1717 = vsel %vm1685, %v1493, 0.0
      %v1718 = vsel %vm1686, %v1494, 0.0
      %v1719 = vsel %vm1687, %v1495, 0.0
      %v1720 = vsel %vm1688, %v1496, 0.0
      %v1721 = vsel %vm1689, %v1497, 0.0
      %v1722 = vpack.c.bf16 %v1691, %v1690
      %v1723 = vpack.c.bf16 %v1693, %v1692
      %v1724 = vpack.c.bf16 %v1695, %v1694
      %v1725 = vpack.c.bf16 %v1697, %v1696
      %v1726 = vpack.c.bf16 %v1699, %v1698
      %v1727 = vpack.c.bf16 %v1701, %v1700
      %v1728 = vpack.c.bf16 %v1703, %v1702
      %v1729 = vpack.c.bf16 %v1705, %v1704
      %v1730 = vpack.c.bf16 %v1707, %v1706
      %v1731 = vpack.c.bf16 %v1709, %v1708
      %v1732 = vpack.c.bf16 %v1711, %v1710
      %v1733 = vpack.c.bf16 %v1713, %v1712
      %v1734 = vpack.c.bf16 %v1715, %v1714
      %v1735 = vpack.c.bf16 %v1717, %v1716
      %v1736 = vpack.c.bf16 %v1719, %v1718
      %v1737 = vpack.c.bf16 %v1721, %v1720
      %s1738 = scalar_lea.vmem %s3, 128
      %v1739 = vld [vmem:[%s1738] sm:$0xf]
      %v1740 = vld [vmem:[%s1738 + $0x4] sm:$0xf]
      %v1741 = vld [vmem:[%s1738 + $0x8] sm:$0xf]
      %v1742 = vld [vmem:[%s1738 + $0xc] sm:$0xf]
      %v1743 = vld [vmem:[%s1738 + $0x10] sm:$0xf]
      %v1744 = vld [vmem:[%s1738 + $0x14] sm:$0xf]
      %v1745 = vld [vmem:[%s1738 + $0x18] sm:$0xf]
      %v1746 = vld [vmem:[%s1738 + $0x1c] sm:$0xf]
      %v1747 = vld [vmem:[%s1738 + $0x20] sm:$0xf]
      %v1748 = vld [vmem:[%s1738 + $0x24] sm:$0xf]
      %v1749 = vld [vmem:[%s1738 + $0x28] sm:$0xf]
      %v1750 = vld [vmem:[%s1738 + $0x2c] sm:$0xf]
      %v1751 = vld [vmem:[%s1738 + $0x30] sm:$0xf]
      %v1752 = vld [vmem:[%s1738 + $0x34] sm:$0xf]
      %v1753 = vld [vmem:[%s1738 + $0x38] sm:$0xf]
      %v1754 = vld [vmem:[%s1738 + $0x3c] sm:$0xf]
      %v1771 = vunpack.c.l.b16 %v1739
      %v1772 = vunpack.c.l.b16 %v1740
      %v1773 = vunpack.c.l.b16 %v1741
      %v1774 = vunpack.c.l.b16 %v1742
      %v1775 = vunpack.c.l.b16 %v1743
      %v1776 = vunpack.c.l.b16 %v1744
      %v1777 = vunpack.c.l.b16 %v1745
      %v1778 = vunpack.c.l.b16 %v1746
      %v1779 = vunpack.c.l.b16 %v1747
      %v1780 = vunpack.c.l.b16 %v1748
      %v1781 = vunpack.c.l.b16 %v1749
      %v1782 = vunpack.c.l.b16 %v1750
      %v1783 = vunpack.c.l.b16 %v1751
      %v1784 = vunpack.c.l.b16 %v1752
      %v1785 = vunpack.c.l.b16 %v1753
      %v1786 = vunpack.c.l.b16 %v1754
      %v1787 = vpack.c.b16 %v1772, %v1771
      %v1788 = vpack.c.b16 %v1774, %v1773
      %v1789 = vpack.c.b16 %v1776, %v1775
      %v1790 = vpack.c.b16 %v1778, %v1777
      %v1791 = vpack.c.b16 %v1780, %v1779
      %v1792 = vpack.c.b16 %v1782, %v1781
      %v1793 = vpack.c.b16 %v1784, %v1783
      %v1794 = vpack.c.b16 %v1786, %v1785
      %1803 = vmatprep.subr.bf16.mxu0 0
      %1804 = vmatpush1.bf16.msra.mxu0 %v1787
      %1805 = vmatprep.subr.bf16.mxu0 0
      %1806 = vmatpush1.bf16.msra.mxu0 %v1788
      %1807 = vmatprep.subr.bf16.mxu0 0
      %1808 = vmatpush1.bf16.msra.mxu0 %v1789
      %1809 = vmatprep.subr.bf16.mxu0 0
      %1810 = vmatpush1.bf16.msra.mxu0 %v1790
      %1811 = vmatprep.subr.bf16.mxu0 0
      %1812 = vmatpush1.bf16.msra.mxu0 %v1791
      %1813 = vmatprep.subr.bf16.mxu0 0
      %1814 = vmatpush1.bf16.msra.mxu0 %v1792
      %1815 = vmatprep.subr.bf16.mxu0 0
      %1816 = vmatpush1.bf16.msra.mxu0 %v1793
      %1817 = vmatprep.subr.bf16.mxu0 0
      %1818 = vmatpush1.bf16.msra.mxu0 %v1794
      %1819 = vmatprep.subr.bf16.mxu0 0
      %1820 = vmatpush1.bf16.msra.mxu0 0
      %1821 = vmatprep.subr.bf16.mxu0 0
      %1822 = vmatpush1.bf16.msra.mxu0 0
      %1823 = vmatprep.subr.bf16.mxu0 0
      %1824 = vmatpush1.bf16.msra.mxu0 0
      %1825 = vmatprep.subr.bf16.mxu0 0
      %1826 = vmatpush1.bf16.msra.mxu0 0
      %1827 = vmatprep.subr.bf16.mxu0 0
      %1828 = vmatpush1.bf16.msra.mxu0 0
      %1829 = vmatprep.subr.bf16.mxu0 0
      %1830 = vmatpush1.bf16.msra.mxu0 0
      %1831 = vmatprep.subr.bf16.mxu0 0
      %1832 = vmatpush1.bf16.msra.mxu0 0
      %1833 = vmatprep.subr.bf16.mxu0 0
      %1834 = vmatpush1.bf16.msra.mxu0 0
      %1835 = vmatprep.mubr.bf16.mxu0 0
      %1836 = vmatmul.mubr.bf16.gmra.mrb[0].mxu0 %v1722
      %v1837 = vpop.f32.mrb[0].mxu0
      %v1838 = vadd.f32 0.0, %v1837
      %v1839 = vpop.f32.mrb[0].mxu0
      %v1840 = vpop.f32.mrb[0].mxu0
      %v1841 = vadd.f32 0.0, %v1840
      %v1842 = vpop.f32.mrb[0].mxu0
      %1843 = vmatprep.mubr.bf16.mxu0 0
      %1844 = vmatmul.mubr.bf16.gmra.mrb[0].mxu0 %v1723
      %v1845 = vpop.f32.mrb[0].mxu0
      %v1846 = vadd.f32 0.0, %v1845
      %v1847 = vpop.f32.mrb[0].mxu0
      %v1848 = vpop.f32.mrb[0].mxu0
      %v1849 = vadd.f32 0.0, %v1848
      %v1850 = vpop.f32.mrb[0].mxu0
      %1851 = vmatprep.mubr.bf16.mxu0 0
      %1852 = vmatmul.mubr.bf16.gmra.mrb[0].mxu0 %v1724
      %v1853 = vpop.f32.mrb[0].mxu0
      %v1854 = vadd.f32 0.0, %v1853
      %v1855 = vpop.f32.mrb[0].mxu0
      %v1856 = vpop.f32.mrb[0].mxu0
      %v1857 = vadd.f32 0.0, %v1856
      %v1858 = vpop.f32.mrb[0].mxu0
      %1859 = vmatprep.mubr.bf16.mxu0 0
      %1860 = vmatmul.mubr.bf16.gmra.mrb[0].mxu0 %v1725
      %v1861 = vpop.f32.mrb[0].mxu0
      %v1862 = vadd.f32 0.0, %v1861
      %v1863 = vpop.f32.mrb[0].mxu0
      %v1864 = vpop.f32.mrb[0].mxu0
      %v1865 = vadd.f32 0.0, %v1864
      %v1866 = vpop.f32.mrb[0].mxu0
      %1867 = vmatprep.mubr.bf16.mxu0 0
      %1868 = vmatmul.mubr.bf16.gmra.mrb[0].mxu0 %v1726
      %v1869 = vpop.f32.mrb[0].mxu0
      %v1870 = vadd.f32 0.0, %v1869
      %v1871 = vpop.f32.mrb[0].mxu0
      %v1872 = vpop.f32.mrb[0].mxu0
      %v1873 = vadd.f32 0.0, %v1872
      %v1874 = vpop.f32.mrb[0].mxu0
      %1875 = vmatprep.mubr.bf16.mxu0 0
      %1876 = vmatmul.mubr.bf16.gmra.mrb[0].mxu0 %v1727
      %v1877 = vpop.f32.mrb[0].mxu0
      %v1878 = vadd.f32 0.0, %v1877
      %v1879 = vpop.f32.mrb[0].mxu0
      %v1880 = vpop.f32.mrb[0].mxu0
      %v1881 = vadd.f32 0.0, %v1880
      %v1882 = vpop.f32.mrb[0].mxu0
      %1883 = vmatprep.mubr.bf16.mxu0 0
      %1884 = vmatmul.mubr.bf16.gmra.mrb[0].mxu0 %v1728
      %v1885 = vpop.f32.mrb[0].mxu0
      %v1886 = vadd.f32 0.0, %v1885
      %v1887 = vpop.f32.mrb[0].mxu0
      %v1888 = vpop.f32.mrb[0].mxu0
      %v1889 = vadd.f32 0.0, %v1888
      %v1890 = vpop.f32.mrb[0].mxu0
      %1891 = vmatprep.mubr.bf16.mxu0 0
      %1892 = vmatmul.mubr.bf16.gmra.mrb[0].mxu0 %v1729
      %v1893 = vpop.f32.mrb[0].mxu0
      %v1894 = vadd.f32 0.0, %v1893
      %v1895 = vpop.f32.mrb[0].mxu0
      %v1896 = vpop.f32.mrb[0].mxu0
      %v1897 = vadd.f32 0.0, %v1896
      %v1898 = vpop.f32.mrb[0].mxu0
      %1899 = vmatprep.mubr.bf16.mxu0 0
      %1900 = vmatmul.mubr.bf16.gmra.mrb[0].mxu0 %v1730
      %v1901 = vpop.f32.mrb[0].mxu0
      %v1902 = vadd.f32 0.0, %v1901
      %v1903 = vpop.f32.mrb[0].mxu0
      %v1904 = vpop.f32.mrb[0].mxu0
      %v1905 = vadd.f32 0.0, %v1904
      %v1906 = vpop.f32.mrb[0].mxu0
      %1907 = vmatprep.mubr.bf16.mxu0 0
      %1908 = vmatmul.mubr.bf16.gmra.mrb[0].mxu0 %v1731
      %v1909 = vpop.f32.mrb[0].mxu0
      %v1910 = vadd.f32 0.0, %v1909
      %v1911 = vpop.f32.mrb[0].mxu0
      %v1912 = vpop.f32.mrb[0].mxu0
      %v1913 = vadd.f32 0.0, %v1912
      %v1914 = vpop.f32.mrb[0].mxu0
      %1915 = vmatprep.mubr.bf16.mxu0 0
      %1916 = vmatmul.mubr.bf16.gmra.mrb[0].mxu0 %v1732
      %v1917 = vpop.f32.mrb[0].mxu0
      %v1918 = vadd.f32 0.0, %v1917
      %v1919 = vpop.f32.mrb[0].mxu0
      %v1920 = vpop.f32.mrb[0].mxu0
      %v1921 = vadd.f32 0.0, %v1920
      %v1922 = vpop.f32.mrb[0].mxu0
      %1923 = vmatprep.mubr.bf16.mxu0 0
      %1924 = vmatmul.mubr.bf16.gmra.mrb[0].mxu0 %v1733
      %v1925 = vpop.f32.mrb[0].mxu0
      %v1926 = vadd.f32 0.0, %v1925
      %v1927 = vpop.f32.mrb[0].mxu0
      %v1928 = vpop.f32.mrb[0].mxu0
      %v1929 = vadd.f32 0.0, %v1928
      %v1930 = vpop.f32.mrb[0].mxu0
      %1931 = vmatprep.mubr.bf16.mxu0 0
      %1932 = vmatmul.mubr.bf16.gmra.mrb[0].mxu0 %v1734
      %v1933 = vpop.f32.mrb[0].mxu0
      %v1934 = vadd.f32 0.0, %v1933
      %v1935 = vpop.f32.mrb[0].mxu0
      %v1936 = vpop.f32.mrb[0].mxu0
      %v1937 = vadd.f32 0.0, %v1936
      %v1938 = vpop.f32.mrb[0].mxu0
      %1939 = vmatprep.mubr.bf16.mxu0 0
      %1940 = vmatmul.mubr.bf16.gmra.mrb[0].mxu0 %v1735
      %v1941 = vpop.f32.mrb[0].mxu0
      %v1942 = vadd.f32 0.0, %v1941
      %v1943 = vpop.f32.mrb[0].mxu0
      %v1944 = vpop.f32.mrb[0].mxu0
      %v1945 = vadd.f32 0.0, %v1944
      %v1946 = vpop.f32.mrb[0].mxu0
      %1947 = vmatprep.mubr.bf16.mxu0 0
      %1948 = vmatmul.mubr.bf16.gmra.mrb[0].mxu0 %v1736
      %v1949 = vpop.f32.mrb[0].mxu0
      %v1950 = vadd.f32 0.0, %v1949
      %v1951 = vpop.f32.mrb[0].mxu0
      %v1952 = vpop.f32.mrb[0].mxu0
      %v1953 = vadd.f32 0.0, %v1952
      %v1954 = vpop.f32.mrb[0].mxu0
      %1955 = vmatprep.mubr.bf16.mxu0 0
      %1956 = vmatmul.mubr.bf16.gmra.mrb[0].mxu0 %v1737
      %v1957 = vpop.f32.mrb[0].mxu0
      %v1958 = vadd.f32 0.0, %v1957
      %v1959 = vpop.f32.mrb[0].mxu0
      %v1960 = vpop.f32.mrb[0].mxu0
      %v1961 = vadd.f32 0.0, %v1960
      %v1962 = vpop.f32.mrb[0].mxu0
      %1963 = vdwg.mxu0
      %v1964 = vadd.f32 %v1340, %v1838
      %v1965 = vadd.f32 %v1343, %v1841
      %v1966 = vadd.f32 %v1348, %v1846
      %v1967 = vadd.f32 %v1351, %v1849
      %v1968 = vadd.f32 %v1356, %v1854
      %v1969 = vadd.f32 %v1359, %v1857
      %v1970 = vadd.f32 %v1364, %v1862
      %v1971 = vadd.f32 %v1367, %v1865
      %v1972 = vadd.f32 %v1372, %v1870
      %v1973 = vadd.f32 %v1375, %v1873
      %v1974 = vadd.f32 %v1380, %v1878
      %v1975 = vadd.f32 %v1383, %v1881
      %v1976 = vadd.f32 %v1388, %v1886
      %v1977 = vadd.f32 %v1391, %v1889
      %v1978 = vadd.f32 %v1396, %v1894
      %v1979 = vadd.f32 %v1399, %v1897
      %v1980 = vadd.f32 %v1404, %v1902
      %v1981 = vadd.f32 %v1407, %v1905
      %v1982 = vadd.f32 %v1412, %v1910
      %v1983 = vadd.f32 %v1415, %v1913
      %v1984 = vadd.f32 %v1420, %v1918
      %v1985 = vadd.f32 %v1423, %v1921
      %v1986 = vadd.f32 %v1428, %v1926
      %v1987 = vadd.f32 %v1431, %v1929
      %v1988 = vadd.f32 %v1436, %v1934
      %v1989 = vadd.f32 %v1439, %v1937
      %v1990 = vadd.f32 %v1444, %v1942
      %v1991 = vadd.f32 %v1447, %v1945
      %v1992 = vadd.f32 %v1452, %v1950
      %v1993 = vadd.f32 %v1455, %v1953
      %v1994 = vadd.f32 %v1460, %v1958
      %v1995 = vadd.f32 %v1463, %v1961
      %v1996 = vld [vmem:[#allocation2 + $0x17] sm:$0xff]
      %v1997 = vld [vmem:[#allocation2 + $0x1f] sm:$0xff]
      %v1998 = vld [vmem:[#allocation2 + $0x27] sm:$0xff]
      %v1999 = vld [vmem:[#allocation2 + $0x2f] sm:$0xff]
      %v2000 = vld [vmem:[#allocation2 + $0x37] sm:$0xff]
      %v2001 = vld [vmem:[#allocation2 + $0x3f] sm:$0xff]
      %v2002 = vld [vmem:[#allocation2 + $0x47] sm:$0xff]
      %v2003 = vld [vmem:[#allocation2 + $0x4f] sm:$0xff]
      %v2004 = vld [vmem:[#allocation2 + $0x57] sm:$0xff]
      %v2005 = vld [vmem:[#allocation2 + $0x5f] sm:$0xff]
      %v2006 = vld [vmem:[#allocation2 + $0x67] sm:$0xff]
      %v2007 = vld [vmem:[#allocation2 + $0x6f] sm:$0xff]
      %v2008 = vld [vmem:[#allocation2 + $0x77] sm:$0xff]
      %v2009 = vld [vmem:[#allocation2 + $0x7f] sm:$0xff]
      %v2010 = vld [vmem:[#allocation2 + $0x87] sm:$0xff]
      %v2011 = vld [vmem:[#allocation2 + $0x8f] sm:$0xff]
      %v2012 = vld [vmem:[#allocation2 + $0x97] sm:$0xff]
      %v2013 = vld [vmem:[#allocation2 + $0x9f] sm:$0xff]
      %v2014 = vld [vmem:[#allocation2 + $0xa7] sm:$0xff]
      %v2015 = vld [vmem:[#allocation2 + $0xaf] sm:$0xff]
      %v2016 = vld [vmem:[#allocation2 + $0xb7] sm:$0xff]
      %v2017 = vld [vmem:[#allocation2 + $0xbf] sm:$0xff]
      %v2018 = vld [vmem:[#allocation2 + $0xc7] sm:$0xff]
      %v2019 = vld [vmem:[#allocation2 + $0xcf] sm:$0xff]
      %v2020 = vld [vmem:[#allocation2 + $0xd7] sm:$0xff]
      %v2021 = vld [vmem:[#allocation2 + $0xdf] sm:$0xff]
      %v2022 = vld [vmem:[#allocation2 + $0xe7] sm:$0xff]
      %v2023 = vld [vmem:[#allocation2 + $0xef] sm:$0xff]
      %v2024 = vld [vmem:[#allocation2 + $0xf7] sm:$0xff]
      %v2025 = vld [vmem:[#allocation2 + $0xff] sm:$0xff]
      %v2026 = vld [vmem:[#allocation2 + $0x107] sm:$0xff]
      %v2027 = vld [vmem:[#allocation2 + $0x10f] sm:$0xff]
      %v2028 = vsel %vm887, %v1996, 0.0
      %v2029 = vsel %vm888, %v1997, 0.0
      %v2030 = vsel %vm889, %v1998, 0.0
      %v2031 = vsel %vm890, %v1999, 0.0
      %v2032 = vsel %vm891, %v2000, 0.0
      %v2033 = vsel %vm892, %v2001, 0.0
      %v2034 = vsel %vm893, %v2002, 0.0
      %v2035 = vsel %vm894, %v2003, 0.0
      %v2036 = vsel %vm895, %v2004, 0.0
      %v2037 = vsel %vm896, %v2005, 0.0
      %v2038 = vsel %vm897, %v2006, 0.0
      %v2039 = vsel %vm898, %v2007, 0.0
      %v2040 = vsel %vm899, %v2008, 0.0
      %v2041 = vsel %vm900, %v2009, 0.0
      %v2042 = vsel %vm901, %v2010, 0.0
      %v2043 = vsel %vm902, %v2011, 0.0
      %v2044 = vsel %vm903, %v2012, 0.0
      %v2045 = vsel %vm904, %v2013, 0.0
      %v2046 = vsel %vm905, %v2014, 0.0
      %v2047 = vsel %vm906, %v2015, 0.0
      %v2048 = vsel %vm907, %v2016, 0.0
      %v2049 = vsel %vm908, %v2017, 0.0
      %v2050 = vsel %vm909, %v2018, 0.0
      %v2051 = vsel %vm910, %v2019, 0.0
      %v2052 = vsel %vm911, %v2020, 0.0
      %v2053 = vsel %vm912, %v2021, 0.0
      %v2054 = vsel %vm913, %v2022, 0.0
      %v2055 = vsel %vm914, %v2023, 0.0
      %v2056 = vsel %vm915, %v2024, 0.0
      %v2057 = vsel %vm916, %v2025, 0.0
      %v2058 = vsel %vm917, %v2026, 0.0
      %v2059 = vsel %vm918, %v2027, 0.0
      %v2060 = vpack.c.bf16 %v2029, %v2028
      %v2061 = vpack.c.bf16 %v2031, %v2030
      %v2062 = vpack.c.bf16 %v2033, %v2032
      %v2063 = vpack.c.bf16 %v2035, %v2034
      %v2064 = vpack.c.bf16 %v2037, %v2036
      %v2065 = vpack.c.bf16 %v2039, %v2038
      %v2066 = vpack.c.bf16 %v2041, %v2040
      %v2067 = vpack.c.bf16 %v2043, %v2042
      %v2068 = vpack.c.bf16 %v2045, %v2044
      %v2069 = vpack.c.bf16 %v2047, %v2046
      %v2070 = vpack.c.bf16 %v2049, %v2048
      %v2071 = vpack.c.bf16 %v2051, %v2050
      %v2072 = vpack.c.bf16 %v2053, %v2052
      %v2073 = vpack.c.bf16 %v2055, %v2054
      %v2074 = vpack.c.bf16 %v2057, %v2056
      %v2075 = vpack.c.bf16 %v2059, %v2058
      %s2076 = scalar_lea.vmem %s3, 192
      %v2077 = vld [vmem:[%s2076] sm:$0xf]
      %v2078 = vld [vmem:[%s2076 + $0x4] sm:$0xf]
      %v2079 = vld [vmem:[%s2076 + $0x8] sm:$0xf]
      %v2080 = vld [vmem:[%s2076 + $0xc] sm:$0xf]
      %v2081 = vld [vmem:[%s2076 + $0x10] sm:$0xf]
      %v2082 = vld [vmem:[%s2076 + $0x14] sm:$0xf]
      %v2083 = vld [vmem:[%s2076 + $0x18] sm:$0xf]
      %v2084 = vld [vmem:[%s2076 + $0x1c] sm:$0xf]
      %v2085 = vld [vmem:[%s2076 + $0x20] sm:$0xf]
      %v2086 = vld [vmem:[%s2076 + $0x24] sm:$0xf]
      %v2087 = vld [vmem:[%s2076 + $0x28] sm:$0xf]
      %v2088 = vld [vmem:[%s2076 + $0x2c] sm:$0xf]
      %v2089 = vld [vmem:[%s2076 + $0x30] sm:$0xf]
      %v2090 = vld [vmem:[%s2076 + $0x34] sm:$0xf]
      %v2091 = vld [vmem:[%s2076 + $0x38] sm:$0xf]
      %v2092 = vld [vmem:[%s2076 + $0x3c] sm:$0xf]
      %v2109 = vunpack.c.l.b16 %v2077
      %v2110 = vunpack.c.l.b16 %v2078
      %v2111 = vunpack.c.l.b16 %v2079
      %v2112 = vunpack.c.l.b16 %v2080
      %v2113 = vunpack.c.l.b16 %v2081
      %v2114 = vunpack.c.l.b16 %v2082
      %v2115 = vunpack.c.l.b16 %v2083
      %v2116 = vunpack.c.l.b16 %v2084
      %v2117 = vunpack.c.l.b16 %v2085
      %v2118 = vunpack.c.l.b16 %v2086
      %v2119 = vunpack.c.l.b16 %v2087
      %v2120 = vunpack.c.l.b16 %v2088
      %v2121 = vunpack.c.l.b16 %v2089
      %v2122 = vunpack.c.l.b16 %v2090
      %v2123 = vunpack.c.l.b16 %v2091
      %v2124 = vunpack.c.l.b16 %v2092
      %v2125 = vpack.c.b16 %v2110, %v2109
      %v2126 = vpack.c.b16 %v2112, %v2111
      %v2127 = vpack.c.b16 %v2114, %v2113
      %v2128 = vpack.c.b16 %v2116, %v2115
      %v2129 = vpack.c.b16 %v2118, %v2117
      %v2130 = vpack.c.b16 %v2120, %v2119
      %v2131 = vpack.c.b16 %v2122, %v2121
      %v2132 = vpack.c.b16 %v2124, %v2123
      %2141 = vmatprep.subr.bf16.mxu0 0
      %2142 = vmatpush1.bf16.msra.mxu0 %v2125
      %2143 = vmatprep.subr.bf16.mxu0 0
      %2144 = vmatpush1.bf16.msra.mxu0 %v2126
      %2145 = vmatprep.subr.bf16.mxu0 0
      %2146 = vmatpush1.bf16.msra.mxu0 %v2127
      %2147 = vmatprep.subr.bf16.mxu0 0
      %2148 = vmatpush1.bf16.msra.mxu0 %v2128
      %2149 = vmatprep.subr.bf16.mxu0 0
      %2150 = vmatpush1.bf16.msra.mxu0 %v2129
      %2151 = vmatprep.subr.bf16.mxu0 0
      %2152 = vmatpush1.bf16.msra.mxu0 %v2130
      %2153 = vmatprep.subr.bf16.mxu0 0
      %2154 = vmatpush1.bf16.msra.mxu0 %v2131
      %2155 = vmatprep.subr.bf16.mxu0 0
      %2156 = vmatpush1.bf16.msra.mxu0 %v2132
      %2157 = vmatprep.subr.bf16.mxu0 0
      %2158 = vmatpush1.bf16.msra.mxu0 0
      %2159 = vmatprep.subr.bf16.mxu0 0
      %2160 = vmatpush1.bf16.msra.mxu0 0
      %2161 = vmatprep.subr.bf16.mxu0 0
      %2162 = vmatpush1.bf16.msra.mxu0 0
      %2163 = vmatprep.subr.bf16.mxu0 0
      %2164 = vmatpush1.bf16.msra.mxu0 0
      %2165 = vmatprep.subr.bf16.mxu0 0
      %2166 = vmatpush1.bf16.msra.mxu0 0
      %2167 = vmatprep.subr.bf16.mxu0 0
      %2168 = vmatpush1.bf16.msra.mxu0 0
      %2169 = vmatprep.subr.bf16.mxu0 0
      %2170 = vmatpush1.bf16.msra.mxu0 0
      %2171 = vmatprep.subr.bf16.mxu0 0
      %2172 = vmatpush1.bf16.msra.mxu0 0
      %2173 = vmatprep.mubr.bf16.mxu0 0
      %2174 = vmatmul.mubr.bf16.gmra.mrb[0].mxu0 %v2060
      %v2175 = vpop.f32.mrb[0].mxu0
      %v2176 = vadd.f32 0.0, %v2175
      %v2177 = vpop.f32.mrb[0].mxu0
      %v2178 = vpop.f32.mrb[0].mxu0
      %v2179 = vadd.f32 0.0, %v2178
      %v2180 = vpop.f32.mrb[0].mxu0
      %2181 = vmatprep.mubr.bf16.mxu0 0
      %2182 = vmatmul.mubr.bf16.gmra.mrb[0].mxu0 %v2061
      %v2183 = vpop.f32.mrb[0].mxu0
      %v2184 = vadd.f32 0.0, %v2183
      %v2185 = vpop.f32.mrb[0].mxu0
      %v2186 = vpop.f32.mrb[0].mxu0
      %v2187 = vadd.f32 0.0, %v2186
      %v2188 = vpop.f32.mrb[0].mxu0
      %2189 = vmatprep.mubr.bf16.mxu0 0
      %2190 = vmatmul.mubr.bf16.gmra.mrb[0].mxu0 %v2062
      %v2191 = vpop.f32.mrb[0].mxu0
      %v2192 = vadd.f32 0.0, %v2191
      %v2193 = vpop.f32.mrb[0].mxu0
      %v2194 = vpop.f32.mrb[0].mxu0
      %v2195 = vadd.f32 0.0, %v2194
      %v2196 = vpop.f32.mrb[0].mxu0
      %2197 = vmatprep.mubr.bf16.mxu0 0
      %2198 = vmatmul.mubr.bf16.gmra.mrb[0].mxu0 %v2063
      %v2199 = vpop.f32.mrb[0].mxu0
      %v2200 = vadd.f32 0.0, %v2199
      %v2201 = vpop.f32.mrb[0].mxu0
      %v2202 = vpop.f32.mrb[0].mxu0
      %v2203 = vadd.f32 0.0, %v2202
      %v2204 = vpop.f32.mrb[0].mxu0
      %2205 = vmatprep.mubr.bf16.mxu0 0
      %2206 = vmatmul.mubr.bf16.gmra.mrb[0].mxu0 %v2064
      %v2207 = vpop.f32.mrb[0].mxu0
      %v2208 = vadd.f32 0.0, %v2207
      %v2209 = vpop.f32.mrb[0].mxu0
      %v2210 = vpop.f32.mrb[0].mxu0
      %v2211 = vadd.f32 0.0, %v2210
      %v2212 = vpop.f32.mrb[0].mxu0
      %2213 = vmatprep.mubr.bf16.mxu0 0
      %2214 = vmatmul.mubr.bf16.gmra.mrb[0].mxu0 %v2065
      %v2215 = vpop.f32.mrb[0].mxu0
      %v2216 = vadd.f32 0.0, %v2215
      %v2217 = vpop.f32.mrb[0].mxu0
      %v2218 = vpop.f32.mrb[0].mxu0
      %v2219 = vadd.f32 0.0, %v2218
      %v2220 = vpop.f32.mrb[0].mxu0
      %2221 = vmatprep.mubr.bf16.mxu0 0
      %2222 = vmatmul.mubr.bf16.gmra.mrb[0].mxu0 %v2066
      %v2223 = vpop.f32.mrb[0].mxu0
      %v2224 = vadd.f32 0.0, %v2223
      %v2225 = vpop.f32.mrb[0].mxu0
      %v2226 = vpop.f32.mrb[0].mxu0
      %v2227 = vadd.f32 0.0, %v2226
      %v2228 = vpop.f32.mrb[0].mxu0
      %2229 = vmatprep.mubr.bf16.mxu0 0
      %2230 = vmatmul.mubr.bf16.gmra.mrb[0].mxu0 %v2067
      %v2231 = vpop.f32.mrb[0].mxu0
      %v2232 = vadd.f32 0.0, %v2231
      %v2233 = vpop.f32.mrb[0].mxu0
      %v2234 = vpop.f32.mrb[0].mxu0
      %v2235 = vadd.f32 0.0, %v2234
      %v2236 = vpop.f32.mrb[0].mxu0
      %2237 = vmatprep.mubr.bf16.mxu0 0
      %2238 = vmatmul.mubr.bf16.gmra.mrb[0].mxu0 %v2068
      %v2239 = vpop.f32.mrb[0].mxu0
      %v2240 = vadd.f32 0.0, %v2239
      %v2241 = vpop.f32.mrb[0].mxu0
      %v2242 = vpop.f32.mrb[0].mxu0
      %v2243 = vadd.f32 0.0, %v2242
      %v2244 = vpop.f32.mrb[0].mxu0
      %2245 = vmatprep.mubr.bf16.mxu0 0
      %2246 = vmatmul.mubr.bf16.gmra.mrb[0].mxu0 %v2069
      %v2247 = vpop.f32.mrb[0].mxu0
      %v2248 = vadd.f32 0.0, %v2247
      %v2249 = vpop.f32.mrb[0].mxu0
      %v2250 = vpop.f32.mrb[0].mxu0
      %v2251 = vadd.f32 0.0, %v2250
      %v2252 = vpop.f32.mrb[0].mxu0
      %2253 = vmatprep.mubr.bf16.mxu0 0
      %2254 = vmatmul.mubr.bf16.gmra.mrb[0].mxu0 %v2070
      %v2255 = vpop.f32.mrb[0].mxu0
      %v2256 = vadd.f32 0.0, %v2255
      %v2257 = vpop.f32.mrb[0].mxu0
      %v2258 = vpop.f32.mrb[0].mxu0
      %v2259 = vadd.f32 0.0, %v2258
      %v2260 = vpop.f32.mrb[0].mxu0
      %2261 = vmatprep.mubr.bf16.mxu0 0
      %2262 = vmatmul.mubr.bf16.gmra.mrb[0].mxu0 %v2071
      %v2263 = vpop.f32.mrb[0].mxu0
      %v2264 = vadd.f32 0.0, %v2263
      %v2265 = vpop.f32.mrb[0].mxu0
      %v2266 = vpop.f32.mrb[0].mxu0
      %v2267 = vadd.f32 0.0, %v2266
      %v2268 = vpop.f32.mrb[0].mxu0
      %2269 = vmatprep.mubr.bf16.mxu0 0
      %2270 = vmatmul.mubr.bf16.gmra.mrb[0].mxu0 %v2072
      %v2271 = vpop.f32.mrb[0].mxu0
      %v2272 = vadd.f32 0.0, %v2271
      %v2273 = vpop.f32.mrb[0].mxu0
      %v2274 = vpop.f32.mrb[0].mxu0
      %v2275 = vadd.f32 0.0, %v2274
      %v2276 = vpop.f32.mrb[0].mxu0
      %2277 = vmatprep.mubr.bf16.mxu0 0
      %2278 = vmatmul.mubr.bf16.gmra.mrb[0].mxu0 %v2073
      %v2279 = vpop.f32.mrb[0].mxu0
      %v2280 = vadd.f32 0.0, %v2279
      %v2281 = vpop.f32.mrb[0].mxu0
      %v2282 = vpop.f32.mrb[0].mxu0
      %v2283 = vadd.f32 0.0, %v2282
      %v2284 = vpop.f32.mrb[0].mxu0
      %2285 = vmatprep.mubr.bf16.mxu0 0
      %2286 = vmatmul.mubr.bf16.gmra.mrb[0].mxu0 %v2074
      %v2287 = vpop.f32.mrb[0].mxu0
      %v2288 = vadd.f32 0.0, %v2287
      %v2289 = vpop.f32.mrb[0].mxu0
      %v2290 = vpop.f32.mrb[0].mxu0
      %v2291 = vadd.f32 0.0, %v2290
      %v2292 = vpop.f32.mrb[0].mxu0
      %2293 = vmatprep.mubr.bf16.mxu0 0
      %2294 = vmatmul.mubr.bf16.gmra.mrb[0].mxu0 %v2075
      %v2295 = vpop.f32.mrb[0].mxu0
      %v2296 = vadd.f32 0.0, %v2295
      %v2297 = vpop.f32.mrb[0].mxu0
      %v2298 = vpop.f32.mrb[0].mxu0
      %v2299 = vadd.f32 0.0, %v2298
      %v2300 = vpop.f32.mrb[0].mxu0
      %2301 = vdwg.mxu0
      %v2302 = vadd.f32 %v1964, %v2176
      %v2303 = vadd.f32 %v1965, %v2179
      %v2304 = vadd.f32 %v1966, %v2184
      %v2305 = vadd.f32 %v1967, %v2187
      %v2306 = vadd.f32 %v1968, %v2192
      %v2307 = vadd.f32 %v1969, %v2195
      %v2308 = vadd.f32 %v1970, %v2200
      %v2309 = vadd.f32 %v1971, %v2203
      %v2310 = vadd.f32 %v1972, %v2208
      %v2311 = vadd.f32 %v1973, %v2211
      %v2312 = vadd.f32 %v1974, %v2216
      %v2313 = vadd.f32 %v1975, %v2219
      %v2314 = vadd.f32 %v1976, %v2224
      %v2315 = vadd.f32 %v1977, %v2227
      %v2316 = vadd.f32 %v1978, %v2232
      %v2317 = vadd.f32 %v1979, %v2235
      %v2318 = vadd.f32 %v1980, %v2240
      %v2319 = vadd.f32 %v1981, %v2243
      %v2320 = vadd.f32 %v1982, %v2248
      %v2321 = vadd.f32 %v1983, %v2251
      %v2322 = vadd.f32 %v1984, %v2256
      %v2323 = vadd.f32 %v1985, %v2259
      %v2324 = vadd.f32 %v1986, %v2264
      %v2325 = vadd.f32 %v1987, %v2267
      %v2326 = vadd.f32 %v1988, %v2272
      %v2327 = vadd.f32 %v1989, %v2275
      %v2328 = vadd.f32 %v1990, %v2280
      %v2329 = vadd.f32 %v1991, %v2283
      %v2330 = vadd.f32 %v1992, %v2288
      %v2331 = vadd.f32 %v1993, %v2291
      %v2332 = vadd.f32 %v1994, %v2296
      %v2333 = vadd.f32 %v1995, %v2299
      %v2334 = vld [vmem:[#allocation2 + $0x18] sm:$0xff]
      %v2335 = vld [vmem:[#allocation2 + $0x20] sm:$0xff]
      %v2336 = vld [vmem:[#allocation2 + $0x28] sm:$0xff]
      %v2337 = vld [vmem:[#allocation2 + $0x30] sm:$0xff]
      %v2338 = vld [vmem:[#allocation2 + $0x38] sm:$0xff]
      %v2339 = vld [vmem:[#allocation2 + $0x40] sm:$0xff]
      %v2340 = vld [vmem:[#allocation2 + $0x48] sm:$0xff]
      %v2341 = vld [vmem:[#allocation2 + $0x50] sm:$0xff]
      %v2342 = vld [vmem:[#allocation2 + $0x58] sm:$0xff]
      %v2343 = vld [vmem:[#allocation2 + $0x60] sm:$0xff]
      %v2344 = vld [vmem:[#allocation2 + $0x68] sm:$0xff]
      %v2345 = vld [vmem:[#allocation2 + $0x70] sm:$0xff]
      %v2346 = vld [vmem:[#allocation2 + $0x78] sm:$0xff]
      %v2347 = vld [vmem:[#allocation2 + $0x80] sm:$0xff]
      %v2348 = vld [vmem:[#allocation2 + $0x88] sm:$0xff]
      %v2349 = vld [vmem:[#allocation2 + $0x90] sm:$0xff]
      %v2350 = vld [vmem:[#allocation2 + $0x98] sm:$0xff]
      %v2351 = vld [vmem:[#allocation2 + $0xa0] sm:$0xff]
      %v2352 = vld [vmem:[#allocation2 + $0xa8] sm:$0xff]
      %v2353 = vld [vmem:[#allocation2 + $0xb0] sm:$0xff]
      %v2354 = vld [vmem:[#allocation2 + $0xb8] sm:$0xff]
      %v2355 = vld [vmem:[#allocation2 + $0xc0] sm:$0xff]
      %v2356 = vld [vmem:[#allocation2 + $0xc8] sm:$0xff]
      %v2357 = vld [vmem:[#allocation2 + $0xd0] sm:$0xff]
      %v2358 = vld [vmem:[#allocation2 + $0xd8] sm:$0xff]
      %v2359 = vld [vmem:[#allocation2 + $0xe0] sm:$0xff]
      %v2360 = vld [vmem:[#allocation2 + $0xe8] sm:$0xff]
      %v2361 = vld [vmem:[#allocation2 + $0xf0] sm:$0xff]
      %v2362 = vld [vmem:[#allocation2 + $0xf8] sm:$0xff]
      %v2363 = vld [vmem:[#allocation2 + $0x100] sm:$0xff]
      %v2364 = vld [vmem:[#allocation2 + $0x108] sm:$0xff]
      %v2365 = vld [vmem:[#allocation2 + $0x110] sm:$0xff]
      %v2366 = vpack.c.bf16 %v2335, %v2334
      %v2367 = vpack.c.bf16 %v2337, %v2336
      %v2368 = vpack.c.bf16 %v2339, %v2338
      %v2369 = vpack.c.bf16 %v2341, %v2340
      %v2370 = vpack.c.bf16 %v2343, %v2342
      %v2371 = vpack.c.bf16 %v2345, %v2344
      %v2372 = vpack.c.bf16 %v2347, %v2346
      %v2373 = vpack.c.bf16 %v2349, %v2348
      %v2374 = vpack.c.bf16 %v2351, %v2350
      %v2375 = vpack.c.bf16 %v2353, %v2352
      %v2376 = vpack.c.bf16 %v2355, %v2354
      %v2377 = vpack.c.bf16 %v2357, %v2356
      %v2378 = vpack.c.bf16 %v2359, %v2358
      %v2379 = vpack.c.bf16 %v2361, %v2360
      %v2380 = vpack.c.bf16 %v2363, %v2362
      %v2381 = vpack.c.bf16 %v2365, %v2364
      %s2382 = scalar_lea.vmem %s3, 256
      %v2383 = vld [vmem:[%s2382] sm:$0xf]
      %v2384 = vld [vmem:[%s2382 + $0x4] sm:$0xf]
      %v2385 = vld [vmem:[%s2382 + $0x8] sm:$0xf]
      %v2386 = vld [vmem:[%s2382 + $0xc] sm:$0xf]
      %v2387 = vld [vmem:[%s2382 + $0x10] sm:$0xf]
      %v2388 = vld [vmem:[%s2382 + $0x14] sm:$0xf]
      %v2389 = vld [vmem:[%s2382 + $0x18] sm:$0xf]
      %v2390 = vld [vmem:[%s2382 + $0x1c] sm:$0xf]
      %v2391 = vld [vmem:[%s2382 + $0x20] sm:$0xf]
      %v2392 = vld [vmem:[%s2382 + $0x24] sm:$0xf]
      %v2393 = vld [vmem:[%s2382 + $0x28] sm:$0xf]
      %v2394 = vld [vmem:[%s2382 + $0x2c] sm:$0xf]
      %v2395 = vld [vmem:[%s2382 + $0x30] sm:$0xf]
      %v2396 = vld [vmem:[%s2382 + $0x34] sm:$0xf]
      %v2397 = vld [vmem:[%s2382 + $0x38] sm:$0xf]
      %v2398 = vld [vmem:[%s2382 + $0x3c] sm:$0xf]
      %v2415 = vunpack.c.l.b16 %v2383
      %v2416 = vunpack.c.l.b16 %v2384
      %v2417 = vunpack.c.l.b16 %v2385
      %v2418 = vunpack.c.l.b16 %v2386
      %v2419 = vunpack.c.l.b16 %v2387
      %v2420 = vunpack.c.l.b16 %v2388
      %v2421 = vunpack.c.l.b16 %v2389
      %v2422 = vunpack.c.l.b16 %v2390
      %v2423 = vunpack.c.l.b16 %v2391
      %v2424 = vunpack.c.l.b16 %v2392
      %v2425 = vunpack.c.l.b16 %v2393
      %v2426 = vunpack.c.l.b16 %v2394
      %v2427 = vunpack.c.l.b16 %v2395
      %v2428 = vunpack.c.l.b16 %v2396
      %v2429 = vunpack.c.l.b16 %v2397
      %v2430 = vunpack.c.l.b16 %v2398
      %v2431 = vpack.c.b16 %v2416, %v2415
      %v2432 = vpack.c.b16 %v2418, %v2417
      %v2433 = vpack.c.b16 %v2420, %v2419
      %v2434 = vpack.c.b16 %v2422, %v2421
      %v2435 = vpack.c.b16 %v2424, %v2423
      %v2436 = vpack.c.b16 %v2426, %v2425
      %v2437 = vpack.c.b16 %v2428, %v2427
      %v2438 = vpack.c.b16 %v2430, %v2429
      %2447 = vmatprep.subr.bf16.mxu0 0
      %2448 = vmatpush1.bf16.msra.mxu0 %v2431
      %2449 = vmatprep.subr.bf16.mxu0 0
      %2450 = vmatpush1.bf16.msra.mxu0 %v2432
      %2451 = vmatprep.subr.bf16.mxu0 0
      %2452 = vmatpush1.bf16.msra.mxu0 %v2433
      %2453 = vmatprep.subr.bf16.mxu0 0
      %2454 = vmatpush1.bf16.msra.mxu0 %v2434
      %2455 = vmatprep.subr.bf16.mxu0 0
      %2456 = vmatpush1.bf16.msra.mxu0 %v2435
      %2457 = vmatprep.subr.bf16.mxu0 0
      %2458 = vmatpush1.bf16.msra.mxu0 %v2436
      %2459 = vmatprep.subr.bf16.mxu0 0
      %2460 = vmatpush1.bf16.msra.mxu0 %v2437
      %2461 = vmatprep.subr.bf16.mxu0 0
      %2462 = vmatpush1.bf16.msra.mxu0 %v2438
      %2463 = vmatprep.subr.bf16.mxu0 0
      %2464 = vmatpush1.bf16.msra.mxu0 0
      %2465 = vmatprep.subr.bf16.mxu0 0
      %2466 = vmatpush1.bf16.msra.mxu0 0
      %2467 = vmatprep.subr.bf16.mxu0 0
      %2468 = vmatpush1.bf16.msra.mxu0 0
      %2469 = vmatprep.subr.bf16.mxu0 0
      %2470 = vmatpush1.bf16.msra.mxu0 0
      %2471 = vmatprep.subr.bf16.mxu0 0
      %2472 = vmatpush1.bf16.msra.mxu0 0
      %2473 = vmatprep.subr.bf16.mxu0 0
      %2474 = vmatpush1.bf16.msra.mxu0 0
      %2475 = vmatprep.subr.bf16.mxu0 0
      %2476 = vmatpush1.bf16.msra.mxu0 0
      %2477 = vmatprep.subr.bf16.mxu0 0
      %2478 = vmatpush1.bf16.msra.mxu0 0
      %2479 = vmatprep.mubr.bf16.mxu0 0
      %2480 = vmatmul.mubr.bf16.gmra.mrb[0].mxu0 %v2366
      %v2481 = vpop.f32.mrb[0].mxu0
      %v2482 = vadd.f32 0.0, %v2481
      %v2483 = vpop.f32.mrb[0].mxu0
      %v2484 = vpop.f32.mrb[0].mxu0
      %v2485 = vadd.f32 0.0, %v2484
      %v2486 = vpop.f32.mrb[0].mxu0
      %2487 = vmatprep.mubr.bf16.mxu0 0
      %2488 = vmatmul.mubr.bf16.gmra.mrb[0].mxu0 %v2367
      %v2489 = vpop.f32.mrb[0].mxu0
      %v2490 = vadd.f32 0.0, %v2489
      %v2491 = vpop.f32.mrb[0].mxu0
      %v2492 = vpop.f32.mrb[0].mxu0
      %v2493 = vadd.f32 0.0, %v2492
      %v2494 = vpop.f32.mrb[0].mxu0
      %2495 = vmatprep.mubr.bf16.mxu0 0
      %2496 = vmatmul.mubr.bf16.gmra.mrb[0].mxu0 %v2368
      %v2497 = vpop.f32.mrb[0].mxu0
      %v2498 = vadd.f32 0.0, %v2497
      %v2499 = vpop.f32.mrb[0].mxu0
      %v2500 = vpop.f32.mrb[0].mxu0
      %v2501 = vadd.f32 0.0, %v2500
      %v2502 = vpop.f32.mrb[0].mxu0
      %2503 = vmatprep.mubr.bf16.mxu0 0
      %2504 = vmatmul.mubr.bf16.gmra.mrb[0].mxu0 %v2369
      %v2505 = vpop.f32.mrb[0].mxu0
      %v2506 = vadd.f32 0.0, %v2505
      %v2507 = vpop.f32.mrb[0].mxu0
      %v2508 = vpop.f32.mrb[0].mxu0
      %v2509 = vadd.f32 0.0, %v2508
      %v2510 = vpop.f32.mrb[0].mxu0
      %2511 = vmatprep.mubr.bf16.mxu0 0
      %2512 = vmatmul.mubr.bf16.gmra.mrb[0].mxu0 %v2370
      %v2513 = vpop.f32.mrb[0].mxu0
      %v2514 = vadd.f32 0.0, %v2513
      %v2515 = vpop.f32.mrb[0].mxu0
      %v2516 = vpop.f32.mrb[0].mxu0
      %v2517 = vadd.f32 0.0, %v2516
      %v2518 = vpop.f32.mrb[0].mxu0
      %2519 = vmatprep.mubr.bf16.mxu0 0
      %2520 = vmatmul.mubr.bf16.gmra.mrb[0].mxu0 %v2371
      %v2521 = vpop.f32.mrb[0].mxu0
      %v2522 = vadd.f32 0.0, %v2521
      %v2523 = vpop.f32.mrb[0].mxu0
      %v2524 = vpop.f32.mrb[0].mxu0
      %v2525 = vadd.f32 0.0, %v2524
      %v2526 = vpop.f32.mrb[0].mxu0
      %2527 = vmatprep.mubr.bf16.mxu0 0
      %2528 = vmatmul.mubr.bf16.gmra.mrb[0].mxu0 %v2372
      %v2529 = vpop.f32.mrb[0].mxu0
      %v2530 = vadd.f32 0.0, %v2529
      %v2531 = vpop.f32.mrb[0].mxu0
      %v2532 = vpop.f32.mrb[0].mxu0
      %v2533 = vadd.f32 0.0, %v2532
      %v2534 = vpop.f32.mrb[0].mxu0
      %2535 = vmatprep.mubr.bf16.mxu0 0
      %2536 = vmatmul.mubr.bf16.gmra.mrb[0].mxu0 %v2373
      %v2537 = vpop.f32.mrb[0].mxu0
      %v2538 = vadd.f32 0.0, %v2537
      %v2539 = vpop.f32.mrb[0].mxu0
      %v2540 = vpop.f32.mrb[0].mxu0
      %v2541 = vadd.f32 0.0, %v2540
      %v2542 = vpop.f32.mrb[0].mxu0
      %2543 = vmatprep.mubr.bf16.mxu0 0
      %2544 = vmatmul.mubr.bf16.gmra.mrb[0].mxu0 %v2374
      %v2545 = vpop.f32.mrb[0].mxu0
      %v2546 = vadd.f32 0.0, %v2545
      %v2547 = vpop.f32.mrb[0].mxu0
      %v2548 = vpop.f32.mrb[0].mxu0
      %v2549 = vadd.f32 0.0, %v2548
      %v2550 = vpop.f32.mrb[0].mxu0
      %2551 = vmatprep.mubr.bf16.mxu0 0
      %2552 = vmatmul.mubr.bf16.gmra.mrb[0].mxu0 %v2375
      %v2553 = vpop.f32.mrb[0].mxu0
      %v2554 = vadd.f32 0.0, %v2553
      %v2555 = vpop.f32.mrb[0].mxu0
      %v2556 = vpop.f32.mrb[0].mxu0
      %v2557 = vadd.f32 0.0, %v2556
      %v2558 = vpop.f32.mrb[0].mxu0
      %2559 = vmatprep.mubr.bf16.mxu0 0
      %2560 = vmatmul.mubr.bf16.gmra.mrb[0].mxu0 %v2376
      %v2561 = vpop.f32.mrb[0].mxu0
      %v2562 = vadd.f32 0.0, %v2561
      %v2563 = vpop.f32.mrb[0].mxu0
      %v2564 = vpop.f32.mrb[0].mxu0
      %v2565 = vadd.f32 0.0, %v2564
      %v2566 = vpop.f32.mrb[0].mxu0
      %2567 = vmatprep.mubr.bf16.mxu0 0
      %2568 = vmatmul.mubr.bf16.gmra.mrb[0].mxu0 %v2377
      %v2569 = vpop.f32.mrb[0].mxu0
      %v2570 = vadd.f32 0.0, %v2569
      %v2571 = vpop.f32.mrb[0].mxu0
      %v2572 = vpop.f32.mrb[0].mxu0
      %v2573 = vadd.f32 0.0, %v2572
      %v2574 = vpop.f32.mrb[0].mxu0
      %2575 = vmatprep.mubr.bf16.mxu0 0
      %2576 = vmatmul.mubr.bf16.gmra.mrb[0].mxu0 %v2378
      %v2577 = vpop.f32.mrb[0].mxu0
      %v2578 = vadd.f32 0.0, %v2577
      %v2579 = vpop.f32.mrb[0].mxu0
      %v2580 = vpop.f32.mrb[0].mxu0
      %v2581 = vadd.f32 0.0, %v2580
      %v2582 = vpop.f32.mrb[0].mxu0
      %2583 = vmatprep.mubr.bf16.mxu0 0
      %2584 = vmatmul.mubr.bf16.gmra.mrb[0].mxu0 %v2379
      %v2585 = vpop.f32.mrb[0].mxu0
      %v2586 = vadd.f32 0.0, %v2585
      %v2587 = vpop.f32.mrb[0].mxu0
      %v2588 = vpop.f32.mrb[0].mxu0
      %v2589 = vadd.f32 0.0, %v2588
      %v2590 = vpop.f32.mrb[0].mxu0
      %2591 = vmatprep.mubr.bf16.mxu0 0
      %2592 = vmatmul.mubr.bf16.gmra.mrb[0].mxu0 %v2380
      %v2593 = vpop.f32.mrb[0].mxu0
      %v2594 = vadd.f32 0.0, %v2593
      %v2595 = vpop.f32.mrb[0].mxu0
      %v2596 = vpop.f32.mrb[0].mxu0
      %v2597 = vadd.f32 0.0, %v2596
      %v2598 = vpop.f32.mrb[0].mxu0
      %2599 = vmatprep.mubr.bf16.mxu0 0
      %2600 = vmatmul.mubr.bf16.gmra.mrb[0].mxu0 %v2381
      %v2601 = vpop.f32.mrb[0].mxu0
      %v2602 = vadd.f32 0.0, %v2601
      %v2603 = vpop.f32.mrb[0].mxu0
      %v2604 = vpop.f32.mrb[0].mxu0
      %v2605 = vadd.f32 0.0, %v2604
      %v2606 = vpop.f32.mrb[0].mxu0
      %2607 = vdwg.mxu0
      %v2608 = vadd.f32 %v2302, %v2482
      %v2609 = vadd.f32 %v2303, %v2485
      %v2610 = vadd.f32 %v2304, %v2490
      %v2611 = vadd.f32 %v2305, %v2493
      %v2612 = vadd.f32 %v2306, %v2498
      %v2613 = vadd.f32 %v2307, %v2501
      %v2614 = vadd.f32 %v2308, %v2506
      %v2615 = vadd.f32 %v2309, %v2509
      %v2616 = vadd.f32 %v2310, %v2514
      %v2617 = vadd.f32 %v2311, %v2517
      %v2618 = vadd.f32 %v2312, %v2522
      %v2619 = vadd.f32 %v2313, %v2525
      %v2620 = vadd.f32 %v2314, %v2530
      %v2621 = vadd.f32 %v2315, %v2533
      %v2622 = vadd.f32 %v2316, %v2538
      %v2623 = vadd.f32 %v2317, %v2541
      %v2624 = vadd.f32 %v2318, %v2546
      %v2625 = vadd.f32 %v2319, %v2549
      %v2626 = vadd.f32 %v2320, %v2554
      %v2627 = vadd.f32 %v2321, %v2557
      %v2628 = vadd.f32 %v2322, %v2562
      %v2629 = vadd.f32 %v2323, %v2565
      %v2630 = vadd.f32 %v2324, %v2570
      %v2631 = vadd.f32 %v2325, %v2573
      %v2632 = vadd.f32 %v2326, %v2578
      %v2633 = vadd.f32 %v2327, %v2581
      %v2634 = vadd.f32 %v2328, %v2586
      %v2635 = vadd.f32 %v2329, %v2589
      %v2636 = vadd.f32 %v2330, %v2594
      %v2637 = vadd.f32 %v2331, %v2597
      %v2638 = vadd.f32 %v2332, %v2602
      %v2639 = vadd.f32 %v2333, %v2605
      %v2640 = vld [vmem:[#allocation2 + $0x19] sm:$0xff]
      %v2641 = vld [vmem:[#allocation2 + $0x21] sm:$0xff]
      %v2642 = vld [vmem:[#allocation2 + $0x29] sm:$0xff]
      %v2643 = vld [vmem:[#allocation2 + $0x31] sm:$0xff]
      %v2644 = vld [vmem:[#allocation2 + $0x39] sm:$0xff]
      %v2645 = vld [vmem:[#allocation2 + $0x41] sm:$0xff]
      %v2646 = vld [vmem:[#allocation2 + $0x49] sm:$0xff]
      %v2647 = vld [vmem:[#allocation2 + $0x51] sm:$0xff]
      %v2648 = vld [vmem:[#allocation2 + $0x59] sm:$0xff]
      %v2649 = vld [vmem:[#allocation2 + $0x61] sm:$0xff]
      %v2650 = vld [vmem:[#allocation2 + $0x69] sm:$0xff]
      %v2651 = vld [vmem:[#allocation2 + $0x71] sm:$0xff]
      %v2652 = vld [vmem:[#allocation2 + $0x79] sm:$0xff]
      %v2653 = vld [vmem:[#allocation2 + $0x81] sm:$0xff]
      %v2654 = vld [vmem:[#allocation2 + $0x89] sm:$0xff]
      %v2655 = vld [vmem:[#allocation2 + $0x91] sm:$0xff]
      %v2656 = vld [vmem:[#allocation2 + $0x99] sm:$0xff]
      %v2657 = vld [vmem:[#allocation2 + $0xa1] sm:$0xff]
      %v2658 = vld [vmem:[#allocation2 + $0xa9] sm:$0xff]
      %v2659 = vld [vmem:[#allocation2 + $0xb1] sm:$0xff]
      %v2660 = vld [vmem:[#allocation2 + $0xb9] sm:$0xff]
      %v2661 = vld [vmem:[#allocation2 + $0xc1] sm:$0xff]
      %v2662 = vld [vmem:[#allocation2 + $0xc9] sm:$0xff]
      %v2663 = vld [vmem:[#allocation2 + $0xd1] sm:$0xff]
      %v2664 = vld [vmem:[#allocation2 + $0xd9] sm:$0xff]
      %v2665 = vld [vmem:[#allocation2 + $0xe1] sm:$0xff]
      %v2666 = vld [vmem:[#allocation2 + $0xe9] sm:$0xff]
      %v2667 = vld [vmem:[#allocation2 + $0xf1] sm:$0xff]
      %v2668 = vld [vmem:[#allocation2 + $0xf9] sm:$0xff]
      %v2669 = vld [vmem:[#allocation2 + $0x101] sm:$0xff]
      %v2670 = vld [vmem:[#allocation2 + $0x109] sm:$0xff]
      %v2671 = vld [vmem:[#allocation2 + $0x111] sm:$0xff]
      %v2672 = vsel %vm1658, %v2640, 0.0
      %v2673 = vsel %vm1659, %v2641, 0.0
      %v2674 = vsel %vm1660, %v2642, 0.0
      %v2675 = vsel %vm1661, %v2643, 0.0
      %v2676 = vsel %vm1662, %v2644, 0.0
      %v2677 = vsel %vm1663, %v2645, 0.0
      %v2678 = vsel %vm1664, %v2646, 0.0
      %v2679 = vsel %vm1665, %v2647, 0.0
      %v2680 = vsel %vm1666, %v2648, 0.0
      %v2681 = vsel %vm1667, %v2649, 0.0
      %v2682 = vsel %vm1668, %v2650, 0.0
      %v2683 = vsel %vm1669, %v2651, 0.0
      %v2684 = vsel %vm1670, %v2652, 0.0
      %v2685 = vsel %vm1671, %v2653, 0.0
      %v2686 = vsel %vm1672, %v2654, 0.0
      %v2687 = vsel %vm1673, %v2655, 0.0
      %v2688 = vsel %vm1674, %v2656, 0.0
      %v2689 = vsel %vm1675, %v2657, 0.0
      %v2690 = vsel %vm1676, %v2658, 0.0
      %v2691 = vsel %vm1677, %v2659, 0.0
      %v2692 = vsel %vm1678, %v2660, 0.0
      %v2693 = vsel %vm1679, %v2661, 0.0
      %v2694 = vsel %vm1680, %v2662, 0.0
      %v2695 = vsel %vm1681, %v2663, 0.0
      %v2696 = vsel %vm1682, %v2664, 0.0
      %v2697 = vsel %vm1683, %v2665, 0.0
      %v2698 = vsel %vm1684, %v2666, 0.0
      %v2699 = vsel %vm1685, %v2667, 0.0
      %v2700 = vsel %vm1686, %v2668, 0.0
      %v2701 = vsel %vm1687, %v2669, 0.0
      %v2702 = vsel %vm1688, %v2670, 0.0
      %v2703 = vsel %vm1689, %v2671, 0.0
      %v2704 = vpack.c.bf16 %v2673, %v2672
      %v2705 = vpack.c.bf16 %v2675, %v2674
      %v2706 = vpack.c.bf16 %v2677, %v2676
      %v2707 = vpack.c.bf16 %v2679, %v2678
      %v2708 = vpack.c.bf16 %v2681, %v2680
      %v2709 = vpack.c.bf16 %v2683, %v2682
      %v2710 = vpack.c.bf16 %v2685, %v2684
      %v2711 = vpack.c.bf16 %v2687, %v2686
      %v2712 = vpack.c.bf16 %v2689, %v2688
      %v2713 = vpack.c.bf16 %v2691, %v2690
      %v2714 = vpack.c.bf16 %v2693, %v2692
      %v2715 = vpack.c.bf16 %v2695, %v2694
      %v2716 = vpack.c.bf16 %v2697, %v2696
      %v2717 = vpack.c.bf16 %v2699, %v2698
      %v2718 = vpack.c.bf16 %v2701, %v2700
      %v2719 = vpack.c.bf16 %v2703, %v2702
      %s2720 = scalar_lea.vmem %s3, 320
      %v2721 = vld [vmem:[%s2720] sm:$0xf]
      %v2722 = vld [vmem:[%s2720 + $0x4] sm:$0xf]
      %v2723 = vld [vmem:[%s2720 + $0x8] sm:$0xf]
      %v2724 = vld [vmem:[%s2720 + $0xc] sm:$0xf]
      %v2725 = vld [vmem:[%s2720 + $0x10] sm:$0xf]
      %v2726 = vld [vmem:[%s2720 + $0x14] sm:$0xf]
      %v2727 = vld [vmem:[%s2720 + $0x18] sm:$0xf]
      %v2728 = vld [vmem:[%s2720 + $0x1c] sm:$0xf]
      %v2729 = vld [vmem:[%s2720 + $0x20] sm:$0xf]
      %v2730 = vld [vmem:[%s2720 + $0x24] sm:$0xf]
      %v2731 = vld [vmem:[%s2720 + $0x28] sm:$0xf]
      %v2732 = vld [vmem:[%s2720 + $0x2c] sm:$0xf]
      %v2733 = vld [vmem:[%s2720 + $0x30] sm:$0xf]
      %v2734 = vld [vmem:[%s2720 + $0x34] sm:$0xf]
      %v2735 = vld [vmem:[%s2720 + $0x38] sm:$0xf]
      %v2736 = vld [vmem:[%s2720 + $0x3c] sm:$0xf]
      %v2753 = vunpack.c.l.b16 %v2721
      %v2754 = vunpack.c.l.b16 %v2722
      %v2755 = vunpack.c.l.b16 %v2723
      %v2756 = vunpack.c.l.b16 %v2724
      %v2757 = vunpack.c.l.b16 %v2725
      %v2758 = vunpack.c.l.b16 %v2726
      %v2759 = vunpack.c.l.b16 %v2727
      %v2760 = vunpack.c.l.b16 %v2728
      %v2761 = vunpack.c.l.b16 %v2729
      %v2762 = vunpack.c.l.b16 %v2730
      %v2763 = vunpack.c.l.b16 %v2731
      %v2764 = vunpack.c.l.b16 %v2732
      %v2765 = vunpack.c.l.b16 %v2733
      %v2766 = vunpack.c.l.b16 %v2734
      %v2767 = vunpack.c.l.b16 %v2735
      %v2768 = vunpack.c.l.b16 %v2736
      %v2769 = vpack.c.b16 %v2754, %v2753
      %v2770 = vpack.c.b16 %v2756, %v2755
      %v2771 = vpack.c.b16 %v2758, %v2757
      %v2772 = vpack.c.b16 %v2760, %v2759
      %v2773 = vpack.c.b16 %v2762, %v2761
      %v2774 = vpack.c.b16 %v2764, %v2763
      %v2775 = vpack.c.b16 %v2766, %v2765
      %v2776 = vpack.c.b16 %v2768, %v2767
      %2785 = vmatprep.subr.bf16.mxu0 0
      %2786 = vmatpush1.bf16.msra.mxu0 %v2769
      %2787 = vmatprep.subr.bf16.mxu0 0
      %2788 = vmatpush1.bf16.msra.mxu0 %v2770
      %2789 = vmatprep.subr.bf16.mxu0 0
      %2790 = vmatpush1.bf16.msra.mxu0 %v2771
      %2791 = vmatprep.subr.bf16.mxu0 0
      %2792 = vmatpush1.bf16.msra.mxu0 %v2772
      %2793 = vmatprep.subr.bf16.mxu0 0
      %2794 = vmatpush1.bf16.msra.mxu0 %v2773
      %2795 = vmatprep.subr.bf16.mxu0 0
      %2796 = vmatpush1.bf16.msra.mxu0 %v2774
      %2797 = vmatprep.subr.bf16.mxu0 0
      %2798 = vmatpush1.bf16.msra.mxu0 %v2775
      %2799 = vmatprep.subr.bf16.mxu0 0
      %2800 = vmatpush1.bf16.msra.mxu0 %v2776
      %2801 = vmatprep.subr.bf16.mxu0 0
      %2802 = vmatpush1.bf16.msra.mxu0 0
      %2803 = vmatprep.subr.bf16.mxu0 0
      %2804 = vmatpush1.bf16.msra.mxu0 0
      %2805 = vmatprep.subr.bf16.mxu0 0
      %2806 = vmatpush1.bf16.msra.mxu0 0
      %2807 = vmatprep.subr.bf16.mxu0 0
      %2808 = vmatpush1.bf16.msra.mxu0 0
      %2809 = vmatprep.subr.bf16.mxu0 0
      %2810 = vmatpush1.bf16.msra.mxu0 0
      %2811 = vmatprep.subr.bf16.mxu0 0
      %2812 = vmatpush1.bf16.msra.mxu0 0
      %2813 = vmatprep.subr.bf16.mxu0 0
      %2814 = vmatpush1.bf16.msra.mxu0 0
      %2815 = vmatprep.subr.bf16.mxu0 0
      %2816 = vmatpush1.bf16.msra.mxu0 0
      %2817 = vmatprep.mubr.bf16.mxu0 0
      %2818 = vmatmul.mubr.bf16.gmra.mrb[0].mxu0 %v2704
      %v2819 = vpop.f32.mrb[0].mxu0
      %v2820 = vadd.f32 0.0, %v2819
      %v2821 = vpop.f32.mrb[0].mxu0
      %v2822 = vpop.f32.mrb[0].mxu0
      %v2823 = vadd.f32 0.0, %v2822
      %v2824 = vpop.f32.mrb[0].mxu0
      %2825 = vmatprep.mubr.bf16.mxu0 0
      %2826 = vmatmul.mubr.bf16.gmra.mrb[0].mxu0 %v2705
      %v2827 = vpop.f32.mrb[0].mxu0
      %v2828 = vadd.f32 0.0, %v2827
      %v2829 = vpop.f32.mrb[0].mxu0
      %v2830 = vpop.f32.mrb[0].mxu0
      %v2831 = vadd.f32 0.0, %v2830
      %v2832 = vpop.f32.mrb[0].mxu0
      %2833 = vmatprep.mubr.bf16.mxu0 0
      %2834 = vmatmul.mubr.bf16.gmra.mrb[0].mxu0 %v2706
      %v2835 = vpop.f32.mrb[0].mxu0
      %v2836 = vadd.f32 0.0, %v2835
      %v2837 = vpop.f32.mrb[0].mxu0
      %v2838 = vpop.f32.mrb[0].mxu0
      %v2839 = vadd.f32 0.0, %v2838
      %v2840 = vpop.f32.mrb[0].mxu0
      %2841 = vmatprep.mubr.bf16.mxu0 0
      %2842 = vmatmul.mubr.bf16.gmra.mrb[0].mxu0 %v2707
      %v2843 = vpop.f32.mrb[0].mxu0
      %v2844 = vadd.f32 0.0, %v2843
      %v2845 = vpop.f32.mrb[0].mxu0
      %v2846 = vpop.f32.mrb[0].mxu0
      %v2847 = vadd.f32 0.0, %v2846
      %v2848 = vpop.f32.mrb[0].mxu0
      %2849 = vmatprep.mubr.bf16.mxu0 0
      %2850 = vmatmul.mubr.bf16.gmra.mrb[0].mxu0 %v2708
      %v2851 = vpop.f32.mrb[0].mxu0
      %v2852 = vadd.f32 0.0, %v2851
      %v2853 = vpop.f32.mrb[0].mxu0
      %v2854 = vpop.f32.mrb[0].mxu0
      %v2855 = vadd.f32 0.0, %v2854
      %v2856 = vpop.f32.mrb[0].mxu0
      %2857 = vmatprep.mubr.bf16.mxu0 0
      %2858 = vmatmul.mubr.bf16.gmra.mrb[0].mxu0 %v2709
      %v2859 = vpop.f32.mrb[0].mxu0
      %v2860 = vadd.f32 0.0, %v2859
      %v2861 = vpop.f32.mrb[0].mxu0
      %v2862 = vpop.f32.mrb[0].mxu0
      %v2863 = vadd.f32 0.0, %v2862
      %v2864 = vpop.f32.mrb[0].mxu0
      %2865 = vmatprep.mubr.bf16.mxu0 0
      %2866 = vmatmul.mubr.bf16.gmra.mrb[0].mxu0 %v2710
      %v2867 = vpop.f32.mrb[0].mxu0
      %v2868 = vadd.f32 0.0, %v2867
      %v2869 = vpop.f32.mrb[0].mxu0
      %v2870 = vpop.f32.mrb[0].mxu0
      %v2871 = vadd.f32 0.0, %v2870
      %v2872 = vpop.f32.mrb[0].mxu0
      %2873 = vmatprep.mubr.bf16.mxu0 0
      %2874 = vmatmul.mubr.bf16.gmra.mrb[0].mxu0 %v2711
      %v2875 = vpop.f32.mrb[0].mxu0
      %v2876 = vadd.f32 0.0, %v2875
      %v2877 = vpop.f32.mrb[0].mxu0
      %v2878 = vpop.f32.mrb[0].mxu0
      %v2879 = vadd.f32 0.0, %v2878
      %v2880 = vpop.f32.mrb[0].mxu0
      %2881 = vmatprep.mubr.bf16.mxu0 0
      %2882 = vmatmul.mubr.bf16.gmra.mrb[0].mxu0 %v2712
      %v2883 = vpop.f32.mrb[0].mxu0
      %v2884 = vadd.f32 0.0, %v2883
      %v2885 = vpop.f32.mrb[0].mxu0
      %v2886 = vpop.f32.mrb[0].mxu0
      %v2887 = vadd.f32 0.0, %v2886
      %v2888 = vpop.f32.mrb[0].mxu0
      %2889 = vmatprep.mubr.bf16.mxu0 0
      %2890 = vmatmul.mubr.bf16.gmra.mrb[0].mxu0 %v2713
      %v2891 = vpop.f32.mrb[0].mxu0
      %v2892 = vadd.f32 0.0, %v2891
      %v2893 = vpop.f32.mrb[0].mxu0
      %v2894 = vpop.f32.mrb[0].mxu0
      %v2895 = vadd.f32 0.0, %v2894
      %v2896 = vpop.f32.mrb[0].mxu0
      %2897 = vmatprep.mubr.bf16.mxu0 0
      %2898 = vmatmul.mubr.bf16.gmra.mrb[0].mxu0 %v2714
      %v2899 = vpop.f32.mrb[0].mxu0
      %v2900 = vadd.f32 0.0, %v2899
      %v2901 = vpop.f32.mrb[0].mxu0
      %v2902 = vpop.f32.mrb[0].mxu0
      %v2903 = vadd.f32 0.0, %v2902
      %v2904 = vpop.f32.mrb[0].mxu0
      %2905 = vmatprep.mubr.bf16.mxu0 0
      %2906 = vmatmul.mubr.bf16.gmra.mrb[0].mxu0 %v2715
      %v2907 = vpop.f32.mrb[0].mxu0
      %v2908 = vadd.f32 0.0, %v2907
      %v2909 = vpop.f32.mrb[0].mxu0
      %v2910 = vpop.f32.mrb[0].mxu0
      %v2911 = vadd.f32 0.0, %v2910
      %v2912 = vpop.f32.mrb[0].mxu0
      %2913 = vmatprep.mubr.bf16.mxu0 0
      %2914 = vmatmul.mubr.bf16.gmra.mrb[0].mxu0 %v2716
      %v2915 = vpop.f32.mrb[0].mxu0
      %v2916 = vadd.f32 0.0, %v2915
      %v2917 = vpop.f32.mrb[0].mxu0
      %v2918 = vpop.f32.mrb[0].mxu0
      %v2919 = vadd.f32 0.0, %v2918
      %v2920 = vpop.f32.mrb[0].mxu0
      %2921 = vmatprep.mubr.bf16.mxu0 0
      %2922 = vmatmul.mubr.bf16.gmra.mrb[0].mxu0 %v2717
      %v2923 = vpop.f32.mrb[0].mxu0
      %v2924 = vadd.f32 0.0, %v2923
      %v2925 = vpop.f32.mrb[0].mxu0
      %v2926 = vpop.f32.mrb[0].mxu0
      %v2927 = vadd.f32 0.0, %v2926
      %v2928 = vpop.f32.mrb[0].mxu0
      %2929 = vmatprep.mubr.bf16.mxu0 0
      %2930 = vmatmul.mubr.bf16.gmra.mrb[0].mxu0 %v2718
      %v2931 = vpop.f32.mrb[0].mxu0
      %v2932 = vadd.f32 0.0, %v2931
      %v2933 = vpop.f32.mrb[0].mxu0
      %v2934 = vpop.f32.mrb[0].mxu0
      %v2935 = vadd.f32 0.0, %v2934
      %v2936 = vpop.f32.mrb[0].mxu0
      %2937 = vmatprep.mubr.bf16.mxu0 0
      %2938 = vmatmul.mubr.bf16.gmra.mrb[0].mxu0 %v2719
      %v2939 = vpop.f32.mrb[0].mxu0
      %v2940 = vadd.f32 0.0, %v2939
      %v2941 = vpop.f32.mrb[0].mxu0
      %v2942 = vpop.f32.mrb[0].mxu0
      %v2943 = vadd.f32 0.0, %v2942
      %v2944 = vpop.f32.mrb[0].mxu0
      %2945 = vdwg.mxu0
      %v2946 = vadd.f32 %v2608, %v2820
      %v2947 = vadd.f32 %v2609, %v2823
      %v2948 = vadd.f32 %v2610, %v2828
      %v2949 = vadd.f32 %v2611, %v2831
      %v2950 = vadd.f32 %v2612, %v2836
      %v2951 = vadd.f32 %v2613, %v2839
      %v2952 = vadd.f32 %v2614, %v2844
      %v2953 = vadd.f32 %v2615, %v2847
      %v2954 = vadd.f32 %v2616, %v2852
      %v2955 = vadd.f32 %v2617, %v2855
      %v2956 = vadd.f32 %v2618, %v2860
      %v2957 = vadd.f32 %v2619, %v2863
      %v2958 = vadd.f32 %v2620, %v2868
      %v2959 = vadd.f32 %v2621, %v2871
      %v2960 = vadd.f32 %v2622, %v2876
      %v2961 = vadd.f32 %v2623, %v2879
      %v2962 = vadd.f32 %v2624, %v2884
      %v2963 = vadd.f32 %v2625, %v2887
      %v2964 = vadd.f32 %v2626, %v2892
      %v2965 = vadd.f32 %v2627, %v2895
      %v2966 = vadd.f32 %v2628, %v2900
      %v2967 = vadd.f32 %v2629, %v2903
      %v2968 = vadd.f32 %v2630, %v2908
      %v2969 = vadd.f32 %v2631, %v2911
      %v2970 = vadd.f32 %v2632, %v2916
      %v2971 = vadd.f32 %v2633, %v2919
      %v2972 = vadd.f32 %v2634, %v2924
      %v2973 = vadd.f32 %v2635, %v2927
      %v2974 = vadd.f32 %v2636, %v2932
      %v2975 = vadd.f32 %v2637, %v2935
      %v2976 = vadd.f32 %v2638, %v2940
      %v2977 = vadd.f32 %v2639, %v2943
      %v2978 = vld [vmem:[#allocation2 + $0x27] sm:$0xff]
      %v2979 = vld [vmem:[#allocation2 + $0x2f] sm:$0xff]
      %v2980 = vld [vmem:[#allocation2 + $0x37] sm:$0xff]
      %v2981 = vld [vmem:[#allocation2 + $0x3f] sm:$0xff]
      %v2982 = vld [vmem:[#allocation2 + $0x47] sm:$0xff]
      %v2983 = vld [vmem:[#allocation2 + $0x4f] sm:$0xff]
      %v2984 = vld [vmem:[#allocation2 + $0x57] sm:$0xff]
      %v2985 = vld [vmem:[#allocation2 + $0x5f] sm:$0xff]
      %v2986 = vld [vmem:[#allocation2 + $0x67] sm:$0xff]
      %v2987 = vld [vmem:[#allocation2 + $0x6f] sm:$0xff]
      %v2988 = vld [vmem:[#allocation2 + $0x77] sm:$0xff]
      %v2989 = vld [vmem:[#allocation2 + $0x7f] sm:$0xff]
      %v2990 = vld [vmem:[#allocation2 + $0x87] sm:$0xff]
      %v2991 = vld [vmem:[#allocation2 + $0x8f] sm:$0xff]
      %v2992 = vld [vmem:[#allocation2 + $0x97] sm:$0xff]
      %v2993 = vld [vmem:[#allocation2 + $0x9f] sm:$0xff]
      %v2994 = vld [vmem:[#allocation2 + $0xa7] sm:$0xff]
      %v2995 = vld [vmem:[#allocation2 + $0xaf] sm:$0xff]
      %v2996 = vld [vmem:[#allocation2 + $0xb7] sm:$0xff]
      %v2997 = vld [vmem:[#allocation2 + $0xbf] sm:$0xff]
      %v2998 = vld [vmem:[#allocation2 + $0xc7] sm:$0xff]
      %v2999 = vld [vmem:[#allocation2 + $0xcf] sm:$0xff]
      %v3000 = vld [vmem:[#allocation2 + $0xd7] sm:$0xff]
      %v3001 = vld [vmem:[#allocation2 + $0xdf] sm:$0xff]
      %v3002 = vld [vmem:[#allocation2 + $0xe7] sm:$0xff]
      %v3003 = vld [vmem:[#allocation2 + $0xef] sm:$0xff]
      %v3004 = vld [vmem:[#allocation2 + $0xf7] sm:$0xff]
      %v3005 = vld [vmem:[#allocation2 + $0xff] sm:$0xff]
      %v3006 = vld [vmem:[#allocation2 + $0x107] sm:$0xff]
      %v3007 = vld [vmem:[#allocation2 + $0x10f] sm:$0xff]
      %v3008 = vld [vmem:[#allocation2 + $0x117] sm:$0xff]
      %v3009 = vld [vmem:[#allocation2 + $0x11f] sm:$0xff]
      %v3010 = vsel %vm887, %v2978, 0.0
      %v3011 = vsel %vm888, %v2979, 0.0
      %v3012 = vsel %vm889, %v2980, 0.0
      %v3013 = vsel %vm890, %v2981, 0.0
      %v3014 = vsel %vm891, %v2982, 0.0
      %v3015 = vsel %vm892, %v2983, 0.0
      %v3016 = vsel %vm893, %v2984, 0.0
      %v3017 = vsel %vm894, %v2985, 0.0
      %v3018 = vsel %vm895, %v2986, 0.0
      %v3019 = vsel %vm896, %v2987, 0.0
      %v3020 = vsel %vm897, %v2988, 0.0
      %v3021 = vsel %vm898, %v2989, 0.0
      %v3022 = vsel %vm899, %v2990, 0.0
      %v3023 = vsel %vm900, %v2991, 0.0
      %v3024 = vsel %vm901, %v2992, 0.0
      %v3025 = vsel %vm902, %v2993, 0.0
      %v3026 = vsel %vm903, %v2994, 0.0
      %v3027 = vsel %vm904, %v2995, 0.0
      %v3028 = vsel %vm905, %v2996, 0.0
      %v3029 = vsel %vm906, %v2997, 0.0
      %v3030 = vsel %vm907, %v2998, 0.0
      %v3031 = vsel %vm908, %v2999, 0.0
      %v3032 = vsel %vm909, %v3000, 0.0
      %v3033 = vsel %vm910, %v3001, 0.0
      %v3034 = vsel %vm911, %v3002, 0.0
      %v3035 = vsel %vm912, %v3003, 0.0
      %v3036 = vsel %vm913, %v3004, 0.0
      %v3037 = vsel %vm914, %v3005, 0.0
      %v3038 = vsel %vm915, %v3006, 0.0
      %v3039 = vsel %vm916, %v3007, 0.0
      %v3040 = vsel %vm917, %v3008, 0.0
      %v3041 = vsel %vm918, %v3009, 0.0
      %v3042 = vpack.c.bf16 %v3011, %v3010
      %v3043 = vpack.c.bf16 %v3013, %v3012
      %v3044 = vpack.c.bf16 %v3015, %v3014
      %v3045 = vpack.c.bf16 %v3017, %v3016
      %v3046 = vpack.c.bf16 %v3019, %v3018
      %v3047 = vpack.c.bf16 %v3021, %v3020
      %v3048 = vpack.c.bf16 %v3023, %v3022
      %v3049 = vpack.c.bf16 %v3025, %v3024
      %v3050 = vpack.c.bf16 %v3027, %v3026
      %v3051 = vpack.c.bf16 %v3029, %v3028
      %v3052 = vpack.c.bf16 %v3031, %v3030
      %v3053 = vpack.c.bf16 %v3033, %v3032
      %v3054 = vpack.c.bf16 %v3035, %v3034
      %v3055 = vpack.c.bf16 %v3037, %v3036
      %v3056 = vpack.c.bf16 %v3039, %v3038
      %v3057 = vpack.c.bf16 %v3041, %v3040
      %s3058 = scalar_lea.vmem %s3, 384
      %v3059 = vld [vmem:[%s3058] sm:$0xf]
      %v3060 = vld [vmem:[%s3058 + $0x4] sm:$0xf]
      %v3061 = vld [vmem:[%s3058 + $0x8] sm:$0xf]
      %v3062 = vld [vmem:[%s3058 + $0xc] sm:$0xf]
      %v3063 = vld [vmem:[%s3058 + $0x10] sm:$0xf]
      %v3064 = vld [vmem:[%s3058 + $0x14] sm:$0xf]
      %v3065 = vld [vmem:[%s3058 + $0x18] sm:$0xf]
      %v3066 = vld [vmem:[%s3058 + $0x1c] sm:$0xf]
      %v3067 = vld [vmem:[%s3058 + $0x20] sm:$0xf]
      %v3068 = vld [vmem:[%s3058 + $0x24] sm:$0xf]
      %v3069 = vld [vmem:[%s3058 + $0x28] sm:$0xf]
      %v3070 = vld [vmem:[%s3058 + $0x2c] sm:$0xf]
      %v3071 = vld [vmem:[%s3058 + $0x30] sm:$0xf]
      %v3072 = vld [vmem:[%s3058 + $0x34] sm:$0xf]
      %v3073 = vld [vmem:[%s3058 + $0x38] sm:$0xf]
      %v3074 = vld [vmem:[%s3058 + $0x3c] sm:$0xf]
      %v3091 = vunpack.c.l.b16 %v3059
      %v3092 = vunpack.c.l.b16 %v3060
      %v3093 = vunpack.c.l.b16 %v3061
      %v3094 = vunpack.c.l.b16 %v3062
      %v3095 = vunpack.c.l.b16 %v3063
      %v3096 = vunpack.c.l.b16 %v3064
      %v3097 = vunpack.c.l.b16 %v3065
      %v3098 = vunpack.c.l.b16 %v3066
      %v3099 = vunpack.c.l.b16 %v3067
      %v3100 = vunpack.c.l.b16 %v3068
      %v3101 = vunpack.c.l.b16 %v3069
      %v3102 = vunpack.c.l.b16 %v3070
      %v3103 = vunpack.c.l.b16 %v3071
      %v3104 = vunpack.c.l.b16 %v3072
      %v3105 = vunpack.c.l.b16 %v3073
      %v3106 = vunpack.c.l.b16 %v3074
      %v3107 = vpack.c.b16 %v3092, %v3091
      %v3108 = vpack.c.b16 %v3094, %v3093
      %v3109 = vpack.c.b16 %v3096, %v3095
      %v3110 = vpack.c.b16 %v3098, %v3097
      %v3111 = vpack.c.b16 %v3100, %v3099
      %v3112 = vpack.c.b16 %v3102, %v3101
      %v3113 = vpack.c.b16 %v3104, %v3103
      %v3114 = vpack.c.b16 %v3106, %v3105
      %3123 = vmatprep.subr.bf16.mxu0 0
      %3124 = vmatpush1.bf16.msra.mxu0 %v3107
      %3125 = vmatprep.subr.bf16.mxu0 0
      %3126 = vmatpush1.bf16.msra.mxu0 %v3108
      %3127 = vmatprep.subr.bf16.mxu0 0
      %3128 = vmatpush1.bf16.msra.mxu0 %v3109
      %3129 = vmatprep.subr.bf16.mxu0 0
      %3130 = vmatpush1.bf16.msra.mxu0 %v3110
      %3131 = vmatprep.subr.bf16.mxu0 0
      %3132 = vmatpush1.bf16.msra.mxu0 %v3111
      %3133 = vmatprep.subr.bf16.mxu0 0
      %3134 = vmatpush1.bf16.msra.mxu0 %v3112
      %3135 = vmatprep.subr.bf16.mxu0 0
      %3136 = vmatpush1.bf16.msra.mxu0 %v3113
      %3137 = vmatprep.subr.bf16.mxu0 0
      %3138 = vmatpush1.bf16.msra.mxu0 %v3114
      %3139 = vmatprep.subr.bf16.mxu0 0
      %3140 = vmatpush1.bf16.msra.mxu0 0
      %3141 = vmatprep.subr.bf16.mxu0 0
      %3142 = vmatpush1.bf16.msra.mxu0 0
      %3143 = vmatprep.subr.bf16.mxu0 0
      %3144 = vmatpush1.bf16.msra.mxu0 0
      %3145 = vmatprep.subr.bf16.mxu0 0
      %3146 = vmatpush1.bf16.msra.mxu0 0
      %3147 = vmatprep.subr.bf16.mxu0 0
      %3148 = vmatpush1.bf16.msra.mxu0 0
      %3149 = vmatprep.subr.bf16.mxu0 0
      %3150 = vmatpush1.bf16.msra.mxu0 0
      %3151 = vmatprep.subr.bf16.mxu0 0
      %3152 = vmatpush1.bf16.msra.mxu0 0
      %3153 = vmatprep.subr.bf16.mxu0 0
      %3154 = vmatpush1.bf16.msra.mxu0 0
      %3155 = vmatprep.mubr.bf16.mxu0 0
      %3156 = vmatmul.mubr.bf16.gmra.mrb[0].mxu0 %v3042
      %v3157 = vpop.f32.mrb[0].mxu0
      %v3158 = vadd.f32 0.0, %v3157
      %v3159 = vpop.f32.mrb[0].mxu0
      %v3160 = vpop.f32.mrb[0].mxu0
      %v3161 = vadd.f32 0.0, %v3160
      %v3162 = vpop.f32.mrb[0].mxu0
      %3163 = vmatprep.mubr.bf16.mxu0 0
      %3164 = vmatmul.mubr.bf16.gmra.mrb[0].mxu0 %v3043
      %v3165 = vpop.f32.mrb[0].mxu0
      %v3166 = vadd.f32 0.0, %v3165
      %v3167 = vpop.f32.mrb[0].mxu0
      %v3168 = vpop.f32.mrb[0].mxu0
      %v3169 = vadd.f32 0.0, %v3168
      %v3170 = vpop.f32.mrb[0].mxu0
      %3171 = vmatprep.mubr.bf16.mxu0 0
      %3172 = vmatmul.mubr.bf16.gmra.mrb[0].mxu0 %v3044
      %v3173 = vpop.f32.mrb[0].mxu0
      %v3174 = vadd.f32 0.0, %v3173
      %v3175 = vpop.f32.mrb[0].mxu0
      %v3176 = vpop.f32.mrb[0].mxu0
      %v3177 = vadd.f32 0.0, %v3176
      %v3178 = vpop.f32.mrb[0].mxu0
      %3179 = vmatprep.mubr.bf16.mxu0 0
      %3180 = vmatmul.mubr.bf16.gmra.mrb[0].mxu0 %v3045
      %v3181 = vpop.f32.mrb[0].mxu0
      %v3182 = vadd.f32 0.0, %v3181
      %v3183 = vpop.f32.mrb[0].mxu0
      %v3184 = vpop.f32.mrb[0].mxu0
      %v3185 = vadd.f32 0.0, %v3184
      %v3186 = vpop.f32.mrb[0].mxu0
      %3187 = vmatprep.mubr.bf16.mxu0 0
      %3188 = vmatmul.mubr.bf16.gmra.mrb[0].mxu0 %v3046
      %v3189 = vpop.f32.mrb[0].mxu0
      %v3190 = vadd.f32 0.0, %v3189
      %v3191 = vpop.f32.mrb[0].mxu0
      %v3192 = vpop.f32.mrb[0].mxu0
      %v3193 = vadd.f32 0.0, %v3192
      %v3194 = vpop.f32.mrb[0].mxu0
      %3195 = vmatprep.mubr.bf16.mxu0 0
      %3196 = vmatmul.mubr.bf16.gmra.mrb[0].mxu0 %v3047
      %v3197 = vpop.f32.mrb[0].mxu0
      %v3198 = vadd.f32 0.0, %v3197
      %v3199 = vpop.f32.mrb[0].mxu0
      %v3200 = vpop.f32.mrb[0].mxu0
      %v3201 = vadd.f32 0.0, %v3200
      %v3202 = vpop.f32.mrb[0].mxu0
      %3203 = vmatprep.mubr.bf16.mxu0 0
      %3204 = vmatmul.mubr.bf16.gmra.mrb[0].mxu0 %v3048
      %v3205 = vpop.f32.mrb[0].mxu0
      %v3206 = vadd.f32 0.0, %v3205
      %v3207 = vpop.f32.mrb[0].mxu0
      %v3208 = vpop.f32.mrb[0].mxu0
      %v3209 = vadd.f32 0.0, %v3208
      %v3210 = vpop.f32.mrb[0].mxu0
      %3211 = vmatprep.mubr.bf16.mxu0 0
      %3212 = vmatmul.mubr.bf16.gmra.mrb[0].mxu0 %v3049
      %v3213 = vpop.f32.mrb[0].mxu0
      %v3214 = vadd.f32 0.0, %v3213
      %v3215 = vpop.f32.mrb[0].mxu0
      %v3216 = vpop.f32.mrb[0].mxu0
      %v3217 = vadd.f32 0.0, %v3216
      %v3218 = vpop.f32.mrb[0].mxu0
      %3219 = vmatprep.mubr.bf16.mxu0 0
      %3220 = vmatmul.mubr.bf16.gmra.mrb[0].mxu0 %v3050
      %v3221 = vpop.f32.mrb[0].mxu0
      %v3222 = vadd.f32 0.0, %v3221
      %v3223 = vpop.f32.mrb[0].mxu0
      %v3224 = vpop.f32.mrb[0].mxu0
      %v3225 = vadd.f32 0.0, %v3224
      %v3226 = vpop.f32.mrb[0].mxu0
      %3227 = vmatprep.mubr.bf16.mxu0 0
      %3228 = vmatmul.mubr.bf16.gmra.mrb[0].mxu0 %v3051
      %v3229 = vpop.f32.mrb[0].mxu0
      %v3230 = vadd.f32 0.0, %v3229
      %v3231 = vpop.f32.mrb[0].mxu0
      %v3232 = vpop.f32.mrb[0].mxu0
      %v3233 = vadd.f32 0.0, %v3232
      %v3234 = vpop.f32.mrb[0].mxu0
      %3235 = vmatprep.mubr.bf16.mxu0 0
      %3236 = vmatmul.mubr.bf16.gmra.mrb[0].mxu0 %v3052
      %v3237 = vpop.f32.mrb[0].mxu0
      %v3238 = vadd.f32 0.0, %v3237
      %v3239 = vpop.f32.mrb[0].mxu0
      %v3240 = vpop.f32.mrb[0].mxu0
      %v3241 = vadd.f32 0.0, %v3240
      %v3242 = vpop.f32.mrb[0].mxu0
      %3243 = vmatprep.mubr.bf16.mxu0 0
      %3244 = vmatmul.mubr.bf16.gmra.mrb[0].mxu0 %v3053
      %v3245 = vpop.f32.mrb[0].mxu0
      %v3246 = vadd.f32 0.0, %v3245
      %v3247 = vpop.f32.mrb[0].mxu0
      %v3248 = vpop.f32.mrb[0].mxu0
      %v3249 = vadd.f32 0.0, %v3248
      %v3250 = vpop.f32.mrb[0].mxu0
      %3251 = vmatprep.mubr.bf16.mxu0 0
      %3252 = vmatmul.mubr.bf16.gmra.mrb[0].mxu0 %v3054
      %v3253 = vpop.f32.mrb[0].mxu0
      %v3254 = vadd.f32 0.0, %v3253
      %v3255 = vpop.f32.mrb[0].mxu0
      %v3256 = vpop.f32.mrb[0].mxu0
      %v3257 = vadd.f32 0.0, %v3256
      %v3258 = vpop.f32.mrb[0].mxu0
      %3259 = vmatprep.mubr.bf16.mxu0 0
      %3260 = vmatmul.mubr.bf16.gmra.mrb[0].mxu0 %v3055
      %v3261 = vpop.f32.mrb[0].mxu0
      %v3262 = vadd.f32 0.0, %v3261
      %v3263 = vpop.f32.mrb[0].mxu0
      %v3264 = vpop.f32.mrb[0].mxu0
      %v3265 = vadd.f32 0.0, %v3264
      %v3266 = vpop.f32.mrb[0].mxu0
      %3267 = vmatprep.mubr.bf16.mxu0 0
      %3268 = vmatmul.mubr.bf16.gmra.mrb[0].mxu0 %v3056
      %v3269 = vpop.f32.mrb[0].mxu0
      %v3270 = vadd.f32 0.0, %v3269
      %v3271 = vpop.f32.mrb[0].mxu0
      %v3272 = vpop.f32.mrb[0].mxu0
      %v3273 = vadd.f32 0.0, %v3272
      %v3274 = vpop.f32.mrb[0].mxu0
      %3275 = vmatprep.mubr.bf16.mxu0 0
      %3276 = vmatmul.mubr.bf16.gmra.mrb[0].mxu0 %v3057
      %v3277 = vpop.f32.mrb[0].mxu0
      %v3278 = vadd.f32 0.0, %v3277
      %v3279 = vpop.f32.mrb[0].mxu0
      %v3280 = vpop.f32.mrb[0].mxu0
      %v3281 = vadd.f32 0.0, %v3280
      %v3282 = vpop.f32.mrb[0].mxu0
      %3283 = vdwg.mxu0
      %v3284 = vadd.f32 %v2946, %v3158
      %v3285 = vadd.f32 %v2947, %v3161
      %v3286 = vadd.f32 %v2948, %v3166
      %v3287 = vadd.f32 %v2949, %v3169
      %v3288 = vadd.f32 %v2950, %v3174
      %v3289 = vadd.f32 %v2951, %v3177
      %v3290 = vadd.f32 %v2952, %v3182
      %v3291 = vadd.f32 %v2953, %v3185
      %v3292 = vadd.f32 %v2954, %v3190
      %v3293 = vadd.f32 %v2955, %v3193
      %v3294 = vadd.f32 %v2956, %v3198
      %v3295 = vadd.f32 %v2957, %v3201
      %v3296 = vadd.f32 %v2958, %v3206
      %v3297 = vadd.f32 %v2959, %v3209
      %v3298 = vadd.f32 %v2960, %v3214
      %v3299 = vadd.f32 %v2961, %v3217
      %v3300 = vadd.f32 %v2962, %v3222
      %v3301 = vadd.f32 %v2963, %v3225
      %v3302 = vadd.f32 %v2964, %v3230
      %v3303 = vadd.f32 %v2965, %v3233
      %v3304 = vadd.f32 %v2966, %v3238
      %v3305 = vadd.f32 %v2967, %v3241
      %v3306 = vadd.f32 %v2968, %v3246
      %v3307 = vadd.f32 %v2969, %v3249
      %v3308 = vadd.f32 %v2970, %v3254
      %v3309 = vadd.f32 %v2971, %v3257
      %v3310 = vadd.f32 %v2972, %v3262
      %v3311 = vadd.f32 %v2973, %v3265
      %v3312 = vadd.f32 %v2974, %v3270
      %v3313 = vadd.f32 %v2975, %v3273
      %v3314 = vadd.f32 %v2976, %v3278
      %v3315 = vadd.f32 %v2977, %v3281
      %v3316 = vld [vmem:[#allocation2 + $0x28] sm:$0xff]
      %v3317 = vld [vmem:[#allocation2 + $0x30] sm:$0xff]
      %v3318 = vld [vmem:[#allocation2 + $0x38] sm:$0xff]
      %v3319 = vld [vmem:[#allocation2 + $0x40] sm:$0xff]
      %v3320 = vld [vmem:[#allocation2 + $0x48] sm:$0xff]
      %v3321 = vld [vmem:[#allocation2 + $0x50] sm:$0xff]
      %v3322 = vld [vmem:[#allocation2 + $0x58] sm:$0xff]
      %v3323 = vld [vmem:[#allocation2 + $0x60] sm:$0xff]
      %v3324 = vld [vmem:[#allocation2 + $0x68] sm:$0xff]
      %v3325 = vld [vmem:[#allocation2 + $0x70] sm:$0xff]
      %v3326 = vld [vmem:[#allocation2 + $0x78] sm:$0xff]
      %v3327 = vld [vmem:[#allocation2 + $0x80] sm:$0xff]
      %v3328 = vld [vmem:[#allocation2 + $0x88] sm:$0xff]
      %v3329 = vld [vmem:[#allocation2 + $0x90] sm:$0xff]
      %v3330 = vld [vmem:[#allocation2 + $0x98] sm:$0xff]
      %v3331 = vld [vmem:[#allocation2 + $0xa0] sm:$0xff]
      %v3332 = vld [vmem:[#allocation2 + $0xa8] sm:$0xff]
      %v3333 = vld [vmem:[#allocation2 + $0xb0] sm:$0xff]
      %v3334 = vld [vmem:[#allocation2 + $0xb8] sm:$0xff]
      %v3335 = vld [vmem:[#allocation2 + $0xc0] sm:$0xff]
      %v3336 = vld [vmem:[#allocation2 + $0xc8] sm:$0xff]
      %v3337 = vld [vmem:[#allocation2 + $0xd0] sm:$0xff]
      %v3338 = vld [vmem:[#allocation2 + $0xd8] sm:$0xff]
      %v3339 = vld [vmem:[#allocation2 + $0xe0] sm:$0xff]
      %v3340 = vld [vmem:[#allocation2 + $0xe8] sm:$0xff]
      %v3341 = vld [vmem:[#allocation2 + $0xf0] sm:$0xff]
      %v3342 = vld [vmem:[#allocation2 + $0xf8] sm:$0xff]
      %v3343 = vld [vmem:[#allocation2 + $0x100] sm:$0xff]
      %v3344 = vld [vmem:[#allocation2 + $0x108] sm:$0xff]
      %v3345 = vld [vmem:[#allocation2 + $0x110] sm:$0xff]
      %v3346 = vld [vmem:[#allocation2 + $0x118] sm:$0xff]
      %v3347 = vld [vmem:[#allocation2 + $0x120] sm:$0xff]
      %v3348 = vpack.c.bf16 %v3317, %v3316
      %v3349 = vpack.c.bf16 %v3319, %v3318
      %v3350 = vpack.c.bf16 %v3321, %v3320
      %v3351 = vpack.c.bf16 %v3323, %v3322
      %v3352 = vpack.c.bf16 %v3325, %v3324
      %v3353 = vpack.c.bf16 %v3327, %v3326
      %v3354 = vpack.c.bf16 %v3329, %v3328
      %v3355 = vpack.c.bf16 %v3331, %v3330
      %v3356 = vpack.c.bf16 %v3333, %v3332
      %v3357 = vpack.c.bf16 %v3335, %v3334
      %v3358 = vpack.c.bf16 %v3337, %v3336
      %v3359 = vpack.c.bf16 %v3339, %v3338
      %v3360 = vpack.c.bf16 %v3341, %v3340
      %v3361 = vpack.c.bf16 %v3343, %v3342
      %v3362 = vpack.c.bf16 %v3345, %v3344
      %v3363 = vpack.c.bf16 %v3347, %v3346
      %s3364 = scalar_lea.vmem %s3, 448
      %v3365 = vld [vmem:[%s3364] sm:$0xf]
      %v3366 = vld [vmem:[%s3364 + $0x4] sm:$0xf]
      %v3367 = vld [vmem:[%s3364 + $0x8] sm:$0xf]
      %v3368 = vld [vmem:[%s3364 + $0xc] sm:$0xf]
      %v3369 = vld [vmem:[%s3364 + $0x10] sm:$0xf]
      %v3370 = vld [vmem:[%s3364 + $0x14] sm:$0xf]
      %v3371 = vld [vmem:[%s3364 + $0x18] sm:$0xf]
      %v3372 = vld [vmem:[%s3364 + $0x1c] sm:$0xf]
      %v3373 = vld [vmem:[%s3364 + $0x20] sm:$0xf]
      %v3374 = vld [vmem:[%s3364 + $0x24] sm:$0xf]
      %v3375 = vld [vmem:[%s3364 + $0x28] sm:$0xf]
      %v3376 = vld [vmem:[%s3364 + $0x2c] sm:$0xf]
      %v3377 = vld [vmem:[%s3364 + $0x30] sm:$0xf]
      %v3378 = vld [vmem:[%s3364 + $0x34] sm:$0xf]
      %v3379 = vld [vmem:[%s3364 + $0x38] sm:$0xf]
      %v3380 = vld [vmem:[%s3364 + $0x3c] sm:$0xf]
      %v3397 = vunpack.c.l.b16 %v3365
      %v3398 = vunpack.c.l.b16 %v3366
      %v3399 = vunpack.c.l.b16 %v3367
      %v3400 = vunpack.c.l.b16 %v3368
      %v3401 = vunpack.c.l.b16 %v3369
      %v3402 = vunpack.c.l.b16 %v3370
      %v3403 = vunpack.c.l.b16 %v3371
      %v3404 = vunpack.c.l.b16 %v3372
      %v3405 = vunpack.c.l.b16 %v3373
      %v3406 = vunpack.c.l.b16 %v3374
      %v3407 = vunpack.c.l.b16 %v3375
      %v3408 = vunpack.c.l.b16 %v3376
      %v3409 = vunpack.c.l.b16 %v3377
      %v3410 = vunpack.c.l.b16 %v3378
      %v3411 = vunpack.c.l.b16 %v3379
      %v3412 = vunpack.c.l.b16 %v3380
      %v3413 = vpack.c.b16 %v3398, %v3397
      %v3414 = vpack.c.b16 %v3400, %v3399
      %v3415 = vpack.c.b16 %v3402, %v3401
      %v3416 = vpack.c.b16 %v3404, %v3403
      %v3417 = vpack.c.b16 %v3406, %v3405
      %v3418 = vpack.c.b16 %v3408, %v3407
      %v3419 = vpack.c.b16 %v3410, %v3409
      %v3420 = vpack.c.b16 %v3412, %v3411
      %3429 = vmatprep.subr.bf16.mxu0 0
      %3430 = vmatpush1.bf16.msra.mxu0 %v3413
      %3431 = vmatprep.subr.bf16.mxu0 0
      %3432 = vmatpush1.bf16.msra.mxu0 %v3414
      %3433 = vmatprep.subr.bf16.mxu0 0
      %3434 = vmatpush1.bf16.msra.mxu0 %v3415
      %3435 = vmatprep.subr.bf16.mxu0 0
      %3436 = vmatpush1.bf16.msra.mxu0 %v3416
      %3437 = vmatprep.subr.bf16.mxu0 0
      %3438 = vmatpush1.bf16.msra.mxu0 %v3417
      %3439 = vmatprep.subr.bf16.mxu0 0
      %3440 = vmatpush1.bf16.msra.mxu0 %v3418
      %3441 = vmatprep.subr.bf16.mxu0 0
      %3442 = vmatpush1.bf16.msra.mxu0 %v3419
      %3443 = vmatprep.subr.bf16.mxu0 0
      %3444 = vmatpush1.bf16.msra.mxu0 %v3420
      %3445 = vmatprep.subr.bf16.mxu0 0
      %3446 = vmatpush1.bf16.msra.mxu0 0
      %3447 = vmatprep.subr.bf16.mxu0 0
      %3448 = vmatpush1.bf16.msra.mxu0 0
      %3449 = vmatprep.subr.bf16.mxu0 0
      %3450 = vmatpush1.bf16.msra.mxu0 0
      %3451 = vmatprep.subr.bf16.mxu0 0
      %3452 = vmatpush1.bf16.msra.mxu0 0
      %3453 = vmatprep.subr.bf16.mxu0 0
      %3454 = vmatpush1.bf16.msra.mxu0 0
      %3455 = vmatprep.subr.bf16.mxu0 0
      %3456 = vmatpush1.bf16.msra.mxu0 0
      %3457 = vmatprep.subr.bf16.mxu0 0
      %3458 = vmatpush1.bf16.msra.mxu0 0
      %3459 = vmatprep.subr.bf16.mxu0 0
      %3460 = vmatpush1.bf16.msra.mxu0 0
      %3461 = vmatprep.mubr.bf16.mxu0 0
      %3462 = vmatmul.mubr.bf16.gmra.mrb[0].mxu0 %v3348
      %v3463 = vpop.f32.mrb[0].mxu0
      %v3464 = vadd.f32 0.0, %v3463
      %v3465 = vpop.f32.mrb[0].mxu0
      %v3466 = vpop.f32.mrb[0].mxu0
      %v3467 = vadd.f32 0.0, %v3466
      %v3468 = vpop.f32.mrb[0].mxu0
      %3469 = vmatprep.mubr.bf16.mxu0 0
      %3470 = vmatmul.mubr.bf16.gmra.mrb[0].mxu0 %v3349
      %v3471 = vpop.f32.mrb[0].mxu0
      %v3472 = vadd.f32 0.0, %v3471
      %v3473 = vpop.f32.mrb[0].mxu0
      %v3474 = vpop.f32.mrb[0].mxu0
      %v3475 = vadd.f32 0.0, %v3474
      %v3476 = vpop.f32.mrb[0].mxu0
      %3477 = vmatprep.mubr.bf16.mxu0 0
      %3478 = vmatmul.mubr.bf16.gmra.mrb[0].mxu0 %v3350
      %v3479 = vpop.f32.mrb[0].mxu0
      %v3480 = vadd.f32 0.0, %v3479
      %v3481 = vpop.f32.mrb[0].mxu0
      %v3482 = vpop.f32.mrb[0].mxu0
      %v3483 = vadd.f32 0.0, %v3482
      %v3484 = vpop.f32.mrb[0].mxu0
      %3485 = vmatprep.mubr.bf16.mxu0 0
      %3486 = vmatmul.mubr.bf16.gmra.mrb[0].mxu0 %v3351
      %v3487 = vpop.f32.mrb[0].mxu0
      %v3488 = vadd.f32 0.0, %v3487
      %v3489 = vpop.f32.mrb[0].mxu0
      %v3490 = vpop.f32.mrb[0].mxu0
      %v3491 = vadd.f32 0.0, %v3490
      %v3492 = vpop.f32.mrb[0].mxu0
      %3493 = vmatprep.mubr.bf16.mxu0 0
      %3494 = vmatmul.mubr.bf16.gmra.mrb[0].mxu0 %v3352
      %v3495 = vpop.f32.mrb[0].mxu0
      %v3496 = vadd.f32 0.0, %v3495
      %v3497 = vpop.f32.mrb[0].mxu0
      %v3498 = vpop.f32.mrb[0].mxu0
      %v3499 = vadd.f32 0.0, %v3498
      %v3500 = vpop.f32.mrb[0].mxu0
      %3501 = vmatprep.mubr.bf16.mxu0 0
      %3502 = vmatmul.mubr.bf16.gmra.mrb[0].mxu0 %v3353
      %v3503 = vpop.f32.mrb[0].mxu0
      %v3504 = vadd.f32 0.0, %v3503
      %v3505 = vpop.f32.mrb[0].mxu0
      %v3506 = vpop.f32.mrb[0].mxu0
      %v3507 = vadd.f32 0.0, %v3506
      %v3508 = vpop.f32.mrb[0].mxu0
      %3509 = vmatprep.mubr.bf16.mxu0 0
      %3510 = vmatmul.mubr.bf16.gmra.mrb[0].mxu0 %v3354
      %v3511 = vpop.f32.mrb[0].mxu0
      %v3512 = vadd.f32 0.0, %v3511
      %v3513 = vpop.f32.mrb[0].mxu0
      %v3514 = vpop.f32.mrb[0].mxu0
      %v3515 = vadd.f32 0.0, %v3514
      %v3516 = vpop.f32.mrb[0].mxu0
      %3517 = vmatprep.mubr.bf16.mxu0 0
      %3518 = vmatmul.mubr.bf16.gmra.mrb[0].mxu0 %v3355
      %v3519 = vpop.f32.mrb[0].mxu0
      %v3520 = vadd.f32 0.0, %v3519
      %v3521 = vpop.f32.mrb[0].mxu0
      %v3522 = vpop.f32.mrb[0].mxu0
      %v3523 = vadd.f32 0.0, %v3522
      %v3524 = vpop.f32.mrb[0].mxu0
      %3525 = vmatprep.mubr.bf16.mxu0 0
      %3526 = vmatmul.mubr.bf16.gmra.mrb[0].mxu0 %v3356
      %v3527 = vpop.f32.mrb[0].mxu0
      %v3528 = vadd.f32 0.0, %v3527
      %v3529 = vpop.f32.mrb[0].mxu0
      %v3530 = vpop.f32.mrb[0].mxu0
      %v3531 = vadd.f32 0.0, %v3530
      %v3532 = vpop.f32.mrb[0].mxu0
      %3533 = vmatprep.mubr.bf16.mxu0 0
      %3534 = vmatmul.mubr.bf16.gmra.mrb[0].mxu0 %v3357
      %v3535 = vpop.f32.mrb[0].mxu0
      %v3536 = vadd.f32 0.0, %v3535
      %v3537 = vpop.f32.mrb[0].mxu0
      %v3538 = vpop.f32.mrb[0].mxu0
      %v3539 = vadd.f32 0.0, %v3538
      %v3540 = vpop.f32.mrb[0].mxu0
      %3541 = vmatprep.mubr.bf16.mxu0 0
      %3542 = vmatmul.mubr.bf16.gmra.mrb[0].mxu0 %v3358
      %v3543 = vpop.f32.mrb[0].mxu0
      %v3544 = vadd.f32 0.0, %v3543
      %v3545 = vpop.f32.mrb[0].mxu0
      %v3546 = vpop.f32.mrb[0].mxu0
      %v3547 = vadd.f32 0.0, %v3546
      %v3548 = vpop.f32.mrb[0].mxu0
      %3549 = vmatprep.mubr.bf16.mxu0 0
      %3550 = vmatmul.mubr.bf16.gmra.mrb[0].mxu0 %v3359
      %v3551 = vpop.f32.mrb[0].mxu0
      %v3552 = vadd.f32 0.0, %v3551
      %v3553 = vpop.f32.mrb[0].mxu0
      %v3554 = vpop.f32.mrb[0].mxu0
      %v3555 = vadd.f32 0.0, %v3554
      %v3556 = vpop.f32.mrb[0].mxu0
      %3557 = vmatprep.mubr.bf16.mxu0 0
      %3558 = vmatmul.mubr.bf16.gmra.mrb[0].mxu0 %v3360
      %v3559 = vpop.f32.mrb[0].mxu0
      %v3560 = vadd.f32 0.0, %v3559
      %v3561 = vpop.f32.mrb[0].mxu0
      %v3562 = vpop.f32.mrb[0].mxu0
      %v3563 = vadd.f32 0.0, %v3562
      %v3564 = vpop.f32.mrb[0].mxu0
      %3565 = vmatprep.mubr.bf16.mxu0 0
      %3566 = vmatmul.mubr.bf16.gmra.mrb[0].mxu0 %v3361
      %v3567 = vpop.f32.mrb[0].mxu0
      %v3568 = vadd.f32 0.0, %v3567
      %v3569 = vpop.f32.mrb[0].mxu0
      %v3570 = vpop.f32.mrb[0].mxu0
      %v3571 = vadd.f32 0.0, %v3570
      %v3572 = vpop.f32.mrb[0].mxu0
      %3573 = vmatprep.mubr.bf16.mxu0 0
      %3574 = vmatmul.mubr.bf16.gmra.mrb[0].mxu0 %v3362
      %v3575 = vpop.f32.mrb[0].mxu0
      %v3576 = vadd.f32 0.0, %v3575
      %v3577 = vpop.f32.mrb[0].mxu0
      %v3578 = vpop.f32.mrb[0].mxu0
      %v3579 = vadd.f32 0.0, %v3578
      %v3580 = vpop.f32.mrb[0].mxu0
      %3581 = vmatprep.mubr.bf16.mxu0 0
      %3582 = vmatmul.mubr.bf16.gmra.mrb[0].mxu0 %v3363
      %v3583 = vpop.f32.mrb[0].mxu0
      %v3584 = vadd.f32 0.0, %v3583
      %v3585 = vpop.f32.mrb[0].mxu0
      %v3586 = vpop.f32.mrb[0].mxu0
      %v3587 = vadd.f32 0.0, %v3586
      %v3588 = vpop.f32.mrb[0].mxu0
      %3589 = vdwg.mxu0
      %v3590 = vadd.f32 %v3284, %v3464
      %v3591 = vadd.f32 %v3285, %v3467
      %v3592 = vadd.f32 %v3286, %v3472
      %v3593 = vadd.f32 %v3287, %v3475
      %v3594 = vadd.f32 %v3288, %v3480
      %v3595 = vadd.f32 %v3289, %v3483
      %v3596 = vadd.f32 %v3290, %v3488
      %v3597 = vadd.f32 %v3291, %v3491
      %v3598 = vadd.f32 %v3292, %v3496
      %v3599 = vadd.f32 %v3293, %v3499
      %v3600 = vadd.f32 %v3294, %v3504
      %v3601 = vadd.f32 %v3295, %v3507
      %v3602 = vadd.f32 %v3296, %v3512
      %v3603 = vadd.f32 %v3297, %v3515
      %v3604 = vadd.f32 %v3298, %v3520
      %v3605 = vadd.f32 %v3299, %v3523
      %v3606 = vadd.f32 %v3300, %v3528
      %v3607 = vadd.f32 %v3301, %v3531
      %v3608 = vadd.f32 %v3302, %v3536
      %v3609 = vadd.f32 %v3303, %v3539
      %v3610 = vadd.f32 %v3304, %v3544
      %v3611 = vadd.f32 %v3305, %v3547
      %v3612 = vadd.f32 %v3306, %v3552
      %v3613 = vadd.f32 %v3307, %v3555
      %v3614 = vadd.f32 %v3308, %v3560
      %v3615 = vadd.f32 %v3309, %v3563
      %v3616 = vadd.f32 %v3310, %v3568
      %v3617 = vadd.f32 %v3311, %v3571
      %v3618 = vadd.f32 %v3312, %v3576
      %v3619 = vadd.f32 %v3313, %v3579
      %v3620 = vadd.f32 %v3314, %v3584
      %v3621 = vadd.f32 %v3315, %v3587
      %v3622 = vld [vmem:[#allocation2 + $0x29] sm:$0xff]
      %v3623 = vld [vmem:[#allocation2 + $0x31] sm:$0xff]
      %v3624 = vld [vmem:[#allocation2 + $0x39] sm:$0xff]
      %v3625 = vld [vmem:[#allocation2 + $0x41] sm:$0xff]
      %v3626 = vld [vmem:[#allocation2 + $0x49] sm:$0xff]
      %v3627 = vld [vmem:[#allocation2 + $0x51] sm:$0xff]
      %v3628 = vld [vmem:[#allocation2 + $0x59] sm:$0xff]
      %v3629 = vld [vmem:[#allocation2 + $0x61] sm:$0xff]
      %v3630 = vld [vmem:[#allocation2 + $0x69] sm:$0xff]
      %v3631 = vld [vmem:[#allocation2 + $0x71] sm:$0xff]
      %v3632 = vld [vmem:[#allocation2 + $0x79] sm:$0xff]
      %v3633 = vld [vmem:[#allocation2 + $0x81] sm:$0xff]
      %v3634 = vld [vmem:[#allocation2 + $0x89] sm:$0xff]
      %v3635 = vld [vmem:[#allocation2 + $0x91] sm:$0xff]
      %v3636 = vld [vmem:[#allocation2 + $0x99] sm:$0xff]
      %v3637 = vld [vmem:[#allocation2 + $0xa1] sm:$0xff]
      %v3638 = vld [vmem:[#allocation2 + $0xa9] sm:$0xff]
      %v3639 = vld [vmem:[#allocation2 + $0xb1] sm:$0xff]
      %v3640 = vld [vmem:[#allocation2 + $0xb9] sm:$0xff]
      %v3641 = vld [vmem:[#allocation2 + $0xc1] sm:$0xff]
      %v3642 = vld [vmem:[#allocation2 + $0xc9] sm:$0xff]
      %v3643 = vld [vmem:[#allocation2 + $0xd1] sm:$0xff]
      %v3644 = vld [vmem:[#allocation2 + $0xd9] sm:$0xff]
      %v3645 = vld [vmem:[#allocation2 + $0xe1] sm:$0xff]
      %v3646 = vld [vmem:[#allocation2 + $0xe9] sm:$0xff]
      %v3647 = vld [vmem:[#allocation2 + $0xf1] sm:$0xff]
      %v3648 = vld [vmem:[#allocation2 + $0xf9] sm:$0xff]
      %v3649 = vld [vmem:[#allocation2 + $0x101] sm:$0xff]
      %v3650 = vld [vmem:[#allocation2 + $0x109] sm:$0xff]
      %v3651 = vld [vmem:[#allocation2 + $0x111] sm:$0xff]
      %v3652 = vld [vmem:[#allocation2 + $0x119] sm:$0xff]
      %v3653 = vld [vmem:[#allocation2 + $0x121] sm:$0xff]
      %v3654 = vsel %vm1658, %v3622, 0.0
      %v3655 = vsel %vm1659, %v3623, 0.0
      %v3656 = vsel %vm1660, %v3624, 0.0
      %v3657 = vsel %vm1661, %v3625, 0.0
      %v3658 = vsel %vm1662, %v3626, 0.0
      %v3659 = vsel %vm1663, %v3627, 0.0
      %v3660 = vsel %vm1664, %v3628, 0.0
      %v3661 = vsel %vm1665, %v3629, 0.0
      %v3662 = vsel %vm1666, %v3630, 0.0
      %v3663 = vsel %vm1667, %v3631, 0.0
      %v3664 = vsel %vm1668, %v3632, 0.0
      %v3665 = vsel %vm1669, %v3633, 0.0
      %v3666 = vsel %vm1670, %v3634, 0.0
      %v3667 = vsel %vm1671, %v3635, 0.0
      %v3668 = vsel %vm1672, %v3636, 0.0
      %v3669 = vsel %vm1673, %v3637, 0.0
      %v3670 = vsel %vm1674, %v3638, 0.0
      %v3671 = vsel %vm1675, %v3639, 0.0
      %v3672 = vsel %vm1676, %v3640, 0.0
      %v3673 = vsel %vm1677, %v3641, 0.0
      %v3674 = vsel %vm1678, %v3642, 0.0
      %v3675 = vsel %vm1679, %v3643, 0.0
      %v3676 = vsel %vm1680, %v3644, 0.0
      %v3677 = vsel %vm1681, %v3645, 0.0
      %v3678 = vsel %vm1682, %v3646, 0.0
      %v3679 = vsel %vm1683, %v3647, 0.0
      %v3680 = vsel %vm1684, %v3648, 0.0
      %v3681 = vsel %vm1685, %v3649, 0.0
      %v3682 = vsel %vm1686, %v3650, 0.0
      %v3683 = vsel %vm1687, %v3651, 0.0
      %v3684 = vsel %vm1688, %v3652, 0.0
      %v3685 = vsel %vm1689, %v3653, 0.0
      %v3686 = vpack.c.bf16 %v3655, %v3654
      %v3687 = vpack.c.bf16 %v3657, %v3656
      %v3688 = vpack.c.bf16 %v3659, %v3658
      %v3689 = vpack.c.bf16 %v3661, %v3660
      %v3690 = vpack.c.bf16 %v3663, %v3662
      %v3691 = vpack.c.bf16 %v3665, %v3664
      %v3692 = vpack.c.bf16 %v3667, %v3666
      %v3693 = vpack.c.bf16 %v3669, %v3668
      %v3694 = vpack.c.bf16 %v3671, %v3670
      %v3695 = vpack.c.bf16 %v3673, %v3672
      %v3696 = vpack.c.bf16 %v3675, %v3674
      %v3697 = vpack.c.bf16 %v3677, %v3676
      %v3698 = vpack.c.bf16 %v3679, %v3678
      %v3699 = vpack.c.bf16 %v3681, %v3680
      %v3700 = vpack.c.bf16 %v3683, %v3682
      %v3701 = vpack.c.bf16 %v3685, %v3684
      %s3702 = scalar_lea.vmem %s3, 512
      %v3703 = vld [vmem:[%s3702] sm:$0xf]
      %v3704 = vld [vmem:[%s3702 + $0x4] sm:$0xf]
      %v3705 = vld [vmem:[%s3702 + $0x8] sm:$0xf]
      %v3706 = vld [vmem:[%s3702 + $0xc] sm:$0xf]
      %v3707 = vld [vmem:[%s3702 + $0x10] sm:$0xf]
      %v3708 = vld [vmem:[%s3702 + $0x14] sm:$0xf]
      %v3709 = vld [vmem:[%s3702 + $0x18] sm:$0xf]
      %v3710 = vld [vmem:[%s3702 + $0x1c] sm:$0xf]
      %v3711 = vld [vmem:[%s3702 + $0x20] sm:$0xf]
      %v3712 = vld [vmem:[%s3702 + $0x24] sm:$0xf]
      %v3713 = vld [vmem:[%s3702 + $0x28] sm:$0xf]
      %v3714 = vld [vmem:[%s3702 + $0x2c] sm:$0xf]
      %v3715 = vld [vmem:[%s3702 + $0x30] sm:$0xf]
      %v3716 = vld [vmem:[%s3702 + $0x34] sm:$0xf]
      %v3717 = vld [vmem:[%s3702 + $0x38] sm:$0xf]
      %v3718 = vld [vmem:[%s3702 + $0x3c] sm:$0xf]
      %v3735 = vunpack.c.l.b16 %v3703
      %v3736 = vunpack.c.l.b16 %v3704
      %v3737 = vunpack.c.l.b16 %v3705
      %v3738 = vunpack.c.l.b16 %v3706
      %v3739 = vunpack.c.l.b16 %v3707
      %v3740 = vunpack.c.l.b16 %v3708
      %v3741 = vunpack.c.l.b16 %v3709
      %v3742 = vunpack.c.l.b16 %v3710
      %v3743 = vunpack.c.l.b16 %v3711
      %v3744 = vunpack.c.l.b16 %v3712
      %v3745 = vunpack.c.l.b16 %v3713
      %v3746 = vunpack.c.l.b16 %v3714
      %v3747 = vunpack.c.l.b16 %v3715
      %v3748 = vunpack.c.l.b16 %v3716
      %v3749 = vunpack.c.l.b16 %v3717
      %v3750 = vunpack.c.l.b16 %v3718
      %v3751 = vpack.c.b16 %v3736, %v3735
      %v3752 = vpack.c.b16 %v3738, %v3737
      %v3753 = vpack.c.b16 %v3740, %v3739
      %v3754 = vpack.c.b16 %v3742, %v3741
      %v3755 = vpack.c.b16 %v3744, %v3743
      %v3756 = vpack.c.b16 %v3746, %v3745
      %v3757 = vpack.c.b16 %v3748, %v3747
      %v3758 = vpack.c.b16 %v3750, %v3749
      %3767 = vmatprep.subr.bf16.mxu0 0
      %3768 = vmatpush1.bf16.msra.mxu0 %v3751
      %3769 = vmatprep.subr.bf16.mxu0 0
      %3770 = vmatpush1.bf16.msra.mxu0 %v3752
      %3771 = vmatprep.subr.bf16.mxu0 0
      %3772 = vmatpush1.bf16.msra.mxu0 %v3753
      %3773 = vmatprep.subr.bf16.mxu0 0
      %3774 = vmatpush1.bf16.msra.mxu0 %v3754
      %3775 = vmatprep.subr.bf16.mxu0 0
      %3776 = vmatpush1.bf16.msra.mxu0 %v3755
      %3777 = vmatprep.subr.bf16.mxu0 0
      %3778 = vmatpush1.bf16.msra.mxu0 %v3756
      %3779 = vmatprep.subr.bf16.mxu0 0
      %3780 = vmatpush1.bf16.msra.mxu0 %v3757
      %3781 = vmatprep.subr.bf16.mxu0 0
      %3782 = vmatpush1.bf16.msra.mxu0 %v3758
      %3783 = vmatprep.subr.bf16.mxu0 0
      %3784 = vmatpush1.bf16.msra.mxu0 0
      %3785 = vmatprep.subr.bf16.mxu0 0
      %3786 = vmatpush1.bf16.msra.mxu0 0
      %3787 = vmatprep.subr.bf16.mxu0 0
      %3788 = vmatpush1.bf16.msra.mxu0 0
      %3789 = vmatprep.subr.bf16.mxu0 0
      %3790 = vmatpush1.bf16.msra.mxu0 0
      %3791 = vmatprep.subr.bf16.mxu0 0
      %3792 = vmatpush1.bf16.msra.mxu0 0
      %3793 = vmatprep.subr.bf16.mxu0 0
      %3794 = vmatpush1.bf16.msra.mxu0 0
      %3795 = vmatprep.subr.bf16.mxu0 0
      %3796 = vmatpush1.bf16.msra.mxu0 0
      %3797 = vmatprep.subr.bf16.mxu0 0
      %3798 = vmatpush1.bf16.msra.mxu0 0
      %3799 = vmatprep.mubr.bf16.mxu0 0
      %3800 = vmatmul.mubr.bf16.gmra.mrb[0].mxu0 %v3686
      %v3801 = vpop.f32.mrb[0].mxu0
      %v3802 = vadd.f32 0.0, %v3801
      %v3803 = vpop.f32.mrb[0].mxu0
      %v3804 = vpop.f32.mrb[0].mxu0
      %v3805 = vadd.f32 0.0, %v3804
      %v3806 = vpop.f32.mrb[0].mxu0
      %3807 = vmatprep.mubr.bf16.mxu0 0
      %3808 = vmatmul.mubr.bf16.gmra.mrb[0].mxu0 %v3687
      %v3809 = vpop.f32.mrb[0].mxu0
      %v3810 = vadd.f32 0.0, %v3809
      %v3811 = vpop.f32.mrb[0].mxu0
      %v3812 = vpop.f32.mrb[0].mxu0
      %v3813 = vadd.f32 0.0, %v3812
      %v3814 = vpop.f32.mrb[0].mxu0
      %3815 = vmatprep.mubr.bf16.mxu0 0
      %3816 = vmatmul.mubr.bf16.gmra.mrb[0].mxu0 %v3688
      %v3817 = vpop.f32.mrb[0].mxu0
      %v3818 = vadd.f32 0.0, %v3817
      %v3819 = vpop.f32.mrb[0].mxu0
      %v3820 = vpop.f32.mrb[0].mxu0
      %v3821 = vadd.f32 0.0, %v3820
      %v3822 = vpop.f32.mrb[0].mxu0
      %3823 = vmatprep.mubr.bf16.mxu0 0
      %3824 = vmatmul.mubr.bf16.gmra.mrb[0].mxu0 %v3689
      %v3825 = vpop.f32.mrb[0].mxu0
      %v3826 = vadd.f32 0.0, %v3825
      %v3827 = vpop.f32.mrb[0].mxu0
      %v3828 = vpop.f32.mrb[0].mxu0
      %v3829 = vadd.f32 0.0, %v3828
      %v3830 = vpop.f32.mrb[0].mxu0
      %3831 = vmatprep.mubr.bf16.mxu0 0
      %3832 = vmatmul.mubr.bf16.gmra.mrb[0].mxu0 %v3690
      %v3833 = vpop.f32.mrb[0].mxu0
      %v3834 = vadd.f32 0.0, %v3833
      %v3835 = vpop.f32.mrb[0].mxu0
      %v3836 = vpop.f32.mrb[0].mxu0
      %v3837 = vadd.f32 0.0, %v3836
      %v3838 = vpop.f32.mrb[0].mxu0
      %3839 = vmatprep.mubr.bf16.mxu0 0
      %3840 = vmatmul.mubr.bf16.gmra.mrb[0].mxu0 %v3691
      %v3841 = vpop.f32.mrb[0].mxu0
      %v3842 = vadd.f32 0.0, %v3841
      %v3843 = vpop.f32.mrb[0].mxu0
      %v3844 = vpop.f32.mrb[0].mxu0
      %v3845 = vadd.f32 0.0, %v3844
      %v3846 = vpop.f32.mrb[0].mxu0
      %3847 = vmatprep.mubr.bf16.mxu0 0
      %3848 = vmatmul.mubr.bf16.gmra.mrb[0].mxu0 %v3692
      %v3849 = vpop.f32.mrb[0].mxu0
      %v3850 = vadd.f32 0.0, %v3849
      %v3851 = vpop.f32.mrb[0].mxu0
      %v3852 = vpop.f32.mrb[0].mxu0
      %v3853 = vadd.f32 0.0, %v3852
      %v3854 = vpop.f32.mrb[0].mxu0
      %3855 = vmatprep.mubr.bf16.mxu0 0
      %3856 = vmatmul.mubr.bf16.gmra.mrb[0].mxu0 %v3693
      %v3857 = vpop.f32.mrb[0].mxu0
      %v3858 = vadd.f32 0.0, %v3857
      %v3859 = vpop.f32.mrb[0].mxu0
      %v3860 = vpop.f32.mrb[0].mxu0
      %v3861 = vadd.f32 0.0, %v3860
      %v3862 = vpop.f32.mrb[0].mxu0
      %3863 = vmatprep.mubr.bf16.mxu0 0
      %3864 = vmatmul.mubr.bf16.gmra.mrb[0].mxu0 %v3694
      %v3865 = vpop.f32.mrb[0].mxu0
      %v3866 = vadd.f32 0.0, %v3865
      %v3867 = vpop.f32.mrb[0].mxu0
      %v3868 = vpop.f32.mrb[0].mxu0
      %v3869 = vadd.f32 0.0, %v3868
      %v3870 = vpop.f32.mrb[0].mxu0
      %3871 = vmatprep.mubr.bf16.mxu0 0
      %3872 = vmatmul.mubr.bf16.gmra.mrb[0].mxu0 %v3695
      %v3873 = vpop.f32.mrb[0].mxu0
      %v3874 = vadd.f32 0.0, %v3873
      %v3875 = vpop.f32.mrb[0].mxu0
      %v3876 = vpop.f32.mrb[0].mxu0
      %v3877 = vadd.f32 0.0, %v3876
      %v3878 = vpop.f32.mrb[0].mxu0
      %3879 = vmatprep.mubr.bf16.mxu0 0
      %3880 = vmatmul.mubr.bf16.gmra.mrb[0].mxu0 %v3696
      %v3881 = vpop.f32.mrb[0].mxu0
      %v3882 = vadd.f32 0.0, %v3881
      %v3883 = vpop.f32.mrb[0].mxu0
      %v3884 = vpop.f32.mrb[0].mxu0
      %v3885 = vadd.f32 0.0, %v3884
      %v3886 = vpop.f32.mrb[0].mxu0
      %3887 = vmatprep.mubr.bf16.mxu0 0
      %3888 = vmatmul.mubr.bf16.gmra.mrb[0].mxu0 %v3697
      %v3889 = vpop.f32.mrb[0].mxu0
      %v3890 = vadd.f32 0.0, %v3889
      %v3891 = vpop.f32.mrb[0].mxu0
      %v3892 = vpop.f32.mrb[0].mxu0
      %v3893 = vadd.f32 0.0, %v3892
      %v3894 = vpop.f32.mrb[0].mxu0
      %3895 = vmatprep.mubr.bf16.mxu0 0
      %3896 = vmatmul.mubr.bf16.gmra.mrb[0].mxu0 %v3698
      %v3897 = vpop.f32.mrb[0].mxu0
      %v3898 = vadd.f32 0.0, %v3897
      %v3899 = vpop.f32.mrb[0].mxu0
      %v3900 = vpop.f32.mrb[0].mxu0
      %v3901 = vadd.f32 0.0, %v3900
      %v3902 = vpop.f32.mrb[0].mxu0
      %3903 = vmatprep.mubr.bf16.mxu0 0
      %3904 = vmatmul.mubr.bf16.gmra.mrb[0].mxu0 %v3699
      %v3905 = vpop.f32.mrb[0].mxu0
      %v3906 = vadd.f32 0.0, %v3905
      %v3907 = vpop.f32.mrb[0].mxu0
      %v3908 = vpop.f32.mrb[0].mxu0
      %v3909 = vadd.f32 0.0, %v3908
      %v3910 = vpop.f32.mrb[0].mxu0
      %3911 = vmatprep.mubr.bf16.mxu0 0
      %3912 = vmatmul.mubr.bf16.gmra.mrb[0].mxu0 %v3700
      %v3913 = vpop.f32.mrb[0].mxu0
      %v3914 = vadd.f32 0.0, %v3913
      %v3915 = vpop.f32.mrb[0].mxu0
      %v3916 = vpop.f32.mrb[0].mxu0
      %v3917 = vadd.f32 0.0, %v3916
      %v3918 = vpop.f32.mrb[0].mxu0
      %3919 = vmatprep.mubr.bf16.mxu0 0
      %3920 = vmatmul.mubr.bf16.gmra.mrb[0].mxu0 %v3701
      %v3921 = vpop.f32.mrb[0].mxu0
      %v3922 = vadd.f32 0.0, %v3921
      %v3923 = vpop.f32.mrb[0].mxu0
      %v3924 = vpop.f32.mrb[0].mxu0
      %v3925 = vadd.f32 0.0, %v3924
      %v3926 = vpop.f32.mrb[0].mxu0
      %3927 = vdwg.mxu0
      %v3928 = vadd.f32 %v3590, %v3802
      %v3929 = vadd.f32 %v3591, %v3805
      %v3930 = vadd.f32 %v3592, %v3810
      %v3931 = vadd.f32 %v3593, %v3813
      %v3932 = vadd.f32 %v3594, %v3818
      %v3933 = vadd.f32 %v3595, %v3821
      %v3934 = vadd.f32 %v3596, %v3826
      %v3935 = vadd.f32 %v3597, %v3829
      %v3936 = vadd.f32 %v3598, %v3834
      %v3937 = vadd.f32 %v3599, %v3837
      %v3938 = vadd.f32 %v3600, %v3842
      %v3939 = vadd.f32 %v3601, %v3845
      %v3940 = vadd.f32 %v3602, %v3850
      %v3941 = vadd.f32 %v3603, %v3853
      %v3942 = vadd.f32 %v3604, %v3858
      %v3943 = vadd.f32 %v3605, %v3861
      %v3944 = vadd.f32 %v3606, %v3866
      %v3945 = vadd.f32 %v3607, %v3869
      %v3946 = vadd.f32 %v3608, %v3874
      %v3947 = vadd.f32 %v3609, %v3877
      %v3948 = vadd.f32 %v3610, %v3882
      %v3949 = vadd.f32 %v3611, %v3885
      %v3950 = vadd.f32 %v3612, %v3890
      %v3951 = vadd.f32 %v3613, %v3893
      %v3952 = vadd.f32 %v3614, %v3898
      %v3953 = vadd.f32 %v3615, %v3901
      %v3954 = vadd.f32 %v3616, %v3906
      %v3955 = vadd.f32 %v3617, %v3909
      %v3956 = vadd.f32 %v3618, %v3914
      %v3957 = vadd.f32 %v3619, %v3917
      %v3958 = vadd.f32 %v3620, %v3922
      %v3959 = vadd.f32 %v3621, %v3925
      %v3960 = vld [vmem:[%s4] sm:$0x1]
      %v3962 = vlaneseq
      %v3963 = vshrl.u32 %v3962, 7
      %v3964 = vsub.s32 0, %v3963
      %v3965 = vrot.slane %v3960, %v3964
      %v3967 = vadd.f32 %v3928, %v3965
      %v3968 = vadd.f32 %v3929, %v3965
      %v3969 = vadd.f32 %v3930, %v3965
      %v3970 = vadd.f32 %v3931, %v3965
      %v3971 = vadd.f32 %v3932, %v3965
      %v3972 = vadd.f32 %v3933, %v3965
      %v3973 = vadd.f32 %v3934, %v3965
      %v3974 = vadd.f32 %v3935, %v3965
      %v3975 = vadd.f32 %v3936, %v3965
      %v3976 = vadd.f32 %v3937, %v3965
      %v3977 = vadd.f32 %v3938, %v3965
      %v3978 = vadd.f32 %v3939, %v3965
      %v3979 = vadd.f32 %v3940, %v3965
      %v3980 = vadd.f32 %v3941, %v3965
      %v3981 = vadd.f32 %v3942, %v3965
      %v3982 = vadd.f32 %v3943, %v3965
      %v3983 = vadd.f32 %v3944, %v3965
      %v3984 = vadd.f32 %v3945, %v3965
      %v3985 = vadd.f32 %v3946, %v3965
      %v3986 = vadd.f32 %v3947, %v3965
      %v3987 = vadd.f32 %v3948, %v3965
      %v3988 = vadd.f32 %v3949, %v3965
      %v3989 = vadd.f32 %v3950, %v3965
      %v3990 = vadd.f32 %v3951, %v3965
      %v3991 = vadd.f32 %v3952, %v3965
      %v3992 = vadd.f32 %v3953, %v3965
      %v3993 = vadd.f32 %v3954, %v3965
      %v3994 = vadd.f32 %v3955, %v3965
      %v3995 = vadd.f32 %v3956, %v3965
      %v3996 = vadd.f32 %v3957, %v3965
      %v3997 = vadd.f32 %v3958, %v3965
      %v3998 = vadd.f32 %v3959, %v3965
      %v3999 = vmax.f32 %v3967, 0.0
      %v4000 = vmax.f32 %v3968, 0.0
      %v4001 = vmax.f32 %v3969, 0.0
      %v4002 = vmax.f32 %v3970, 0.0
      %v4003 = vmax.f32 %v3971, 0.0
      %v4004 = vmax.f32 %v3972, 0.0
      %v4005 = vmax.f32 %v3973, 0.0
      %v4006 = vmax.f32 %v3974, 0.0
      %v4007 = vmax.f32 %v3975, 0.0
      %v4008 = vmax.f32 %v3976, 0.0
      %v4009 = vmax.f32 %v3977, 0.0
      %v4010 = vmax.f32 %v3978, 0.0
      %v4011 = vmax.f32 %v3979, 0.0
      %v4012 = vmax.f32 %v3980, 0.0
      %v4013 = vmax.f32 %v3981, 0.0
      %v4014 = vmax.f32 %v3982, 0.0
      %v4015 = vmax.f32 %v3983, 0.0
      %v4016 = vmax.f32 %v3984, 0.0
      %v4017 = vmax.f32 %v3985, 0.0
      %v4018 = vmax.f32 %v3986, 0.0
      %v4019 = vmax.f32 %v3987, 0.0
      %v4020 = vmax.f32 %v3988, 0.0
      %v4021 = vmax.f32 %v3989, 0.0
      %v4022 = vmax.f32 %v3990, 0.0
      %v4023 = vmax.f32 %v3991, 0.0
      %v4024 = vmax.f32 %v3992, 0.0
      %v4025 = vmax.f32 %v3993, 0.0
      %v4026 = vmax.f32 %v3994, 0.0
      %v4027 = vmax.f32 %v3995, 0.0
      %v4028 = vmax.f32 %v3996, 0.0
      %v4029 = vmax.f32 %v3997, 0.0
      %v4030 = vmax.f32 %v3998, 0.0
      %4031 = vst [vmem:[#allocation2 + $0x18] sm:$0xff] %v3999
      %4032 = vst [vmem:[#allocation2 + $0x20] sm:$0xff] %v4000
      %4033 = vst [vmem:[#allocation2 + $0x28] sm:$0xff] %v4001
      %4034 = vst [vmem:[#allocation2 + $0x30] sm:$0xff] %v4002
      %4035 = vst [vmem:[#allocation2 + $0x38] sm:$0xff] %v4003
      %4036 = vst [vmem:[#allocation2 + $0x40] sm:$0xff] %v4004
      %4037 = vst [vmem:[#allocation2 + $0x48] sm:$0xff] %v4005
      %4038 = vst [vmem:[#allocation2 + $0x50] sm:$0xff] %v4006
      %4039 = vst [vmem:[#allocation2 + $0x58] sm:$0xff] %v4007
      %4040 = vst [vmem:[#allocation2 + $0x60] sm:$0xff] %v4008
      %4041 = vst [vmem:[#allocation2 + $0x68] sm:$0xff] %v4009
      %4042 = vst [vmem:[#allocation2 + $0x70] sm:$0xff] %v4010
      %4043 = vst [vmem:[#allocation2 + $0x78] sm:$0xff] %v4011
      %4044 = vst [vmem:[#allocation2 + $0x80] sm:$0xff] %v4012
      %4045 = vst [vmem:[#allocation2 + $0x88] sm:$0xff] %v4013
      %4046 = vst [vmem:[#allocation2 + $0x90] sm:$0xff] %v4014
      %4047 = vst [vmem:[#allocation2 + $0x98] sm:$0xff] %v4015
      %4048 = vst [vmem:[#allocation2 + $0xa0] sm:$0xff] %v4016
      %4049 = vst [vmem:[#allocation2 + $0xa8] sm:$0xff] %v4017
      %4050 = vst [vmem:[#allocation2 + $0xb0] sm:$0xff] %v4018
      %4051 = vst [vmem:[#allocation2 + $0xb8] sm:$0xff] %v4019
      %4052 = vst [vmem:[#allocation2 + $0xc0] sm:$0xff] %v4020
      %4053 = vst [vmem:[#allocation2 + $0xc8] sm:$0xff] %v4021
      %4054 = vst [vmem:[#allocation2 + $0xd0] sm:$0xff] %v4022
      %4055 = vst [vmem:[#allocation2 + $0xd8] sm:$0xff] %v4023
      %4056 = vst [vmem:[#allocation2 + $0xe0] sm:$0xff] %v4024
      %4057 = vst [vmem:[#allocation2 + $0xe8] sm:$0xff] %v4025
      %4058 = vst [vmem:[#allocation2 + $0xf0] sm:$0xff] %v4026
      %4059 = vst [vmem:[#allocation2 + $0xf8] sm:$0xff] %v4027
      %4060 = vst [vmem:[#allocation2 + $0x100] sm:$0xff] %v4028
      %4061 = vst [vmem:[#allocation2 + $0x108] sm:$0xff] %v4029
      %4062 = vst [vmem:[#allocation2 + $0x110] sm:$0xff] %v4030
      %v4063 = vld [vmem:[#allocation2 + $0x7] sm:$0xff]
      %v4064 = vld [vmem:[#allocation2 + $0xf] sm:$0xff]
      %v4065 = vld [vmem:[#allocation2 + $0x17] sm:$0xff]
      %v4066 = vld [vmem:[#allocation2 + $0x1f] sm:$0xff]
      %v4067 = vld [vmem:[#allocation2 + $0x27] sm:$0xff]
      %v4068 = vld [vmem:[#allocation2 + $0x2f] sm:$0xff]
      %v4069 = vld [vmem:[#allocation2 + $0x37] sm:$0xff]
      %v4070 = vld [vmem:[#allocation2 + $0x3f] sm:$0xff]
      %v4071 = vld [vmem:[#allocation2 + $0x47] sm:$0xff]
      %v4072 = vld [vmem:[#allocation2 + $0x4f] sm:$0xff]
      %v4073 = vld [vmem:[#allocation2 + $0x57] sm:$0xff]
      %v4074 = vld [vmem:[#allocation2 + $0x5f] sm:$0xff]
      %v4075 = vld [vmem:[#allocation2 + $0x67] sm:$0xff]
      %v4076 = vld [vmem:[#allocation2 + $0x6f] sm:$0xff]
      %v4077 = vld [vmem:[#allocation2 + $0x77] sm:$0xff]
      %v4078 = vld [vmem:[#allocation2 + $0x7f] sm:$0xff]
      %v4079 = vld [vmem:[#allocation2 + $0x87] sm:$0xff]
      %v4080 = vld [vmem:[#allocation2 + $0x8f] sm:$0xff]
      %v4081 = vld [vmem:[#allocation2 + $0x97] sm:$0xff]
      %v4082 = vld [vmem:[#allocation2 + $0x9f] sm:$0xff]
      %v4083 = vld [vmem:[#allocation2 + $0xa7] sm:$0xff]
      %v4084 = vld [vmem:[#allocation2 + $0xaf] sm:$0xff]
      %v4085 = vld [vmem:[#allocation2 + $0xb7] sm:$0xff]
      %v4086 = vld [vmem:[#allocation2 + $0xbf] sm:$0xff]
      %v4087 = vld [vmem:[#allocation2 + $0xc7] sm:$0xff]
      %v4088 = vld [vmem:[#allocation2 + $0xcf] sm:$0xff]
      %v4089 = vld [vmem:[#allocation2 + $0xd7] sm:$0xff]
      %v4090 = vld [vmem:[#allocation2 + $0xdf] sm:$0xff]
      %v4091 = vld [vmem:[#allocation2 + $0xe7] sm:$0xff]
      %v4092 = vld [vmem:[#allocation2 + $0xef] sm:$0xff]
      %v4093 = vld [vmem:[#allocation2 + $0xf7] sm:$0xff]
      %v4094 = vld [vmem:[#allocation2 + $0xff] sm:$0xff]
      %v4095 = vsel %vm887, %v4063, 0.0
      %v4096 = vsel %vm888, %v4064, 0.0
      %v4097 = vsel %vm889, %v4065, 0.0
      %v4098 = vsel %vm890, %v4066, 0.0
      %v4099 = vsel %vm891, %v4067, 0.0
      %v4100 = vsel %vm892, %v4068, 0.0
      %v4101 = vsel %vm893, %v4069, 0.0
      %v4102 = vsel %vm894, %v4070, 0.0
      %v4103 = vsel %vm895, %v4071, 0.0
      %v4104 = vsel %vm896, %v4072, 0.0
      %v4105 = vsel %vm897, %v4073, 0.0
      %v4106 = vsel %vm898, %v4074, 0.0
      %v4107 = vsel %vm899, %v4075, 0.0
      %v4108 = vsel %vm900, %v4076, 0.0
      %v4109 = vsel %vm901, %v4077, 0.0
      %v4110 = vsel %vm902, %v4078, 0.0
      %v4111 = vsel %vm903, %v4079, 0.0
      %v4112 = vsel %vm904, %v4080, 0.0
      %v4113 = vsel %vm905, %v4081, 0.0
      %v4114 = vsel %vm906, %v4082, 0.0
      %v4115 = vsel %vm907, %v4083, 0.0
      %v4116 = vsel %vm908, %v4084, 0.0
      %v4117 = vsel %vm909, %v4085, 0.0
      %v4118 = vsel %vm910, %v4086, 0.0
      %v4119 = vsel %vm911, %v4087, 0.0
      %v4120 = vsel %vm912, %v4088, 0.0
      %v4121 = vsel %vm913, %v4089, 0.0
      %v4122 = vsel %vm914, %v4090, 0.0
      %v4123 = vsel %vm915, %v4091, 0.0
      %v4124 = vsel %vm916, %v4092, 0.0
      %v4125 = vsel %vm917, %v4093, 0.0
      %v4126 = vsel %vm918, %v4094, 0.0
      %v4127 = vpack.c.bf16 %v4096, %v4095
      %v4128 = vpack.c.bf16 %v4098, %v4097
      %v4129 = vpack.c.bf16 %v4100, %v4099
      %v4130 = vpack.c.bf16 %v4102, %v4101
      %v4131 = vpack.c.bf16 %v4104, %v4103
      %v4132 = vpack.c.bf16 %v4106, %v4105
      %v4133 = vpack.c.bf16 %v4108, %v4107
      %v4134 = vpack.c.bf16 %v4110, %v4109
      %v4135 = vpack.c.bf16 %v4112, %v4111
      %v4136 = vpack.c.bf16 %v4114, %v4113
      %v4137 = vpack.c.bf16 %v4116, %v4115
      %v4138 = vpack.c.bf16 %v4118, %v4117
      %v4139 = vpack.c.bf16 %v4120, %v4119
      %v4140 = vpack.c.bf16 %v4122, %v4121
      %v4141 = vpack.c.bf16 %v4124, %v4123
      %v4142 = vpack.c.bf16 %v4126, %v4125
      %v4143 = vld [vmem:[%s5] sm:$0xf]
      %v4144 = vld [vmem:[%s5 + $0x4] sm:$0xf]
      %v4145 = vld [vmem:[%s5 + $0x8] sm:$0xf]
      %v4146 = vld [vmem:[%s5 + $0xc] sm:$0xf]
      %v4147 = vld [vmem:[%s5 + $0x10] sm:$0xf]
      %v4148 = vld [vmem:[%s5 + $0x14] sm:$0xf]
      %v4149 = vld [vmem:[%s5 + $0x18] sm:$0xf]
      %v4150 = vld [vmem:[%s5 + $0x1c] sm:$0xf]
      %v4151 = vld [vmem:[%s5 + $0x20] sm:$0xf]
      %v4152 = vld [vmem:[%s5 + $0x24] sm:$0xf]
      %v4153 = vld [vmem:[%s5 + $0x28] sm:$0xf]
      %v4154 = vld [vmem:[%s5 + $0x2c] sm:$0xf]
      %v4155 = vld [vmem:[%s5 + $0x30] sm:$0xf]
      %v4156 = vld [vmem:[%s5 + $0x34] sm:$0xf]
      %v4157 = vld [vmem:[%s5 + $0x38] sm:$0xf]
      %v4158 = vld [vmem:[%s5 + $0x3c] sm:$0xf]
      %v4159 = vld [vmem:[#allocation2 + $0x8] sm:$0xff]
      %v4160 = vld [vmem:[#allocation2 + $0x10] sm:$0xff]
      %v4161 = vld [vmem:[#allocation2 + $0x18] sm:$0xff]
      %v4162 = vld [vmem:[#allocation2 + $0x20] sm:$0xff]
      %v4163 = vld [vmem:[#allocation2 + $0x28] sm:$0xff]
      %v4164 = vld [vmem:[#allocation2 + $0x30] sm:$0xff]
      %v4165 = vld [vmem:[#allocation2 + $0x38] sm:$0xff]
      %v4166 = vld [vmem:[#allocation2 + $0x40] sm:$0xff]
      %v4167 = vld [vmem:[#allocation2 + $0x48] sm:$0xff]
      %v4168 = vld [vmem:[#allocation2 + $0x50] sm:$0xff]
      %v4169 = vld [vmem:[#allocation2 + $0x58] sm:$0xff]
      %v4170 = vld [vmem:[#allocation2 + $0x60] sm:$0xff]
      %v4171 = vld [vmem:[#allocation2 + $0x68] sm:$0xff]
      %v4172 = vld [vmem:[#allocation2 + $0x70] sm:$0xff]
      %v4173 = vld [vmem:[#allocation2 + $0x78] sm:$0xff]
      %v4174 = vld [vmem:[#allocation2 + $0x80] sm:$0xff]
      %v4175 = vld [vmem:[#allocation2 + $0x88] sm:$0xff]
      %v4176 = vld [vmem:[#allocation2 + $0x90] sm:$0xff]
      %v4177 = vld [vmem:[#allocation2 + $0x98] sm:$0xff]
      %v4178 = vld [vmem:[#allocation2 + $0xa0] sm:$0xff]
      %v4179 = vld [vmem:[#allocation2 + $0xa8] sm:$0xff]
      %v4180 = vld [vmem:[#allocation2 + $0xb0] sm:$0xff]
      %v4181 = vld [vmem:[#allocation2 + $0xb8] sm:$0xff]
      %v4182 = vld [vmem:[#allocation2 + $0xc0] sm:$0xff]
      %v4183 = vld [vmem:[#allocation2 + $0xc8] sm:$0xff]
      %v4184 = vld [vmem:[#allocation2 + $0xd0] sm:$0xff]
      %v4185 = vld [vmem:[#allocation2 + $0xd8] sm:$0xff]
      %v4186 = vld [vmem:[#allocation2 + $0xe0] sm:$0xff]
      %v4187 = vld [vmem:[#allocation2 + $0xe8] sm:$0xff]
      %v4188 = vld [vmem:[#allocation2 + $0xf0] sm:$0xff]
      %v4189 = vld [vmem:[#allocation2 + $0xf8] sm:$0xff]
      %v4190 = vld [vmem:[#allocation2 + $0x100] sm:$0xff]
      %v4191 = vpack.c.bf16 %v4160, %v4159
      %v4192 = vpack.c.bf16 %v4162, %v4161
      %v4193 = vpack.c.bf16 %v4164, %v4163
      %v4194 = vpack.c.bf16 %v4166, %v4165
      %v4195 = vpack.c.bf16 %v4168, %v4167
      %v4196 = vpack.c.bf16 %v4170, %v4169
      %v4197 = vpack.c.bf16 %v4172, %v4171
      %v4198 = vpack.c.bf16 %v4174, %v4173
      %v4199 = vpack.c.bf16 %v4176, %v4175
      %v4200 = vpack.c.bf16 %v4178, %v4177
      %v4201 = vpack.c.bf16 %v4180, %v4179
      %v4202 = vpack.c.bf16 %v4182, %v4181
      %v4203 = vpack.c.bf16 %v4184, %v4183
      %v4204 = vpack.c.bf16 %v4186, %v4185
      %v4205 = vpack.c.bf16 %v4188, %v4187
      %v4206 = vpack.c.bf16 %v4190, %v4189
      %s4207 = scalar_lea.vmem %s5, 64
      %v4208 = vld [vmem:[%s4207] sm:$0xf]
      %v4209 = vld [vmem:[%s4207 + $0x4] sm:$0xf]
      %v4210 = vld [vmem:[%s4207 + $0x8] sm:$0xf]
      %v4211 = vld [vmem:[%s4207 + $0xc] sm:$0xf]
      %v4212 = vld [vmem:[%s4207 + $0x10] sm:$0xf]
      %v4213 = vld [vmem:[%s4207 + $0x14] sm:$0xf]
      %v4214 = vld [vmem:[%s4207 + $0x18] sm:$0xf]
      %v4215 = vld [vmem:[%s4207 + $0x1c] sm:$0xf]
      %v4216 = vld [vmem:[%s4207 + $0x20] sm:$0xf]
      %v4217 = vld [vmem:[%s4207 + $0x24] sm:$0xf]
      %v4218 = vld [vmem:[%s4207 + $0x28] sm:$0xf]
      %v4219 = vld [vmem:[%s4207 + $0x2c] sm:$0xf]
      %v4220 = vld [vmem:[%s4207 + $0x30] sm:$0xf]
      %v4221 = vld [vmem:[%s4207 + $0x34] sm:$0xf]
      %v4222 = vld [vmem:[%s4207 + $0x38] sm:$0xf]
      %v4223 = vld [vmem:[%s4207 + $0x3c] sm:$0xf]
      %v4240 = vunpack.c.l.b16 %v4208
      %v4241 = vunpack.c.l.b16 %v4209
      %v4242 = vunpack.c.l.b16 %v4210
      %v4243 = vunpack.c.l.b16 %v4211
      %v4244 = vunpack.c.l.b16 %v4212
      %v4245 = vunpack.c.l.b16 %v4213
      %v4246 = vunpack.c.l.b16 %v4214
      %v4247 = vunpack.c.l.b16 %v4215
      %v4248 = vunpack.c.l.b16 %v4216
      %v4249 = vunpack.c.l.b16 %v4217
      %v4250 = vunpack.c.l.b16 %v4218
      %v4251 = vunpack.c.l.b16 %v4219
      %v4252 = vunpack.c.l.b16 %v4220
      %v4253 = vunpack.c.l.b16 %v4221
      %v4254 = vunpack.c.l.b16 %v4222
      %v4255 = vunpack.c.l.b16 %v4223
      %v4256 = vpack.c.b16 %v4241, %v4240
      %v4257 = vpack.c.b16 %v4243, %v4242
      %v4258 = vpack.c.b16 %v4245, %v4244
      %v4259 = vpack.c.b16 %v4247, %v4246
      %v4260 = vpack.c.b16 %v4249, %v4248
      %v4261 = vpack.c.b16 %v4251, %v4250
      %v4262 = vpack.c.b16 %v4253, %v4252
      %v4263 = vpack.c.b16 %v4255, %v4254
      %4272 = vmatprep.subr.bf16.mxu0 0
      %4273 = vmatpush1.bf16.msra.mxu0 %v4256
      %4274 = vmatprep.subr.bf16.mxu0 0
      %4275 = vmatpush1.bf16.msra.mxu0 %v4257
      %4276 = vmatprep.subr.bf16.mxu0 0
      %4277 = vmatpush1.bf16.msra.mxu0 %v4258
      %4278 = vmatprep.subr.bf16.mxu0 0
      %4279 = vmatpush1.bf16.msra.mxu0 %v4259
      %4280 = vmatprep.subr.bf16.mxu0 0
      %4281 = vmatpush1.bf16.msra.mxu0 %v4260
      %4282 = vmatprep.subr.bf16.mxu0 0
      %4283 = vmatpush1.bf16.msra.mxu0 %v4261
      %4284 = vmatprep.subr.bf16.mxu0 0
      %4285 = vmatpush1.bf16.msra.mxu0 %v4262
      %4286 = vmatprep.subr.bf16.mxu0 0
      %4287 = vmatpush1.bf16.msra.mxu0 %v4263
      %4288 = vmatprep.subr.bf16.mxu0 0
      %4289 = vmatpush1.bf16.msra.mxu0 0
      %4290 = vmatprep.subr.bf16.mxu0 0
      %4291 = vmatpush1.bf16.msra.mxu0 0
      %4292 = vmatprep.subr.bf16.mxu0 0
      %4293 = vmatpush1.bf16.msra.mxu0 0
      %4294 = vmatprep.subr.bf16.mxu0 0
      %4295 = vmatpush1.bf16.msra.mxu0 0
      %4296 = vmatprep.subr.bf16.mxu0 0
      %4297 = vmatpush1.bf16.msra.mxu0 0
      %4298 = vmatprep.subr.bf16.mxu0 0
      %4299 = vmatpush1.bf16.msra.mxu0 0
      %4300 = vmatprep.subr.bf16.mxu0 0
      %4301 = vmatpush1.bf16.msra.mxu0 0
      %4302 = vmatprep.subr.bf16.mxu0 0
      %4303 = vmatpush1.bf16.msra.mxu0 0
      %4304 = vmatprep.mubr.bf16.mxu0 0
      %4305 = vmatmul.mubr.bf16.gmra.mrb[0].mxu0 %v4191
      %v4306 = vpop.f32.mrb[0].mxu0
      %v4307 = vadd.f32 0.0, %v4306
      %v4308 = vpop.f32.mrb[0].mxu0
      %v4309 = vpop.f32.mrb[0].mxu0
      %v4310 = vadd.f32 0.0, %v4309
      %v4311 = vpop.f32.mrb[0].mxu0
      %4312 = vmatprep.mubr.bf16.mxu0 0
      %4313 = vmatmul.mubr.bf16.gmra.mrb[0].mxu0 %v4192
      %v4314 = vpop.f32.mrb[0].mxu0
      %v4315 = vadd.f32 0.0, %v4314
      %v4316 = vpop.f32.mrb[0].mxu0
      %v4317 = vpop.f32.mrb[0].mxu0
      %v4318 = vadd.f32 0.0, %v4317
      %v4319 = vpop.f32.mrb[0].mxu0
      %4320 = vmatprep.mubr.bf16.mxu0 0
      %4321 = vmatmul.mubr.bf16.gmra.mrb[0].mxu0 %v4193
      %v4322 = vpop.f32.mrb[0].mxu0
      %v4323 = vadd.f32 0.0, %v4322
      %v4324 = vpop.f32.mrb[0].mxu0
      %v4325 = vpop.f32.mrb[0].mxu0
      %v4326 = vadd.f32 0.0, %v4325
      %v4327 = vpop.f32.mrb[0].mxu0
      %4328 = vmatprep.mubr.bf16.mxu0 0
      %4329 = vmatmul.mubr.bf16.gmra.mrb[0].mxu0 %v4194
      %v4330 = vpop.f32.mrb[0].mxu0
      %v4331 = vadd.f32 0.0, %v4330
      %v4332 = vpop.f32.mrb[0].mxu0
      %v4333 = vpop.f32.mrb[0].mxu0
      %v4334 = vadd.f32 0.0, %v4333
      %v4335 = vpop.f32.mrb[0].mxu0
      %4336 = vmatprep.mubr.bf16.mxu0 0
      %4337 = vmatmul.mubr.bf16.gmra.mrb[0].mxu0 %v4195
      %v4338 = vpop.f32.mrb[0].mxu0
      %v4339 = vadd.f32 0.0, %v4338
      %v4340 = vpop.f32.mrb[0].mxu0
      %v4341 = vpop.f32.mrb[0].mxu0
      %v4342 = vadd.f32 0.0, %v4341
      %v4343 = vpop.f32.mrb[0].mxu0
      %4344 = vmatprep.mubr.bf16.mxu0 0
      %4345 = vmatmul.mubr.bf16.gmra.mrb[0].mxu0 %v4196
      %v4346 = vpop.f32.mrb[0].mxu0
      %v4347 = vadd.f32 0.0, %v4346
      %v4348 = vpop.f32.mrb[0].mxu0
      %v4349 = vpop.f32.mrb[0].mxu0
      %v4350 = vadd.f32 0.0, %v4349
      %v4351 = vpop.f32.mrb[0].mxu0
      %4352 = vmatprep.mubr.bf16.mxu0 0
      %4353 = vmatmul.mubr.bf16.gmra.mrb[0].mxu0 %v4197
      %v4354 = vpop.f32.mrb[0].mxu0
      %v4355 = vadd.f32 0.0, %v4354
      %v4356 = vpop.f32.mrb[0].mxu0
      %v4357 = vpop.f32.mrb[0].mxu0
      %v4358 = vadd.f32 0.0, %v4357
      %v4359 = vpop.f32.mrb[0].mxu0
      %4360 = vmatprep.mubr.bf16.mxu0 0
      %4361 = vmatmul.mubr.bf16.gmra.mrb[0].mxu0 %v4198
      %v4362 = vpop.f32.mrb[0].mxu0
      %v4363 = vadd.f32 0.0, %v4362
      %v4364 = vpop.f32.mrb[0].mxu0
      %v4365 = vpop.f32.mrb[0].mxu0
      %v4366 = vadd.f32 0.0, %v4365
      %v4367 = vpop.f32.mrb[0].mxu0
      %4368 = vmatprep.mubr.bf16.mxu0 0
      %4369 = vmatmul.mubr.bf16.gmra.mrb[0].mxu0 %v4199
      %v4370 = vpop.f32.mrb[0].mxu0
      %v4371 = vadd.f32 0.0, %v4370
      %v4372 = vpop.f32.mrb[0].mxu0
      %v4373 = vpop.f32.mrb[0].mxu0
      %v4374 = vadd.f32 0.0, %v4373
      %v4375 = vpop.f32.mrb[0].mxu0
      %4376 = vmatprep.mubr.bf16.mxu0 0
      %4377 = vmatmul.mubr.bf16.gmra.mrb[0].mxu0 %v4200
      %v4378 = vpop.f32.mrb[0].mxu0
      %v4379 = vadd.f32 0.0, %v4378
      %v4380 = vpop.f32.mrb[0].mxu0
      %v4381 = vpop.f32.mrb[0].mxu0
      %v4382 = vadd.f32 0.0, %v4381
      %v4383 = vpop.f32.mrb[0].mxu0
      %4384 = vmatprep.mubr.bf16.mxu0 0
      %4385 = vmatmul.mubr.bf16.gmra.mrb[0].mxu0 %v4201
      %v4386 = vpop.f32.mrb[0].mxu0
      %v4387 = vadd.f32 0.0, %v4386
      %v4388 = vpop.f32.mrb[0].mxu0
      %v4389 = vpop.f32.mrb[0].mxu0
      %v4390 = vadd.f32 0.0, %v4389
      %v4391 = vpop.f32.mrb[0].mxu0
      %4392 = vmatprep.mubr.bf16.mxu0 0
      %4393 = vmatmul.mubr.bf16.gmra.mrb[0].mxu0 %v4202
      %v4394 = vpop.f32.mrb[0].mxu0
      %v4395 = vadd.f32 0.0, %v4394
      %v4396 = vpop.f32.mrb[0].mxu0
      %v4397 = vpop.f32.mrb[0].mxu0
      %v4398 = vadd.f32 0.0, %v4397
      %v4399 = vpop.f32.mrb[0].mxu0
      %4400 = vmatprep.mubr.bf16.mxu0 0
      %4401 = vmatmul.mubr.bf16.gmra.mrb[0].mxu0 %v4203
      %v4402 = vpop.f32.mrb[0].mxu0
      %v4403 = vadd.f32 0.0, %v4402
      %v4404 = vpop.f32.mrb[0].mxu0
      %v4405 = vpop.f32.mrb[0].mxu0
      %v4406 = vadd.f32 0.0, %v4405
      %v4407 = vpop.f32.mrb[0].mxu0
      %4408 = vmatprep.mubr.bf16.mxu0 0
      %4409 = vmatmul.mubr.bf16.gmra.mrb[0].mxu0 %v4204
      %v4410 = vpop.f32.mrb[0].mxu0
      %v4411 = vadd.f32 0.0, %v4410
      %v4412 = vpop.f32.mrb[0].mxu0
      %v4413 = vpop.f32.mrb[0].mxu0
      %v4414 = vadd.f32 0.0, %v4413
      %v4415 = vpop.f32.mrb[0].mxu0
      %4416 = vmatprep.mubr.bf16.mxu0 0
      %4417 = vmatmul.mubr.bf16.gmra.mrb[0].mxu0 %v4205
      %v4418 = vpop.f32.mrb[0].mxu0
      %v4419 = vadd.f32 0.0, %v4418
      %v4420 = vpop.f32.mrb[0].mxu0
      %v4421 = vpop.f32.mrb[0].mxu0
      %v4422 = vadd.f32 0.0, %v4421
      %v4423 = vpop.f32.mrb[0].mxu0
      %4424 = vmatprep.mubr.bf16.mxu0 0
      %4425 = vmatmul.mubr.bf16.gmra.mrb[0].mxu0 %v4206
      %v4426 = vpop.f32.mrb[0].mxu0
      %v4427 = vadd.f32 0.0, %v4426
      %v4428 = vpop.f32.mrb[0].mxu0
      %v4429 = vpop.f32.mrb[0].mxu0
      %v4430 = vadd.f32 0.0, %v4429
      %v4431 = vpop.f32.mrb[0].mxu0
      %4432 = vdwg.mxu0
      %v4449 = vunpack.c.l.b16 %v4143
      %v4450 = vunpack.c.l.b16 %v4144
      %v4451 = vunpack.c.l.b16 %v4145
      %v4452 = vunpack.c.l.b16 %v4146
      %v4453 = vunpack.c.l.b16 %v4147
      %v4454 = vunpack.c.l.b16 %v4148
      %v4455 = vunpack.c.l.b16 %v4149
      %v4456 = vunpack.c.l.b16 %v4150
      %v4457 = vunpack.c.l.b16 %v4151
      %v4458 = vunpack.c.l.b16 %v4152
      %v4459 = vunpack.c.l.b16 %v4153
      %v4460 = vunpack.c.l.b16 %v4154
      %v4461 = vunpack.c.l.b16 %v4155
      %v4462 = vunpack.c.l.b16 %v4156
      %v4463 = vunpack.c.l.b16 %v4157
      %v4464 = vunpack.c.l.b16 %v4158
      %v4465 = vpack.c.b16 %v4450, %v4449
      %v4466 = vpack.c.b16 %v4452, %v4451
      %v4467 = vpack.c.b16 %v4454, %v4453
      %v4468 = vpack.c.b16 %v4456, %v4455
      %v4469 = vpack.c.b16 %v4458, %v4457
      %v4470 = vpack.c.b16 %v4460, %v4459
      %v4471 = vpack.c.b16 %v4462, %v4461
      %v4472 = vpack.c.b16 %v4464, %v4463
      %4481 = vmatprep.subr.bf16.mxu0 0
      %4482 = vmatpush1.bf16.msra.mxu0 %v4465
      %4483 = vmatprep.subr.bf16.mxu0 0
      %4484 = vmatpush1.bf16.msra.mxu0 %v4466
      %4485 = vmatprep.subr.bf16.mxu0 0
      %4486 = vmatpush1.bf16.msra.mxu0 %v4467
      %4487 = vmatprep.subr.bf16.mxu0 0
      %4488 = vmatpush1.bf16.msra.mxu0 %v4468
      %4489 = vmatprep.subr.bf16.mxu0 0
      %4490 = vmatpush1.bf16.msra.mxu0 %v4469
      %4491 = vmatprep.subr.bf16.mxu0 0
      %4492 = vmatpush1.bf16.msra.mxu0 %v4470
      %4493 = vmatprep.subr.bf16.mxu0 0
      %4494 = vmatpush1.bf16.msra.mxu0 %v4471
      %4495 = vmatprep.subr.bf16.mxu0 0
      %4496 = vmatpush1.bf16.msra.mxu0 %v4472
      %4497 = vmatprep.subr.bf16.mxu0 0
      %4498 = vmatpush1.bf16.msra.mxu0 0
      %4499 = vmatprep.subr.bf16.mxu0 0
      %4500 = vmatpush1.bf16.msra.mxu0 0
      %4501 = vmatprep.subr.bf16.mxu0 0
      %4502 = vmatpush1.bf16.msra.mxu0 0
      %4503 = vmatprep.subr.bf16.mxu0 0
      %4504 = vmatpush1.bf16.msra.mxu0 0
      %4505 = vmatprep.subr.bf16.mxu0 0
      %4506 = vmatpush1.bf16.msra.mxu0 0
      %4507 = vmatprep.subr.bf16.mxu0 0
      %4508 = vmatpush1.bf16.msra.mxu0 0
      %4509 = vmatprep.subr.bf16.mxu0 0
      %4510 = vmatpush1.bf16.msra.mxu0 0
      %4511 = vmatprep.subr.bf16.mxu0 0
      %4512 = vmatpush1.bf16.msra.mxu0 0
      %4513 = vmatprep.mubr.bf16.mxu0 0
      %4514 = vmatmul.mubr.bf16.gmra.mrb[0].mxu0 %v4127
      %v4515 = vpop.f32.mrb[0].mxu0
      %v4516 = vadd.f32 %v4307, %v4515
      %v4517 = vpop.f32.mrb[0].mxu0
      %v4518 = vpop.f32.mrb[0].mxu0
      %v4519 = vadd.f32 %v4310, %v4518
      %v4520 = vpop.f32.mrb[0].mxu0
      %4521 = vmatprep.mubr.bf16.mxu0 0
      %4522 = vmatmul.mubr.bf16.gmra.mrb[0].mxu0 %v4128
      %v4523 = vpop.f32.mrb[0].mxu0
      %v4524 = vadd.f32 %v4315, %v4523
      %v4525 = vpop.f32.mrb[0].mxu0
      %v4526 = vpop.f32.mrb[0].mxu0
      %v4527 = vadd.f32 %v4318, %v4526
      %v4528 = vpop.f32.mrb[0].mxu0
      %4529 = vmatprep.mubr.bf16.mxu0 0
      %4530 = vmatmul.mubr.bf16.gmra.mrb[0].mxu0 %v4129
      %v4531 = vpop.f32.mrb[0].mxu0
      %v4532 = vadd.f32 %v4323, %v4531
      %v4533 = vpop.f32.mrb[0].mxu0
      %v4534 = vpop.f32.mrb[0].mxu0
      %v4535 = vadd.f32 %v4326, %v4534
      %v4536 = vpop.f32.mrb[0].mxu0
      %4537 = vmatprep.mubr.bf16.mxu0 0
      %4538 = vmatmul.mubr.bf16.gmra.mrb[0].mxu0 %v4130
      %v4539 = vpop.f32.mrb[0].mxu0
      %v4540 = vadd.f32 %v4331, %v4539
      %v4541 = vpop.f32.mrb[0].mxu0
      %v4542 = vpop.f32.mrb[0].mxu0
      %v4543 = vadd.f32 %v4334, %v4542
      %v4544 = vpop.f32.mrb[0].mxu0
      %4545 = vmatprep.mubr.bf16.mxu0 0
      %4546 = vmatmul.mubr.bf16.gmra.mrb[0].mxu0 %v4131
      %v4547 = vpop.f32.mrb[0].mxu0
      %v4548 = vadd.f32 %v4339, %v4547
      %v4549 = vpop.f32.mrb[0].mxu0
      %v4550 = vpop.f32.mrb[0].mxu0
      %v4551 = vadd.f32 %v4342, %v4550
      %v4552 = vpop.f32.mrb[0].mxu0
      %4553 = vmatprep.mubr.bf16.mxu0 0
      %4554 = vmatmul.mubr.bf16.gmra.mrb[0].mxu0 %v4132
      %v4555 = vpop.f32.mrb[0].mxu0
      %v4556 = vadd.f32 %v4347, %v4555
      %v4557 = vpop.f32.mrb[0].mxu0
      %v4558 = vpop.f32.mrb[0].mxu0
      %v4559 = vadd.f32 %v4350, %v4558
      %v4560 = vpop.f32.mrb[0].mxu0
      %4561 = vmatprep.mubr.bf16.mxu0 0
      %4562 = vmatmul.mubr.bf16.gmra.mrb[0].mxu0 %v4133
      %v4563 = vpop.f32.mrb[0].mxu0
      %v4564 = vadd.f32 %v4355, %v4563
      %v4565 = vpop.f32.mrb[0].mxu0
      %v4566 = vpop.f32.mrb[0].mxu0
      %v4567 = vadd.f32 %v4358, %v4566
      %v4568 = vpop.f32.mrb[0].mxu0
      %4569 = vmatprep.mubr.bf16.mxu0 0
      %4570 = vmatmul.mubr.bf16.gmra.mrb[0].mxu0 %v4134
      %v4571 = vpop.f32.mrb[0].mxu0
      %v4572 = vadd.f32 %v4363, %v4571
      %v4573 = vpop.f32.mrb[0].mxu0
      %v4574 = vpop.f32.mrb[0].mxu0
      %v4575 = vadd.f32 %v4366, %v4574
      %v4576 = vpop.f32.mrb[0].mxu0
      %4577 = vmatprep.mubr.bf16.mxu0 0
      %4578 = vmatmul.mubr.bf16.gmra.mrb[0].mxu0 %v4135
      %v4579 = vpop.f32.mrb[0].mxu0
      %v4580 = vadd.f32 %v4371, %v4579
      %v4581 = vpop.f32.mrb[0].mxu0
      %v4582 = vpop.f32.mrb[0].mxu0
      %v4583 = vadd.f32 %v4374, %v4582
      %v4584 = vpop.f32.mrb[0].mxu0
      %4585 = vmatprep.mubr.bf16.mxu0 0
      %4586 = vmatmul.mubr.bf16.gmra.mrb[0].mxu0 %v4136
      %v4587 = vpop.f32.mrb[0].mxu0
      %v4588 = vadd.f32 %v4379, %v4587
      %v4589 = vpop.f32.mrb[0].mxu0
      %v4590 = vpop.f32.mrb[0].mxu0
      %v4591 = vadd.f32 %v4382, %v4590
      %v4592 = vpop.f32.mrb[0].mxu0
      %4593 = vmatprep.mubr.bf16.mxu0 0
      %4594 = vmatmul.mubr.bf16.gmra.mrb[0].mxu0 %v4137
      %v4595 = vpop.f32.mrb[0].mxu0
      %v4596 = vadd.f32 %v4387, %v4595
      %v4597 = vpop.f32.mrb[0].mxu0
      %v4598 = vpop.f32.mrb[0].mxu0
      %v4599 = vadd.f32 %v4390, %v4598
      %v4600 = vpop.f32.mrb[0].mxu0
      %4601 = vmatprep.mubr.bf16.mxu0 0
      %4602 = vmatmul.mubr.bf16.gmra.mrb[0].mxu0 %v4138
      %v4603 = vpop.f32.mrb[0].mxu0
      %v4604 = vadd.f32 %v4395, %v4603
      %v4605 = vpop.f32.mrb[0].mxu0
      %v4606 = vpop.f32.mrb[0].mxu0
      %v4607 = vadd.f32 %v4398, %v4606
      %v4608 = vpop.f32.mrb[0].mxu0
      %4609 = vmatprep.mubr.bf16.mxu0 0
      %4610 = vmatmul.mubr.bf16.gmra.mrb[0].mxu0 %v4139
      %v4611 = vpop.f32.mrb[0].mxu0
      %v4612 = vadd.f32 %v4403, %v4611
      %v4613 = vpop.f32.mrb[0].mxu0
      %v4614 = vpop.f32.mrb[0].mxu0
      %v4615 = vadd.f32 %v4406, %v4614
      %v4616 = vpop.f32.mrb[0].mxu0
      %4617 = vmatprep.mubr.bf16.mxu0 0
      %4618 = vmatmul.mubr.bf16.gmra.mrb[0].mxu0 %v4140
      %v4619 = vpop.f32.mrb[0].mxu0
      %v4620 = vadd.f32 %v4411, %v4619
      %v4621 = vpop.f32.mrb[0].mxu0
      %v4622 = vpop.f32.mrb[0].mxu0
      %v4623 = vadd.f32 %v4414, %v4622
      %v4624 = vpop.f32.mrb[0].mxu0
      %4625 = vmatprep.mubr.bf16.mxu0 0
      %4626 = vmatmul.mubr.bf16.gmra.mrb[0].mxu0 %v4141
      %v4627 = vpop.f32.mrb[0].mxu0
      %v4628 = vadd.f32 %v4419, %v4627
      %v4629 = vpop.f32.mrb[0].mxu0
      %v4630 = vpop.f32.mrb[0].mxu0
      %v4631 = vadd.f32 %v4422, %v4630
      %v4632 = vpop.f32.mrb[0].mxu0
      %4633 = vmatprep.mubr.bf16.mxu0 0
      %4634 = vmatmul.mubr.bf16.gmra.mrb[0].mxu0 %v4142
      %v4635 = vpop.f32.mrb[0].mxu0
      %v4636 = vadd.f32 %v4427, %v4635
      %v4637 = vpop.f32.mrb[0].mxu0
      %v4638 = vpop.f32.mrb[0].mxu0
      %v4639 = vadd.f32 %v4430, %v4638
      %v4640 = vpop.f32.mrb[0].mxu0
      %4641 = vdwg.mxu0
      %v4642 = vld [vmem:[#allocation2 + $0x9] sm:$0xff]
      %v4643 = vld [vmem:[#allocation2 + $0x11] sm:$0xff]
      %v4644 = vld [vmem:[#allocation2 + $0x19] sm:$0xff]
      %v4645 = vld [vmem:[#allocation2 + $0x21] sm:$0xff]
      %v4646 = vld [vmem:[#allocation2 + $0x29] sm:$0xff]
      %v4647 = vld [vmem:[#allocation2 + $0x31] sm:$0xff]
      %v4648 = vld [vmem:[#allocation2 + $0x39] sm:$0xff]
      %v4649 = vld [vmem:[#allocation2 + $0x41] sm:$0xff]
      %v4650 = vld [vmem:[#allocation2 + $0x49] sm:$0xff]
      %v4651 = vld [vmem:[#allocation2 + $0x51] sm:$0xff]
      %v4652 = vld [vmem:[#allocation2 + $0x59] sm:$0xff]
      %v4653 = vld [vmem:[#allocation2 + $0x61] sm:$0xff]
      %v4654 = vld [vmem:[#allocation2 + $0x69] sm:$0xff]
      %v4655 = vld [vmem:[#allocation2 + $0x71] sm:$0xff]
      %v4656 = vld [vmem:[#allocation2 + $0x79] sm:$0xff]
      %v4657 = vld [vmem:[#allocation2 + $0x81] sm:$0xff]
      %v4658 = vld [vmem:[#allocation2 + $0x89] sm:$0xff]
      %v4659 = vld [vmem:[#allocation2 + $0x91] sm:$0xff]
      %v4660 = vld [vmem:[#allocation2 + $0x99] sm:$0xff]
      %v4661 = vld [vmem:[#allocation2 + $0xa1] sm:$0xff]
      %v4662 = vld [vmem:[#allocation2 + $0xa9] sm:$0xff]
      %v4663 = vld [vmem:[#allocation2 + $0xb1] sm:$0xff]
      %v4664 = vld [vmem:[#allocation2 + $0xb9] sm:$0xff]
      %v4665 = vld [vmem:[#allocation2 + $0xc1] sm:$0xff]
      %v4666 = vld [vmem:[#allocation2 + $0xc9] sm:$0xff]
      %v4667 = vld [vmem:[#allocation2 + $0xd1] sm:$0xff]
      %v4668 = vld [vmem:[#allocation2 + $0xd9] sm:$0xff]
      %v4669 = vld [vmem:[#allocation2 + $0xe1] sm:$0xff]
      %v4670 = vld [vmem:[#allocation2 + $0xe9] sm:$0xff]
      %v4671 = vld [vmem:[#allocation2 + $0xf1] sm:$0xff]
      %v4672 = vld [vmem:[#allocation2 + $0xf9] sm:$0xff]
      %v4673 = vld [vmem:[#allocation2 + $0x101] sm:$0xff]
      %v4674 = vsel %vm1658, %v4642, 0.0
      %v4675 = vsel %vm1659, %v4643, 0.0
      %v4676 = vsel %vm1660, %v4644, 0.0
      %v4677 = vsel %vm1661, %v4645, 0.0
      %v4678 = vsel %vm1662, %v4646, 0.0
      %v4679 = vsel %vm1663, %v4647, 0.0
      %v4680 = vsel %vm1664, %v4648, 0.0
      %v4681 = vsel %vm1665, %v4649, 0.0
      %v4682 = vsel %vm1666, %v4650, 0.0
      %v4683 = vsel %vm1667, %v4651, 0.0
      %v4684 = vsel %vm1668, %v4652, 0.0
      %v4685 = vsel %vm1669, %v4653, 0.0
      %v4686 = vsel %vm1670, %v4654, 0.0
      %v4687 = vsel %vm1671, %v4655, 0.0
      %v4688 = vsel %vm1672, %v4656, 0.0
      %v4689 = vsel %vm1673, %v4657, 0.0
      %v4690 = vsel %vm1674, %v4658, 0.0
      %v4691 = vsel %vm1675, %v4659, 0.0
      %v4692 = vsel %vm1676, %v4660, 0.0
      %v4693 = vsel %vm1677, %v4661, 0.0
      %v4694 = vsel %vm1678, %v4662, 0.0
      %v4695 = vsel %vm1679, %v4663, 0.0
      %v4696 = vsel %vm1680, %v4664, 0.0
      %v4697 = vsel %vm1681, %v4665, 0.0
      %v4698 = vsel %vm1682, %v4666, 0.0
      %v4699 = vsel %vm1683, %v4667, 0.0
      %v4700 = vsel %vm1684, %v4668, 0.0
      %v4701 = vsel %vm1685, %v4669, 0.0
      %v4702 = vsel %vm1686, %v4670, 0.0
      %v4703 = vsel %vm1687, %v4671, 0.0
      %v4704 = vsel %vm1688, %v4672, 0.0
      %v4705 = vsel %vm1689, %v4673, 0.0
      %v4706 = vpack.c.bf16 %v4675, %v4674
      %v4707 = vpack.c.bf16 %v4677, %v4676
      %v4708 = vpack.c.bf16 %v4679, %v4678
      %v4709 = vpack.c.bf16 %v4681, %v4680
      %v4710 = vpack.c.bf16 %v4683, %v4682
      %v4711 = vpack.c.bf16 %v4685, %v4684
      %v4712 = vpack.c.bf16 %v4687, %v4686
      %v4713 = vpack.c.bf16 %v4689, %v4688
      %v4714 = vpack.c.bf16 %v4691, %v4690
      %v4715 = vpack.c.bf16 %v4693, %v4692
      %v4716 = vpack.c.bf16 %v4695, %v4694
      %v4717 = vpack.c.bf16 %v4697, %v4696
      %v4718 = vpack.c.bf16 %v4699, %v4698
      %v4719 = vpack.c.bf16 %v4701, %v4700
      %v4720 = vpack.c.bf16 %v4703, %v4702
      %v4721 = vpack.c.bf16 %v4705, %v4704
      %s4722 = scalar_lea.vmem %s5, 128
      %v4723 = vld [vmem:[%s4722] sm:$0xf]
      %v4724 = vld [vmem:[%s4722 + $0x4] sm:$0xf]
      %v4725 = vld [vmem:[%s4722 + $0x8] sm:$0xf]
      %v4726 = vld [vmem:[%s4722 + $0xc] sm:$0xf]
      %v4727 = vld [vmem:[%s4722 + $0x10] sm:$0xf]
      %v4728 = vld [vmem:[%s4722 + $0x14] sm:$0xf]
      %v4729 = vld [vmem:[%s4722 + $0x18] sm:$0xf]
      %v4730 = vld [vmem:[%s4722 + $0x1c] sm:$0xf]
      %v4731 = vld [vmem:[%s4722 + $0x20] sm:$0xf]
      %v4732 = vld [vmem:[%s4722 + $0x24] sm:$0xf]
      %v4733 = vld [vmem:[%s4722 + $0x28] sm:$0xf]
      %v4734 = vld [vmem:[%s4722 + $0x2c] sm:$0xf]
      %v4735 = vld [vmem:[%s4722 + $0x30] sm:$0xf]
      %v4736 = vld [vmem:[%s4722 + $0x34] sm:$0xf]
      %v4737 = vld [vmem:[%s4722 + $0x38] sm:$0xf]
      %v4738 = vld [vmem:[%s4722 + $0x3c] sm:$0xf]
      %v4755 = vunpack.c.l.b16 %v4723
      %v4756 = vunpack.c.l.b16 %v4724
      %v4757 = vunpack.c.l.b16 %v4725
      %v4758 = vunpack.c.l.b16 %v4726
      %v4759 = vunpack.c.l.b16 %v4727
      %v4760 = vunpack.c.l.b16 %v4728
      %v4761 = vunpack.c.l.b16 %v4729
      %v4762 = vunpack.c.l.b16 %v4730
      %v4763 = vunpack.c.l.b16 %v4731
      %v4764 = vunpack.c.l.b16 %v4732
      %v4765 = vunpack.c.l.b16 %v4733
      %v4766 = vunpack.c.l.b16 %v4734
      %v4767 = vunpack.c.l.b16 %v4735
      %v4768 = vunpack.c.l.b16 %v4736
      %v4769 = vunpack.c.l.b16 %v4737
      %v4770 = vunpack.c.l.b16 %v4738
      %v4771 = vpack.c.b16 %v4756, %v4755
      %v4772 = vpack.c.b16 %v4758, %v4757
      %v4773 = vpack.c.b16 %v4760, %v4759
      %v4774 = vpack.c.b16 %v4762, %v4761
      %v4775 = vpack.c.b16 %v4764, %v4763
      %v4776 = vpack.c.b16 %v4766, %v4765
      %v4777 = vpack.c.b16 %v4768, %v4767
      %v4778 = vpack.c.b16 %v4770, %v4769
      %4787 = vmatprep.subr.bf16.mxu0 0
      %4788 = vmatpush1.bf16.msra.mxu0 %v4771
      %4789 = vmatprep.subr.bf16.mxu0 0
      %4790 = vmatpush1.bf16.msra.mxu0 %v4772
      %4791 = vmatprep.subr.bf16.mxu0 0
      %4792 = vmatpush1.bf16.msra.mxu0 %v4773
      %4793 = vmatprep.subr.bf16.mxu0 0
      %4794 = vmatpush1.bf16.msra.mxu0 %v4774
      %4795 = vmatprep.subr.bf16.mxu0 0
      %4796 = vmatpush1.bf16.msra.mxu0 %v4775
      %4797 = vmatprep.subr.bf16.mxu0 0
      %4798 = vmatpush1.bf16.msra.mxu0 %v4776
      %4799 = vmatprep.subr.bf16.mxu0 0
      %4800 = vmatpush1.bf16.msra.mxu0 %v4777
      %4801 = vmatprep.subr.bf16.mxu0 0
      %4802 = vmatpush1.bf16.msra.mxu0 %v4778
      %4803 = vmatprep.subr.bf16.mxu0 0
      %4804 = vmatpush1.bf16.msra.mxu0 0
      %4805 = vmatprep.subr.bf16.mxu0 0
      %4806 = vmatpush1.bf16.msra.mxu0 0
      %4807 = vmatprep.subr.bf16.mxu0 0
      %4808 = vmatpush1.bf16.msra.mxu0 0
      %4809 = vmatprep.subr.bf16.mxu0 0
      %4810 = vmatpush1.bf16.msra.mxu0 0
      %4811 = vmatprep.subr.bf16.mxu0 0
      %4812 = vmatpush1.bf16.msra.mxu0 0
      %4813 = vmatprep.subr.bf16.mxu0 0
      %4814 = vmatpush1.bf16.msra.mxu0 0
      %4815 = vmatprep.subr.bf16.mxu0 0
      %4816 = vmatpush1.bf16.msra.mxu0 0
      %4817 = vmatprep.subr.bf16.mxu0 0
      %4818 = vmatpush1.bf16.msra.mxu0 0
      %4819 = vmatprep.mubr.bf16.mxu0 0
      %4820 = vmatmul.mubr.bf16.gmra.mrb[0].mxu0 %v4706
      %v4821 = vpop.f32.mrb[0].mxu0
      %v4822 = vadd.f32 0.0, %v4821
      %v4823 = vpop.f32.mrb[0].mxu0
      %v4824 = vpop.f32.mrb[0].mxu0
      %v4825 = vadd.f32 0.0, %v4824
      %v4826 = vpop.f32.mrb[0].mxu0
      %4827 = vmatprep.mubr.bf16.mxu0 0
      %4828 = vmatmul.mubr.bf16.gmra.mrb[0].mxu0 %v4707
      %v4829 = vpop.f32.mrb[0].mxu0
      %v4830 = vadd.f32 0.0, %v4829
      %v4831 = vpop.f32.mrb[0].mxu0
      %v4832 = vpop.f32.mrb[0].mxu0
      %v4833 = vadd.f32 0.0, %v4832
      %v4834 = vpop.f32.mrb[0].mxu0
      %4835 = vmatprep.mubr.bf16.mxu0 0
      %4836 = vmatmul.mubr.bf16.gmra.mrb[0].mxu0 %v4708
      %v4837 = vpop.f32.mrb[0].mxu0
      %v4838 = vadd.f32 0.0, %v4837
      %v4839 = vpop.f32.mrb[0].mxu0
      %v4840 = vpop.f32.mrb[0].mxu0
      %v4841 = vadd.f32 0.0, %v4840
      %v4842 = vpop.f32.mrb[0].mxu0
      %4843 = vmatprep.mubr.bf16.mxu0 0
      %4844 = vmatmul.mubr.bf16.gmra.mrb[0].mxu0 %v4709
      %v4845 = vpop.f32.mrb[0].mxu0
      %v4846 = vadd.f32 0.0, %v4845
      %v4847 = vpop.f32.mrb[0].mxu0
      %v4848 = vpop.f32.mrb[0].mxu0
      %v4849 = vadd.f32 0.0, %v4848
      %v4850 = vpop.f32.mrb[0].mxu0
      %4851 = vmatprep.mubr.bf16.mxu0 0
      %4852 = vmatmul.mubr.bf16.gmra.mrb[0].mxu0 %v4710
      %v4853 = vpop.f32.mrb[0].mxu0
      %v4854 = vadd.f32 0.0, %v4853
      %v4855 = vpop.f32.mrb[0].mxu0
      %v4856 = vpop.f32.mrb[0].mxu0
      %v4857 = vadd.f32 0.0, %v4856
      %v4858 = vpop.f32.mrb[0].mxu0
      %4859 = vmatprep.mubr.bf16.mxu0 0
      %4860 = vmatmul.mubr.bf16.gmra.mrb[0].mxu0 %v4711
      %v4861 = vpop.f32.mrb[0].mxu0
      %v4862 = vadd.f32 0.0, %v4861
      %v4863 = vpop.f32.mrb[0].mxu0
      %v4864 = vpop.f32.mrb[0].mxu0
      %v4865 = vadd.f32 0.0, %v4864
      %v4866 = vpop.f32.mrb[0].mxu0
      %4867 = vmatprep.mubr.bf16.mxu0 0
      %4868 = vmatmul.mubr.bf16.gmra.mrb[0].mxu0 %v4712
      %v4869 = vpop.f32.mrb[0].mxu0
      %v4870 = vadd.f32 0.0, %v4869
      %v4871 = vpop.f32.mrb[0].mxu0
      %v4872 = vpop.f32.mrb[0].mxu0
      %v4873 = vadd.f32 0.0, %v4872
      %v4874 = vpop.f32.mrb[0].mxu0
      %4875 = vmatprep.mubr.bf16.mxu0 0
      %4876 = vmatmul.mubr.bf16.gmra.mrb[0].mxu0 %v4713
      %v4877 = vpop.f32.mrb[0].mxu0
      %v4878 = vadd.f32 0.0, %v4877
      %v4879 = vpop.f32.mrb[0].mxu0
      %v4880 = vpop.f32.mrb[0].mxu0
      %v4881 = vadd.f32 0.0, %v4880
      %v4882 = vpop.f32.mrb[0].mxu0
      %4883 = vmatprep.mubr.bf16.mxu0 0
      %4884 = vmatmul.mubr.bf16.gmra.mrb[0].mxu0 %v4714
      %v4885 = vpop.f32.mrb[0].mxu0
      %v4886 = vadd.f32 0.0, %v4885
      %v4887 = vpop.f32.mrb[0].mxu0
      %v4888 = vpop.f32.mrb[0].mxu0
      %v4889 = vadd.f32 0.0, %v4888
      %v4890 = vpop.f32.mrb[0].mxu0
      %4891 = vmatprep.mubr.bf16.mxu0 0
      %4892 = vmatmul.mubr.bf16.gmra.mrb[0].mxu0 %v4715
      %v4893 = vpop.f32.mrb[0].mxu0
      %v4894 = vadd.f32 0.0, %v4893
      %v4895 = vpop.f32.mrb[0].mxu0
      %v4896 = vpop.f32.mrb[0].mxu0
      %v4897 = vadd.f32 0.0, %v4896
      %v4898 = vpop.f32.mrb[0].mxu0
      %4899 = vmatprep.mubr.bf16.mxu0 0
      %4900 = vmatmul.mubr.bf16.gmra.mrb[0].mxu0 %v4716
      %v4901 = vpop.f32.mrb[0].mxu0
      %v4902 = vadd.f32 0.0, %v4901
      %v4903 = vpop.f32.mrb[0].mxu0
      %v4904 = vpop.f32.mrb[0].mxu0
      %v4905 = vadd.f32 0.0, %v4904
      %v4906 = vpop.f32.mrb[0].mxu0
      %4907 = vmatprep.mubr.bf16.mxu0 0
      %4908 = vmatmul.mubr.bf16.gmra.mrb[0].mxu0 %v4717
      %v4909 = vpop.f32.mrb[0].mxu0
      %v4910 = vadd.f32 0.0, %v4909
      %v4911 = vpop.f32.mrb[0].mxu0
      %v4912 = vpop.f32.mrb[0].mxu0
      %v4913 = vadd.f32 0.0, %v4912
      %v4914 = vpop.f32.mrb[0].mxu0
      %4915 = vmatprep.mubr.bf16.mxu0 0
      %4916 = vmatmul.mubr.bf16.gmra.mrb[0].mxu0 %v4718
      %v4917 = vpop.f32.mrb[0].mxu0
      %v4918 = vadd.f32 0.0, %v4917
      %v4919 = vpop.f32.mrb[0].mxu0
      %v4920 = vpop.f32.mrb[0].mxu0
      %v4921 = vadd.f32 0.0, %v4920
      %v4922 = vpop.f32.mrb[0].mxu0
      %4923 = vmatprep.mubr.bf16.mxu0 0
      %4924 = vmatmul.mubr.bf16.gmra.mrb[0].mxu0 %v4719
      %v4925 = vpop.f32.mrb[0].mxu0
      %v4926 = vadd.f32 0.0, %v4925
      %v4927 = vpop.f32.mrb[0].mxu0
      %v4928 = vpop.f32.mrb[0].mxu0
      %v4929 = vadd.f32 0.0, %v4928
      %v4930 = vpop.f32.mrb[0].mxu0
      %4931 = vmatprep.mubr.bf16.mxu0 0
      %4932 = vmatmul.mubr.bf16.gmra.mrb[0].mxu0 %v4720
      %v4933 = vpop.f32.mrb[0].mxu0
      %v4934 = vadd.f32 0.0, %v4933
      %v4935 = vpop.f32.mrb[0].mxu0
      %v4936 = vpop.f32.mrb[0].mxu0
      %v4937 = vadd.f32 0.0, %v4936
      %v4938 = vpop.f32.mrb[0].mxu0
      %4939 = vmatprep.mubr.bf16.mxu0 0
      %4940 = vmatmul.mubr.bf16.gmra.mrb[0].mxu0 %v4721
      %v4941 = vpop.f32.mrb[0].mxu0
      %v4942 = vadd.f32 0.0, %v4941
      %v4943 = vpop.f32.mrb[0].mxu0
      %v4944 = vpop.f32.mrb[0].mxu0
      %v4945 = vadd.f32 0.0, %v4944
      %v4946 = vpop.f32.mrb[0].mxu0
      %4947 = vdwg.mxu0
      %v4948 = vadd.f32 %v4516, %v4822
      %v4949 = vadd.f32 %v4519, %v4825
      %v4950 = vadd.f32 %v4524, %v4830
      %v4951 = vadd.f32 %v4527, %v4833
      %v4952 = vadd.f32 %v4532, %v4838
      %v4953 = vadd.f32 %v4535, %v4841
      %v4954 = vadd.f32 %v4540, %v4846
      %v4955 = vadd.f32 %v4543, %v4849
      %v4956 = vadd.f32 %v4548, %v4854
      %v4957 = vadd.f32 %v4551, %v4857
      %v4958 = vadd.f32 %v4556, %v4862
      %v4959 = vadd.f32 %v4559, %v4865
      %v4960 = vadd.f32 %v4564, %v4870
      %v4961 = vadd.f32 %v4567, %v4873
      %v4962 = vadd.f32 %v4572, %v4878
      %v4963 = vadd.f32 %v4575, %v4881
      %v4964 = vadd.f32 %v4580, %v4886
      %v4965 = vadd.f32 %v4583, %v4889
      %v4966 = vadd.f32 %v4588, %v4894
      %v4967 = vadd.f32 %v4591, %v4897
      %v4968 = vadd.f32 %v4596, %v4902
      %v4969 = vadd.f32 %v4599, %v4905
      %v4970 = vadd.f32 %v4604, %v4910
      %v4971 = vadd.f32 %v4607, %v4913
      %v4972 = vadd.f32 %v4612, %v4918
      %v4973 = vadd.f32 %v4615, %v4921
      %v4974 = vadd.f32 %v4620, %v4926
      %v4975 = vadd.f32 %v4623, %v4929
      %v4976 = vadd.f32 %v4628, %v4934
      %v4977 = vadd.f32 %v4631, %v4937
      %v4978 = vadd.f32 %v4636, %v4942
      %v4979 = vadd.f32 %v4639, %v4945
      %v4980 = vld [vmem:[#allocation2 + $0x17] sm:$0xff]
      %v4981 = vld [vmem:[#allocation2 + $0x1f] sm:$0xff]
      %v4982 = vld [vmem:[#allocation2 + $0x27] sm:$0xff]
      %v4983 = vld [vmem:[#allocation2 + $0x2f] sm:$0xff]
      %v4984 = vld [vmem:[#allocation2 + $0x37] sm:$0xff]
      %v4985 = vld [vmem:[#allocation2 + $0x3f] sm:$0xff]
      %v4986 = vld [vmem:[#allocation2 + $0x47] sm:$0xff]
      %v4987 = vld [vmem:[#allocation2 + $0x4f] sm:$0xff]
      %v4988 = vld [vmem:[#allocation2 + $0x57] sm:$0xff]
      %v4989 = vld [vmem:[#allocation2 + $0x5f] sm:$0xff]
      %v4990 = vld [vmem:[#allocation2 + $0x67] sm:$0xff]
      %v4991 = vld [vmem:[#allocation2 + $0x6f] sm:$0xff]
      %v4992 = vld [vmem:[#allocation2 + $0x77] sm:$0xff]
      %v4993 = vld [vmem:[#allocation2 + $0x7f] sm:$0xff]
      %v4994 = vld [vmem:[#allocation2 + $0x87] sm:$0xff]
      %v4995 = vld [vmem:[#allocation2 + $0x8f] sm:$0xff]
      %v4996 = vld [vmem:[#allocation2 + $0x97] sm:$0xff]
      %v4997 = vld [vmem:[#allocation2 + $0x9f] sm:$0xff]
      %v4998 = vld [vmem:[#allocation2 + $0xa7] sm:$0xff]
      %v4999 = vld [vmem:[#allocation2 + $0xaf] sm:$0xff]
      %v5000 = vld [vmem:[#allocation2 + $0xb7] sm:$0xff]
      %v5001 = vld [vmem:[#allocation2 + $0xbf] sm:$0xff]
      %v5002 = vld [vmem:[#allocation2 + $0xc7] sm:$0xff]
      %v5003 = vld [vmem:[#allocation2 + $0xcf] sm:$0xff]
      %v5004 = vld [vmem:[#allocation2 + $0xd7] sm:$0xff]
      %v5005 = vld [vmem:[#allocation2 + $0xdf] sm:$0xff]
      %v5006 = vld [vmem:[#allocation2 + $0xe7] sm:$0xff]
      %v5007 = vld [vmem:[#allocation2 + $0xef] sm:$0xff]
      %v5008 = vld [vmem:[#allocation2 + $0xf7] sm:$0xff]
      %v5009 = vld [vmem:[#allocation2 + $0xff] sm:$0xff]
      %v5010 = vld [vmem:[#allocation2 + $0x107] sm:$0xff]
      %v5011 = vld [vmem:[#allocation2 + $0x10f] sm:$0xff]
      %v5012 = vsel %vm887, %v4980, 0.0
      %v5013 = vsel %vm888, %v4981, 0.0
      %v5014 = vsel %vm889, %v4982, 0.0
      %v5015 = vsel %vm890, %v4983, 0.0
      %v5016 = vsel %vm891, %v4984, 0.0
      %v5017 = vsel %vm892, %v4985, 0.0
      %v5018 = vsel %vm893, %v4986, 0.0
      %v5019 = vsel %vm894, %v4987, 0.0
      %v5020 = vsel %vm895, %v4988, 0.0
      %v5021 = vsel %vm896, %v4989, 0.0
      %v5022 = vsel %vm897, %v4990, 0.0
      %v5023 = vsel %vm898, %v4991, 0.0
      %v5024 = vsel %vm899, %v4992, 0.0
      %v5025 = vsel %vm900, %v4993, 0.0
      %v5026 = vsel %vm901, %v4994, 0.0
      %v5027 = vsel %vm902, %v4995, 0.0
      %v5028 = vsel %vm903, %v4996, 0.0
      %v5029 = vsel %vm904, %v4997, 0.0
      %v5030 = vsel %vm905, %v4998, 0.0
      %v5031 = vsel %vm906, %v4999, 0.0
      %v5032 = vsel %vm907, %v5000, 0.0
      %v5033 = vsel %vm908, %v5001, 0.0
      %v5034 = vsel %vm909, %v5002, 0.0
      %v5035 = vsel %vm910, %v5003, 0.0
      %v5036 = vsel %vm911, %v5004, 0.0
      %v5037 = vsel %vm912, %v5005, 0.0
      %v5038 = vsel %vm913, %v5006, 0.0
      %v5039 = vsel %vm914, %v5007, 0.0
      %v5040 = vsel %vm915, %v5008, 0.0
      %v5041 = vsel %vm916, %v5009, 0.0
      %v5042 = vsel %vm917, %v5010, 0.0
      %v5043 = vsel %vm918, %v5011, 0.0
      %v5044 = vpack.c.bf16 %v5013, %v5012
      %v5045 = vpack.c.bf16 %v5015, %v5014
      %v5046 = vpack.c.bf16 %v5017, %v5016
      %v5047 = vpack.c.bf16 %v5019, %v5018
      %v5048 = vpack.c.bf16 %v5021, %v5020
      %v5049 = vpack.c.bf16 %v5023, %v5022
      %v5050 = vpack.c.bf16 %v5025, %v5024
      %v5051 = vpack.c.bf16 %v5027, %v5026
      %v5052 = vpack.c.bf16 %v5029, %v5028
      %v5053 = vpack.c.bf16 %v5031, %v5030
      %v5054 = vpack.c.bf16 %v5033, %v5032
      %v5055 = vpack.c.bf16 %v5035, %v5034
      %v5056 = vpack.c.bf16 %v5037, %v5036
      %v5057 = vpack.c.bf16 %v5039, %v5038
      %v5058 = vpack.c.bf16 %v5041, %v5040
      %v5059 = vpack.c.bf16 %v5043, %v5042
      %s5060 = scalar_lea.vmem %s5, 192
      %v5061 = vld [vmem:[%s5060] sm:$0xf]
      %v5062 = vld [vmem:[%s5060 + $0x4] sm:$0xf]
      %v5063 = vld [vmem:[%s5060 + $0x8] sm:$0xf]
      %v5064 = vld [vmem:[%s5060 + $0xc] sm:$0xf]
      %v5065 = vld [vmem:[%s5060 + $0x10] sm:$0xf]
      %v5066 = vld [vmem:[%s5060 + $0x14] sm:$0xf]
      %v5067 = vld [vmem:[%s5060 + $0x18] sm:$0xf]
      %v5068 = vld [vmem:[%s5060 + $0x1c] sm:$0xf]
      %v5069 = vld [vmem:[%s5060 + $0x20] sm:$0xf]
      %v5070 = vld [vmem:[%s5060 + $0x24] sm:$0xf]
      %v5071 = vld [vmem:[%s5060 + $0x28] sm:$0xf]
      %v5072 = vld [vmem:[%s5060 + $0x2c] sm:$0xf]
      %v5073 = vld [vmem:[%s5060 + $0x30] sm:$0xf]
      %v5074 = vld [vmem:[%s5060 + $0x34] sm:$0xf]
      %v5075 = vld [vmem:[%s5060 + $0x38] sm:$0xf]
      %v5076 = vld [vmem:[%s5060 + $0x3c] sm:$0xf]
      %v5093 = vunpack.c.l.b16 %v5061
      %v5094 = vunpack.c.l.b16 %v5062
      %v5095 = vunpack.c.l.b16 %v5063
      %v5096 = vunpack.c.l.b16 %v5064
      %v5097 = vunpack.c.l.b16 %v5065
      %v5098 = vunpack.c.l.b16 %v5066
      %v5099 = vunpack.c.l.b16 %v5067
      %v5100 = vunpack.c.l.b16 %v5068
      %v5101 = vunpack.c.l.b16 %v5069
      %v5102 = vunpack.c.l.b16 %v5070
      %v5103 = vunpack.c.l.b16 %v5071
      %v5104 = vunpack.c.l.b16 %v5072
      %v5105 = vunpack.c.l.b16 %v5073
      %v5106 = vunpack.c.l.b16 %v5074
      %v5107 = vunpack.c.l.b16 %v5075
      %v5108 = vunpack.c.l.b16 %v5076
      %v5109 = vpack.c.b16 %v5094, %v5093
      %v5110 = vpack.c.b16 %v5096, %v5095
      %v5111 = vpack.c.b16 %v5098, %v5097
      %v5112 = vpack.c.b16 %v5100, %v5099
      %v5113 = vpack.c.b16 %v5102, %v5101
      %v5114 = vpack.c.b16 %v5104, %v5103
      %v5115 = vpack.c.b16 %v5106, %v5105
      %v5116 = vpack.c.b16 %v5108, %v5107
      %5125 = vmatprep.subr.bf16.mxu0 0
      %5126 = vmatpush1.bf16.msra.mxu0 %v5109
      %5127 = vmatprep.subr.bf16.mxu0 0
      %5128 = vmatpush1.bf16.msra.mxu0 %v5110
      %5129 = vmatprep.subr.bf16.mxu0 0
      %5130 = vmatpush1.bf16.msra.mxu0 %v5111
      %5131 = vmatprep.subr.bf16.mxu0 0
      %5132 = vmatpush1.bf16.msra.mxu0 %v5112
      %5133 = vmatprep.subr.bf16.mxu0 0
      %5134 = vmatpush1.bf16.msra.mxu0 %v5113
      %5135 = vmatprep.subr.bf16.mxu0 0
      %5136 = vmatpush1.bf16.msra.mxu0 %v5114
      %5137 = vmatprep.subr.bf16.mxu0 0
      %5138 = vmatpush1.bf16.msra.mxu0 %v5115
      %5139 = vmatprep.subr.bf16.mxu0 0
      %5140 = vmatpush1.bf16.msra.mxu0 %v5116
      %5141 = vmatprep.subr.bf16.mxu0 0
      %5142 = vmatpush1.bf16.msra.mxu0 0
      %5143 = vmatprep.subr.bf16.mxu0 0
      %5144 = vmatpush1.bf16.msra.mxu0 0
      %5145 = vmatprep.subr.bf16.mxu0 0
      %5146 = vmatpush1.bf16.msra.mxu0 0
      %5147 = vmatprep.subr.bf16.mxu0 0
      %5148 = vmatpush1.bf16.msra.mxu0 0
      %5149 = vmatprep.subr.bf16.mxu0 0
      %5150 = vmatpush1.bf16.msra.mxu0 0
      %5151 = vmatprep.subr.bf16.mxu0 0
      %5152 = vmatpush1.bf16.msra.mxu0 0
      %5153 = vmatprep.subr.bf16.mxu0 0
      %5154 = vmatpush1.bf16.msra.mxu0 0
      %5155 = vmatprep.subr.bf16.mxu0 0
      %5156 = vmatpush1.bf16.msra.mxu0 0
      %5157 = vmatprep.mubr.bf16.mxu0 0
      %5158 = vmatmul.mubr.bf16.gmra.mrb[0].mxu0 %v5044
      %v5159 = vpop.f32.mrb[0].mxu0
      %v5160 = vadd.f32 0.0, %v5159
      %v5161 = vpop.f32.mrb[0].mxu0
      %v5162 = vpop.f32.mrb[0].mxu0
      %v5163 = vadd.f32 0.0, %v5162
      %v5164 = vpop.f32.mrb[0].mxu0
      %5165 = vmatprep.mubr.bf16.mxu0 0
      %5166 = vmatmul.mubr.bf16.gmra.mrb[0].mxu0 %v5045
      %v5167 = vpop.f32.mrb[0].mxu0
      %v5168 = vadd.f32 0.0, %v5167
      %v5169 = vpop.f32.mrb[0].mxu0
      %v5170 = vpop.f32.mrb[0].mxu0
      %v5171 = vadd.f32 0.0, %v5170
      %v5172 = vpop.f32.mrb[0].mxu0
      %5173 = vmatprep.mubr.bf16.mxu0 0
      %5174 = vmatmul.mubr.bf16.gmra.mrb[0].mxu0 %v5046
      %v5175 = vpop.f32.mrb[0].mxu0
      %v5176 = vadd.f32 0.0, %v5175
      %v5177 = vpop.f32.mrb[0].mxu0
      %v5178 = vpop.f32.mrb[0].mxu0
      %v5179 = vadd.f32 0.0, %v5178
      %v5180 = vpop.f32.mrb[0].mxu0
      %5181 = vmatprep.mubr.bf16.mxu0 0
      %5182 = vmatmul.mubr.bf16.gmra.mrb[0].mxu0 %v5047
      %v5183 = vpop.f32.mrb[0].mxu0
      %v5184 = vadd.f32 0.0, %v5183
      %v5185 = vpop.f32.mrb[0].mxu0
      %v5186 = vpop.f32.mrb[0].mxu0
      %v5187 = vadd.f32 0.0, %v5186
      %v5188 = vpop.f32.mrb[0].mxu0
      %5189 = vmatprep.mubr.bf16.mxu0 0
      %5190 = vmatmul.mubr.bf16.gmra.mrb[0].mxu0 %v5048
      %v5191 = vpop.f32.mrb[0].mxu0
      %v5192 = vadd.f32 0.0, %v5191
      %v5193 = vpop.f32.mrb[0].mxu0
      %v5194 = vpop.f32.mrb[0].mxu0
      %v5195 = vadd.f32 0.0, %v5194
      %v5196 = vpop.f32.mrb[0].mxu0
      %5197 = vmatprep.mubr.bf16.mxu0 0
      %5198 = vmatmul.mubr.bf16.gmra.mrb[0].mxu0 %v5049
      %v5199 = vpop.f32.mrb[0].mxu0
      %v5200 = vadd.f32 0.0, %v5199
      %v5201 = vpop.f32.mrb[0].mxu0
      %v5202 = vpop.f32.mrb[0].mxu0
      %v5203 = vadd.f32 0.0, %v5202
      %v5204 = vpop.f32.mrb[0].mxu0
      %5205 = vmatprep.mubr.bf16.mxu0 0
      %5206 = vmatmul.mubr.bf16.gmra.mrb[0].mxu0 %v5050
      %v5207 = vpop.f32.mrb[0].mxu0
      %v5208 = vadd.f32 0.0, %v5207
      %v5209 = vpop.f32.mrb[0].mxu0
      %v5210 = vpop.f32.mrb[0].mxu0
      %v5211 = vadd.f32 0.0, %v5210
      %v5212 = vpop.f32.mrb[0].mxu0
      %5213 = vmatprep.mubr.bf16.mxu0 0
      %5214 = vmatmul.mubr.bf16.gmra.mrb[0].mxu0 %v5051
      %v5215 = vpop.f32.mrb[0].mxu0
      %v5216 = vadd.f32 0.0, %v5215
      %v5217 = vpop.f32.mrb[0].mxu0
      %v5218 = vpop.f32.mrb[0].mxu0
      %v5219 = vadd.f32 0.0, %v5218
      %v5220 = vpop.f32.mrb[0].mxu0
      %5221 = vmatprep.mubr.bf16.mxu0 0
      %5222 = vmatmul.mubr.bf16.gmra.mrb[0].mxu0 %v5052
      %v5223 = vpop.f32.mrb[0].mxu0
      %v5224 = vadd.f32 0.0, %v5223
      %v5225 = vpop.f32.mrb[0].mxu0
      %v5226 = vpop.f32.mrb[0].mxu0
      %v5227 = vadd.f32 0.0, %v5226
      %v5228 = vpop.f32.mrb[0].mxu0
      %5229 = vmatprep.mubr.bf16.mxu0 0
      %5230 = vmatmul.mubr.bf16.gmra.mrb[0].mxu0 %v5053
      %v5231 = vpop.f32.mrb[0].mxu0
      %v5232 = vadd.f32 0.0, %v5231
      %v5233 = vpop.f32.mrb[0].mxu0
      %v5234 = vpop.f32.mrb[0].mxu0
      %v5235 = vadd.f32 0.0, %v5234
      %v5236 = vpop.f32.mrb[0].mxu0
      %5237 = vmatprep.mubr.bf16.mxu0 0
      %5238 = vmatmul.mubr.bf16.gmra.mrb[0].mxu0 %v5054
      %v5239 = vpop.f32.mrb[0].mxu0
      %v5240 = vadd.f32 0.0, %v5239
      %v5241 = vpop.f32.mrb[0].mxu0
      %v5242 = vpop.f32.mrb[0].mxu0
      %v5243 = vadd.f32 0.0, %v5242
      %v5244 = vpop.f32.mrb[0].mxu0
      %5245 = vmatprep.mubr.bf16.mxu0 0
      %5246 = vmatmul.mubr.bf16.gmra.mrb[0].mxu0 %v5055
      %v5247 = vpop.f32.mrb[0].mxu0
      %v5248 = vadd.f32 0.0, %v5247
      %v5249 = vpop.f32.mrb[0].mxu0
      %v5250 = vpop.f32.mrb[0].mxu0
      %v5251 = vadd.f32 0.0, %v5250
      %v5252 = vpop.f32.mrb[0].mxu0
      %5253 = vmatprep.mubr.bf16.mxu0 0
      %5254 = vmatmul.mubr.bf16.gmra.mrb[0].mxu0 %v5056
      %v5255 = vpop.f32.mrb[0].mxu0
      %v5256 = vadd.f32 0.0, %v5255
      %v5257 = vpop.f32.mrb[0].mxu0
      %v5258 = vpop.f32.mrb[0].mxu0
      %v5259 = vadd.f32 0.0, %v5258
      %v5260 = vpop.f32.mrb[0].mxu0
      %5261 = vmatprep.mubr.bf16.mxu0 0
      %5262 = vmatmul.mubr.bf16.gmra.mrb[0].mxu0 %v5057
      %v5263 = vpop.f32.mrb[0].mxu0
      %v5264 = vadd.f32 0.0, %v5263
      %v5265 = vpop.f32.mrb[0].mxu0
      %v5266 = vpop.f32.mrb[0].mxu0
      %v5267 = vadd.f32 0.0, %v5266
      %v5268 = vpop.f32.mrb[0].mxu0
      %5269 = vmatprep.mubr.bf16.mxu0 0
      %5270 = vmatmul.mubr.bf16.gmra.mrb[0].mxu0 %v5058
      %v5271 = vpop.f32.mrb[0].mxu0
      %v5272 = vadd.f32 0.0, %v5271
      %v5273 = vpop.f32.mrb[0].mxu0
      %v5274 = vpop.f32.mrb[0].mxu0
      %v5275 = vadd.f32 0.0, %v5274
      %v5276 = vpop.f32.mrb[0].mxu0
      %5277 = vmatprep.mubr.bf16.mxu0 0
      %5278 = vmatmul.mubr.bf16.gmra.mrb[0].mxu0 %v5059
      %v5279 = vpop.f32.mrb[0].mxu0
      %v5280 = vadd.f32 0.0, %v5279
      %v5281 = vpop.f32.mrb[0].mxu0
      %v5282 = vpop.f32.mrb[0].mxu0
      %v5283 = vadd.f32 0.0, %v5282
      %v5284 = vpop.f32.mrb[0].mxu0
      %5285 = vdwg.mxu0
      %v5286 = vadd.f32 %v4948, %v5160
      %v5287 = vadd.f32 %v4949, %v5163
      %v5288 = vadd.f32 %v4950, %v5168
      %v5289 = vadd.f32 %v4951, %v5171
      %v5290 = vadd.f32 %v4952, %v5176
      %v5291 = vadd.f32 %v4953, %v5179
      %v5292 = vadd.f32 %v4954, %v5184
      %v5293 = vadd.f32 %v4955, %v5187
      %v5294 = vadd.f32 %v4956, %v5192
      %v5295 = vadd.f32 %v4957, %v5195
      %v5296 = vadd.f32 %v4958, %v5200
      %v5297 = vadd.f32 %v4959, %v5203
      %v5298 = vadd.f32 %v4960, %v5208
      %v5299 = vadd.f32 %v4961, %v5211
      %v5300 = vadd.f32 %v4962, %v5216
      %v5301 = vadd.f32 %v4963, %v5219
      %v5302 = vadd.f32 %v4964, %v5224
      %v5303 = vadd.f32 %v4965, %v5227
      %v5304 = vadd.f32 %v4966, %v5232
      %v5305 = vadd.f32 %v4967, %v5235
      %v5306 = vadd.f32 %v4968, %v5240
      %v5307 = vadd.f32 %v4969, %v5243
      %v5308 = vadd.f32 %v4970, %v5248
      %v5309 = vadd.f32 %v4971, %v5251
      %v5310 = vadd.f32 %v4972, %v5256
      %v5311 = vadd.f32 %v4973, %v5259
      %v5312 = vadd.f32 %v4974, %v5264
      %v5313 = vadd.f32 %v4975, %v5267
      %v5314 = vadd.f32 %v4976, %v5272
      %v5315 = vadd.f32 %v4977, %v5275
      %v5316 = vadd.f32 %v4978, %v5280
      %v5317 = vadd.f32 %v4979, %v5283
      %v5318 = vld [vmem:[#allocation2 + $0x18] sm:$0xff]
      %v5319 = vld [vmem:[#allocation2 + $0x20] sm:$0xff]
      %v5320 = vld [vmem:[#allocation2 + $0x28] sm:$0xff]
      %v5321 = vld [vmem:[#allocation2 + $0x30] sm:$0xff]
      %v5322 = vld [vmem:[#allocation2 + $0x38] sm:$0xff]
      %v5323 = vld [vmem:[#allocation2 + $0x40] sm:$0xff]
      %v5324 = vld [vmem:[#allocation2 + $0x48] sm:$0xff]
      %v5325 = vld [vmem:[#allocation2 + $0x50] sm:$0xff]
      %v5326 = vld [vmem:[#allocation2 + $0x58] sm:$0xff]
      %v5327 = vld [vmem:[#allocation2 + $0x60] sm:$0xff]
      %v5328 = vld [vmem:[#allocation2 + $0x68] sm:$0xff]
      %v5329 = vld [vmem:[#allocation2 + $0x70] sm:$0xff]
      %v5330 = vld [vmem:[#allocation2 + $0x78] sm:$0xff]
      %v5331 = vld [vmem:[#allocation2 + $0x80] sm:$0xff]
      %v5332 = vld [vmem:[#allocation2 + $0x88] sm:$0xff]
      %v5333 = vld [vmem:[#allocation2 + $0x90] sm:$0xff]
      %v5334 = vld [vmem:[#allocation2 + $0x98] sm:$0xff]
      %v5335 = vld [vmem:[#allocation2 + $0xa0] sm:$0xff]
      %v5336 = vld [vmem:[#allocation2 + $0xa8] sm:$0xff]
      %v5337 = vld [vmem:[#allocation2 + $0xb0] sm:$0xff]
      %v5338 = vld [vmem:[#allocation2 + $0xb8] sm:$0xff]
      %v5339 = vld [vmem:[#allocation2 + $0xc0] sm:$0xff]
      %v5340 = vld [vmem:[#allocation2 + $0xc8] sm:$0xff]
      %v5341 = vld [vmem:[#allocation2 + $0xd0] sm:$0xff]
      %v5342 = vld [vmem:[#allocation2 + $0xd8] sm:$0xff]
      %v5343 = vld [vmem:[#allocation2 + $0xe0] sm:$0xff]
      %v5344 = vld [vmem:[#allocation2 + $0xe8] sm:$0xff]
      %v5345 = vld [vmem:[#allocation2 + $0xf0] sm:$0xff]
      %v5346 = vld [vmem:[#allocation2 + $0xf8] sm:$0xff]
      %v5347 = vld [vmem:[#allocation2 + $0x100] sm:$0xff]
      %v5348 = vld [vmem:[#allocation2 + $0x108] sm:$0xff]
      %v5349 = vld [vmem:[#allocation2 + $0x110] sm:$0xff]
      %v5350 = vpack.c.bf16 %v5319, %v5318
      %v5351 = vpack.c.bf16 %v5321, %v5320
      %v5352 = vpack.c.bf16 %v5323, %v5322
      %v5353 = vpack.c.bf16 %v5325, %v5324
      %v5354 = vpack.c.bf16 %v5327, %v5326
      %v5355 = vpack.c.bf16 %v5329, %v5328
      %v5356 = vpack.c.bf16 %v5331, %v5330
      %v5357 = vpack.c.bf16 %v5333, %v5332
      %v5358 = vpack.c.bf16 %v5335, %v5334
      %v5359 = vpack.c.bf16 %v5337, %v5336
      %v5360 = vpack.c.bf16 %v5339, %v5338
      %v5361 = vpack.c.bf16 %v5341, %v5340
      %v5362 = vpack.c.bf16 %v5343, %v5342
      %v5363 = vpack.c.bf16 %v5345, %v5344
      %v5364 = vpack.c.bf16 %v5347, %v5346
      %v5365 = vpack.c.bf16 %v5349, %v5348
      %s5366 = scalar_lea.vmem %s5, 256
      %v5367 = vld [vmem:[%s5366] sm:$0xf]
      %v5368 = vld [vmem:[%s5366 + $0x4] sm:$0xf]
      %v5369 = vld [vmem:[%s5366 + $0x8] sm:$0xf]
      %v5370 = vld [vmem:[%s5366 + $0xc] sm:$0xf]
      %v5371 = vld [vmem:[%s5366 + $0x10] sm:$0xf]
      %v5372 = vld [vmem:[%s5366 + $0x14] sm:$0xf]
      %v5373 = vld [vmem:[%s5366 + $0x18] sm:$0xf]
      %v5374 = vld [vmem:[%s5366 + $0x1c] sm:$0xf]
      %v5375 = vld [vmem:[%s5366 + $0x20] sm:$0xf]
      %v5376 = vld [vmem:[%s5366 + $0x24] sm:$0xf]
      %v5377 = vld [vmem:[%s5366 + $0x28] sm:$0xf]
      %v5378 = vld [vmem:[%s5366 + $0x2c] sm:$0xf]
      %v5379 = vld [vmem:[%s5366 + $0x30] sm:$0xf]
      %v5380 = vld [vmem:[%s5366 + $0x34] sm:$0xf]
      %v5381 = vld [vmem:[%s5366 + $0x38] sm:$0xf]
      %v5382 = vld [vmem:[%s5366 + $0x3c] sm:$0xf]
      %v5399 = vunpack.c.l.b16 %v5367
      %v5400 = vunpack.c.l.b16 %v5368
      %v5401 = vunpack.c.l.b16 %v5369
      %v5402 = vunpack.c.l.b16 %v5370
      %v5403 = vunpack.c.l.b16 %v5371
      %v5404 = vunpack.c.l.b16 %v5372
      %v5405 = vunpack.c.l.b16 %v5373
      %v5406 = vunpack.c.l.b16 %v5374
      %v5407 = vunpack.c.l.b16 %v5375
      %v5408 = vunpack.c.l.b16 %v5376
      %v5409 = vunpack.c.l.b16 %v5377
      %v5410 = vunpack.c.l.b16 %v5378
      %v5411 = vunpack.c.l.b16 %v5379
      %v5412 = vunpack.c.l.b16 %v5380
      %v5413 = vunpack.c.l.b16 %v5381
      %v5414 = vunpack.c.l.b16 %v5382
      %v5415 = vpack.c.b16 %v5400, %v5399
      %v5416 = vpack.c.b16 %v5402, %v5401
      %v5417 = vpack.c.b16 %v5404, %v5403
      %v5418 = vpack.c.b16 %v5406, %v5405
      %v5419 = vpack.c.b16 %v5408, %v5407
      %v5420 = vpack.c.b16 %v5410, %v5409
      %v5421 = vpack.c.b16 %v5412, %v5411
      %v5422 = vpack.c.b16 %v5414, %v5413
      %5431 = vmatprep.subr.bf16.mxu0 0
      %5432 = vmatpush1.bf16.msra.mxu0 %v5415
      %5433 = vmatprep.subr.bf16.mxu0 0
      %5434 = vmatpush1.bf16.msra.mxu0 %v5416
      %5435 = vmatprep.subr.bf16.mxu0 0
      %5436 = vmatpush1.bf16.msra.mxu0 %v5417
      %5437 = vmatprep.subr.bf16.mxu0 0
      %5438 = vmatpush1.bf16.msra.mxu0 %v5418
      %5439 = vmatprep.subr.bf16.mxu0 0
      %5440 = vmatpush1.bf16.msra.mxu0 %v5419
      %5441 = vmatprep.subr.bf16.mxu0 0
      %5442 = vmatpush1.bf16.msra.mxu0 %v5420
      %5443 = vmatprep.subr.bf16.mxu0 0
      %5444 = vmatpush1.bf16.msra.mxu0 %v5421
      %5445 = vmatprep.subr.bf16.mxu0 0
      %5446 = vmatpush1.bf16.msra.mxu0 %v5422
      %5447 = vmatprep.subr.bf16.mxu0 0
      %5448 = vmatpush1.bf16.msra.mxu0 0
      %5449 = vmatprep.subr.bf16.mxu0 0
      %5450 = vmatpush1.bf16.msra.mxu0 0
      %5451 = vmatprep.subr.bf16.mxu0 0
      %5452 = vmatpush1.bf16.msra.mxu0 0
      %5453 = vmatprep.subr.bf16.mxu0 0
      %5454 = vmatpush1.bf16.msra.mxu0 0
      %5455 = vmatprep.subr.bf16.mxu0 0
      %5456 = vmatpush1.bf16.msra.mxu0 0
      %5457 = vmatprep.subr.bf16.mxu0 0
      %5458 = vmatpush1.bf16.msra.mxu0 0
      %5459 = vmatprep.subr.bf16.mxu0 0
      %5460 = vmatpush1.bf16.msra.mxu0 0
      %5461 = vmatprep.subr.bf16.mxu0 0
      %5462 = vmatpush1.bf16.msra.mxu0 0
      %5463 = vmatprep.mubr.bf16.mxu0 0
      %5464 = vmatmul.mubr.bf16.gmra.mrb[0].mxu0 %v5350
      %v5465 = vpop.f32.mrb[0].mxu0
      %v5466 = vadd.f32 0.0, %v5465
      %v5467 = vpop.f32.mrb[0].mxu0
      %v5468 = vpop.f32.mrb[0].mxu0
      %v5469 = vadd.f32 0.0, %v5468
      %v5470 = vpop.f32.mrb[0].mxu0
      %5471 = vmatprep.mubr.bf16.mxu0 0
      %5472 = vmatmul.mubr.bf16.gmra.mrb[0].mxu0 %v5351
      %v5473 = vpop.f32.mrb[0].mxu0
      %v5474 = vadd.f32 0.0, %v5473
      %v5475 = vpop.f32.mrb[0].mxu0
      %v5476 = vpop.f32.mrb[0].mxu0
      %v5477 = vadd.f32 0.0, %v5476
      %v5478 = vpop.f32.mrb[0].mxu0
      %5479 = vmatprep.mubr.bf16.mxu0 0
      %5480 = vmatmul.mubr.bf16.gmra.mrb[0].mxu0 %v5352
      %v5481 = vpop.f32.mrb[0].mxu0
      %v5482 = vadd.f32 0.0, %v5481
      %v5483 = vpop.f32.mrb[0].mxu0
      %v5484 = vpop.f32.mrb[0].mxu0
      %v5485 = vadd.f32 0.0, %v5484
      %v5486 = vpop.f32.mrb[0].mxu0
      %5487 = vmatprep.mubr.bf16.mxu0 0
      %5488 = vmatmul.mubr.bf16.gmra.mrb[0].mxu0 %v5353
      %v5489 = vpop.f32.mrb[0].mxu0
      %v5490 = vadd.f32 0.0, %v5489
      %v5491 = vpop.f32.mrb[0].mxu0
      %v5492 = vpop.f32.mrb[0].mxu0
      %v5493 = vadd.f32 0.0, %v5492
      %v5494 = vpop.f32.mrb[0].mxu0
      %5495 = vmatprep.mubr.bf16.mxu0 0
      %5496 = vmatmul.mubr.bf16.gmra.mrb[0].mxu0 %v5354
      %v5497 = vpop.f32.mrb[0].mxu0
      %v5498 = vadd.f32 0.0, %v5497
      %v5499 = vpop.f32.mrb[0].mxu0
      %v5500 = vpop.f32.mrb[0].mxu0
      %v5501 = vadd.f32 0.0, %v5500
      %v5502 = vpop.f32.mrb[0].mxu0
      %5503 = vmatprep.mubr.bf16.mxu0 0
      %5504 = vmatmul.mubr.bf16.gmra.mrb[0].mxu0 %v5355
      %v5505 = vpop.f32.mrb[0].mxu0
      %v5506 = vadd.f32 0.0, %v5505
      %v5507 = vpop.f32.mrb[0].mxu0
      %v5508 = vpop.f32.mrb[0].mxu0
      %v5509 = vadd.f32 0.0, %v5508
      %v5510 = vpop.f32.mrb[0].mxu0
      %5511 = vmatprep.mubr.bf16.mxu0 0
      %5512 = vmatmul.mubr.bf16.gmra.mrb[0].mxu0 %v5356
      %v5513 = vpop.f32.mrb[0].mxu0
      %v5514 = vadd.f32 0.0, %v5513
      %v5515 = vpop.f32.mrb[0].mxu0
      %v5516 = vpop.f32.mrb[0].mxu0
      %v5517 = vadd.f32 0.0, %v5516
      %v5518 = vpop.f32.mrb[0].mxu0
      %5519 = vmatprep.mubr.bf16.mxu0 0
      %5520 = vmatmul.mubr.bf16.gmra.mrb[0].mxu0 %v5357
      %v5521 = vpop.f32.mrb[0].mxu0
      %v5522 = vadd.f32 0.0, %v5521
      %v5523 = vpop.f32.mrb[0].mxu0
      %v5524 = vpop.f32.mrb[0].mxu0
      %v5525 = vadd.f32 0.0, %v5524
      %v5526 = vpop.f32.mrb[0].mxu0
      %5527 = vmatprep.mubr.bf16.mxu0 0
      %5528 = vmatmul.mubr.bf16.gmra.mrb[0].mxu0 %v5358
      %v5529 = vpop.f32.mrb[0].mxu0
      %v5530 = vadd.f32 0.0, %v5529
      %v5531 = vpop.f32.mrb[0].mxu0
      %v5532 = vpop.f32.mrb[0].mxu0
      %v5533 = vadd.f32 0.0, %v5532
      %v5534 = vpop.f32.mrb[0].mxu0
      %5535 = vmatprep.mubr.bf16.mxu0 0
      %5536 = vmatmul.mubr.bf16.gmra.mrb[0].mxu0 %v5359
      %v5537 = vpop.f32.mrb[0].mxu0
      %v5538 = vadd.f32 0.0, %v5537
      %v5539 = vpop.f32.mrb[0].mxu0
      %v5540 = vpop.f32.mrb[0].mxu0
      %v5541 = vadd.f32 0.0, %v5540
      %v5542 = vpop.f32.mrb[0].mxu0
      %5543 = vmatprep.mubr.bf16.mxu0 0
      %5544 = vmatmul.mubr.bf16.gmra.mrb[0].mxu0 %v5360
      %v5545 = vpop.f32.mrb[0].mxu0
      %v5546 = vadd.f32 0.0, %v5545
      %v5547 = vpop.f32.mrb[0].mxu0
      %v5548 = vpop.f32.mrb[0].mxu0
      %v5549 = vadd.f32 0.0, %v5548
      %v5550 = vpop.f32.mrb[0].mxu0
      %5551 = vmatprep.mubr.bf16.mxu0 0
      %5552 = vmatmul.mubr.bf16.gmra.mrb[0].mxu0 %v5361
      %v5553 = vpop.f32.mrb[0].mxu0
      %v5554 = vadd.f32 0.0, %v5553
      %v5555 = vpop.f32.mrb[0].mxu0
      %v5556 = vpop.f32.mrb[0].mxu0
      %v5557 = vadd.f32 0.0, %v5556
      %v5558 = vpop.f32.mrb[0].mxu0
      %5559 = vmatprep.mubr.bf16.mxu0 0
      %5560 = vmatmul.mubr.bf16.gmra.mrb[0].mxu0 %v5362
      %v5561 = vpop.f32.mrb[0].mxu0
      %v5562 = vadd.f32 0.0, %v5561
      %v5563 = vpop.f32.mrb[0].mxu0
      %v5564 = vpop.f32.mrb[0].mxu0
      %v5565 = vadd.f32 0.0, %v5564
      %v5566 = vpop.f32.mrb[0].mxu0
      %5567 = vmatprep.mubr.bf16.mxu0 0
      %5568 = vmatmul.mubr.bf16.gmra.mrb[0].mxu0 %v5363
      %v5569 = vpop.f32.mrb[0].mxu0
      %v5570 = vadd.f32 0.0, %v5569
      %v5571 = vpop.f32.mrb[0].mxu0
      %v5572 = vpop.f32.mrb[0].mxu0
      %v5573 = vadd.f32 0.0, %v5572
      %v5574 = vpop.f32.mrb[0].mxu0
      %5575 = vmatprep.mubr.bf16.mxu0 0
      %5576 = vmatmul.mubr.bf16.gmra.mrb[0].mxu0 %v5364
      %v5577 = vpop.f32.mrb[0].mxu0
      %v5578 = vadd.f32 0.0, %v5577
      %v5579 = vpop.f32.mrb[0].mxu0
      %v5580 = vpop.f32.mrb[0].mxu0
      %v5581 = vadd.f32 0.0, %v5580
      %v5582 = vpop.f32.mrb[0].mxu0
      %5583 = vmatprep.mubr.bf16.mxu0 0
      %5584 = vmatmul.mubr.bf16.gmra.mrb[0].mxu0 %v5365
      %v5585 = vpop.f32.mrb[0].mxu0
      %v5586 = vadd.f32 0.0, %v5585
      %v5587 = vpop.f32.mrb[0].mxu0
      %v5588 = vpop.f32.mrb[0].mxu0
      %v5589 = vadd.f32 0.0, %v5588
      %v5590 = vpop.f32.mrb[0].mxu0
      %5591 = vdwg.mxu0
      %v5592 = vadd.f32 %v5286, %v5466
      %v5593 = vadd.f32 %v5287, %v5469
      %v5594 = vadd.f32 %v5288, %v5474
      %v5595 = vadd.f32 %v5289, %v5477
      %v5596 = vadd.f32 %v5290, %v5482
      %v5597 = vadd.f32 %v5291, %v5485
      %v5598 = vadd.f32 %v5292, %v5490
      %v5599 = vadd.f32 %v5293, %v5493
      %v5600 = vadd.f32 %v5294, %v5498
      %v5601 = vadd.f32 %v5295, %v5501
      %v5602 = vadd.f32 %v5296, %v5506
      %v5603 = vadd.f32 %v5297, %v5509
      %v5604 = vadd.f32 %v5298, %v5514
      %v5605 = vadd.f32 %v5299, %v5517
      %v5606 = vadd.f32 %v5300, %v5522
      %v5607 = vadd.f32 %v5301, %v5525
      %v5608 = vadd.f32 %v5302, %v5530
      %v5609 = vadd.f32 %v5303, %v5533
      %v5610 = vadd.f32 %v5304, %v5538
      %v5611 = vadd.f32 %v5305, %v5541
      %v5612 = vadd.f32 %v5306, %v5546
      %v5613 = vadd.f32 %v5307, %v5549
      %v5614 = vadd.f32 %v5308, %v5554
      %v5615 = vadd.f32 %v5309, %v5557
      %v5616 = vadd.f32 %v5310, %v5562
      %v5617 = vadd.f32 %v5311, %v5565
      %v5618 = vadd.f32 %v5312, %v5570
      %v5619 = vadd.f32 %v5313, %v5573
      %v5620 = vadd.f32 %v5314, %v5578
      %v5621 = vadd.f32 %v5315, %v5581
      %v5622 = vadd.f32 %v5316, %v5586
      %v5623 = vadd.f32 %v5317, %v5589
      %v5624 = vld [vmem:[#allocation2 + $0x19] sm:$0xff]
      %v5625 = vld [vmem:[#allocation2 + $0x21] sm:$0xff]
      %v5626 = vld [vmem:[#allocation2 + $0x29] sm:$0xff]
      %v5627 = vld [vmem:[#allocation2 + $0x31] sm:$0xff]
      %v5628 = vld [vmem:[#allocation2 + $0x39] sm:$0xff]
      %v5629 = vld [vmem:[#allocation2 + $0x41] sm:$0xff]
      %v5630 = vld [vmem:[#allocation2 + $0x49] sm:$0xff]
      %v5631 = vld [vmem:[#allocation2 + $0x51] sm:$0xff]
      %v5632 = vld [vmem:[#allocation2 + $0x59] sm:$0xff]
      %v5633 = vld [vmem:[#allocation2 + $0x61] sm:$0xff]
      %v5634 = vld [vmem:[#allocation2 + $0x69] sm:$0xff]
      %v5635 = vld [vmem:[#allocation2 + $0x71] sm:$0xff]
      %v5636 = vld [vmem:[#allocation2 + $0x79] sm:$0xff]
      %v5637 = vld [vmem:[#allocation2 + $0x81] sm:$0xff]
      %v5638 = vld [vmem:[#allocation2 + $0x89] sm:$0xff]
      %v5639 = vld [vmem:[#allocation2 + $0x91] sm:$0xff]
      %v5640 = vld [vmem:[#allocation2 + $0x99] sm:$0xff]
      %v5641 = vld [vmem:[#allocation2 + $0xa1] sm:$0xff]
      %v5642 = vld [vmem:[#allocation2 + $0xa9] sm:$0xff]
      %v5643 = vld [vmem:[#allocation2 + $0xb1] sm:$0xff]
      %v5644 = vld [vmem:[#allocation2 + $0xb9] sm:$0xff]
      %v5645 = vld [vmem:[#allocation2 + $0xc1] sm:$0xff]
      %v5646 = vld [vmem:[#allocation2 + $0xc9] sm:$0xff]
      %v5647 = vld [vmem:[#allocation2 + $0xd1] sm:$0xff]
      %v5648 = vld [vmem:[#allocation2 + $0xd9] sm:$0xff]
      %v5649 = vld [vmem:[#allocation2 + $0xe1] sm:$0xff]
      %v5650 = vld [vmem:[#allocation2 + $0xe9] sm:$0xff]
      %v5651 = vld [vmem:[#allocation2 + $0xf1] sm:$0xff]
      %v5652 = vld [vmem:[#allocation2 + $0xf9] sm:$0xff]
      %v5653 = vld [vmem:[#allocation2 + $0x101] sm:$0xff]
      %v5654 = vld [vmem:[#allocation2 + $0x109] sm:$0xff]
      %v5655 = vld [vmem:[#allocation2 + $0x111] sm:$0xff]
      %v5656 = vsel %vm1658, %v5624, 0.0
      %v5657 = vsel %vm1659, %v5625, 0.0
      %v5658 = vsel %vm1660, %v5626, 0.0
      %v5659 = vsel %vm1661, %v5627, 0.0
      %v5660 = vsel %vm1662, %v5628, 0.0
      %v5661 = vsel %vm1663, %v5629, 0.0
      %v5662 = vsel %vm1664, %v5630, 0.0
      %v5663 = vsel %vm1665, %v5631, 0.0
      %v5664 = vsel %vm1666, %v5632, 0.0
      %v5665 = vsel %vm1667, %v5633, 0.0
      %v5666 = vsel %vm1668, %v5634, 0.0
      %v5667 = vsel %vm1669, %v5635, 0.0
      %v5668 = vsel %vm1670, %v5636, 0.0
      %v5669 = vsel %vm1671, %v5637, 0.0
      %v5670 = vsel %vm1672, %v5638, 0.0
      %v5671 = vsel %vm1673, %v5639, 0.0
      %v5672 = vsel %vm1674, %v5640, 0.0
      %v5673 = vsel %vm1675, %v5641, 0.0
      %v5674 = vsel %vm1676, %v5642, 0.0
      %v5675 = vsel %vm1677, %v5643, 0.0
      %v5676 = vsel %vm1678, %v5644, 0.0
      %v5677 = vsel %vm1679, %v5645, 0.0
      %v5678 = vsel %vm1680, %v5646, 0.0
      %v5679 = vsel %vm1681, %v5647, 0.0
      %v5680 = vsel %vm1682, %v5648, 0.0
      %v5681 = vsel %vm1683, %v5649, 0.0
      %v5682 = vsel %vm1684, %v5650, 0.0
      %v5683 = vsel %vm1685, %v5651, 0.0
      %v5684 = vsel %vm1686, %v5652, 0.0
      %v5685 = vsel %vm1687, %v5653, 0.0
      %v5686 = vsel %vm1688, %v5654, 0.0
      %v5687 = vsel %vm1689, %v5655, 0.0
      %v5688 = vpack.c.bf16 %v5657, %v5656
      %v5689 = vpack.c.bf16 %v5659, %v5658
      %v5690 = vpack.c.bf16 %v5661, %v5660
      %v5691 = vpack.c.bf16 %v5663, %v5662
      %v5692 = vpack.c.bf16 %v5665, %v5664
      %v5693 = vpack.c.bf16 %v5667, %v5666
      %v5694 = vpack.c.bf16 %v5669, %v5668
      %v5695 = vpack.c.bf16 %v5671, %v5670
      %v5696 = vpack.c.bf16 %v5673, %v5672
      %v5697 = vpack.c.bf16 %v5675, %v5674
      %v5698 = vpack.c.bf16 %v5677, %v5676
      %v5699 = vpack.c.bf16 %v5679, %v5678
      %v5700 = vpack.c.bf16 %v5681, %v5680
      %v5701 = vpack.c.bf16 %v5683, %v5682
      %v5702 = vpack.c.bf16 %v5685, %v5684
      %v5703 = vpack.c.bf16 %v5687, %v5686
      %s5704 = scalar_lea.vmem %s5, 320
      %v5705 = vld [vmem:[%s5704] sm:$0xf]
      %v5706 = vld [vmem:[%s5704 + $0x4] sm:$0xf]
      %v5707 = vld [vmem:[%s5704 + $0x8] sm:$0xf]
      %v5708 = vld [vmem:[%s5704 + $0xc] sm:$0xf]
      %v5709 = vld [vmem:[%s5704 + $0x10] sm:$0xf]
      %v5710 = vld [vmem:[%s5704 + $0x14] sm:$0xf]
      %v5711 = vld [vmem:[%s5704 + $0x18] sm:$0xf]
      %v5712 = vld [vmem:[%s5704 + $0x1c] sm:$0xf]
      %v5713 = vld [vmem:[%s5704 + $0x20] sm:$0xf]
      %v5714 = vld [vmem:[%s5704 + $0x24] sm:$0xf]
      %v5715 = vld [vmem:[%s5704 + $0x28] sm:$0xf]
      %v5716 = vld [vmem:[%s5704 + $0x2c] sm:$0xf]
      %v5717 = vld [vmem:[%s5704 + $0x30] sm:$0xf]
      %v5718 = vld [vmem:[%s5704 + $0x34] sm:$0xf]
      %v5719 = vld [vmem:[%s5704 + $0x38] sm:$0xf]
      %v5720 = vld [vmem:[%s5704 + $0x3c] sm:$0xf]
      %v5737 = vunpack.c.l.b16 %v5705
      %v5738 = vunpack.c.l.b16 %v5706
      %v5739 = vunpack.c.l.b16 %v5707
      %v5740 = vunpack.c.l.b16 %v5708
      %v5741 = vunpack.c.l.b16 %v5709
      %v5742 = vunpack.c.l.b16 %v5710
      %v5743 = vunpack.c.l.b16 %v5711
      %v5744 = vunpack.c.l.b16 %v5712
      %v5745 = vunpack.c.l.b16 %v5713
      %v5746 = vunpack.c.l.b16 %v5714
      %v5747 = vunpack.c.l.b16 %v5715
      %v5748 = vunpack.c.l.b16 %v5716
      %v5749 = vunpack.c.l.b16 %v5717
      %v5750 = vunpack.c.l.b16 %v5718
      %v5751 = vunpack.c.l.b16 %v5719
      %v5752 = vunpack.c.l.b16 %v5720
      %v5753 = vpack.c.b16 %v5738, %v5737
      %v5754 = vpack.c.b16 %v5740, %v5739
      %v5755 = vpack.c.b16 %v5742, %v5741
      %v5756 = vpack.c.b16 %v5744, %v5743
      %v5757 = vpack.c.b16 %v5746, %v5745
      %v5758 = vpack.c.b16 %v5748, %v5747
      %v5759 = vpack.c.b16 %v5750, %v5749
      %v5760 = vpack.c.b16 %v5752, %v5751
      %5769 = vmatprep.subr.bf16.mxu0 0
      %5770 = vmatpush1.bf16.msra.mxu0 %v5753
      %5771 = vmatprep.subr.bf16.mxu0 0
      %5772 = vmatpush1.bf16.msra.mxu0 %v5754
      %5773 = vmatprep.subr.bf16.mxu0 0
      %5774 = vmatpush1.bf16.msra.mxu0 %v5755
      %5775 = vmatprep.subr.bf16.mxu0 0
      %5776 = vmatpush1.bf16.msra.mxu0 %v5756
      %5777 = vmatprep.subr.bf16.mxu0 0
      %5778 = vmatpush1.bf16.msra.mxu0 %v5757
      %5779 = vmatprep.subr.bf16.mxu0 0
      %5780 = vmatpush1.bf16.msra.mxu0 %v5758
      %5781 = vmatprep.subr.bf16.mxu0 0
      %5782 = vmatpush1.bf16.msra.mxu0 %v5759
      %5783 = vmatprep.subr.bf16.mxu0 0
      %5784 = vmatpush1.bf16.msra.mxu0 %v5760
      %5785 = vmatprep.subr.bf16.mxu0 0
      %5786 = vmatpush1.bf16.msra.mxu0 0
      %5787 = vmatprep.subr.bf16.mxu0 0
      %5788 = vmatpush1.bf16.msra.mxu0 0
      %5789 = vmatprep.subr.bf16.mxu0 0
      %5790 = vmatpush1.bf16.msra.mxu0 0
      %5791 = vmatprep.subr.bf16.mxu0 0
      %5792 = vmatpush1.bf16.msra.mxu0 0
      %5793 = vmatprep.subr.bf16.mxu0 0
      %5794 = vmatpush1.bf16.msra.mxu0 0
      %5795 = vmatprep.subr.bf16.mxu0 0
      %5796 = vmatpush1.bf16.msra.mxu0 0
      %5797 = vmatprep.subr.bf16.mxu0 0
      %5798 = vmatpush1.bf16.msra.mxu0 0
      %5799 = vmatprep.subr.bf16.mxu0 0
      %5800 = vmatpush1.bf16.msra.mxu0 0
      %5801 = vmatprep.mubr.bf16.mxu0 0
      %5802 = vmatmul.mubr.bf16.gmra.mrb[0].mxu0 %v5688
      %v5803 = vpop.f32.mrb[0].mxu0
      %v5804 = vadd.f32 0.0, %v5803
      %v5805 = vpop.f32.mrb[0].mxu0
      %v5806 = vpop.f32.mrb[0].mxu0
      %v5807 = vadd.f32 0.0, %v5806
      %v5808 = vpop.f32.mrb[0].mxu0
      %5809 = vmatprep.mubr.bf16.mxu0 0
      %5810 = vmatmul.mubr.bf16.gmra.mrb[0].mxu0 %v5689
      %v5811 = vpop.f32.mrb[0].mxu0
      %v5812 = vadd.f32 0.0, %v5811
      %v5813 = vpop.f32.mrb[0].mxu0
      %v5814 = vpop.f32.mrb[0].mxu0
      %v5815 = vadd.f32 0.0, %v5814
      %v5816 = vpop.f32.mrb[0].mxu0
      %5817 = vmatprep.mubr.bf16.mxu0 0
      %5818 = vmatmul.mubr.bf16.gmra.mrb[0].mxu0 %v5690
      %v5819 = vpop.f32.mrb[0].mxu0
      %v5820 = vadd.f32 0.0, %v5819
      %v5821 = vpop.f32.mrb[0].mxu0
      %v5822 = vpop.f32.mrb[0].mxu0
      %v5823 = vadd.f32 0.0, %v5822
      %v5824 = vpop.f32.mrb[0].mxu0
      %5825 = vmatprep.mubr.bf16.mxu0 0
      %5826 = vmatmul.mubr.bf16.gmra.mrb[0].mxu0 %v5691
      %v5827 = vpop.f32.mrb[0].mxu0
      %v5828 = vadd.f32 0.0, %v5827
      %v5829 = vpop.f32.mrb[0].mxu0
      %v5830 = vpop.f32.mrb[0].mxu0
      %v5831 = vadd.f32 0.0, %v5830
      %v5832 = vpop.f32.mrb[0].mxu0
      %5833 = vmatprep.mubr.bf16.mxu0 0
      %5834 = vmatmul.mubr.bf16.gmra.mrb[0].mxu0 %v5692
      %v5835 = vpop.f32.mrb[0].mxu0
      %v5836 = vadd.f32 0.0, %v5835
      %v5837 = vpop.f32.mrb[0].mxu0
      %v5838 = vpop.f32.mrb[0].mxu0
      %v5839 = vadd.f32 0.0, %v5838
      %v5840 = vpop.f32.mrb[0].mxu0
      %5841 = vmatprep.mubr.bf16.mxu0 0
      %5842 = vmatmul.mubr.bf16.gmra.mrb[0].mxu0 %v5693
      %v5843 = vpop.f32.mrb[0].mxu0
      %v5844 = vadd.f32 0.0, %v5843
      %v5845 = vpop.f32.mrb[0].mxu0
      %v5846 = vpop.f32.mrb[0].mxu0
      %v5847 = vadd.f32 0.0, %v5846
      %v5848 = vpop.f32.mrb[0].mxu0
      %5849 = vmatprep.mubr.bf16.mxu0 0
      %5850 = vmatmul.mubr.bf16.gmra.mrb[0].mxu0 %v5694
      %v5851 = vpop.f32.mrb[0].mxu0
      %v5852 = vadd.f32 0.0, %v5851
      %v5853 = vpop.f32.mrb[0].mxu0
      %v5854 = vpop.f32.mrb[0].mxu0
      %v5855 = vadd.f32 0.0, %v5854
      %v5856 = vpop.f32.mrb[0].mxu0
      %5857 = vmatprep.mubr.bf16.mxu0 0
      %5858 = vmatmul.mubr.bf16.gmra.mrb[0].mxu0 %v5695
      %v5859 = vpop.f32.mrb[0].mxu0
      %v5860 = vadd.f32 0.0, %v5859
      %v5861 = vpop.f32.mrb[0].mxu0
      %v5862 = vpop.f32.mrb[0].mxu0
      %v5863 = vadd.f32 0.0, %v5862
      %v5864 = vpop.f32.mrb[0].mxu0
      %5865 = vmatprep.mubr.bf16.mxu0 0
      %5866 = vmatmul.mubr.bf16.gmra.mrb[0].mxu0 %v5696
      %v5867 = vpop.f32.mrb[0].mxu0
      %v5868 = vadd.f32 0.0, %v5867
      %v5869 = vpop.f32.mrb[0].mxu0
      %v5870 = vpop.f32.mrb[0].mxu0
      %v5871 = vadd.f32 0.0, %v5870
      %v5872 = vpop.f32.mrb[0].mxu0
      %5873 = vmatprep.mubr.bf16.mxu0 0
      %5874 = vmatmul.mubr.bf16.gmra.mrb[0].mxu0 %v5697
      %v5875 = vpop.f32.mrb[0].mxu0
      %v5876 = vadd.f32 0.0, %v5875
      %v5877 = vpop.f32.mrb[0].mxu0
      %v5878 = vpop.f32.mrb[0].mxu0
      %v5879 = vadd.f32 0.0, %v5878
      %v5880 = vpop.f32.mrb[0].mxu0
      %5881 = vmatprep.mubr.bf16.mxu0 0
      %5882 = vmatmul.mubr.bf16.gmra.mrb[0].mxu0 %v5698
      %v5883 = vpop.f32.mrb[0].mxu0
      %v5884 = vadd.f32 0.0, %v5883
      %v5885 = vpop.f32.mrb[0].mxu0
      %v5886 = vpop.f32.mrb[0].mxu0
      %v5887 = vadd.f32 0.0, %v5886
      %v5888 = vpop.f32.mrb[0].mxu0
      %5889 = vmatprep.mubr.bf16.mxu0 0
      %5890 = vmatmul.mubr.bf16.gmra.mrb[0].mxu0 %v5699
      %v5891 = vpop.f32.mrb[0].mxu0
      %v5892 = vadd.f32 0.0, %v5891
      %v5893 = vpop.f32.mrb[0].mxu0
      %v5894 = vpop.f32.mrb[0].mxu0
      %v5895 = vadd.f32 0.0, %v5894
      %v5896 = vpop.f32.mrb[0].mxu0
      %5897 = vmatprep.mubr.bf16.mxu0 0
      %5898 = vmatmul.mubr.bf16.gmra.mrb[0].mxu0 %v5700
      %v5899 = vpop.f32.mrb[0].mxu0
      %v5900 = vadd.f32 0.0, %v5899
      %v5901 = vpop.f32.mrb[0].mxu0
      %v5902 = vpop.f32.mrb[0].mxu0
      %v5903 = vadd.f32 0.0, %v5902
      %v5904 = vpop.f32.mrb[0].mxu0
      %5905 = vmatprep.mubr.bf16.mxu0 0
      %5906 = vmatmul.mubr.bf16.gmra.mrb[0].mxu0 %v5701
      %v5907 = vpop.f32.mrb[0].mxu0
      %v5908 = vadd.f32 0.0, %v5907
      %v5909 = vpop.f32.mrb[0].mxu0
      %v5910 = vpop.f32.mrb[0].mxu0
      %v5911 = vadd.f32 0.0, %v5910
      %v5912 = vpop.f32.mrb[0].mxu0
      %5913 = vmatprep.mubr.bf16.mxu0 0
      %5914 = vmatmul.mubr.bf16.gmra.mrb[0].mxu0 %v5702
      %v5915 = vpop.f32.mrb[0].mxu0
      %v5916 = vadd.f32 0.0, %v5915
      %v5917 = vpop.f32.mrb[0].mxu0
      %v5918 = vpop.f32.mrb[0].mxu0
      %v5919 = vadd.f32 0.0, %v5918
      %v5920 = vpop.f32.mrb[0].mxu0
      %5921 = vmatprep.mubr.bf16.mxu0 0
      %5922 = vmatmul.mubr.bf16.gmra.mrb[0].mxu0 %v5703
      %v5923 = vpop.f32.mrb[0].mxu0
      %v5924 = vadd.f32 0.0, %v5923
      %v5925 = vpop.f32.mrb[0].mxu0
      %v5926 = vpop.f32.mrb[0].mxu0
      %v5927 = vadd.f32 0.0, %v5926
      %v5928 = vpop.f32.mrb[0].mxu0
      %5929 = vdwg.mxu0
      %v5930 = vadd.f32 %v5592, %v5804
      %v5931 = vadd.f32 %v5593, %v5807
      %v5932 = vadd.f32 %v5594, %v5812
      %v5933 = vadd.f32 %v5595, %v5815
      %v5934 = vadd.f32 %v5596, %v5820
      %v5935 = vadd.f32 %v5597, %v5823
      %v5936 = vadd.f32 %v5598, %v5828
      %v5937 = vadd.f32 %v5599, %v5831
      %v5938 = vadd.f32 %v5600, %v5836
      %v5939 = vadd.f32 %v5601, %v5839
      %v5940 = vadd.f32 %v5602, %v5844
      %v5941 = vadd.f32 %v5603, %v5847
      %v5942 = vadd.f32 %v5604, %v5852
      %v5943 = vadd.f32 %v5605, %v5855
      %v5944 = vadd.f32 %v5606, %v5860
      %v5945 = vadd.f32 %v5607, %v5863
      %v5946 = vadd.f32 %v5608, %v5868
      %v5947 = vadd.f32 %v5609, %v5871
      %v5948 = vadd.f32 %v5610, %v5876
      %v5949 = vadd.f32 %v5611, %v5879
      %v5950 = vadd.f32 %v5612, %v5884
      %v5951 = vadd.f32 %v5613, %v5887
      %v5952 = vadd.f32 %v5614, %v5892
      %v5953 = vadd.f32 %v5615, %v5895
      %v5954 = vadd.f32 %v5616, %v5900
      %v5955 = vadd.f32 %v5617, %v5903
      %v5956 = vadd.f32 %v5618, %v5908
      %v5957 = vadd.f32 %v5619, %v5911
      %v5958 = vadd.f32 %v5620, %v5916
      %v5959 = vadd.f32 %v5621, %v5919
      %v5960 = vadd.f32 %v5622, %v5924
      %v5961 = vadd.f32 %v5623, %v5927
      %v5962 = vld [vmem:[#allocation2 + $0x27] sm:$0xff]
      %v5963 = vld [vmem:[#allocation2 + $0x2f] sm:$0xff]
      %v5964 = vld [vmem:[#allocation2 + $0x37] sm:$0xff]
      %v5965 = vld [vmem:[#allocation2 + $0x3f] sm:$0xff]
      %v5966 = vld [vmem:[#allocation2 + $0x47] sm:$0xff]
      %v5967 = vld [vmem:[#allocation2 + $0x4f] sm:$0xff]
      %v5968 = vld [vmem:[#allocation2 + $0x57] sm:$0xff]
      %v5969 = vld [vmem:[#allocation2 + $0x5f] sm:$0xff]
      %v5970 = vld [vmem:[#allocation2 + $0x67] sm:$0xff]
      %v5971 = vld [vmem:[#allocation2 + $0x6f] sm:$0xff]
      %v5972 = vld [vmem:[#allocation2 + $0x77] sm:$0xff]
      %v5973 = vld [vmem:[#allocation2 + $0x7f] sm:$0xff]
      %v5974 = vld [vmem:[#allocation2 + $0x87] sm:$0xff]
      %v5975 = vld [vmem:[#allocation2 + $0x8f] sm:$0xff]
      %v5976 = vld [vmem:[#allocation2 + $0x97] sm:$0xff]
      %v5977 = vld [vmem:[#allocation2 + $0x9f] sm:$0xff]
      %v5978 = vld [vmem:[#allocation2 + $0xa7] sm:$0xff]
      %v5979 = vld [vmem:[#allocation2 + $0xaf] sm:$0xff]
      %v5980 = vld [vmem:[#allocation2 + $0xb7] sm:$0xff]
      %v5981 = vld [vmem:[#allocation2 + $0xbf] sm:$0xff]
      %v5982 = vld [vmem:[#allocation2 + $0xc7] sm:$0xff]
      %v5983 = vld [vmem:[#allocation2 + $0xcf] sm:$0xff]
      %v5984 = vld [vmem:[#allocation2 + $0xd7] sm:$0xff]
      %v5985 = vld [vmem:[#allocation2 + $0xdf] sm:$0xff]
      %v5986 = vld [vmem:[#allocation2 + $0xe7] sm:$0xff]
      %v5987 = vld [vmem:[#allocation2 + $0xef] sm:$0xff]
      %v5988 = vld [vmem:[#allocation2 + $0xf7] sm:$0xff]
      %v5989 = vld [vmem:[#allocation2 + $0xff] sm:$0xff]
      %v5990 = vld [vmem:[#allocation2 + $0x107] sm:$0xff]
      %v5991 = vld [vmem:[#allocation2 + $0x10f] sm:$0xff]
      %v5992 = vld [vmem:[#allocation2 + $0x117] sm:$0xff]
      %v5993 = vld [vmem:[#allocation2 + $0x11f] sm:$0xff]
      %v5994 = vsel %vm887, %v5962, 0.0
      %v5995 = vsel %vm888, %v5963, 0.0
      %v5996 = vsel %vm889, %v5964, 0.0
      %v5997 = vsel %vm890, %v5965, 0.0
      %v5998 = vsel %vm891, %v5966, 0.0
      %v5999 = vsel %vm892, %v5967, 0.0
      %v6000 = vsel %vm893, %v5968, 0.0
      %v6001 = vsel %vm894, %v5969, 0.0
      %v6002 = vsel %vm895, %v5970, 0.0
      %v6003 = vsel %vm896, %v5971, 0.0
      %v6004 = vsel %vm897, %v5972, 0.0
      %v6005 = vsel %vm898, %v5973, 0.0
      %v6006 = vsel %vm899, %v5974, 0.0
      %v6007 = vsel %vm900, %v5975, 0.0
      %v6008 = vsel %vm901, %v5976, 0.0
      %v6009 = vsel %vm902, %v5977, 0.0
      %v6010 = vsel %vm903, %v5978, 0.0
      %v6011 = vsel %vm904, %v5979, 0.0
      %v6012 = vsel %vm905, %v5980, 0.0
      %v6013 = vsel %vm906, %v5981, 0.0
      %v6014 = vsel %vm907, %v5982, 0.0
      %v6015 = vsel %vm908, %v5983, 0.0
      %v6016 = vsel %vm909, %v5984, 0.0
      %v6017 = vsel %vm910, %v5985, 0.0
      %v6018 = vsel %vm911, %v5986, 0.0
      %v6019 = vsel %vm912, %v5987, 0.0
      %v6020 = vsel %vm913, %v5988, 0.0
      %v6021 = vsel %vm914, %v5989, 0.0
      %v6022 = vsel %vm915, %v5990, 0.0
      %v6023 = vsel %vm916, %v5991, 0.0
      %v6024 = vsel %vm917, %v5992, 0.0
      %v6025 = vsel %vm918, %v5993, 0.0
      %v6026 = vpack.c.bf16 %v5995, %v5994
      %v6027 = vpack.c.bf16 %v5997, %v5996
      %v6028 = vpack.c.bf16 %v5999, %v5998
      %v6029 = vpack.c.bf16 %v6001, %v6000
      %v6030 = vpack.c.bf16 %v6003, %v6002
      %v6031 = vpack.c.bf16 %v6005, %v6004
      %v6032 = vpack.c.bf16 %v6007, %v6006
      %v6033 = vpack.c.bf16 %v6009, %v6008
      %v6034 = vpack.c.bf16 %v6011, %v6010
      %v6035 = vpack.c.bf16 %v6013, %v6012
      %v6036 = vpack.c.bf16 %v6015, %v6014
      %v6037 = vpack.c.bf16 %v6017, %v6016
      %v6038 = vpack.c.bf16 %v6019, %v6018
      %v6039 = vpack.c.bf16 %v6021, %v6020
      %v6040 = vpack.c.bf16 %v6023, %v6022
      %v6041 = vpack.c.bf16 %v6025, %v6024
      %s6042 = scalar_lea.vmem %s5, 384
      %v6043 = vld [vmem:[%s6042] sm:$0xf]
      %v6044 = vld [vmem:[%s6042 + $0x4] sm:$0xf]
      %v6045 = vld [vmem:[%s6042 + $0x8] sm:$0xf]
      %v6046 = vld [vmem:[%s6042 + $0xc] sm:$0xf]
      %v6047 = vld [vmem:[%s6042 + $0x10] sm:$0xf]
      %v6048 = vld [vmem:[%s6042 + $0x14] sm:$0xf]
      %v6049 = vld [vmem:[%s6042 + $0x18] sm:$0xf]
      %v6050 = vld [vmem:[%s6042 + $0x1c] sm:$0xf]
      %v6051 = vld [vmem:[%s6042 + $0x20] sm:$0xf]
      %v6052 = vld [vmem:[%s6042 + $0x24] sm:$0xf]
      %v6053 = vld [vmem:[%s6042 + $0x28] sm:$0xf]
      %v6054 = vld [vmem:[%s6042 + $0x2c] sm:$0xf]
      %v6055 = vld [vmem:[%s6042 + $0x30] sm:$0xf]
      %v6056 = vld [vmem:[%s6042 + $0x34] sm:$0xf]
      %v6057 = vld [vmem:[%s6042 + $0x38] sm:$0xf]
      %v6058 = vld [vmem:[%s6042 + $0x3c] sm:$0xf]
      %v6075 = vunpack.c.l.b16 %v6043
      %v6076 = vunpack.c.l.b16 %v6044
      %v6077 = vunpack.c.l.b16 %v6045
      %v6078 = vunpack.c.l.b16 %v6046
      %v6079 = vunpack.c.l.b16 %v6047
      %v6080 = vunpack.c.l.b16 %v6048
      %v6081 = vunpack.c.l.b16 %v6049
      %v6082 = vunpack.c.l.b16 %v6050
      %v6083 = vunpack.c.l.b16 %v6051
      %v6084 = vunpack.c.l.b16 %v6052
      %v6085 = vunpack.c.l.b16 %v6053
      %v6086 = vunpack.c.l.b16 %v6054
      %v6087 = vunpack.c.l.b16 %v6055
      %v6088 = vunpack.c.l.b16 %v6056
      %v6089 = vunpack.c.l.b16 %v6057
      %v6090 = vunpack.c.l.b16 %v6058
      %v6091 = vpack.c.b16 %v6076, %v6075
      %v6092 = vpack.c.b16 %v6078, %v6077
      %v6093 = vpack.c.b16 %v6080, %v6079
      %v6094 = vpack.c.b16 %v6082, %v6081
      %v6095 = vpack.c.b16 %v6084, %v6083
      %v6096 = vpack.c.b16 %v6086, %v6085
      %v6097 = vpack.c.b16 %v6088, %v6087
      %v6098 = vpack.c.b16 %v6090, %v6089
      %6107 = vmatprep.subr.bf16.mxu0 0
      %6108 = vmatpush1.bf16.msra.mxu0 %v6091
      %6109 = vmatprep.subr.bf16.mxu0 0
      %6110 = vmatpush1.bf16.msra.mxu0 %v6092
      %6111 = vmatprep.subr.bf16.mxu0 0
      %6112 = vmatpush1.bf16.msra.mxu0 %v6093
      %6113 = vmatprep.subr.bf16.mxu0 0
      %6114 = vmatpush1.bf16.msra.mxu0 %v6094
      %6115 = vmatprep.subr.bf16.mxu0 0
      %6116 = vmatpush1.bf16.msra.mxu0 %v6095
      %6117 = vmatprep.subr.bf16.mxu0 0
      %6118 = vmatpush1.bf16.msra.mxu0 %v6096
      %6119 = vmatprep.subr.bf16.mxu0 0
      %6120 = vmatpush1.bf16.msra.mxu0 %v6097
      %6121 = vmatprep.subr.bf16.mxu0 0
      %6122 = vmatpush1.bf16.msra.mxu0 %v6098
      %6123 = vmatprep.subr.bf16.mxu0 0
      %6124 = vmatpush1.bf16.msra.mxu0 0
      %6125 = vmatprep.subr.bf16.mxu0 0
      %6126 = vmatpush1.bf16.msra.mxu0 0
      %6127 = vmatprep.subr.bf16.mxu0 0
      %6128 = vmatpush1.bf16.msra.mxu0 0
      %6129 = vmatprep.subr.bf16.mxu0 0
      %6130 = vmatpush1.bf16.msra.mxu0 0
      %6131 = vmatprep.subr.bf16.mxu0 0
      %6132 = vmatpush1.bf16.msra.mxu0 0
      %6133 = vmatprep.subr.bf16.mxu0 0
      %6134 = vmatpush1.bf16.msra.mxu0 0
      %6135 = vmatprep.subr.bf16.mxu0 0
      %6136 = vmatpush1.bf16.msra.mxu0 0
      %6137 = vmatprep.subr.bf16.mxu0 0
      %6138 = vmatpush1.bf16.msra.mxu0 0
      %6139 = vmatprep.mubr.bf16.mxu0 0
      %6140 = vmatmul.mubr.bf16.gmra.mrb[0].mxu0 %v6026
      %v6141 = vpop.f32.mrb[0].mxu0
      %v6142 = vadd.f32 0.0, %v6141
      %v6143 = vpop.f32.mrb[0].mxu0
      %v6144 = vpop.f32.mrb[0].mxu0
      %v6145 = vadd.f32 0.0, %v6144
      %v6146 = vpop.f32.mrb[0].mxu0
      %6147 = vmatprep.mubr.bf16.mxu0 0
      %6148 = vmatmul.mubr.bf16.gmra.mrb[0].mxu0 %v6027
      %v6149 = vpop.f32.mrb[0].mxu0
      %v6150 = vadd.f32 0.0, %v6149
      %v6151 = vpop.f32.mrb[0].mxu0
      %v6152 = vpop.f32.mrb[0].mxu0
      %v6153 = vadd.f32 0.0, %v6152
      %v6154 = vpop.f32.mrb[0].mxu0
      %6155 = vmatprep.mubr.bf16.mxu0 0
      %6156 = vmatmul.mubr.bf16.gmra.mrb[0].mxu0 %v6028
      %v6157 = vpop.f32.mrb[0].mxu0
      %v6158 = vadd.f32 0.0, %v6157
      %v6159 = vpop.f32.mrb[0].mxu0
      %v6160 = vpop.f32.mrb[0].mxu0
      %v6161 = vadd.f32 0.0, %v6160
      %v6162 = vpop.f32.mrb[0].mxu0
      %6163 = vmatprep.mubr.bf16.mxu0 0
      %6164 = vmatmul.mubr.bf16.gmra.mrb[0].mxu0 %v6029
      %v6165 = vpop.f32.mrb[0].mxu0
      %v6166 = vadd.f32 0.0, %v6165
      %v6167 = vpop.f32.mrb[0].mxu0
      %v6168 = vpop.f32.mrb[0].mxu0
      %v6169 = vadd.f32 0.0, %v6168
      %v6170 = vpop.f32.mrb[0].mxu0
      %6171 = vmatprep.mubr.bf16.mxu0 0
      %6172 = vmatmul.mubr.bf16.gmra.mrb[0].mxu0 %v6030
      %v6173 = vpop.f32.mrb[0].mxu0
      %v6174 = vadd.f32 0.0, %v6173
      %v6175 = vpop.f32.mrb[0].mxu0
      %v6176 = vpop.f32.mrb[0].mxu0
      %v6177 = vadd.f32 0.0, %v6176
      %v6178 = vpop.f32.mrb[0].mxu0
      %6179 = vmatprep.mubr.bf16.mxu0 0
      %6180 = vmatmul.mubr.bf16.gmra.mrb[0].mxu0 %v6031
      %v6181 = vpop.f32.mrb[0].mxu0
      %v6182 = vadd.f32 0.0, %v6181
      %v6183 = vpop.f32.mrb[0].mxu0
      %v6184 = vpop.f32.mrb[0].mxu0
      %v6185 = vadd.f32 0.0, %v6184
      %v6186 = vpop.f32.mrb[0].mxu0
      %6187 = vmatprep.mubr.bf16.mxu0 0
      %6188 = vmatmul.mubr.bf16.gmra.mrb[0].mxu0 %v6032
      %v6189 = vpop.f32.mrb[0].mxu0
      %v6190 = vadd.f32 0.0, %v6189
      %v6191 = vpop.f32.mrb[0].mxu0
      %v6192 = vpop.f32.mrb[0].mxu0
      %v6193 = vadd.f32 0.0, %v6192
      %v6194 = vpop.f32.mrb[0].mxu0
      %6195 = vmatprep.mubr.bf16.mxu0 0
      %6196 = vmatmul.mubr.bf16.gmra.mrb[0].mxu0 %v6033
      %v6197 = vpop.f32.mrb[0].mxu0
      %v6198 = vadd.f32 0.0, %v6197
      %v6199 = vpop.f32.mrb[0].mxu0
      %v6200 = vpop.f32.mrb[0].mxu0
      %v6201 = vadd.f32 0.0, %v6200
      %v6202 = vpop.f32.mrb[0].mxu0
      %6203 = vmatprep.mubr.bf16.mxu0 0
      %6204 = vmatmul.mubr.bf16.gmra.mrb[0].mxu0 %v6034
      %v6205 = vpop.f32.mrb[0].mxu0
      %v6206 = vadd.f32 0.0, %v6205
      %v6207 = vpop.f32.mrb[0].mxu0
      %v6208 = vpop.f32.mrb[0].mxu0
      %v6209 = vadd.f32 0.0, %v6208
      %v6210 = vpop.f32.mrb[0].mxu0
      %6211 = vmatprep.mubr.bf16.mxu0 0
      %6212 = vmatmul.mubr.bf16.gmra.mrb[0].mxu0 %v6035
      %v6213 = vpop.f32.mrb[0].mxu0
      %v6214 = vadd.f32 0.0, %v6213
      %v6215 = vpop.f32.mrb[0].mxu0
      %v6216 = vpop.f32.mrb[0].mxu0
      %v6217 = vadd.f32 0.0, %v6216
      %v6218 = vpop.f32.mrb[0].mxu0
      %6219 = vmatprep.mubr.bf16.mxu0 0
      %6220 = vmatmul.mubr.bf16.gmra.mrb[0].mxu0 %v6036
      %v6221 = vpop.f32.mrb[0].mxu0
      %v6222 = vadd.f32 0.0, %v6221
      %v6223 = vpop.f32.mrb[0].mxu0
      %v6224 = vpop.f32.mrb[0].mxu0
      %v6225 = vadd.f32 0.0, %v6224
      %v6226 = vpop.f32.mrb[0].mxu0
      %6227 = vmatprep.mubr.bf16.mxu0 0
      %6228 = vmatmul.mubr.bf16.gmra.mrb[0].mxu0 %v6037
      %v6229 = vpop.f32.mrb[0].mxu0
      %v6230 = vadd.f32 0.0, %v6229
      %v6231 = vpop.f32.mrb[0].mxu0
      %v6232 = vpop.f32.mrb[0].mxu0
      %v6233 = vadd.f32 0.0, %v6232
      %v6234 = vpop.f32.mrb[0].mxu0
      %6235 = vmatprep.mubr.bf16.mxu0 0
      %6236 = vmatmul.mubr.bf16.gmra.mrb[0].mxu0 %v6038
      %v6237 = vpop.f32.mrb[0].mxu0
      %v6238 = vadd.f32 0.0, %v6237
      %v6239 = vpop.f32.mrb[0].mxu0
      %v6240 = vpop.f32.mrb[0].mxu0
      %v6241 = vadd.f32 0.0, %v6240
      %v6242 = vpop.f32.mrb[0].mxu0
      %6243 = vmatprep.mubr.bf16.mxu0 0
      %6244 = vmatmul.mubr.bf16.gmra.mrb[0].mxu0 %v6039
      %v6245 = vpop.f32.mrb[0].mxu0
      %v6246 = vadd.f32 0.0, %v6245
      %v6247 = vpop.f32.mrb[0].mxu0
      %v6248 = vpop.f32.mrb[0].mxu0
      %v6249 = vadd.f32 0.0, %v6248
      %v6250 = vpop.f32.mrb[0].mxu0
      %6251 = vmatprep.mubr.bf16.mxu0 0
      %6252 = vmatmul.mubr.bf16.gmra.mrb[0].mxu0 %v6040
      %v6253 = vpop.f32.mrb[0].mxu0
      %v6254 = vadd.f32 0.0, %v6253
      %v6255 = vpop.f32.mrb[0].mxu0
      %v6256 = vpop.f32.mrb[0].mxu0
      %v6257 = vadd.f32 0.0, %v6256
      %v6258 = vpop.f32.mrb[0].mxu0
      %6259 = vmatprep.mubr.bf16.mxu0 0
      %6260 = vmatmul.mubr.bf16.gmra.mrb[0].mxu0 %v6041
      %v6261 = vpop.f32.mrb[0].mxu0
      %v6262 = vadd.f32 0.0, %v6261
      %v6263 = vpop.f32.mrb[0].mxu0
      %v6264 = vpop.f32.mrb[0].mxu0
      %v6265 = vadd.f32 0.0, %v6264
      %v6266 = vpop.f32.mrb[0].mxu0
      %6267 = vdwg.mxu0
      %v6268 = vadd.f32 %v5930, %v6142
      %v6269 = vadd.f32 %v5931, %v6145
      %v6270 = vadd.f32 %v5932, %v6150
      %v6271 = vadd.f32 %v5933, %v6153
      %v6272 = vadd.f32 %v5934, %v6158
      %v6273 = vadd.f32 %v5935, %v6161
      %v6274 = vadd.f32 %v5936, %v6166
      %v6275 = vadd.f32 %v5937, %v6169
      %v6276 = vadd.f32 %v5938, %v6174
      %v6277 = vadd.f32 %v5939, %v6177
      %v6278 = vadd.f32 %v5940, %v6182
      %v6279 = vadd.f32 %v5941, %v6185
      %v6280 = vadd.f32 %v5942, %v6190
      %v6281 = vadd.f32 %v5943, %v6193
      %v6282 = vadd.f32 %v5944, %v6198
      %v6283 = vadd.f32 %v5945, %v6201
      %v6284 = vadd.f32 %v5946, %v6206
      %v6285 = vadd.f32 %v5947, %v6209
      %v6286 = vadd.f32 %v5948, %v6214
      %v6287 = vadd.f32 %v5949, %v6217
      %v6288 = vadd.f32 %v5950, %v6222
      %v6289 = vadd.f32 %v5951, %v6225
      %v6290 = vadd.f32 %v5952, %v6230
      %v6291 = vadd.f32 %v5953, %v6233
      %v6292 = vadd.f32 %v5954, %v6238
      %v6293 = vadd.f32 %v5955, %v6241
      %v6294 = vadd.f32 %v5956, %v6246
      %v6295 = vadd.f32 %v5957, %v6249
      %v6296 = vadd.f32 %v5958, %v6254
      %v6297 = vadd.f32 %v5959, %v6257
      %v6298 = vadd.f32 %v5960, %v6262
      %v6299 = vadd.f32 %v5961, %v6265
      %v6300 = vld [vmem:[#allocation2 + $0x28] sm:$0xff]
      %v6301 = vld [vmem:[#allocation2 + $0x30] sm:$0xff]
      %v6302 = vld [vmem:[#allocation2 + $0x38] sm:$0xff]
      %v6303 = vld [vmem:[#allocation2 + $0x40] sm:$0xff]
      %v6304 = vld [vmem:[#allocation2 + $0x48] sm:$0xff]
      %v6305 = vld [vmem:[#allocation2 + $0x50] sm:$0xff]
      %v6306 = vld [vmem:[#allocation2 + $0x58] sm:$0xff]
      %v6307 = vld [vmem:[#allocation2 + $0x60] sm:$0xff]
      %v6308 = vld [vmem:[#allocation2 + $0x68] sm:$0xff]
      %v6309 = vld [vmem:[#allocation2 + $0x70] sm:$0xff]
      %v6310 = vld [vmem:[#allocation2 + $0x78] sm:$0xff]
      %v6311 = vld [vmem:[#allocation2 + $0x80] sm:$0xff]
      %v6312 = vld [vmem:[#allocation2 + $0x88] sm:$0xff]
      %v6313 = vld [vmem:[#allocation2 + $0x90] sm:$0xff]
      %v6314 = vld [vmem:[#allocation2 + $0x98] sm:$0xff]
      %v6315 = vld [vmem:[#allocation2 + $0xa0] sm:$0xff]
      %v6316 = vld [vmem:[#allocation2 + $0xa8] sm:$0xff]
      %v6317 = vld [vmem:[#allocation2 + $0xb0] sm:$0xff]
      %v6318 = vld [vmem:[#allocation2 + $0xb8] sm:$0xff]
      %v6319 = vld [vmem:[#allocation2 + $0xc0] sm:$0xff]
      %v6320 = vld [vmem:[#allocation2 + $0xc8] sm:$0xff]
      %v6321 = vld [vmem:[#allocation2 + $0xd0] sm:$0xff]
      %v6322 = vld [vmem:[#allocation2 + $0xd8] sm:$0xff]
      %v6323 = vld [vmem:[#allocation2 + $0xe0] sm:$0xff]
      %v6324 = vld [vmem:[#allocation2 + $0xe8] sm:$0xff]
      %v6325 = vld [vmem:[#allocation2 + $0xf0] sm:$0xff]
      %v6326 = vld [vmem:[#allocation2 + $0xf8] sm:$0xff]
      %v6327 = vld [vmem:[#allocation2 + $0x100] sm:$0xff]
      %v6328 = vld [vmem:[#allocation2 + $0x108] sm:$0xff]
      %v6329 = vld [vmem:[#allocation2 + $0x110] sm:$0xff]
      %v6330 = vld [vmem:[#allocation2 + $0x118] sm:$0xff]
      %v6331 = vld [vmem:[#allocation2 + $0x120] sm:$0xff]
      %v6332 = vpack.c.bf16 %v6301, %v6300
      %v6333 = vpack.c.bf16 %v6303, %v6302
      %v6334 = vpack.c.bf16 %v6305, %v6304
      %v6335 = vpack.c.bf16 %v6307, %v6306
      %v6336 = vpack.c.bf16 %v6309, %v6308
      %v6337 = vpack.c.bf16 %v6311, %v6310
      %v6338 = vpack.c.bf16 %v6313, %v6312
      %v6339 = vpack.c.bf16 %v6315, %v6314
      %v6340 = vpack.c.bf16 %v6317, %v6316
      %v6341 = vpack.c.bf16 %v6319, %v6318
      %v6342 = vpack.c.bf16 %v6321, %v6320
      %v6343 = vpack.c.bf16 %v6323, %v6322
      %v6344 = vpack.c.bf16 %v6325, %v6324
      %v6345 = vpack.c.bf16 %v6327, %v6326
      %v6346 = vpack.c.bf16 %v6329, %v6328
      %v6347 = vpack.c.bf16 %v6331, %v6330
      %s6348 = scalar_lea.vmem %s5, 448
      %v6349 = vld [vmem:[%s6348] sm:$0xf]
      %v6350 = vld [vmem:[%s6348 + $0x4] sm:$0xf]
      %v6351 = vld [vmem:[%s6348 + $0x8] sm:$0xf]
      %v6352 = vld [vmem:[%s6348 + $0xc] sm:$0xf]
      %v6353 = vld [vmem:[%s6348 + $0x10] sm:$0xf]
      %v6354 = vld [vmem:[%s6348 + $0x14] sm:$0xf]
      %v6355 = vld [vmem:[%s6348 + $0x18] sm:$0xf]
      %v6356 = vld [vmem:[%s6348 + $0x1c] sm:$0xf]
      %v6357 = vld [vmem:[%s6348 + $0x20] sm:$0xf]
      %v6358 = vld [vmem:[%s6348 + $0x24] sm:$0xf]
      %v6359 = vld [vmem:[%s6348 + $0x28] sm:$0xf]
      %v6360 = vld [vmem:[%s6348 + $0x2c] sm:$0xf]
      %v6361 = vld [vmem:[%s6348 + $0x30] sm:$0xf]
      %v6362 = vld [vmem:[%s6348 + $0x34] sm:$0xf]
      %v6363 = vld [vmem:[%s6348 + $0x38] sm:$0xf]
      %v6364 = vld [vmem:[%s6348 + $0x3c] sm:$0xf]
      %v6381 = vunpack.c.l.b16 %v6349
      %v6382 = vunpack.c.l.b16 %v6350
      %v6383 = vunpack.c.l.b16 %v6351
      %v6384 = vunpack.c.l.b16 %v6352
      %v6385 = vunpack.c.l.b16 %v6353
      %v6386 = vunpack.c.l.b16 %v6354
      %v6387 = vunpack.c.l.b16 %v6355
      %v6388 = vunpack.c.l.b16 %v6356
      %v6389 = vunpack.c.l.b16 %v6357
      %v6390 = vunpack.c.l.b16 %v6358
      %v6391 = vunpack.c.l.b16 %v6359
      %v6392 = vunpack.c.l.b16 %v6360
      %v6393 = vunpack.c.l.b16 %v6361
      %v6394 = vunpack.c.l.b16 %v6362
      %v6395 = vunpack.c.l.b16 %v6363
      %v6396 = vunpack.c.l.b16 %v6364
      %v6397 = vpack.c.b16 %v6382, %v6381
      %v6398 = vpack.c.b16 %v6384, %v6383
      %v6399 = vpack.c.b16 %v6386, %v6385
      %v6400 = vpack.c.b16 %v6388, %v6387
      %v6401 = vpack.c.b16 %v6390, %v6389
      %v6402 = vpack.c.b16 %v6392, %v6391
      %v6403 = vpack.c.b16 %v6394, %v6393
      %v6404 = vpack.c.b16 %v6396, %v6395
      %6413 = vmatprep.subr.bf16.mxu0 0
      %6414 = vmatpush1.bf16.msra.mxu0 %v6397
      %6415 = vmatprep.subr.bf16.mxu0 0
      %6416 = vmatpush1.bf16.msra.mxu0 %v6398
      %6417 = vmatprep.subr.bf16.mxu0 0
      %6418 = vmatpush1.bf16.msra.mxu0 %v6399
      %6419 = vmatprep.subr.bf16.mxu0 0
      %6420 = vmatpush1.bf16.msra.mxu0 %v6400
      %6421 = vmatprep.subr.bf16.mxu0 0
      %6422 = vmatpush1.bf16.msra.mxu0 %v6401
      %6423 = vmatprep.subr.bf16.mxu0 0
      %6424 = vmatpush1.bf16.msra.mxu0 %v6402
      %6425 = vmatprep.subr.bf16.mxu0 0
      %6426 = vmatpush1.bf16.msra.mxu0 %v6403
      %6427 = vmatprep.subr.bf16.mxu0 0
      %6428 = vmatpush1.bf16.msra.mxu0 %v6404
      %6429 = vmatprep.subr.bf16.mxu0 0
      %6430 = vmatpush1.bf16.msra.mxu0 0
      %6431 = vmatprep.subr.bf16.mxu0 0
      %6432 = vmatpush1.bf16.msra.mxu0 0
      %6433 = vmatprep.subr.bf16.mxu0 0
      %6434 = vmatpush1.bf16.msra.mxu0 0
      %6435 = vmatprep.subr.bf16.mxu0 0
      %6436 = vmatpush1.bf16.msra.mxu0 0
      %6437 = vmatprep.subr.bf16.mxu0 0
      %6438 = vmatpush1.bf16.msra.mxu0 0
      %6439 = vmatprep.subr.bf16.mxu0 0
      %6440 = vmatpush1.bf16.msra.mxu0 0
      %6441 = vmatprep.subr.bf16.mxu0 0
      %6442 = vmatpush1.bf16.msra.mxu0 0
      %6443 = vmatprep.subr.bf16.mxu0 0
      %6444 = vmatpush1.bf16.msra.mxu0 0
      %6445 = vmatprep.mubr.bf16.mxu0 0
      %6446 = vmatmul.mubr.bf16.gmra.mrb[0].mxu0 %v6332
      %v6447 = vpop.f32.mrb[0].mxu0
      %v6448 = vadd.f32 0.0, %v6447
      %v6449 = vpop.f32.mrb[0].mxu0
      %v6450 = vpop.f32.mrb[0].mxu0
      %v6451 = vadd.f32 0.0, %v6450
      %v6452 = vpop.f32.mrb[0].mxu0
      %6453 = vmatprep.mubr.bf16.mxu0 0
      %6454 = vmatmul.mubr.bf16.gmra.mrb[0].mxu0 %v6333
      %v6455 = vpop.f32.mrb[0].mxu0
      %v6456 = vadd.f32 0.0, %v6455
      %v6457 = vpop.f32.mrb[0].mxu0
      %v6458 = vpop.f32.mrb[0].mxu0
      %v6459 = vadd.f32 0.0, %v6458
      %v6460 = vpop.f32.mrb[0].mxu0
      %6461 = vmatprep.mubr.bf16.mxu0 0
      %6462 = vmatmul.mubr.bf16.gmra.mrb[0].mxu0 %v6334
      %v6463 = vpop.f32.mrb[0].mxu0
      %v6464 = vadd.f32 0.0, %v6463
      %v6465 = vpop.f32.mrb[0].mxu0
      %v6466 = vpop.f32.mrb[0].mxu0
      %v6467 = vadd.f32 0.0, %v6466
      %v6468 = vpop.f32.mrb[0].mxu0
      %6469 = vmatprep.mubr.bf16.mxu0 0
      %6470 = vmatmul.mubr.bf16.gmra.mrb[0].mxu0 %v6335
      %v6471 = vpop.f32.mrb[0].mxu0
      %v6472 = vadd.f32 0.0, %v6471
      %v6473 = vpop.f32.mrb[0].mxu0
      %v6474 = vpop.f32.mrb[0].mxu0
      %v6475 = vadd.f32 0.0, %v6474
      %v6476 = vpop.f32.mrb[0].mxu0
      %6477 = vmatprep.mubr.bf16.mxu0 0
      %6478 = vmatmul.mubr.bf16.gmra.mrb[0].mxu0 %v6336
      %v6479 = vpop.f32.mrb[0].mxu0
      %v6480 = vadd.f32 0.0, %v6479
      %v6481 = vpop.f32.mrb[0].mxu0
      %v6482 = vpop.f32.mrb[0].mxu0
      %v6483 = vadd.f32 0.0, %v6482
      %v6484 = vpop.f32.mrb[0].mxu0
      %6485 = vmatprep.mubr.bf16.mxu0 0
      %6486 = vmatmul.mubr.bf16.gmra.mrb[0].mxu0 %v6337
      %v6487 = vpop.f32.mrb[0].mxu0
      %v6488 = vadd.f32 0.0, %v6487
      %v6489 = vpop.f32.mrb[0].mxu0
      %v6490 = vpop.f32.mrb[0].mxu0
      %v6491 = vadd.f32 0.0, %v6490
      %v6492 = vpop.f32.mrb[0].mxu0
      %6493 = vmatprep.mubr.bf16.mxu0 0
      %6494 = vmatmul.mubr.bf16.gmra.mrb[0].mxu0 %v6338
      %v6495 = vpop.f32.mrb[0].mxu0
      %v6496 = vadd.f32 0.0, %v6495
      %v6497 = vpop.f32.mrb[0].mxu0
      %v6498 = vpop.f32.mrb[0].mxu0
      %v6499 = vadd.f32 0.0, %v6498
      %v6500 = vpop.f32.mrb[0].mxu0
      %6501 = vmatprep.mubr.bf16.mxu0 0
      %6502 = vmatmul.mubr.bf16.gmra.mrb[0].mxu0 %v6339
      %v6503 = vpop.f32.mrb[0].mxu0
      %v6504 = vadd.f32 0.0, %v6503
      %v6505 = vpop.f32.mrb[0].mxu0
      %v6506 = vpop.f32.mrb[0].mxu0
      %v6507 = vadd.f32 0.0, %v6506
      %v6508 = vpop.f32.mrb[0].mxu0
      %6509 = vmatprep.mubr.bf16.mxu0 0
      %6510 = vmatmul.mubr.bf16.gmra.mrb[0].mxu0 %v6340
      %v6511 = vpop.f32.mrb[0].mxu0
      %v6512 = vadd.f32 0.0, %v6511
      %v6513 = vpop.f32.mrb[0].mxu0
      %v6514 = vpop.f32.mrb[0].mxu0
      %v6515 = vadd.f32 0.0, %v6514
      %v6516 = vpop.f32.mrb[0].mxu0
      %6517 = vmatprep.mubr.bf16.mxu0 0
      %6518 = vmatmul.mubr.bf16.gmra.mrb[0].mxu0 %v6341
      %v6519 = vpop.f32.mrb[0].mxu0
      %v6520 = vadd.f32 0.0, %v6519
      %v6521 = vpop.f32.mrb[0].mxu0
      %v6522 = vpop.f32.mrb[0].mxu0
      %v6523 = vadd.f32 0.0, %v6522
      %v6524 = vpop.f32.mrb[0].mxu0
      %6525 = vmatprep.mubr.bf16.mxu0 0
      %6526 = vmatmul.mubr.bf16.gmra.mrb[0].mxu0 %v6342
      %v6527 = vpop.f32.mrb[0].mxu0
      %v6528 = vadd.f32 0.0, %v6527
      %v6529 = vpop.f32.mrb[0].mxu0
      %v6530 = vpop.f32.mrb[0].mxu0
      %v6531 = vadd.f32 0.0, %v6530
      %v6532 = vpop.f32.mrb[0].mxu0
      %6533 = vmatprep.mubr.bf16.mxu0 0
      %6534 = vmatmul.mubr.bf16.gmra.mrb[0].mxu0 %v6343
      %v6535 = vpop.f32.mrb[0].mxu0
      %v6536 = vadd.f32 0.0, %v6535
      %v6537 = vpop.f32.mrb[0].mxu0
      %v6538 = vpop.f32.mrb[0].mxu0
      %v6539 = vadd.f32 0.0, %v6538
      %v6540 = vpop.f32.mrb[0].mxu0
      %6541 = vmatprep.mubr.bf16.mxu0 0
      %6542 = vmatmul.mubr.bf16.gmra.mrb[0].mxu0 %v6344
      %v6543 = vpop.f32.mrb[0].mxu0
      %v6544 = vadd.f32 0.0, %v6543
      %v6545 = vpop.f32.mrb[0].mxu0
      %v6546 = vpop.f32.mrb[0].mxu0
      %v6547 = vadd.f32 0.0, %v6546
      %v6548 = vpop.f32.mrb[0].mxu0
      %6549 = vmatprep.mubr.bf16.mxu0 0
      %6550 = vmatmul.mubr.bf16.gmra.mrb[0].mxu0 %v6345
      %v6551 = vpop.f32.mrb[0].mxu0
      %v6552 = vadd.f32 0.0, %v6551
      %v6553 = vpop.f32.mrb[0].mxu0
      %v6554 = vpop.f32.mrb[0].mxu0
      %v6555 = vadd.f32 0.0, %v6554
      %v6556 = vpop.f32.mrb[0].mxu0
      %6557 = vmatprep.mubr.bf16.mxu0 0
      %6558 = vmatmul.mubr.bf16.gmra.mrb[0].mxu0 %v6346
      %v6559 = vpop.f32.mrb[0].mxu0
      %v6560 = vadd.f32 0.0, %v6559
      %v6561 = vpop.f32.mrb[0].mxu0
      %v6562 = vpop.f32.mrb[0].mxu0
      %v6563 = vadd.f32 0.0, %v6562
      %v6564 = vpop.f32.mrb[0].mxu0
      %6565 = vmatprep.mubr.bf16.mxu0 0
      %6566 = vmatmul.mubr.bf16.gmra.mrb[0].mxu0 %v6347
      %v6567 = vpop.f32.mrb[0].mxu0
      %v6568 = vadd.f32 0.0, %v6567
      %v6569 = vpop.f32.mrb[0].mxu0
      %v6570 = vpop.f32.mrb[0].mxu0
      %v6571 = vadd.f32 0.0, %v6570
      %v6572 = vpop.f32.mrb[0].mxu0
      %6573 = vdwg.mxu0
      %v6574 = vadd.f32 %v6268, %v6448
      %v6575 = vadd.f32 %v6269, %v6451
      %v6576 = vadd.f32 %v6270, %v6456
      %v6577 = vadd.f32 %v6271, %v6459
      %v6578 = vadd.f32 %v6272, %v6464
      %v6579 = vadd.f32 %v6273, %v6467
      %v6580 = vadd.f32 %v6274, %v6472
      %v6581 = vadd.f32 %v6275, %v6475
      %v6582 = vadd.f32 %v6276, %v6480
      %v6583 = vadd.f32 %v6277, %v6483
      %v6584 = vadd.f32 %v6278, %v6488
      %v6585 = vadd.f32 %v6279, %v6491
      %v6586 = vadd.f32 %v6280, %v6496
      %v6587 = vadd.f32 %v6281, %v6499
      %v6588 = vadd.f32 %v6282, %v6504
      %v6589 = vadd.f32 %v6283, %v6507
      %v6590 = vadd.f32 %v6284, %v6512
      %v6591 = vadd.f32 %v6285, %v6515
      %v6592 = vadd.f32 %v6286, %v6520
      %v6593 = vadd.f32 %v6287, %v6523
      %v6594 = vadd.f32 %v6288, %v6528
      %v6595 = vadd.f32 %v6289, %v6531
      %v6596 = vadd.f32 %v6290, %v6536
      %v6597 = vadd.f32 %v6291, %v6539
      %v6598 = vadd.f32 %v6292, %v6544
      %v6599 = vadd.f32 %v6293, %v6547
      %v6600 = vadd.f32 %v6294, %v6552
      %v6601 = vadd.f32 %v6295, %v6555
      %v6602 = vadd.f32 %v6296, %v6560
      %v6603 = vadd.f32 %v6297, %v6563
      %v6604 = vadd.f32 %v6298, %v6568
      %v6605 = vadd.f32 %v6299, %v6571
      %v6606 = vld [vmem:[#allocation2 + $0x29] sm:$0xff]
      %v6607 = vld [vmem:[#allocation2 + $0x31] sm:$0xff]
      %v6608 = vld [vmem:[#allocation2 + $0x39] sm:$0xff]
      %v6609 = vld [vmem:[#allocation2 + $0x41] sm:$0xff]
      %v6610 = vld [vmem:[#allocation2 + $0x49] sm:$0xff]
      %v6611 = vld [vmem:[#allocation2 + $0x51] sm:$0xff]
      %v6612 = vld [vmem:[#allocation2 + $0x59] sm:$0xff]
      %v6613 = vld [vmem:[#allocation2 + $0x61] sm:$0xff]
      %v6614 = vld [vmem:[#allocation2 + $0x69] sm:$0xff]
      %v6615 = vld [vmem:[#allocation2 + $0x71] sm:$0xff]
      %v6616 = vld [vmem:[#allocation2 + $0x79] sm:$0xff]
      %v6617 = vld [vmem:[#allocation2 + $0x81] sm:$0xff]
      %v6618 = vld [vmem:[#allocation2 + $0x89] sm:$0xff]
      %v6619 = vld [vmem:[#allocation2 + $0x91] sm:$0xff]
      %v6620 = vld [vmem:[#allocation2 + $0x99] sm:$0xff]
      %v6621 = vld [vmem:[#allocation2 + $0xa1] sm:$0xff]
      %v6622 = vld [vmem:[#allocation2 + $0xa9] sm:$0xff]
      %v6623 = vld [vmem:[#allocation2 + $0xb1] sm:$0xff]
      %v6624 = vld [vmem:[#allocation2 + $0xb9] sm:$0xff]
      %v6625 = vld [vmem:[#allocation2 + $0xc1] sm:$0xff]
      %v6626 = vld [vmem:[#allocation2 + $0xc9] sm:$0xff]
      %v6627 = vld [vmem:[#allocation2 + $0xd1] sm:$0xff]
      %v6628 = vld [vmem:[#allocation2 + $0xd9] sm:$0xff]
      %v6629 = vld [vmem:[#allocation2 + $0xe1] sm:$0xff]
      %v6630 = vld [vmem:[#allocation2 + $0xe9] sm:$0xff]
      %v6631 = vld [vmem:[#allocation2 + $0xf1] sm:$0xff]
      %v6632 = vld [vmem:[#allocation2 + $0xf9] sm:$0xff]
      %v6633 = vld [vmem:[#allocation2 + $0x101] sm:$0xff]
      %v6634 = vld [vmem:[#allocation2 + $0x109] sm:$0xff]
      %v6635 = vld [vmem:[#allocation2 + $0x111] sm:$0xff]
      %v6636 = vld [vmem:[#allocation2 + $0x119] sm:$0xff]
      %v6637 = vld [vmem:[#allocation2 + $0x121] sm:$0xff]
      %v6638 = vsel %vm1658, %v6606, 0.0
      %v6639 = vsel %vm1659, %v6607, 0.0
      %v6640 = vsel %vm1660, %v6608, 0.0
      %v6641 = vsel %vm1661, %v6609, 0.0
      %v6642 = vsel %vm1662, %v6610, 0.0
      %v6643 = vsel %vm1663, %v6611, 0.0
      %v6644 = vsel %vm1664, %v6612, 0.0
      %v6645 = vsel %vm1665, %v6613, 0.0
      %v6646 = vsel %vm1666, %v6614, 0.0
      %v6647 = vsel %vm1667, %v6615, 0.0
      %v6648 = vsel %vm1668, %v6616, 0.0
      %v6649 = vsel %vm1669, %v6617, 0.0
      %v6650 = vsel %vm1670, %v6618, 0.0
      %v6651 = vsel %vm1671, %v6619, 0.0
      %v6652 = vsel %vm1672, %v6620, 0.0
      %v6653 = vsel %vm1673, %v6621, 0.0
      %v6654 = vsel %vm1674, %v6622, 0.0
      %v6655 = vsel %vm1675, %v6623, 0.0
      %v6656 = vsel %vm1676, %v6624, 0.0
      %v6657 = vsel %vm1677, %v6625, 0.0
      %v6658 = vsel %vm1678, %v6626, 0.0
      %v6659 = vsel %vm1679, %v6627, 0.0
      %v6660 = vsel %vm1680, %v6628, 0.0
      %v6661 = vsel %vm1681, %v6629, 0.0
      %v6662 = vsel %vm1682, %v6630, 0.0
      %v6663 = vsel %vm1683, %v6631, 0.0
      %v6664 = vsel %vm1684, %v6632, 0.0
      %v6665 = vsel %vm1685, %v6633, 0.0
      %v6666 = vsel %vm1686, %v6634, 0.0
      %v6667 = vsel %vm1687, %v6635, 0.0
      %v6668 = vsel %vm1688, %v6636, 0.0
      %v6669 = vsel %vm1689, %v6637, 0.0
      %v6670 = vpack.c.bf16 %v6639, %v6638
      %v6671 = vpack.c.bf16 %v6641, %v6640
      %v6672 = vpack.c.bf16 %v6643, %v6642
      %v6673 = vpack.c.bf16 %v6645, %v6644
      %v6674 = vpack.c.bf16 %v6647, %v6646
      %v6675 = vpack.c.bf16 %v6649, %v6648
      %v6676 = vpack.c.bf16 %v6651, %v6650
      %v6677 = vpack.c.bf16 %v6653, %v6652
      %v6678 = vpack.c.bf16 %v6655, %v6654
      %v6679 = vpack.c.bf16 %v6657, %v6656
      %v6680 = vpack.c.bf16 %v6659, %v6658
      %v6681 = vpack.c.bf16 %v6661, %v6660
      %v6682 = vpack.c.bf16 %v6663, %v6662
      %v6683 = vpack.c.bf16 %v6665, %v6664
      %v6684 = vpack.c.bf16 %v6667, %v6666
      %v6685 = vpack.c.bf16 %v6669, %v6668
      %s6686 = scalar_lea.vmem %s5, 512
      %v6687 = vld [vmem:[%s6686] sm:$0xf]
      %v6688 = vld [vmem:[%s6686 + $0x4] sm:$0xf]
      %v6689 = vld [vmem:[%s6686 + $0x8] sm:$0xf]
      %v6690 = vld [vmem:[%s6686 + $0xc] sm:$0xf]
      %v6691 = vld [vmem:[%s6686 + $0x10] sm:$0xf]
      %v6692 = vld [vmem:[%s6686 + $0x14] sm:$0xf]
      %v6693 = vld [vmem:[%s6686 + $0x18] sm:$0xf]
      %v6694 = vld [vmem:[%s6686 + $0x1c] sm:$0xf]
      %v6695 = vld [vmem:[%s6686 + $0x20] sm:$0xf]
      %v6696 = vld [vmem:[%s6686 + $0x24] sm:$0xf]
      %v6697 = vld [vmem:[%s6686 + $0x28] sm:$0xf]
      %v6698 = vld [vmem:[%s6686 + $0x2c] sm:$0xf]
      %v6699 = vld [vmem:[%s6686 + $0x30] sm:$0xf]
      %v6700 = vld [vmem:[%s6686 + $0x34] sm:$0xf]
      %v6701 = vld [vmem:[%s6686 + $0x38] sm:$0xf]
      %v6702 = vld [vmem:[%s6686 + $0x3c] sm:$0xf]
      %v6719 = vunpack.c.l.b16 %v6687
      %v6720 = vunpack.c.l.b16 %v6688
      %v6721 = vunpack.c.l.b16 %v6689
      %v6722 = vunpack.c.l.b16 %v6690
      %v6723 = vunpack.c.l.b16 %v6691
      %v6724 = vunpack.c.l.b16 %v6692
      %v6725 = vunpack.c.l.b16 %v6693
      %v6726 = vunpack.c.l.b16 %v6694
      %v6727 = vunpack.c.l.b16 %v6695
      %v6728 = vunpack.c.l.b16 %v6696
      %v6729 = vunpack.c.l.b16 %v6697
      %v6730 = vunpack.c.l.b16 %v6698
      %v6731 = vunpack.c.l.b16 %v6699
      %v6732 = vunpack.c.l.b16 %v6700
      %v6733 = vunpack.c.l.b16 %v6701
      %v6734 = vunpack.c.l.b16 %v6702
      %v6735 = vpack.c.b16 %v6720, %v6719
      %v6736 = vpack.c.b16 %v6722, %v6721
      %v6737 = vpack.c.b16 %v6724, %v6723
      %v6738 = vpack.c.b16 %v6726, %v6725
      %v6739 = vpack.c.b16 %v6728, %v6727
      %v6740 = vpack.c.b16 %v6730, %v6729
      %v6741 = vpack.c.b16 %v6732, %v6731
      %v6742 = vpack.c.b16 %v6734, %v6733
      %6751 = vmatprep.subr.bf16.mxu0 0
      %6752 = vmatpush1.bf16.msra.mxu0 %v6735
      %6753 = vmatprep.subr.bf16.mxu0 0
      %6754 = vmatpush1.bf16.msra.mxu0 %v6736
      %6755 = vmatprep.subr.bf16.mxu0 0
      %6756 = vmatpush1.bf16.msra.mxu0 %v6737
      %6757 = vmatprep.subr.bf16.mxu0 0
      %6758 = vmatpush1.bf16.msra.mxu0 %v6738
      %6759 = vmatprep.subr.bf16.mxu0 0
      %6760 = vmatpush1.bf16.msra.mxu0 %v6739
      %6761 = vmatprep.subr.bf16.mxu0 0
      %6762 = vmatpush1.bf16.msra.mxu0 %v6740
      %6763 = vmatprep.subr.bf16.mxu0 0
      %6764 = vmatpush1.bf16.msra.mxu0 %v6741
      %6765 = vmatprep.subr.bf16.mxu0 0
      %6766 = vmatpush1.bf16.msra.mxu0 %v6742
      %6767 = vmatprep.subr.bf16.mxu0 0
      %6768 = vmatpush1.bf16.msra.mxu0 0
      %6769 = vmatprep.subr.bf16.mxu0 0
      %6770 = vmatpush1.bf16.msra.mxu0 0
      %6771 = vmatprep.subr.bf16.mxu0 0
      %6772 = vmatpush1.bf16.msra.mxu0 0
      %6773 = vmatprep.subr.bf16.mxu0 0
      %6774 = vmatpush1.bf16.msra.mxu0 0
      %6775 = vmatprep.subr.bf16.mxu0 0
      %6776 = vmatpush1.bf16.msra.mxu0 0
      %6777 = vmatprep.subr.bf16.mxu0 0
      %6778 = vmatpush1.bf16.msra.mxu0 0
      %6779 = vmatprep.subr.bf16.mxu0 0
      %6780 = vmatpush1.bf16.msra.mxu0 0
      %6781 = vmatprep.subr.bf16.mxu0 0
      %6782 = vmatpush1.bf16.msra.mxu0 0
      %6783 = vmatprep.mubr.bf16.mxu0 0
      %6784 = vmatmul.mubr.bf16.gmra.mrb[0].mxu0 %v6670
      %v6785 = vpop.f32.mrb[0].mxu0
      %v6786 = vadd.f32 0.0, %v6785
      %v6787 = vpop.f32.mrb[0].mxu0
      %v6788 = vpop.f32.mrb[0].mxu0
      %v6789 = vadd.f32 0.0, %v6788
      %v6790 = vpop.f32.mrb[0].mxu0
      %6791 = vmatprep.mubr.bf16.mxu0 0
      %6792 = vmatmul.mubr.bf16.gmra.mrb[0].mxu0 %v6671
      %v6793 = vpop.f32.mrb[0].mxu0
      %v6794 = vadd.f32 0.0, %v6793
      %v6795 = vpop.f32.mrb[0].mxu0
      %v6796 = vpop.f32.mrb[0].mxu0
      %v6797 = vadd.f32 0.0, %v6796
      %v6798 = vpop.f32.mrb[0].mxu0
      %6799 = vmatprep.mubr.bf16.mxu0 0
      %6800 = vmatmul.mubr.bf16.gmra.mrb[0].mxu0 %v6672
      %v6801 = vpop.f32.mrb[0].mxu0
      %v6802 = vadd.f32 0.0, %v6801
      %v6803 = vpop.f32.mrb[0].mxu0
      %v6804 = vpop.f32.mrb[0].mxu0
      %v6805 = vadd.f32 0.0, %v6804
      %v6806 = vpop.f32.mrb[0].mxu0
      %6807 = vmatprep.mubr.bf16.mxu0 0
      %6808 = vmatmul.mubr.bf16.gmra.mrb[0].mxu0 %v6673
      %v6809 = vpop.f32.mrb[0].mxu0
      %v6810 = vadd.f32 0.0, %v6809
      %v6811 = vpop.f32.mrb[0].mxu0
      %v6812 = vpop.f32.mrb[0].mxu0
      %v6813 = vadd.f32 0.0, %v6812
      %v6814 = vpop.f32.mrb[0].mxu0
      %6815 = vmatprep.mubr.bf16.mxu0 0
      %6816 = vmatmul.mubr.bf16.gmra.mrb[0].mxu0 %v6674
      %v6817 = vpop.f32.mrb[0].mxu0
      %v6818 = vadd.f32 0.0, %v6817
      %v6819 = vpop.f32.mrb[0].mxu0
      %v6820 = vpop.f32.mrb[0].mxu0
      %v6821 = vadd.f32 0.0, %v6820
      %v6822 = vpop.f32.mrb[0].mxu0
      %6823 = vmatprep.mubr.bf16.mxu0 0
      %6824 = vmatmul.mubr.bf16.gmra.mrb[0].mxu0 %v6675
      %v6825 = vpop.f32.mrb[0].mxu0
      %v6826 = vadd.f32 0.0, %v6825
      %v6827 = vpop.f32.mrb[0].mxu0
      %v6828 = vpop.f32.mrb[0].mxu0
      %v6829 = vadd.f32 0.0, %v6828
      %v6830 = vpop.f32.mrb[0].mxu0
      %6831 = vmatprep.mubr.bf16.mxu0 0
      %6832 = vmatmul.mubr.bf16.gmra.mrb[0].mxu0 %v6676
      %v6833 = vpop.f32.mrb[0].mxu0
      %v6834 = vadd.f32 0.0, %v6833
      %v6835 = vpop.f32.mrb[0].mxu0
      %v6836 = vpop.f32.mrb[0].mxu0
      %v6837 = vadd.f32 0.0, %v6836
      %v6838 = vpop.f32.mrb[0].mxu0
      %6839 = vmatprep.mubr.bf16.mxu0 0
      %6840 = vmatmul.mubr.bf16.gmra.mrb[0].mxu0 %v6677
      %v6841 = vpop.f32.mrb[0].mxu0
      %v6842 = vadd.f32 0.0, %v6841
      %v6843 = vpop.f32.mrb[0].mxu0
      %v6844 = vpop.f32.mrb[0].mxu0
      %v6845 = vadd.f32 0.0, %v6844
      %v6846 = vpop.f32.mrb[0].mxu0
      %6847 = vmatprep.mubr.bf16.mxu0 0
      %6848 = vmatmul.mubr.bf16.gmra.mrb[0].mxu0 %v6678
      %v6849 = vpop.f32.mrb[0].mxu0
      %v6850 = vadd.f32 0.0, %v6849
      %v6851 = vpop.f32.mrb[0].mxu0
      %v6852 = vpop.f32.mrb[0].mxu0
      %v6853 = vadd.f32 0.0, %v6852
      %v6854 = vpop.f32.mrb[0].mxu0
      %6855 = vmatprep.mubr.bf16.mxu0 0
      %6856 = vmatmul.mubr.bf16.gmra.mrb[0].mxu0 %v6679
      %v6857 = vpop.f32.mrb[0].mxu0
      %v6858 = vadd.f32 0.0, %v6857
      %v6859 = vpop.f32.mrb[0].mxu0
      %v6860 = vpop.f32.mrb[0].mxu0
      %v6861 = vadd.f32 0.0, %v6860
      %v6862 = vpop.f32.mrb[0].mxu0
      %6863 = vmatprep.mubr.bf16.mxu0 0
      %6864 = vmatmul.mubr.bf16.gmra.mrb[0].mxu0 %v6680
      %v6865 = vpop.f32.mrb[0].mxu0
      %v6866 = vadd.f32 0.0, %v6865
      %v6867 = vpop.f32.mrb[0].mxu0
      %v6868 = vpop.f32.mrb[0].mxu0
      %v6869 = vadd.f32 0.0, %v6868
      %v6870 = vpop.f32.mrb[0].mxu0
      %6871 = vmatprep.mubr.bf16.mxu0 0
      %6872 = vmatmul.mubr.bf16.gmra.mrb[0].mxu0 %v6681
      %v6873 = vpop.f32.mrb[0].mxu0
      %v6874 = vadd.f32 0.0, %v6873
      %v6875 = vpop.f32.mrb[0].mxu0
      %v6876 = vpop.f32.mrb[0].mxu0
      %v6877 = vadd.f32 0.0, %v6876
      %v6878 = vpop.f32.mrb[0].mxu0
      %6879 = vmatprep.mubr.bf16.mxu0 0
      %6880 = vmatmul.mubr.bf16.gmra.mrb[0].mxu0 %v6682
      %v6881 = vpop.f32.mrb[0].mxu0
      %v6882 = vadd.f32 0.0, %v6881
      %v6883 = vpop.f32.mrb[0].mxu0
      %v6884 = vpop.f32.mrb[0].mxu0
      %v6885 = vadd.f32 0.0, %v6884
      %v6886 = vpop.f32.mrb[0].mxu0
      %6887 = vmatprep.mubr.bf16.mxu0 0
      %6888 = vmatmul.mubr.bf16.gmra.mrb[0].mxu0 %v6683
      %v6889 = vpop.f32.mrb[0].mxu0
      %v6890 = vadd.f32 0.0, %v6889
      %v6891 = vpop.f32.mrb[0].mxu0
      %v6892 = vpop.f32.mrb[0].mxu0
      %v6893 = vadd.f32 0.0, %v6892
      %v6894 = vpop.f32.mrb[0].mxu0
      %6895 = vmatprep.mubr.bf16.mxu0 0
      %6896 = vmatmul.mubr.bf16.gmra.mrb[0].mxu0 %v6684
      %v6897 = vpop.f32.mrb[0].mxu0
      %v6898 = vadd.f32 0.0, %v6897
      %v6899 = vpop.f32.mrb[0].mxu0
      %v6900 = vpop.f32.mrb[0].mxu0
      %v6901 = vadd.f32 0.0, %v6900
      %v6902 = vpop.f32.mrb[0].mxu0
      %6903 = vmatprep.mubr.bf16.mxu0 0
      %6904 = vmatmul.mubr.bf16.gmra.mrb[0].mxu0 %v6685
      %v6905 = vpop.f32.mrb[0].mxu0
      %v6906 = vadd.f32 0.0, %v6905
      %v6907 = vpop.f32.mrb[0].mxu0
      %v6908 = vpop.f32.mrb[0].mxu0
      %v6909 = vadd.f32 0.0, %v6908
      %v6910 = vpop.f32.mrb[0].mxu0
      %6911 = vdwg.mxu0
      %v6912 = vadd.f32 %v6574, %v6786
      %v6913 = vadd.f32 %v6575, %v6789
      %v6914 = vadd.f32 %v6576, %v6794
      %v6915 = vadd.f32 %v6577, %v6797
      %v6916 = vadd.f32 %v6578, %v6802
      %v6917 = vadd.f32 %v6579, %v6805
      %v6918 = vadd.f32 %v6580, %v6810
      %v6919 = vadd.f32 %v6581, %v6813
      %v6920 = vadd.f32 %v6582, %v6818
      %v6921 = vadd.f32 %v6583, %v6821
      %v6922 = vadd.f32 %v6584, %v6826
      %v6923 = vadd.f32 %v6585, %v6829
      %v6924 = vadd.f32 %v6586, %v6834
      %v6925 = vadd.f32 %v6587, %v6837
      %v6926 = vadd.f32 %v6588, %v6842
      %v6927 = vadd.f32 %v6589, %v6845
      %v6928 = vadd.f32 %v6590, %v6850
      %v6929 = vadd.f32 %v6591, %v6853
      %v6930 = vadd.f32 %v6592, %v6858
      %v6931 = vadd.f32 %v6593, %v6861
      %v6932 = vadd.f32 %v6594, %v6866
      %v6933 = vadd.f32 %v6595, %v6869
      %v6934 = vadd.f32 %v6596, %v6874
      %v6935 = vadd.f32 %v6597, %v6877
      %v6936 = vadd.f32 %v6598, %v6882
      %v6937 = vadd.f32 %v6599, %v6885
      %v6938 = vadd.f32 %v6600, %v6890
      %v6939 = vadd.f32 %v6601, %v6893
      %v6940 = vadd.f32 %v6602, %v6898
      %v6941 = vadd.f32 %v6603, %v6901
      %v6942 = vadd.f32 %v6604, %v6906
      %v6943 = vadd.f32 %v6605, %v6909
      %v6944 = vld [vmem:[%s6] sm:$0x1]
      %v6946 = vlaneseq
      %v6947 = vshrl.u32 %v6946, 7
      %v6948 = vsub.s32 0, %v6947
      %v6949 = vrot.slane %v6944, %v6948
      %v6951 = vadd.f32 %v6912, %v6949
      %v6952 = vadd.f32 %v6913, %v6949
      %v6953 = vadd.f32 %v6914, %v6949
      %v6954 = vadd.f32 %v6915, %v6949
      %v6955 = vadd.f32 %v6916, %v6949
      %v6956 = vadd.f32 %v6917, %v6949
      %v6957 = vadd.f32 %v6918, %v6949
      %v6958 = vadd.f32 %v6919, %v6949
      %v6959 = vadd.f32 %v6920, %v6949
      %v6960 = vadd.f32 %v6921, %v6949
      %v6961 = vadd.f32 %v6922, %v6949
      %v6962 = vadd.f32 %v6923, %v6949
      %v6963 = vadd.f32 %v6924, %v6949
      %v6964 = vadd.f32 %v6925, %v6949
      %v6965 = vadd.f32 %v6926, %v6949
      %v6966 = vadd.f32 %v6927, %v6949
      %v6967 = vadd.f32 %v6928, %v6949
      %v6968 = vadd.f32 %v6929, %v6949
      %v6969 = vadd.f32 %v6930, %v6949
      %v6970 = vadd.f32 %v6931, %v6949
      %v6971 = vadd.f32 %v6932, %v6949
      %v6972 = vadd.f32 %v6933, %v6949
      %v6973 = vadd.f32 %v6934, %v6949
      %v6974 = vadd.f32 %v6935, %v6949
      %v6975 = vadd.f32 %v6936, %v6949
      %v6976 = vadd.f32 %v6937, %v6949
      %v6977 = vadd.f32 %v6938, %v6949
      %v6978 = vadd.f32 %v6939, %v6949
      %v6979 = vadd.f32 %v6940, %v6949
      %v6980 = vadd.f32 %v6941, %v6949
      %v6981 = vadd.f32 %v6942, %v6949
      %v6982 = vadd.f32 %v6943, %v6949
      %v6983 = vmax.f32 %v6951, 0.0
      %v6984 = vmax.f32 %v6952, 0.0
      %v6985 = vmax.f32 %v6953, 0.0
      %v6986 = vmax.f32 %v6954, 0.0
      %v6987 = vmax.f32 %v6955, 0.0
      %v6988 = vmax.f32 %v6956, 0.0
      %v6989 = vmax.f32 %v6957, 0.0
      %v6990 = vmax.f32 %v6958, 0.0
      %v6991 = vmax.f32 %v6959, 0.0
      %v6992 = vmax.f32 %v6960, 0.0
      %v6993 = vmax.f32 %v6961, 0.0
      %v6994 = vmax.f32 %v6962, 0.0
      %v6995 = vmax.f32 %v6963, 0.0
      %v6996 = vmax.f32 %v6964, 0.0
      %v6997 = vmax.f32 %v6965, 0.0
      %v6998 = vmax.f32 %v6966, 0.0
      %v6999 = vmax.f32 %v6967, 0.0
      %v7000 = vmax.f32 %v6968, 0.0
      %v7001 = vmax.f32 %v6969, 0.0
      %v7002 = vmax.f32 %v6970, 0.0
      %v7003 = vmax.f32 %v6971, 0.0
      %v7004 = vmax.f32 %v6972, 0.0
      %v7005 = vmax.f32 %v6973, 0.0
      %v7006 = vmax.f32 %v6974, 0.0
      %v7007 = vmax.f32 %v6975, 0.0
      %v7008 = vmax.f32 %v6976, 0.0
      %v7009 = vmax.f32 %v6977, 0.0
      %v7010 = vmax.f32 %v6978, 0.0
      %v7011 = vmax.f32 %v6979, 0.0
      %v7012 = vmax.f32 %v6980, 0.0
      %v7013 = vmax.f32 %v6981, 0.0
      %v7014 = vmax.f32 %v6982, 0.0
      %v7015 = vadd.f32 %v6983, %v434
      %v7016 = vadd.f32 %v6984, %v437
      %v7017 = vadd.f32 %v6985, %v442
      %v7018 = vadd.f32 %v6986, %v445
      %v7019 = vadd.f32 %v6987, %v450
      %v7020 = vadd.f32 %v6988, %v453
      %v7021 = vadd.f32 %v6989, %v458
      %v7022 = vadd.f32 %v6990, %v461
      %v7023 = vadd.f32 %v6991, %v466
      %v7024 = vadd.f32 %v6992, %v469
      %v7025 = vadd.f32 %v6993, %v474
      %v7026 = vadd.f32 %v6994, %v477
      %v7027 = vadd.f32 %v6995, %v482
      %v7028 = vadd.f32 %v6996, %v485
      %v7029 = vadd.f32 %v6997, %v490
      %v7030 = vadd.f32 %v6998, %v493
      %v7031 = vadd.f32 %v6999, %v498
      %v7032 = vadd.f32 %v7000, %v501
      %v7033 = vadd.f32 %v7001, %v506
      %v7034 = vadd.f32 %v7002, %v509
      %v7035 = vadd.f32 %v7003, %v514
      %v7036 = vadd.f32 %v7004, %v517
      %v7037 = vadd.f32 %v7005, %v522
      %v7038 = vadd.f32 %v7006, %v525
      %v7039 = vadd.f32 %v7007, %v530
      %v7040 = vadd.f32 %v7008, %v533
      %v7041 = vadd.f32 %v7009, %v538
      %v7042 = vadd.f32 %v7010, %v541
      %v7043 = vadd.f32 %v7011, %v546
      %v7044 = vadd.f32 %v7012, %v549
      %v7045 = vadd.f32 %v7013, %v554
      %v7046 = vadd.f32 %v7014, %v557
      %v7047 = vmax.f32 %v7015, 0.0
      %v7048 = vmax.f32 %v7016, 0.0
      %v7049 = vmax.f32 %v7017, 0.0
      %v7050 = vmax.f32 %v7018, 0.0
      %v7051 = vmax.f32 %v7019, 0.0
      %v7052 = vmax.f32 %v7020, 0.0
      %v7053 = vmax.f32 %v7021, 0.0
      %v7054 = vmax.f32 %v7022, 0.0
      %v7055 = vmax.f32 %v7023, 0.0
      %v7056 = vmax.f32 %v7024, 0.0
      %v7057 = vmax.f32 %v7025, 0.0
      %v7058 = vmax.f32 %v7026, 0.0
      %v7059 = vmax.f32 %v7027, 0.0
      %v7060 = vmax.f32 %v7028, 0.0
      %v7061 = vmax.f32 %v7029, 0.0
      %v7062 = vmax.f32 %v7030, 0.0
      %v7063 = vmax.f32 %v7031, 0.0
      %v7064 = vmax.f32 %v7032, 0.0
      %v7065 = vmax.f32 %v7033, 0.0
      %v7066 = vmax.f32 %v7034, 0.0
      %v7067 = vmax.f32 %v7035, 0.0
      %v7068 = vmax.f32 %v7036, 0.0
      %v7069 = vmax.f32 %v7037, 0.0
      %v7070 = vmax.f32 %v7038, 0.0
      %v7071 = vmax.f32 %v7039, 0.0
      %v7072 = vmax.f32 %v7040, 0.0
      %v7073 = vmax.f32 %v7041, 0.0
      %v7074 = vmax.f32 %v7042, 0.0
      %v7075 = vmax.f32 %v7043, 0.0
      %v7076 = vmax.f32 %v7044, 0.0
      %v7077 = vmax.f32 %v7045, 0.0
      %v7078 = vmax.f32 %v7046, 0.0
      %7079 = vst [vmem:[%s278] sm:$0xff] %v7047
      %7080 = vst [vmem:[%s278 + $0x8] sm:$0xff] %v7048
      %7081 = vst [vmem:[%s278 + $0x10] sm:$0xff] %v7049
      %7082 = vst [vmem:[%s278 + $0x18] sm:$0xff] %v7050
      %7083 = vst [vmem:[%s278 + $0x20] sm:$0xff] %v7051
      %7084 = vst [vmem:[%s278 + $0x28] sm:$0xff] %v7052
      %7085 = vst [vmem:[%s278 + $0x30] sm:$0xff] %v7053
      %7086 = vst [vmem:[%s278 + $0x38] sm:$0xff] %v7054
      %7087 = vst [vmem:[%s278 + $0x40] sm:$0xff] %v7055
      %7088 = vst [vmem:[%s278 + $0x48] sm:$0xff] %v7056
      %7089 = vst [vmem:[%s278 + $0x50] sm:$0xff] %v7057
      %7090 = vst [vmem:[%s278 + $0x58] sm:$0xff] %v7058
      %7091 = vst [vmem:[%s278 + $0x60] sm:$0xff] %v7059
      %7092 = vst [vmem:[%s278 + $0x68] sm:$0xff] %v7060
      %7093 = vst [vmem:[%s278 + $0x70] sm:$0xff] %v7061
      %7094 = vst [vmem:[%s278 + $0x78] sm:$0xff] %v7062
      %7095 = vst [vmem:[%s278 + $0x80] sm:$0xff] %v7063
      %7096 = vst [vmem:[%s278 + $0x88] sm:$0xff] %v7064
      %7097 = vst [vmem:[%s278 + $0x90] sm:$0xff] %v7065
      %7098 = vst [vmem:[%s278 + $0x98] sm:$0xff] %v7066
      %7099 = vst [vmem:[%s278 + $0xa0] sm:$0xff] %v7067
      %7100 = vst [vmem:[%s278 + $0xa8] sm:$0xff] %v7068
      %7101 = vst [vmem:[%s278 + $0xb0] sm:$0xff] %v7069
      %7102 = vst [vmem:[%s278 + $0xb8] sm:$0xff] %v7070
      %7103 = vst [vmem:[%s278 + $0xc0] sm:$0xff] %v7071
      %7104 = vst [vmem:[%s278 + $0xc8] sm:$0xff] %v7072
      %7105 = vst [vmem:[%s278 + $0xd0] sm:$0xff] %v7073
      %7106 = vst [vmem:[%s278 + $0xd8] sm:$0xff] %v7074
      %7107 = vst [vmem:[%s278 + $0xe0] sm:$0xff] %v7075
      %7108 = vst [vmem:[%s278 + $0xe8] sm:$0xff] %v7076
      %7109 = vst [vmem:[%s278 + $0xf0] sm:$0xff] %v7077
      %7110 = vst [vmem:[%s278 + $0xf8] sm:$0xff] %v7078
      %p7111 = scmp.lt.s32.totalorder %s18, 1
      %s7112 = scalar_select %p7111, %s18, 1
      %s7113 = smul.addr %s7112, 32
      %s7114 = smul.addr %s7113, 8
      %s7115 = scalar_lea.vmem %s7, %s7114
      // Predicated region
      $region49: #{resblocki_forward.2} parent=47 // pred_check
        %p7116 = pneg %p188
      $region50: #{resblocki_forward.2} parent=47 // pred_check_branch
        %7118 = sbr.rel (%p7116) target = $region52
      $region51: #{resblocki_forward.2} parent=47 // pred_region
        _
      $region52: #{resblocki_forward.2} parent=47 // pred_fallthru
        _
    $region48: #{resblocki_forward.2} parent=5 // pred_fallthru
      _
    %p7119 = scmp.le.s32.totalorder 2, %s13
    // Predicated region
    $region53: #{resblocki_forward.2} parent=5 // pred_check
      %p7120 = pneg %p7119
    $region54: #{resblocki_forward.2} parent=5 // pred_check_branch
      %7122 = sbr.rel (%p7120) target = $region56
    $region55: #{resblocki_forward.2} parent=5 // pred_region
      %s7123 = ssub.s32 %s13, 2
      // Predicated region
      $region57: #{resblocki_forward.2} parent=55 // pred_check
        %p7124 = pneg %p194
      $region58: #{resblocki_forward.2} parent=55 // pred_check_branch
        %7126 = sbr.rel (%p7124) target = $region60
      $region59: #{resblocki_forward.2} parent=55 // pred_region
        %p7127 = scmp.lt.s32.totalorder %s19, 1
        %s7128 = scalar_select %p7127, %s19, 1
        %s7129 = smul.addr %s7128, 32
        %s7130 = smul.addr %s7129, 8
        %s7131 = scalar_lea.vmem %s7, %s7130
      $region60: #{resblocki_forward.2} parent=55 // pred_fallthru
        _
    $region56: #{resblocki_forward.2} parent=5 // pred_fallthru
      _
  $region6: #{resblocki_forward.2} parent=0 // loop_footer
    %s17 = sadd.s32 1, %s13
  $region7: #{resblocki_forward.2} parent=0 // loop_footer_branch
    %12 = sbr.rel target = $region3
  $region8: #{resblocki_forward.2} parent=0 // loop_exit
    _

// kernel: resblocki_forward.3
$region0: #{resblocki_forward.3}
  #allocation0 [shape = 'u32[]', space=smem, size = 0x4, offset = 0x4, fixed_abs, tag = 'smem constant byte address 0x4 - core index']
  #allocation1 [shape = 'u32[144,128]{1,0:T(1,128)}', space=vmem, size = 0x12000, scoped, tag = 'internal scratch']
  %s0 = inlined_call_operand.vmem [shape: f32[2,8,2,8,2,8,16], index: 0, kind: input, shape index: {}]
  %s1 = inlined_call_operand.vmem [shape: f32[2,8,8,8,8], index: 1, kind: output, shape index: {}]
  %s2 = sld [smem:[#allocation0]]
  $region37: #{resblocki_forward.3} parent=0
    _
  %s4 = ssub.s32 1, %s2
  %s5 = scalar_select 0, %s4, %s2
  loop: start=0, step=1, limit=4
  $region2: #{resblocki_forward.3} parent=0 // loop_pre_header
    _
  $region3: #{resblocki_forward.3} parent=0 // loop_header
    %s7 = sphi 0, %s11
    %p8 = scmp.ge.s32.totalorder %s7, 4
    %s17 = sphi 0, %s19
    %s20 = sphi 0, %s17
    %s21 = sphi 0, %s20
    %s37 = sphi 0, %s21
    %s43 = sphi 0, %s45
    %s46 = sphi 0, %s43
    %s47 = sphi 0, %s46
    %s63 = sphi 0, %s47
  $region4: #{resblocki_forward.3} parent=0 // loop_header_branch
    %10 = sbr.rel (%p8) target = $region8
  $region5: #{resblocki_forward.3} parent=0 // loop_body
    %s12 = ssub.s32 %s7, 1
    %s13 = ssub.s32 %s7, 2
    %s14 = sadd.s32 %s7, 1
    %s15 = ssub.s32 %s7, %s14
    %p16 = scmp.eq.s32.totalorder %s15, 0
    %s18 = sadd.s32 %s17, 1
    %s19 = scalar_select %p16, %s17, %s18
    %p22 = pneg %p16
    %p23 = scmp.eq.s32.totalorder %s7, 1
    %p24 = por %p22, %p23
    %p25 = scmp.ne.s32.totalorder %s17, %s20
    %p26 = scmp.eq.s32.totalorder %s7, 0
    %p27 = por %p25, %p26
    %p28 = scmp.ne.s32.totalorder %s17, %s20
    %p29 = scmp.eq.s32.totalorder %s12, 1
    %p30 = por %p28, %p29
    %p31 = scmp.ne.s32.totalorder %s20, %s21
    %p32 = scmp.eq.s32.totalorder %s12, 0
    %p33 = por %p31, %p32
    %p34 = scmp.ne.s32.totalorder %s20, %s21
    %p35 = scmp.eq.s32.totalorder %s13, 1
    %p36 = por %p34, %p35
    %p38 = scmp.ne.s32.totalorder %s21, %s37
    %p39 = scmp.eq.s32.totalorder %s13, 0
    %p40 = por %p38, %p39
    %s41 = ssub.s32 %s7, %s14
    %p42 = scmp.eq.s32.totalorder %s41, 0
    %s44 = sadd.s32 %s43, 1
    %s45 = scalar_select %p42, %s43, %s44
    %p48 = pneg %p42
    %p49 = scmp.eq.s32.totalorder %s7, 1
    %p50 = por %p48, %p49
    %p51 = scmp.ne.s32.totalorder %s43, %s46
    %p52 = scmp.eq.s32.totalorder %s7, 0
    %p53 = por %p51, %p52
    %p54 = scmp.ne.s32.totalorder %s43, %s46
    %p55 = scmp.eq.s32.totalorder %s12, 1
    %p56 = por %p54, %p55
    %p57 = scmp.ne.s32.totalorder %s46, %s47
    %p58 = scmp.eq.s32.totalorder %s12, 0
    %p59 = por %p57, %p58
    %p60 = scmp.ne.s32.totalorder %s46, %s47
    %p61 = scmp.eq.s32.totalorder %s13, 1
    %p62 = por %p60, %p61
    %p64 = scmp.ne.s32.totalorder %s47, %s63
    %p65 = scmp.eq.s32.totalorder %s13, 0
    %p66 = por %p64, %p65
    %p67 = scmp.le.s32.totalorder 1, %s7
    %p68 = scmp.lt.s32.totalorder %s7, 3
    %p69 = pnand %p67, %p68
    %p70 = pneg %p69
    // Predicated region
    $region9: #{resblocki_forward.3} parent=5 // pred_check
      _
    $region10: #{resblocki_forward.3} parent=5 // pred_check_branch
      %72 = sbr.rel (%p69) target = $region12
    $region11: #{resblocki_forward.3} parent=5 // pred_region
      %s73 = ssub.s32 %s7, 1
    $region12: #{resblocki_forward.3} parent=5 // pred_fallthru
      _
    %p74 = scmp.lt.s32.totalorder %s7, 2
    // Predicated region
    $region13: #{resblocki_forward.3} parent=5 // pred_check
      %p75 = pneg %p74
    $region14: #{resblocki_forward.3} parent=5 // pred_check_branch
      %77 = sbr.rel (%p75) target = $region16
    $region15: #{resblocki_forward.3} parent=5 // pred_region
      // Predicated region
      $region17: #{resblocki_forward.3} parent=15 // pred_check
        %p78 = pneg %p27
      $region18: #{resblocki_forward.3} parent=15 // pred_check_branch
        %80 = sbr.rel (%p78) target = $region20
      $region19: #{resblocki_forward.3} parent=15 // pred_region
        %p81 = scmp.lt.s32.totalorder %s7, 1
        %s82 = scalar_select %p81, %s7, 1
        %s83 = smul.addr %s82, 256
        %s84 = smul.addr %s83, 8
        %s85 = scalar_lea.vmem %s0, %s84
      $region20: #{resblocki_forward.3} parent=15 // pred_fallthru
        _
    $region16: #{resblocki_forward.3} parent=5 // pred_fallthru
      _
    %p86 = scmp.le.s32.totalorder 1, %s7
    %p87 = scmp.lt.s32.totalorder %s7, 3
    %p88 = pnand %p86, %p87
    %p89 = pneg %p88
    // Predicated region
    $region21: #{resblocki_forward.3} parent=5 // pred_check
      _
    $region22: #{resblocki_forward.3} parent=5 // pred_check_branch
      %91 = sbr.rel (%p88) target = $region24
    $region23: #{resblocki_forward.3} parent=5 // pred_region
      %s92 = ssub.s32 %s7, 1
      %p93 = scmp.lt.s32.totalorder %s12, 1
      %s94 = scalar_select %p93, %s12, 1
      %s95 = smul.addr %s94, 256
      %s96 = smul.addr %s95, 8
      %s97 = scalar_lea.vmem %s0, %s96
      %p98 = pneg %p33
      %p99 = pneg %p30
      %p100 = pneg %p59
      %p101 = pneg %p56
      %p102 = scmp.lt.s32.totalorder %s12, 1
      %s103 = scalar_select %p102, %s12, 1
      %s104 = smul.addr %s103, 64
      %s105 = smul.addr %s104, 8
      %s106 = scalar_lea.vmem %s1, %s105
      %p107 = scmp.lt.s32.totalorder %s12, 1
      %s108 = scalar_select %p107, %s12, 1
      %s109 = smul.addr %s108, 256
      %s110 = smul.addr %s109, 8
      %s111 = scalar_lea.vmem %s0, %s110
      %p112 = scmp.lt.s32.totalorder %s12, 1
      %s113 = scalar_select %p112, %s12, 1
      %s114 = smul.addr %s113, 64
      %s115 = smul.addr %s114, 8
      %s116 = scalar_lea.vmem %s1, %s115
      %v117 = vld [vmem:[%s111] sm:$0xff]
      %v118 = vld [vmem:[%s111 + $0x8] sm:$0xff]
      %v119 = vld [vmem:[%s111 + $0x10] sm:$0xff]
      %v120 = vld [vmem:[%s111 + $0x18] sm:$0xff]
      %v121 = vld [vmem:[%s111 + $0x20] sm:$0xff]
      %v122 = vld [vmem:[%s111 + $0x28] sm:$0xff]
      %v123 = vld [vmem:[%s111 + $0x30] sm:$0xff]
      %v124 = vld [vmem:[%s111 + $0x38] sm:$0xff]
      %v125 = vld [vmem:[%s111 + $0x40] sm:$0xff]
      %v126 = vld [vmem:[%s111 + $0x48] sm:$0xff]
      %v127 = vld [vmem:[%s111 + $0x50] sm:$0xff]
      %v128 = vld [vmem:[%s111 + $0x58] sm:$0xff]
      %v129 = vld [vmem:[%s111 + $0x60] sm:$0xff]
      %v130 = vld [vmem:[%s111 + $0x68] sm:$0xff]
      %v131 = vld [vmem:[%s111 + $0x70] sm:$0xff]
      %v132 = vld [vmem:[%s111 + $0x78] sm:$0xff]
      %v133 = vld [vmem:[%s111 + $0x100] sm:$0xff]
      %v134 = vld [vmem:[%s111 + $0x108] sm:$0xff]
      %v135 = vld [vmem:[%s111 + $0x110] sm:$0xff]
      %v136 = vld [vmem:[%s111 + $0x118] sm:$0xff]
      %v137 = vld [vmem:[%s111 + $0x120] sm:$0xff]
      %v138 = vld [vmem:[%s111 + $0x128] sm:$0xff]
      %v139 = vld [vmem:[%s111 + $0x130] sm:$0xff]
      %v140 = vld [vmem:[%s111 + $0x138] sm:$0xff]
      %v141 = vld [vmem:[%s111 + $0x140] sm:$0xff]
      %v142 = vld [vmem:[%s111 + $0x148] sm:$0xff]
      %v143 = vld [vmem:[%s111 + $0x150] sm:$0xff]
      %v144 = vld [vmem:[%s111 + $0x158] sm:$0xff]
      %v145 = vld [vmem:[%s111 + $0x160] sm:$0xff]
      %v146 = vld [vmem:[%s111 + $0x168] sm:$0xff]
      %v147 = vld [vmem:[%s111 + $0x170] sm:$0xff]
      %v148 = vld [vmem:[%s111 + $0x178] sm:$0xff]
      %v149 = vld [vmem:[%s111 + $0x200] sm:$0xff]
      %v150 = vld [vmem:[%s111 + $0x208] sm:$0xff]
      %v151 = vld [vmem:[%s111 + $0x210] sm:$0xff]
      %v152 = vld [vmem:[%s111 + $0x218] sm:$0xff]
      %v153 = vld [vmem:[%s111 + $0x220] sm:$0xff]
      %v154 = vld [vmem:[%s111 + $0x228] sm:$0xff]
      %v155 = vld [vmem:[%s111 + $0x230] sm:$0xff]
      %v156 = vld [vmem:[%s111 + $0x238] sm:$0xff]
      %v157 = vld [vmem:[%s111 + $0x240] sm:$0xff]
      %v158 = vld [vmem:[%s111 + $0x248] sm:$0xff]
      %v159 = vld [vmem:[%s111 + $0x250] sm:$0xff]
      %v160 = vld [vmem:[%s111 + $0x258] sm:$0xff]
      %v161 = vld [vmem:[%s111 + $0x260] sm:$0xff]
      %v162 = vld [vmem:[%s111 + $0x268] sm:$0xff]
      %v163 = vld [vmem:[%s111 + $0x270] sm:$0xff]
      %v164 = vld [vmem:[%s111 + $0x278] sm:$0xff]
      %v165 = vld [vmem:[%s111 + $0x300] sm:$0xff]
      %v166 = vld [vmem:[%s111 + $0x308] sm:$0xff]
      %v167 = vld [vmem:[%s111 + $0x310] sm:$0xff]
      %v168 = vld [vmem:[%s111 + $0x318] sm:$0xff]
      %v169 = vld [vmem:[%s111 + $0x320] sm:$0xff]
      %v170 = vld [vmem:[%s111 + $0x328] sm:$0xff]
      %v171 = vld [vmem:[%s111 + $0x330] sm:$0xff]
      %v172 = vld [vmem:[%s111 + $0x338] sm:$0xff]
      %v173 = vld [vmem:[%s111 + $0x340] sm:$0xff]
      %v174 = vld [vmem:[%s111 + $0x348] sm:$0xff]
      %v175 = vld [vmem:[%s111 + $0x350] sm:$0xff]
      %v176 = vld [vmem:[%s111 + $0x358] sm:$0xff]
      %v177 = vld [vmem:[%s111 + $0x360] sm:$0xff]
      %v178 = vld [vmem:[%s111 + $0x368] sm:$0xff]
      %v179 = vld [vmem:[%s111 + $0x370] sm:$0xff]
      %v180 = vld [vmem:[%s111 + $0x378] sm:$0xff]
      %v181 = vld [vmem:[%s111 + $0x400] sm:$0xff]
      %v182 = vld [vmem:[%s111 + $0x408] sm:$0xff]
      %v183 = vld [vmem:[%s111 + $0x410] sm:$0xff]
      %v184 = vld [vmem:[%s111 + $0x418] sm:$0xff]
      %v185 = vld [vmem:[%s111 + $0x420] sm:$0xff]
      %v186 = vld [vmem:[%s111 + $0x428] sm:$0xff]
      %v187 = vld [vmem:[%s111 + $0x430] sm:$0xff]
      %v188 = vld [vmem:[%s111 + $0x438] sm:$0xff]
      %v189 = vld [vmem:[%s111 + $0x440] sm:$0xff]
      %v190 = vld [vmem:[%s111 + $0x448] sm:$0xff]
      %v191 = vld [vmem:[%s111 + $0x450] sm:$0xff]
      %v192 = vld [vmem:[%s111 + $0x458] sm:$0xff]
      %v193 = vld [vmem:[%s111 + $0x460] sm:$0xff]
      %v194 = vld [vmem:[%s111 + $0x468] sm:$0xff]
      %v195 = vld [vmem:[%s111 + $0x470] sm:$0xff]
      %v196 = vld [vmem:[%s111 + $0x478] sm:$0xff]
      %v197 = vld [vmem:[%s111 + $0x500] sm:$0xff]
      %v198 = vld [vmem:[%s111 + $0x508] sm:$0xff]
      %v199 = vld [vmem:[%s111 + $0x510] sm:$0xff]
      %v200 = vld [vmem:[%s111 + $0x518] sm:$0xff]
      %v201 = vld [vmem:[%s111 + $0x520] sm:$0xff]
      %v202 = vld [vmem:[%s111 + $0x528] sm:$0xff]
      %v203 = vld [vmem:[%s111 + $0x530] sm:$0xff]
      %v204 = vld [vmem:[%s111 + $0x538] sm:$0xff]
      %v205 = vld [vmem:[%s111 + $0x540] sm:$0xff]
      %v206 = vld [vmem:[%s111 + $0x548] sm:$0xff]
      %v207 = vld [vmem:[%s111 + $0x550] sm:$0xff]
      %v208 = vld [vmem:[%s111 + $0x558] sm:$0xff]
      %v209 = vld [vmem:[%s111 + $0x560] sm:$0xff]
      %v210 = vld [vmem:[%s111 + $0x568] sm:$0xff]
      %v211 = vld [vmem:[%s111 + $0x570] sm:$0xff]
      %v212 = vld [vmem:[%s111 + $0x578] sm:$0xff]
      %v213 = vld [vmem:[%s111 + $0x600] sm:$0xff]
      %v214 = vld [vmem:[%s111 + $0x608] sm:$0xff]
      %v215 = vld [vmem:[%s111 + $0x610] sm:$0xff]
      %v216 = vld [vmem:[%s111 + $0x618] sm:$0xff]
      %v217 = vld [vmem:[%s111 + $0x620] sm:$0xff]
      %v218 = vld [vmem:[%s111 + $0x628] sm:$0xff]
      %v219 = vld [vmem:[%s111 + $0x630] sm:$0xff]
      %v220 = vld [vmem:[%s111 + $0x638] sm:$0xff]
      %v221 = vld [vmem:[%s111 + $0x640] sm:$0xff]
      %v222 = vld [vmem:[%s111 + $0x648] sm:$0xff]
      %v223 = vld [vmem:[%s111 + $0x650] sm:$0xff]
      %v224 = vld [vmem:[%s111 + $0x658] sm:$0xff]
      %v225 = vld [vmem:[%s111 + $0x660] sm:$0xff]
      %v226 = vld [vmem:[%s111 + $0x668] sm:$0xff]
      %v227 = vld [vmem:[%s111 + $0x670] sm:$0xff]
      %v228 = vld [vmem:[%s111 + $0x678] sm:$0xff]
      %v229 = vld [vmem:[%s111 + $0x700] sm:$0xff]
      %v230 = vld [vmem:[%s111 + $0x708] sm:$0xff]
      %v231 = vld [vmem:[%s111 + $0x710] sm:$0xff]
      %v232 = vld [vmem:[%s111 + $0x718] sm:$0xff]
      %v233 = vld [vmem:[%s111 + $0x720] sm:$0xff]
      %v234 = vld [vmem:[%s111 + $0x728] sm:$0xff]
      %v235 = vld [vmem:[%s111 + $0x730] sm:$0xff]
      %v236 = vld [vmem:[%s111 + $0x738] sm:$0xff]
      %v237 = vld [vmem:[%s111 + $0x740] sm:$0xff]
      %v238 = vld [vmem:[%s111 + $0x748] sm:$0xff]
      %v239 = vld [vmem:[%s111 + $0x750] sm:$0xff]
      %v240 = vld [vmem:[%s111 + $0x758] sm:$0xff]
      %v241 = vld [vmem:[%s111 + $0x760] sm:$0xff]
      %v242 = vld [vmem:[%s111 + $0x768] sm:$0xff]
      %v243 = vld [vmem:[%s111 + $0x770] sm:$0xff]
      %v244 = vld [vmem:[%s111 + $0x778] sm:$0xff]
      %s245 = scalar_lea.vmem %s111, 128
      %v246 = vld [vmem:[%s245] sm:$0xff]
      %v247 = vld [vmem:[%s245 + $0x8] sm:$0xff]
      %v248 = vld [vmem:[%s245 + $0x10] sm:$0xff]
      %v249 = vld [vmem:[%s245 + $0x18] sm:$0xff]
      %v250 = vld [vmem:[%s245 + $0x20] sm:$0xff]
      %v251 = vld [vmem:[%s245 + $0x28] sm:$0xff]
      %v252 = vld [vmem:[%s245 + $0x30] sm:$0xff]
      %v253 = vld [vmem:[%s245 + $0x38] sm:$0xff]
      %v254 = vld [vmem:[%s245 + $0x40] sm:$0xff]
      %v255 = vld [vmem:[%s245 + $0x48] sm:$0xff]
      %v256 = vld [vmem:[%s245 + $0x50] sm:$0xff]
      %v257 = vld [vmem:[%s245 + $0x58] sm:$0xff]
      %v258 = vld [vmem:[%s245 + $0x60] sm:$0xff]
      %v259 = vld [vmem:[%s245 + $0x68] sm:$0xff]
      %v260 = vld [vmem:[%s245 + $0x70] sm:$0xff]
      %v261 = vld [vmem:[%s245 + $0x78] sm:$0xff]
      %v262 = vld [vmem:[%s245 + $0x100] sm:$0xff]
      %v263 = vld [vmem:[%s245 + $0x108] sm:$0xff]
      %v264 = vld [vmem:[%s245 + $0x110] sm:$0xff]
      %v265 = vld [vmem:[%s245 + $0x118] sm:$0xff]
      %v266 = vld [vmem:[%s245 + $0x120] sm:$0xff]
      %v267 = vld [vmem:[%s245 + $0x128] sm:$0xff]
      %v268 = vld [vmem:[%s245 + $0x130] sm:$0xff]
      %v269 = vld [vmem:[%s245 + $0x138] sm:$0xff]
      %v270 = vld [vmem:[%s245 + $0x140] sm:$0xff]
      %v271 = vld [vmem:[%s245 + $0x148] sm:$0xff]
      %v272 = vld [vmem:[%s245 + $0x150] sm:$0xff]
      %v273 = vld [vmem:[%s245 + $0x158] sm:$0xff]
      %v274 = vld [vmem:[%s245 + $0x160] sm:$0xff]
      %v275 = vld [vmem:[%s245 + $0x168] sm:$0xff]
      %v276 = vld [vmem:[%s245 + $0x170] sm:$0xff]
      %v277 = vld [vmem:[%s245 + $0x178] sm:$0xff]
      %v278 = vld [vmem:[%s245 + $0x200] sm:$0xff]
      %v279 = vld [vmem:[%s245 + $0x208] sm:$0xff]
      %v280 = vld [vmem:[%s245 + $0x210] sm:$0xff]
      %v281 = vld [vmem:[%s245 + $0x218] sm:$0xff]
      %v282 = vld [vmem:[%s245 + $0x220] sm:$0xff]
      %v283 = vld [vmem:[%s245 + $0x228] sm:$0xff]
      %v284 = vld [vmem:[%s245 + $0x230] sm:$0xff]
      %v285 = vld [vmem:[%s245 + $0x238] sm:$0xff]
      %v286 = vld [vmem:[%s245 + $0x240] sm:$0xff]
      %v287 = vld [vmem:[%s245 + $0x248] sm:$0xff]
      %v288 = vld [vmem:[%s245 + $0x250] sm:$0xff]
      %v289 = vld [vmem:[%s245 + $0x258] sm:$0xff]
      %v290 = vld [vmem:[%s245 + $0x260] sm:$0xff]
      %v291 = vld [vmem:[%s245 + $0x268] sm:$0xff]
      %v292 = vld [vmem:[%s245 + $0x270] sm:$0xff]
      %v293 = vld [vmem:[%s245 + $0x278] sm:$0xff]
      %v294 = vld [vmem:[%s245 + $0x300] sm:$0xff]
      %v295 = vld [vmem:[%s245 + $0x308] sm:$0xff]
      %v296 = vld [vmem:[%s245 + $0x310] sm:$0xff]
      %v297 = vld [vmem:[%s245 + $0x318] sm:$0xff]
      %v298 = vld [vmem:[%s245 + $0x320] sm:$0xff]
      %v299 = vld [vmem:[%s245 + $0x328] sm:$0xff]
      %v300 = vld [vmem:[%s245 + $0x330] sm:$0xff]
      %v301 = vld [vmem:[%s245 + $0x338] sm:$0xff]
      %v302 = vld [vmem:[%s245 + $0x340] sm:$0xff]
      %v303 = vld [vmem:[%s245 + $0x348] sm:$0xff]
      %v304 = vld [vmem:[%s245 + $0x350] sm:$0xff]
      %v305 = vld [vmem:[%s245 + $0x358] sm:$0xff]
      %v306 = vld [vmem:[%s245 + $0x360] sm:$0xff]
      %v307 = vld [vmem:[%s245 + $0x368] sm:$0xff]
      %v308 = vld [vmem:[%s245 + $0x370] sm:$0xff]
      %v309 = vld [vmem:[%s245 + $0x378] sm:$0xff]
      %v310 = vld [vmem:[%s245 + $0x400] sm:$0xff]
      %v311 = vld [vmem:[%s245 + $0x408] sm:$0xff]
      %v312 = vld [vmem:[%s245 + $0x410] sm:$0xff]
      %v313 = vld [vmem:[%s245 + $0x418] sm:$0xff]
      %v314 = vld [vmem:[%s245 + $0x420] sm:$0xff]
      %v315 = vld [vmem:[%s245 + $0x428] sm:$0xff]
      %v316 = vld [vmem:[%s245 + $0x430] sm:$0xff]
      %v317 = vld [vmem:[%s245 + $0x438] sm:$0xff]
      %v318 = vld [vmem:[%s245 + $0x440] sm:$0xff]
      %v319 = vld [vmem:[%s245 + $0x448] sm:$0xff]
      %v320 = vld [vmem:[%s245 + $0x450] sm:$0xff]
      %v321 = vld [vmem:[%s245 + $0x458] sm:$0xff]
      %v322 = vld [vmem:[%s245 + $0x460] sm:$0xff]
      %v323 = vld [vmem:[%s245 + $0x468] sm:$0xff]
      %v324 = vld [vmem:[%s245 + $0x470] sm:$0xff]
      %v325 = vld [vmem:[%s245 + $0x478] sm:$0xff]
      %v326 = vld [vmem:[%s245 + $0x500] sm:$0xff]
      %v327 = vld [vmem:[%s245 + $0x508] sm:$0xff]
      %v328 = vld [vmem:[%s245 + $0x510] sm:$0xff]
      %v329 = vld [vmem:[%s245 + $0x518] sm:$0xff]
      %v330 = vld [vmem:[%s245 + $0x520] sm:$0xff]
      %v331 = vld [vmem:[%s245 + $0x528] sm:$0xff]
      %v332 = vld [vmem:[%s245 + $0x530] sm:$0xff]
      %v333 = vld [vmem:[%s245 + $0x538] sm:$0xff]
      %v334 = vld [vmem:[%s245 + $0x540] sm:$0xff]
      %v335 = vld [vmem:[%s245 + $0x548] sm:$0xff]
      %v336 = vld [vmem:[%s245 + $0x550] sm:$0xff]
      %v337 = vld [vmem:[%s245 + $0x558] sm:$0xff]
      %v338 = vld [vmem:[%s245 + $0x560] sm:$0xff]
      %v339 = vld [vmem:[%s245 + $0x568] sm:$0xff]
      %v340 = vld [vmem:[%s245 + $0x570] sm:$0xff]
      %v341 = vld [vmem:[%s245 + $0x578] sm:$0xff]
      %v342 = vld [vmem:[%s245 + $0x600] sm:$0xff]
      %v343 = vld [vmem:[%s245 + $0x608] sm:$0xff]
      %v344 = vld [vmem:[%s245 + $0x610] sm:$0xff]
      %v345 = vld [vmem:[%s245 + $0x618] sm:$0xff]
      %v346 = vld [vmem:[%s245 + $0x620] sm:$0xff]
      %v347 = vld [vmem:[%s245 + $0x628] sm:$0xff]
      %v348 = vld [vmem:[%s245 + $0x630] sm:$0xff]
      %v349 = vld [vmem:[%s245 + $0x638] sm:$0xff]
      %v350 = vld [vmem:[%s245 + $0x640] sm:$0xff]
      %v351 = vld [vmem:[%s245 + $0x648] sm:$0xff]
      %v352 = vld [vmem:[%s245 + $0x650] sm:$0xff]
      %v353 = vld [vmem:[%s245 + $0x658] sm:$0xff]
      %v354 = vld [vmem:[%s245 + $0x660] sm:$0xff]
      %v355 = vld [vmem:[%s245 + $0x668] sm:$0xff]
      %v356 = vld [vmem:[%s245 + $0x670] sm:$0xff]
      %v357 = vld [vmem:[%s245 + $0x678] sm:$0xff]
      %v358 = vld [vmem:[%s245 + $0x700] sm:$0xff]
      %v359 = vld [vmem:[%s245 + $0x708] sm:$0xff]
      %v360 = vld [vmem:[%s245 + $0x710] sm:$0xff]
      %v361 = vld [vmem:[%s245 + $0x718] sm:$0xff]
      %v362 = vld [vmem:[%s245 + $0x720] sm:$0xff]
      %v363 = vld [vmem:[%s245 + $0x728] sm:$0xff]
      %v364 = vld [vmem:[%s245 + $0x730] sm:$0xff]
      %v365 = vld [vmem:[%s245 + $0x738] sm:$0xff]
      %v366 = vld [vmem:[%s245 + $0x740] sm:$0xff]
      %v367 = vld [vmem:[%s245 + $0x748] sm:$0xff]
      %v368 = vld [vmem:[%s245 + $0x750] sm:$0xff]
      %v369 = vld [vmem:[%s245 + $0x758] sm:$0xff]
      %v370 = vld [vmem:[%s245 + $0x760] sm:$0xff]
      %v371 = vld [vmem:[%s245 + $0x768] sm:$0xff]
      %v372 = vld [vmem:[%s245 + $0x770] sm:$0xff]
      %v373 = vld [vmem:[%s245 + $0x778] sm:$0xff]
      %v374 = vmax.f32 %v117, %v246
      %v375 = vmax.f32 %v118, %v247
      %v376 = vmax.f32 %v119, %v248
      %v377 = vmax.f32 %v120, %v249
      %v378 = vmax.f32 %v121, %v250
      %v379 = vmax.f32 %v122, %v251
      %v380 = vmax.f32 %v123, %v252
      %v381 = vmax.f32 %v124, %v253
      %v382 = vmax.f32 %v125, %v254
      %v383 = vmax.f32 %v126, %v255
      %v384 = vmax.f32 %v127, %v256
      %v385 = vmax.f32 %v128, %v257
      %v386 = vmax.f32 %v129, %v258
      %v387 = vmax.f32 %v130, %v259
      %v388 = vmax.f32 %v131, %v260
      %v389 = vmax.f32 %v132, %v261
      %v390 = vmax.f32 %v133, %v262
      %v391 = vmax.f32 %v134, %v263
      %v392 = vmax.f32 %v135, %v264
      %v393 = vmax.f32 %v136, %v265
      %v394 = vmax.f32 %v137, %v266
      %v395 = vmax.f32 %v138, %v267
      %v396 = vmax.f32 %v139, %v268
      %v397 = vmax.f32 %v140, %v269
      %v398 = vmax.f32 %v141, %v270
      %v399 = vmax.f32 %v142, %v271
      %v400 = vmax.f32 %v143, %v272
      %v401 = vmax.f32 %v144, %v273
      %v402 = vmax.f32 %v145, %v274
      %v403 = vmax.f32 %v146, %v275
      %v404 = vmax.f32 %v147, %v276
      %v405 = vmax.f32 %v148, %v277
      %v406 = vmax.f32 %v149, %v278
      %v407 = vmax.f32 %v150, %v279
      %v408 = vmax.f32 %v151, %v280
      %v409 = vmax.f32 %v152, %v281
      %v410 = vmax.f32 %v153, %v282
      %v411 = vmax.f32 %v154, %v283
      %v412 = vmax.f32 %v155, %v284
      %v413 = vmax.f32 %v156, %v285
      %v414 = vmax.f32 %v157, %v286
      %v415 = vmax.f32 %v158, %v287
      %v416 = vmax.f32 %v159, %v288
      %v417 = vmax.f32 %v160, %v289
      %v418 = vmax.f32 %v161, %v290
      %v419 = vmax.f32 %v162, %v291
      %v420 = vmax.f32 %v163, %v292
      %v421 = vmax.f32 %v164, %v293
      %v422 = vmax.f32 %v165, %v294
      %v423 = vmax.f32 %v166, %v295
      %v424 = vmax.f32 %v167, %v296
      %v425 = vmax.f32 %v168, %v297
      %v426 = vmax.f32 %v169, %v298
      %v427 = vmax.f32 %v170, %v299
      %v428 = vmax.f32 %v171, %v300
      %v429 = vmax.f32 %v172, %v301
      %v430 = vmax.f32 %v173, %v302
      %v431 = vmax.f32 %v174, %v303
      %v432 = vmax.f32 %v175, %v304
      %v433 = vmax.f32 %v176, %v305
      %v434 = vmax.f32 %v177, %v306
      %v435 = vmax.f32 %v178, %v307
      %v436 = vmax.f32 %v179, %v308
      %v437 = vmax.f32 %v180, %v309
      %v438 = vmax.f32 %v181, %v310
      %v439 = vmax.f32 %v182, %v311
      %v440 = vmax.f32 %v183, %v312
      %v441 = vmax.f32 %v184, %v313
      %v442 = vmax.f32 %v185, %v314
      %v443 = vmax.f32 %v186, %v315
      %v444 = vmax.f32 %v187, %v316
      %v445 = vmax.f32 %v188, %v317
      %v446 = vmax.f32 %v189, %v318
      %v447 = vmax.f32 %v190, %v319
      %v448 = vmax.f32 %v191, %v320
      %v449 = vmax.f32 %v192, %v321
      %v450 = vmax.f32 %v193, %v322
      %v451 = vmax.f32 %v194, %v323
      %v452 = vmax.f32 %v195, %v324
      %v453 = vmax.f32 %v196, %v325
      %v454 = vmax.f32 %v197, %v326
      %v455 = vmax.f32 %v198, %v327
      %v456 = vmax.f32 %v199, %v328
      %v457 = vmax.f32 %v200, %v329
      %v458 = vmax.f32 %v201, %v330
      %v459 = vmax.f32 %v202, %v331
      %v460 = vmax.f32 %v203, %v332
      %v461 = vmax.f32 %v204, %v333
      %v462 = vmax.f32 %v205, %v334
      %v463 = vmax.f32 %v206, %v335
      %v464 = vmax.f32 %v207, %v336
      %v465 = vmax.f32 %v208, %v337
      %v466 = vmax.f32 %v209, %v338
      %v467 = vmax.f32 %v210, %v339
      %v468 = vmax.f32 %v211, %v340
      %v469 = vmax.f32 %v212, %v341
      %v470 = vmax.f32 %v213, %v342
      %v471 = vmax.f32 %v214, %v343
      %v472 = vmax.f32 %v215, %v344
      %v473 = vmax.f32 %v216, %v345
      %v474 = vmax.f32 %v217, %v346
      %v475 = vmax.f32 %v218, %v347
      %v476 = vmax.f32 %v219, %v348
      %v477 = vmax.f32 %v220, %v349
      %v478 = vmax.f32 %v221, %v350
      %v479 = vmax.f32 %v222, %v351
      %v480 = vmax.f32 %v223, %v352
      %v481 = vmax.f32 %v224, %v353
      %v482 = vmax.f32 %v225, %v354
      %v483 = vmax.f32 %v226, %v355
      %v484 = vmax.f32 %v227, %v356
      %v485 = vmax.f32 %v228, %v357
      %v486 = vmax.f32 %v229, %v358
      %v487 = vmax.f32 %v230, %v359
      %v488 = vmax.f32 %v231, %v360
      %v489 = vmax.f32 %v232, %v361
      %v490 = vmax.f32 %v233, %v362
      %v491 = vmax.f32 %v234, %v363
      %v492 = vmax.f32 %v235, %v364
      %v493 = vmax.f32 %v236, %v365
      %v494 = vmax.f32 %v237, %v366
      %v495 = vmax.f32 %v238, %v367
      %v496 = vmax.f32 %v239, %v368
      %v497 = vmax.f32 %v240, %v369
      %v498 = vmax.f32 %v241, %v370
      %v499 = vmax.f32 %v242, %v371
      %v500 = vmax.f32 %v243, %v372
      %v501 = vmax.f32 %v244, %v373
      %v502 = vmax.f32 %v374, %v375
      %v503 = vmax.f32 %v376, %v377
      %v504 = vmax.f32 %v378, %v379
      %v505 = vmax.f32 %v380, %v381
      %v506 = vmax.f32 %v382, %v383
      %v507 = vmax.f32 %v384, %v385
      %v508 = vmax.f32 %v386, %v387
      %v509 = vmax.f32 %v388, %v389
      %v510 = vmax.f32 %v390, %v391
      %v511 = vmax.f32 %v392, %v393
      %v512 = vmax.f32 %v394, %v395
      %v513 = vmax.f32 %v396, %v397
      %v514 = vmax.f32 %v398, %v399
      %v515 = vmax.f32 %v400, %v401
      %v516 = vmax.f32 %v402, %v403
      %v517 = vmax.f32 %v404, %v405
      %v518 = vmax.f32 %v406, %v407
      %v519 = vmax.f32 %v408, %v409
      %v520 = vmax.f32 %v410, %v411
      %v521 = vmax.f32 %v412, %v413
      %v522 = vmax.f32 %v414, %v415
      %v523 = vmax.f32 %v416, %v417
      %v524 = vmax.f32 %v418, %v419
      %v525 = vmax.f32 %v420, %v421
      %v526 = vmax.f32 %v422, %v423
      %v527 = vmax.f32 %v424, %v425
      %v528 = vmax.f32 %v426, %v427
      %v529 = vmax.f32 %v428, %v429
      %v530 = vmax.f32 %v430, %v431
      %v531 = vmax.f32 %v432, %v433
      %v532 = vmax.f32 %v434, %v435
      %v533 = vmax.f32 %v436, %v437
      %v534 = vmax.f32 %v438, %v439
      %v535 = vmax.f32 %v440, %v441
      %v536 = vmax.f32 %v442, %v443
      %v537 = vmax.f32 %v444, %v445
      %v538 = vmax.f32 %v446, %v447
      %v539 = vmax.f32 %v448, %v449
      %v540 = vmax.f32 %v450, %v451
      %v541 = vmax.f32 %v452, %v453
      %v542 = vmax.f32 %v454, %v455
      %v543 = vmax.f32 %v456, %v457
      %v544 = vmax.f32 %v458, %v459
      %v545 = vmax.f32 %v460, %v461
      %v546 = vmax.f32 %v462, %v463
      %v547 = vmax.f32 %v464, %v465
      %v548 = vmax.f32 %v466, %v467
      %v549 = vmax.f32 %v468, %v469
      %v550 = vmax.f32 %v470, %v471
      %v551 = vmax.f32 %v472, %v473
      %v552 = vmax.f32 %v474, %v475
      %v553 = vmax.f32 %v476, %v477
      %v554 = vmax.f32 %v478, %v479
      %v555 = vmax.f32 %v480, %v481
      %v556 = vmax.f32 %v482, %v483
      %v557 = vmax.f32 %v484, %v485
      %v558 = vmax.f32 %v486, %v487
      %v559 = vmax.f32 %v488, %v489
      %v560 = vmax.f32 %v490, %v491
      %v561 = vmax.f32 %v492, %v493
      %v562 = vmax.f32 %v494, %v495
      %v563 = vmax.f32 %v496, %v497
      %v564 = vmax.f32 %v498, %v499
      %v565 = vmax.f32 %v500, %v501
      %630 = vrot.lane.b32.xlu0 %v502, 120
      %v631 = vpop.permute.xlu0 %630
      %632 = vrot.lane.b32.xlu0 %v503, 120
      %v633 = vpop.permute.xlu0 %632
      %634 = vrot.lane.b32.xlu0 %v504, 120
      %v635 = vpop.permute.xlu0 %634
      %636 = vrot.lane.b32.xlu0 %v505, 120
      %v637 = vpop.permute.xlu0 %636
      %638 = vrot.lane.b32.xlu0 %v506, 120
      %v639 = vpop.permute.xlu0 %638
      %640 = vrot.lane.b32.xlu0 %v507, 120
      %v641 = vpop.permute.xlu0 %640
      %642 = vrot.lane.b32.xlu0 %v508, 120
      %v643 = vpop.permute.xlu0 %642
      %644 = vrot.lane.b32.xlu0 %v509, 120
      %v645 = vpop.permute.xlu0 %644
      %646 = vrot.lane.b32.xlu0 %v510, 120
      %v647 = vpop.permute.xlu0 %646
      %648 = vrot.lane.b32.xlu0 %v511, 120
      %v649 = vpop.permute.xlu0 %648
      %650 = vrot.lane.b32.xlu0 %v512, 120
      %v651 = vpop.permute.xlu0 %650
      %652 = vrot.lane.b32.xlu0 %v513, 120
      %v653 = vpop.permute.xlu0 %652
      %654 = vrot.lane.b32.xlu0 %v514, 120
      %v655 = vpop.permute.xlu0 %654
      %656 = vrot.lane.b32.xlu0 %v515, 120
      %v657 = vpop.permute.xlu0 %656
      %658 = vrot.lane.b32.xlu0 %v516, 120
      %v659 = vpop.permute.xlu0 %658
      %660 = vrot.lane.b32.xlu0 %v517, 120
      %v661 = vpop.permute.xlu0 %660
      %662 = vrot.lane.b32.xlu0 %v518, 120
      %v663 = vpop.permute.xlu0 %662
      %664 = vrot.lane.b32.xlu0 %v519, 120
      %v665 = vpop.permute.xlu0 %664
      %666 = vrot.lane.b32.xlu0 %v520, 120
      %v667 = vpop.permute.xlu0 %666
      %668 = vrot.lane.b32.xlu0 %v521, 120
      %v669 = vpop.permute.xlu0 %668
      %670 = vrot.lane.b32.xlu0 %v522, 120
      %v671 = vpop.permute.xlu0 %670
      %672 = vrot.lane.b32.xlu0 %v523, 120
      %v673 = vpop.permute.xlu0 %672
      %674 = vrot.lane.b32.xlu0 %v524, 120
      %v675 = vpop.permute.xlu0 %674
      %676 = vrot.lane.b32.xlu0 %v525, 120
      %v677 = vpop.permute.xlu0 %676
      %678 = vrot.lane.b32.xlu0 %v526, 120
      %v679 = vpop.permute.xlu0 %678
      %680 = vrot.lane.b32.xlu0 %v527, 120
      %v681 = vpop.permute.xlu0 %680
      %682 = vrot.lane.b32.xlu0 %v528, 120
      %v683 = vpop.permute.xlu0 %682
      %684 = vrot.lane.b32.xlu0 %v529, 120
      %v685 = vpop.permute.xlu0 %684
      %686 = vrot.lane.b32.xlu0 %v530, 120
      %v687 = vpop.permute.xlu0 %686
      %688 = vrot.lane.b32.xlu0 %v531, 120
      %v689 = vpop.permute.xlu0 %688
      %690 = vrot.lane.b32.xlu0 %v532, 120
      %v691 = vpop.permute.xlu0 %690
      %692 = vrot.lane.b32.xlu0 %v533, 120
      %v693 = vpop.permute.xlu0 %692
      %694 = vrot.lane.b32.xlu0 %v534, 120
      %v695 = vpop.permute.xlu0 %694
      %696 = vrot.lane.b32.xlu0 %v535, 120
      %v697 = vpop.permute.xlu0 %696
      %698 = vrot.lane.b32.xlu0 %v536, 120
      %v699 = vpop.permute.xlu0 %698
      %700 = vrot.lane.b32.xlu0 %v537, 120
      %v701 = vpop.permute.xlu0 %700
      %702 = vrot.lane.b32.xlu0 %v538, 120
      %v703 = vpop.permute.xlu0 %702
      %704 = vrot.lane.b32.xlu0 %v539, 120
      %v705 = vpop.permute.xlu0 %704
      %706 = vrot.lane.b32.xlu0 %v540, 120
      %v707 = vpop.permute.xlu0 %706
      %708 = vrot.lane.b32.xlu0 %v541, 120
      %v709 = vpop.permute.xlu0 %708
      %710 = vrot.lane.b32.xlu0 %v542, 120
      %v711 = vpop.permute.xlu0 %710
      %712 = vrot.lane.b32.xlu0 %v543, 120
      %v713 = vpop.permute.xlu0 %712
      %714 = vrot.lane.b32.xlu0 %v544, 120
      %v715 = vpop.permute.xlu0 %714
      %716 = vrot.lane.b32.xlu0 %v545, 120
      %v717 = vpop.permute.xlu0 %716
      %718 = vrot.lane.b32.xlu0 %v546, 120
      %v719 = vpop.permute.xlu0 %718
      %720 = vrot.lane.b32.xlu0 %v547, 120
      %v721 = vpop.permute.xlu0 %720
      %722 = vrot.lane.b32.xlu0 %v548, 120
      %v723 = vpop.permute.xlu0 %722
      %724 = vrot.lane.b32.xlu0 %v549, 120
      %v725 = vpop.permute.xlu0 %724
      %726 = vrot.lane.b32.xlu0 %v550, 120
      %v727 = vpop.permute.xlu0 %726
      %728 = vrot.lane.b32.xlu0 %v551, 120
      %v729 = vpop.permute.xlu0 %728
      %730 = vrot.lane.b32.xlu0 %v552, 120
      %v731 = vpop.permute.xlu0 %730
      %732 = vrot.lane.b32.xlu0 %v553, 120
      %v733 = vpop.permute.xlu0 %732
      %734 = vrot.lane.b32.xlu0 %v554, 120
      %v735 = vpop.permute.xlu0 %734
      %736 = vrot.lane.b32.xlu0 %v555, 120
      %v737 = vpop.permute.xlu0 %736
      %738 = vrot.lane.b32.xlu0 %v556, 120
      %v739 = vpop.permute.xlu0 %738
      %740 = vrot.lane.b32.xlu0 %v557, 120
      %v741 = vpop.permute.xlu0 %740
      %742 = vrot.lane.b32.xlu0 %v558, 120
      %v743 = vpop.permute.xlu0 %742
      %744 = vrot.lane.b32.xlu0 %v559, 120
      %v745 = vpop.permute.xlu0 %744
      %746 = vrot.lane.b32.xlu0 %v560, 120
      %v747 = vpop.permute.xlu0 %746
      %748 = vrot.lane.b32.xlu0 %v561, 120
      %v749 = vpop.permute.xlu0 %748
      %750 = vrot.lane.b32.xlu0 %v562, 120
      %v751 = vpop.permute.xlu0 %750
      %752 = vrot.lane.b32.xlu0 %v563, 120
      %v753 = vpop.permute.xlu0 %752
      %754 = vrot.lane.b32.xlu0 %v564, 120
      %v755 = vpop.permute.xlu0 %754
      %756 = vrot.lane.b32.xlu0 %v565, 120
      %v757 = vpop.permute.xlu0 %756
      %v822 = vmax.f32 %v502, %v631
      %v823 = vmax.f32 %v503, %v633
      %v824 = vmax.f32 %v504, %v635
      %v825 = vmax.f32 %v505, %v637
      %v826 = vmax.f32 %v506, %v639
      %v827 = vmax.f32 %v507, %v641
      %v828 = vmax.f32 %v508, %v643
      %v829 = vmax.f32 %v509, %v645
      %v830 = vmax.f32 %v510, %v647
      %v831 = vmax.f32 %v511, %v649
      %v832 = vmax.f32 %v512, %v651
      %v833 = vmax.f32 %v513, %v653
      %v834 = vmax.f32 %v514, %v655
      %v835 = vmax.f32 %v515, %v657
      %v836 = vmax.f32 %v516, %v659
      %v837 = vmax.f32 %v517, %v661
      %v838 = vmax.f32 %v518, %v663
      %v839 = vmax.f32 %v519, %v665
      %v840 = vmax.f32 %v520, %v667
      %v841 = vmax.f32 %v521, %v669
      %v842 = vmax.f32 %v522, %v671
      %v843 = vmax.f32 %v523, %v673
      %v844 = vmax.f32 %v524, %v675
      %v845 = vmax.f32 %v525, %v677
      %v846 = vmax.f32 %v526, %v679
      %v847 = vmax.f32 %v527, %v681
      %v848 = vmax.f32 %v528, %v683
      %v849 = vmax.f32 %v529, %v685
      %v850 = vmax.f32 %v530, %v687
      %v851 = vmax.f32 %v531, %v689
      %v852 = vmax.f32 %v532, %v691
      %v853 = vmax.f32 %v533, %v693
      %v854 = vmax.f32 %v534, %v695
      %v855 = vmax.f32 %v535, %v697
      %v856 = vmax.f32 %v536, %v699
      %v857 = vmax.f32 %v537, %v701
      %v858 = vmax.f32 %v538, %v703
      %v859 = vmax.f32 %v539, %v705
      %v860 = vmax.f32 %v540, %v707
      %v861 = vmax.f32 %v541, %v709
      %v862 = vmax.f32 %v542, %v711
      %v863 = vmax.f32 %v543, %v713
      %v864 = vmax.f32 %v544, %v715
      %v865 = vmax.f32 %v545, %v717
      %v866 = vmax.f32 %v546, %v719
      %v867 = vmax.f32 %v547, %v721
      %v868 = vmax.f32 %v548, %v723
      %v869 = vmax.f32 %v549, %v725
      %v870 = vmax.f32 %v550, %v727
      %v871 = vmax.f32 %v551, %v729
      %v872 = vmax.f32 %v552, %v731
      %v873 = vmax.f32 %v553, %v733
      %v874 = vmax.f32 %v554, %v735
      %v875 = vmax.f32 %v555, %v737
      %v876 = vmax.f32 %v556, %v739
      %v877 = vmax.f32 %v557, %v741
      %v878 = vmax.f32 %v558, %v743
      %v879 = vmax.f32 %v559, %v745
      %v880 = vmax.f32 %v560, %v747
      %v881 = vmax.f32 %v561, %v749
      %v882 = vmax.f32 %v562, %v751
      %v883 = vmax.f32 %v563, %v753
      %v884 = vmax.f32 %v564, %v755
      %v885 = vmax.f32 %v565, %v757
      %vm886 = vcmask 64512
      %887 = vst.msk [vmem:[%s116] sm:$0xff] %vm886, %v822
      %888 = vst.msk [vmem:[%s116 + $0x8] sm:$0xff] %vm886, %v823
      %889 = vst.msk [vmem:[%s116 + $0x10] sm:$0xff] %vm886, %v824
      %890 = vst.msk [vmem:[%s116 + $0x18] sm:$0xff] %vm886, %v825
      %891 = vst.msk [vmem:[%s116 + $0x20] sm:$0xff] %vm886, %v826
      %892 = vst.msk [vmem:[%s116 + $0x28] sm:$0xff] %vm886, %v827
      %893 = vst.msk [vmem:[%s116 + $0x30] sm:$0xff] %vm886, %v828
      %894 = vst.msk [vmem:[%s116 + $0x38] sm:$0xff] %vm886, %v829
      %895 = vst.msk [vmem:[%s116 + $0x40] sm:$0xff] %vm886, %v830
      %896 = vst.msk [vmem:[%s116 + $0x48] sm:$0xff] %vm886, %v831
      %897 = vst.msk [vmem:[%s116 + $0x50] sm:$0xff] %vm886, %v832
      %898 = vst.msk [vmem:[%s116 + $0x58] sm:$0xff] %vm886, %v833
      %899 = vst.msk [vmem:[%s116 + $0x60] sm:$0xff] %vm886, %v834
      %900 = vst.msk [vmem:[%s116 + $0x68] sm:$0xff] %vm886, %v835
      %901 = vst.msk [vmem:[%s116 + $0x70] sm:$0xff] %vm886, %v836
      %902 = vst.msk [vmem:[%s116 + $0x78] sm:$0xff] %vm886, %v837
      %903 = vst.msk [vmem:[%s116 + $0x80] sm:$0xff] %vm886, %v838
      %904 = vst.msk [vmem:[%s116 + $0x88] sm:$0xff] %vm886, %v839
      %905 = vst.msk [vmem:[%s116 + $0x90] sm:$0xff] %vm886, %v840
      %906 = vst.msk [vmem:[%s116 + $0x98] sm:$0xff] %vm886, %v841
      %907 = vst.msk [vmem:[%s116 + $0xa0] sm:$0xff] %vm886, %v842
      %908 = vst.msk [vmem:[%s116 + $0xa8] sm:$0xff] %vm886, %v843
      %909 = vst.msk [vmem:[%s116 + $0xb0] sm:$0xff] %vm886, %v844
      %910 = vst.msk [vmem:[%s116 + $0xb8] sm:$0xff] %vm886, %v845
      %911 = vst.msk [vmem:[%s116 + $0xc0] sm:$0xff] %vm886, %v846
      %912 = vst.msk [vmem:[%s116 + $0xc8] sm:$0xff] %vm886, %v847
      %913 = vst.msk [vmem:[%s116 + $0xd0] sm:$0xff] %vm886, %v848
      %914 = vst.msk [vmem:[%s116 + $0xd8] sm:$0xff] %vm886, %v849
      %915 = vst.msk [vmem:[%s116 + $0xe0] sm:$0xff] %vm886, %v850
      %916 = vst.msk [vmem:[%s116 + $0xe8] sm:$0xff] %vm886, %v851
      %917 = vst.msk [vmem:[%s116 + $0xf0] sm:$0xff] %vm886, %v852
      %918 = vst.msk [vmem:[%s116 + $0xf8] sm:$0xff] %vm886, %v853
      %919 = vst.msk [vmem:[%s116 + $0x100] sm:$0xff] %vm886, %v854
      %920 = vst.msk [vmem:[%s116 + $0x108] sm:$0xff] %vm886, %v855
      %921 = vst.msk [vmem:[%s116 + $0x110] sm:$0xff] %vm886, %v856
      %922 = vst.msk [vmem:[%s116 + $0x118] sm:$0xff] %vm886, %v857
      %923 = vst.msk [vmem:[%s116 + $0x120] sm:$0xff] %vm886, %v858
      %924 = vst.msk [vmem:[%s116 + $0x128] sm:$0xff] %vm886, %v859
      %925 = vst.msk [vmem:[%s116 + $0x130] sm:$0xff] %vm886, %v860
      %926 = vst.msk [vmem:[%s116 + $0x138] sm:$0xff] %vm886, %v861
      %927 = vst.msk [vmem:[%s116 + $0x140] sm:$0xff] %vm886, %v862
      %928 = vst.msk [vmem:[%s116 + $0x148] sm:$0xff] %vm886, %v863
      %929 = vst.msk [vmem:[%s116 + $0x150] sm:$0xff] %vm886, %v864
      %930 = vst.msk [vmem:[%s116 + $0x158] sm:$0xff] %vm886, %v865
      %931 = vst.msk [vmem:[%s116 + $0x160] sm:$0xff] %vm886, %v866
      %932 = vst.msk [vmem:[%s116 + $0x168] sm:$0xff] %vm886, %v867
      %933 = vst.msk [vmem:[%s116 + $0x170] sm:$0xff] %vm886, %v868
      %934 = vst.msk [vmem:[%s116 + $0x178] sm:$0xff] %vm886, %v869
      %935 = vst.msk [vmem:[%s116 + $0x180] sm:$0xff] %vm886, %v870
      %936 = vst.msk [vmem:[%s116 + $0x188] sm:$0xff] %vm886, %v871
      %937 = vst.msk [vmem:[%s116 + $0x190] sm:$0xff] %vm886, %v872
      %938 = vst.msk [vmem:[%s116 + $0x198] sm:$0xff] %vm886, %v873
      %939 = vst.msk [vmem:[%s116 + $0x1a0] sm:$0xff] %vm886, %v874
      %940 = vst.msk [vmem:[%s116 + $0x1a8] sm:$0xff] %vm886, %v875
      %941 = vst.msk [vmem:[%s116 + $0x1b0] sm:$0xff] %vm886, %v876
      %942 = vst.msk [vmem:[%s116 + $0x1b8] sm:$0xff] %vm886, %v877
      %943 = vst.msk [vmem:[%s116 + $0x1c0] sm:$0xff] %vm886, %v878
      %944 = vst.msk [vmem:[%s116 + $0x1c8] sm:$0xff] %vm886, %v879
      %945 = vst.msk [vmem:[%s116 + $0x1d0] sm:$0xff] %vm886, %v880
      %946 = vst.msk [vmem:[%s116 + $0x1d8] sm:$0xff] %vm886, %v881
      %947 = vst.msk [vmem:[%s116 + $0x1e0] sm:$0xff] %vm886, %v882
      %948 = vst.msk [vmem:[%s116 + $0x1e8] sm:$0xff] %vm886, %v883
      %949 = vst.msk [vmem:[%s116 + $0x1f0] sm:$0xff] %vm886, %v884
      %950 = vst.msk [vmem:[%s116 + $0x1f8] sm:$0xff] %vm886, %v885
      %p951 = scmp.lt.s32.totalorder %s12, 1
      %s952 = scalar_select %p951, %s12, 1
      %s953 = smul.addr %s952, 64
      %s954 = smul.addr %s953, 8
      %s955 = scalar_lea.vmem %s1, %s954
      // Predicated region
      $region25: #{resblocki_forward.3} parent=23 // pred_check
        %p956 = pneg %p56
      $region26: #{resblocki_forward.3} parent=23 // pred_check_branch
        %958 = sbr.rel (%p956) target = $region28
      $region27: #{resblocki_forward.3} parent=23 // pred_region
        _
      $region28: #{resblocki_forward.3} parent=23 // pred_fallthru
        _
    $region24: #{resblocki_forward.3} parent=5 // pred_fallthru
      _
    %p959 = scmp.le.s32.totalorder 2, %s7
    // Predicated region
    $region29: #{resblocki_forward.3} parent=5 // pred_check
      %p960 = pneg %p959
    $region30: #{resblocki_forward.3} parent=5 // pred_check_branch
      %962 = sbr.rel (%p960) target = $region32
    $region31: #{resblocki_forward.3} parent=5 // pred_region
      %s963 = ssub.s32 %s7, 2
      // Predicated region
      $region33: #{resblocki_forward.3} parent=31 // pred_check
        %p964 = pneg %p62
      $region34: #{resblocki_forward.3} parent=31 // pred_check_branch
        %966 = sbr.rel (%p964) target = $region36
      $region35: #{resblocki_forward.3} parent=31 // pred_region
        %p967 = scmp.lt.s32.totalorder %s13, 1
        %s968 = scalar_select %p967, %s13, 1
        %s969 = smul.addr %s968, 64
        %s970 = smul.addr %s969, 8
        %s971 = scalar_lea.vmem %s1, %s970
      $region36: #{resblocki_forward.3} parent=31 // pred_fallthru
        _
    $region32: #{resblocki_forward.3} parent=5 // pred_fallthru
      _
  $region6: #{resblocki_forward.3} parent=0 // loop_footer
    %s11 = sadd.s32 1, %s7
  $region7: #{resblocki_forward.3} parent=0 // loop_footer_branch
    %6 = sbr.rel target = $region3
  $region8: #{resblocki_forward.3} parent=0 // loop_exit
    _

</llo_original>
